<compile_context>
chip_gen: v5e
topology: v5e:2x2
jax: 0.10.0
libtpu: 0.0.40
codegen_flags: <defaults>
</compile_context>

<pallas_src>
import functools
import math

import numpy as np

import jax
import jax.numpy as jnp
from jax.experimental import pallas as pl
from jax.experimental.pallas import tpu as pltpu


# ----------------------------------------------------------------- host-side helpers
def _im2col3x3(x_nhwc):
    """(B, H, W, C) -> (B, H*W, 9*C) patches for a 3x3 / pad=1 conv (reference only)."""
    B, H, W, C = x_nhwc.shape
    xp = jnp.pad(x_nhwc, ((0, 0), (1, 1), (1, 1), (0, 0)))
    cols = [xp[:, dy:dy + H, dx:dx + W, :] for dy in range(3) for dx in range(3)]
    return jnp.concatenate(cols, axis=-1).reshape(B, H * W, 9 * C)


def _psp_matrix(h, w, grids):
    """Averaging matrix P (S, H*W) reproducing PSPModule's adaptive_avg_pool2d + cat."""
    ar = w / h
    rows = []
    for g in grids:
        oh = g
        ow = max(1, round(ar * g))
        for i in range(oh):
            hs, he = math.floor(i * h / oh), math.ceil((i + 1) * h / oh)
            for j in range(ow):
                ws, we = math.floor(j * w / ow), math.ceil((j + 1) * w / ow)
                row = np.zeros((h, w), np.float32)
                row[hs:he, ws:we] = 1.0 / ((he - hs) * (we - ws))
                rows.append(row.reshape(-1))
    return np.stack(rows).astype(np.float32)  # (S, H*W)


# ----------------------------------------------------------------- fused Pallas kernel
def _cfc_crb_kernel(xpad_ref, edge_ref, wrc_ref, rcs_ref, rcb_ref,
                    wq_ref, psp_ref, sbias_ref, wvk_ref,
                    wla1_ref, la1s_ref, la1b_ref, wla2_ref,
                    out_ref, col_ref, *, H, W, Bb, compute_local_mask):
    f32, bf16 = jnp.float32, jnp.bfloat16
    HW = H * W
    BHW = Bb * HW
    C = out_ref.shape[-1]

    edge = edge_ref[...]                       # (BHW, 2) bf16, exact 0/1 masks

    def conv3x3(xpads, cin, w_flat):
        """3x3 / pad=1 conv over per-batch token-padded (HWp, cin) bf16 maps.

        Lane-packs the 9 shifted, edge-masked taps into the bf16 im2col scratch
        and issues ONE (BHW, 9*cin) x (9*cin, Cout) MXU matmul (f32 accumulation).
        """
        # hoisted edge broadcasts (JAX does not CSE broadcast_in_dim)
        nl = jnp.broadcast_to(edge[:, 0:1], (BHW, cin))   # 0 where x == 0
        nr = jnp.broadcast_to(edge[:, 1:2], (BHW, cin))   # 0 where x == W-1
        for t in range(9):
            dx = t % 3
            off = (t // 3) * W + dx
            taps = [xp[off:off + HW, :] for xp in xpads]
            tap = taps[0] if Bb == 1 else jnp.concatenate(taps, axis=0)   # (BHW, cin) bf16
            if dx == 0:
                tap = tap * nl
            elif dx == 2:
                tap = tap * nr
            col_ref[:, t * cin:(t + 1) * cin] = tap
        return jnp.dot(col_ref[:, :9 * cin], w_flat, preferred_element_type=f32)

    # ---- reduce_channel: 3x3 conv + folded BN + SiLU (elementwise in f32) ----
    xpads = [xpad_ref[b] for b in range(Bb)]                               # bf16 slabs
    feat = conv3x3(xpads, C, wrc_ref[...])                                 # (BHW, C) f32
    feat = feat * rcs_ref[...] + rcb_ref[...]
    feat = feat * jax.nn.sigmoid(feat)                                     # SiLU
    feat_bf = feat.astype(bf16)

    # ---- query projection (folded over batch) ----
    q = jnp.dot(feat_bf, wq_ref[...], preferred_element_type=f32)         # (BHW, 32)

    psp = psp_ref[...]                                                     # (S_pad, HW) bf16
    wvk = wvk_ref[...]                                                     # (C, C+32) bf16
    sbias = sbias_ref[...]                                                 # (1, S_pad) f32 (keep f32!)

    # ---- per-batch PSP pooling, fused value|key, softmax attention ----
    ctx_parts = []
    for b in range(Bb):
        feat_b = feat_bf[b * HW:(b + 1) * HW, :]                           # (HW, C)
        q_b = q[b * HW:(b + 1) * HW, :]                                    # (HW, 32)
        pooled = jnp.dot(psp, feat_b, preferred_element_type=f32)          # (S_pad, C)
        vk = jnp.dot(pooled.astype(bf16), wvk, preferred_element_type=f32)  # (S_pad, C+32)
        v = vk[:, :C]
        k = vk[:, C:]
        sim = jax.lax.dot_general(q_b.astype(bf16), k.astype(bf16),
                                  (((1,), (1,)), ((), ())),
                                  preferred_element_type=f32)              # (HW, S_pad)
        sim = sim + sbias                                                  # -1e30 on padded cols
        sim = sim - jnp.max(sim, axis=-1, keepdims=True)
        e = jnp.exp(sim)
        attn = e * pl.reciprocal(jnp.sum(e, axis=-1, keepdims=True), approx=True)
        ctx_b = jnp.dot(attn.astype(bf16), v.astype(bf16),
                        preferred_element_type=f32)                        # (HW, C)
        ctx_parts.append(ctx_b)
    ctx = ctx_parts[0] if Bb == 1 else jnp.concatenate(ctx_parts, axis=0)  # (BHW, C)

    # ---- LocalAttenModule + residual ----
    if compute_local_mask:
        C8 = wla1_ref.shape[-1]
        # conv[0]: 1x1 conv + BN + SiLU -> (BHW, C//8)
        t1 = jnp.dot(ctx.astype(bf16), wla1_ref[...], preferred_element_type=f32)
        t1 = t1 * la1s_ref[...] + la1b_ref[...]
        t1 = t1 * jax.nn.sigmoid(t1)
        t1_bf = t1.astype(bf16)
        # conv[1]: 3x3 conv (zero-initialized weights) -> tanh spatial mask
        zp = jnp.zeros((W + 1, C8), bf16)
        t1pads = [jnp.concatenate([zp, t1_bf[b * HW:(b + 1) * HW, :], zp], axis=0)
                  for b in range(Bb)]                                      # (HWp, C8) each
        mask = jnp.tanh(conv3x3(t1pads, C8, wla2_ref[...]))                # (BHW, C)
        out = feat + ctx * mask + ctx
    else:
        # conv[1].weight is identically zero -> tanh(0) = 0 -> context*0 + context
        out = feat + ctx

    for b in range(Bb):
        out_ref[b] = out[b * HW:(b + 1) * HW, :]


# ----------------------------------------------------------------- forward wrapper
def cfc_crb_forward(x, params, skip_zero_mask=None, batch_block=None):
    B, C, H, W = x.shape
    HW = H * W
    P = params['psp']                     # (S_pad, HW) f32, zero rows past s_valid
    S_pad = P.shape[0]
    S = int(params['s_valid'])
    C8 = params['w_la1'].shape[1]

    Bb = B if batch_block is None else int(batch_block)
    assert B % Bb == 0, "batch_block must divide B"
    G = B // Bb

    if skip_zero_mask is None:
        # static host-side decision; if params are traced (under jit) stay faithful
        try:
            skip_zero_mask = bool(np.all(np.asarray(params['w_la2']) == 0.0))
        except Exception:
            skip_zero_mask = False

    bf16 = jnp.bfloat16

    # token-major / channels-last bf16 activation, zero-padded by (W+1) tokens each side
    x_tok = jnp.transpose(x.astype(bf16), (0, 2, 3, 1)).reshape(B, HW, C)
    zpad = jnp.zeros((B, W + 1, C), bf16)
    xpad = jnp.concatenate([zpad, x_tok, zpad], axis=1)                # (B, HWp, C) bf16
    HWp = HW + 2 * (W + 1)

    # column-edge masks for the dx=-1 / dx=+1 conv taps (0/1 -> exact in bf16)
    col = np.arange(HW) % W
    edge_np = np.stack([(col != 0), (col != W - 1)], axis=1).astype(np.float32)
    edge = jnp.asarray(np.tile(edge_np, (Bb, 1))).astype(bf16)         # (Bb*HW, 2)

    # additive softmax bias masking the padded PSP tokens (MUST stay f32)
    s_bias_np = np.zeros((1, S_pad), np.float32)
    s_bias_np[:, S:] = -1e30
    s_bias = jnp.asarray(s_bias_np)

    # bf16, im2col-flattened weights for the MXU
    w_rc = params['w_rc'].reshape(9 * C, C).astype(bf16)               # (9C, C)
    w_q = params['w_q'].astype(bf16)                                   # (C, 32)
    psp = P.astype(bf16)                                               # (S_pad, HW)
    w_vk = params['w_vk'].astype(bf16)                                 # (C, C+32)
    w_la1 = params['w_la1'].astype(bf16)                               # (C, C8)
    w_la2 = params['w_la2'].reshape(9 * C8, C).astype(bf16)            # (9*C8, C)

    kernel = functools.partial(_cfc_crb_kernel, H=H, W=W, Bb=Bb,
                               compute_local_mask=not skip_zero_mask)

    def blocked(*dims):
        nd = len(dims)
        return pl.BlockSpec((Bb,) + dims, lambda g, _nd=nd: (g,) + (0,) * _nd)

    def shared(arr):
        nd = arr.ndim
        return pl.BlockSpec(arr.shape, lambda g, _nd=nd: (0,) * _nd)

    # advisory cost estimate so XLA can overlap the surrounding layout ops
    flops = (2 * B * HW * (9 * C) * C          # reduce_channel conv (im2col matmul)
             + 2 * B * HW * C * 32             # query
             + 2 * B * S_pad * HW * C          # PSP pooling
             + 2 * B * S_pad * C * (C + 32)    # fused value|key
             + 2 * B * HW * S_pad * 32         # Q K^T
             + 2 * B * HW * S_pad * C)         # attn @ V
    trans = B * HW * C + B * HW * S_pad
    if not skip_zero_mask:
        flops += 2 * B * HW * C * C8 + 2 * B * HW * (9 * C8) * C
        trans += B * HW * C8 + B * HW * C
    in_arrays = [xpad, edge, w_rc, params['rc_scale'], params['rc_shift'],
                 w_q, psp, s_bias, w_vk,
                 w_la1, params['la1_scale'], params['la1_shift'], w_la2]
    bytes_acc = sum(int(np.prod(a.shape)) * a.dtype.itemsize for a in in_arrays)
    bytes_acc += B * HW * C * 4
    cost = pl.CostEstimate(flops=int(flops), transcendentals=int(trans),
                           bytes_accessed=int(bytes_acc))

    out = pl.pallas_call(
        kernel,
        out_shape=jax.ShapeDtypeStruct((B, HW, C), jnp.float32),
        grid=(G,),
        in_specs=[blocked(HWp, C),
                  shared(edge),
                  shared(w_rc), shared(params['rc_scale']), shared(params['rc_shift']),
                  shared(w_q), shared(psp), shared(s_bias), shared(w_vk),
                  shared(w_la1), shared(params['la1_scale']), shared(params['la1_shift']),
                  shared(w_la2)],
        out_specs=blocked(HW, C),
        scratch_shapes=[pltpu.VMEM((Bb * HW, 9 * C), bf16)],           # bf16 im2col scratch
        compiler_params=pltpu.CompilerParams(dimension_semantics=("parallel",)),
        cost_estimate=cost,
    )(xpad, edge,
      w_rc, params['rc_scale'], params['rc_shift'],
      w_q, psp, s_bias, w_vk,
      w_la1, params['la1_scale'], params['la1_shift'], w_la2)

    return jnp.transpose(out.reshape(B, H, W, C), (0, 3, 1, 2))        # back to NCHW


# ----------------------------------------------------------------- deterministic params
def init_params(C, H, W, grids=(6, 3, 2, 1), seed=1):
    C8 = C // 8
    keys = jax.random.split(jax.random.PRNGKey(seed), 16)

    def xavier(k, out_c, in_c, ksz):
        fan_in, fan_out = in_c * ksz * ksz, out_c * ksz * ksz
        std = math.sqrt(2.0 / (fan_in + fan_out))
        return std * jax.random.normal(k, (out_c, in_c, ksz, ksz), jnp.float32)

    def fold_bn(kg, kb, km, kv, ch, eps=1e-3):
        gamma = jax.random.uniform(kg, (1, ch), jnp.float32, 0.8, 1.2)
        beta = 0.1 * jax.random.normal(kb, (1, ch), jnp.float32)
        mean = 0.1 * jax.random.normal(km, (1, ch), jnp.float32)
        var = jax.random.uniform(kv, (1, ch), jnp.float32, 0.8, 1.2)
        scale = gamma / jnp.sqrt(var + eps)
        return scale, beta - mean * scale

    # reduce_channel = Conv(C, C, 3): conv2d(3x3, no bias) + BN + SiLU; tap-major weights
    w_rc = jnp.transpose(xavier(keys[0], C, C, 3), (2, 3, 1, 0)).reshape(9, C, C)
    rc_scale, rc_shift = fold_bn(keys[1], keys[2], keys[3], keys[4], C)

    # query / key / value 1x1 convs (xavier_normal, biases zeroed by keras_init_weight)
    w_q = jnp.transpose(xavier(keys[5], 32, C, 1)[:, :, 0, 0])            # (C, 32)
    w_k = jnp.transpose(xavier(keys[6], 32, C, 1)[:, :, 0, 0])            # (C, 32)
    w_v = jnp.transpose(xavier(keys[7], C, C, 1)[:, :, 0, 0])             # (C, C)
    w_vk = jnp.concatenate([w_v, w_k], axis=1)                            # fused (C, C+32)

    # local_attention.conv[0] = Conv(C, C//8, 1): conv + BN + SiLU
    w_la1 = jnp.transpose(xavier(keys[8], C8, C, 1)[:, :, 0, 0])          # (C, C8)
    la1_scale, la1_shift = fold_bn(keys[9], keys[10], keys[11], keys[12], C8)

    # local_attention.conv[1]: Conv2d(C//8, C, 3, pad=1, bias=False), weight zeroed in __init__
    w_la2 = jnp.zeros((9, C8, C), jnp.float32)

    # PSP averaging matrix, zero-padded along S to a tile-friendly size
    P = _psp_matrix(H, W, grids)                                          # (S, HW)
    S = P.shape[0]
    S_pad = max(64, -(-S // 8) * 8)
    P_pad = np.zeros((S_pad, H * W), np.float32)
    P_pad[:S] = P

    return dict(w_rc=w_rc, rc_scale=rc_scale, rc_shift=rc_shift,
                w_q=w_q, w_vk=w_vk,
                w_la1=w_la1, la1_scale=la1_scale, la1_shift=la1_shift,
                w_la2=w_la2, psp=jnp.asarray(P_pad), s_valid=S)


# ----------------------------------------------------------------- pure-JAX reference
def reference_forward(x, params, H, W):
    B, C = x.shape[0], x.shape[1]
    C8 = C // 8
    hp = jax.lax.Precision.HIGHEST
    x_nhwc = jnp.transpose(x, (0, 2, 3, 1)).astype(jnp.float32)
    xcol = _im2col3x3(x_nhwc)
    feat = jnp.einsum('bpk,kc->bpc', xcol, params['w_rc'].reshape(9 * C, C), precision=hp)
    feat = feat * params['rc_scale'] + params['rc_shift']
    feat = feat * jax.nn.sigmoid(feat)
    P = params['psp'][:int(params['s_valid'])]
    q = jnp.einsum('bpc,ck->bpk', feat, params['w_q'], precision=hp)
    pooled = jnp.einsum('sp,bpc->bsc', P, feat, precision=hp)
    w_v, w_k = params['w_vk'][:, :C], params['w_vk'][:, C:]
    k = jnp.einsum('bsc,ck->bsk', pooled, w_k, precision=hp)
    v = jnp.einsum('bsc,cd->bsd', pooled, w_v, precision=hp)
    sim = jnp.einsum('bpk,bsk->bps', q, k, precision=hp)
    attn = jax.nn.softmax(sim, axis=-1)
    ctx = jnp.einsum('bps,bsd->bpd', attn, v, precision=hp)
    t1 = jnp.einsum('bpc,cd->bpd', ctx, params['w_la1'], precision=hp)
    t1 = t1 * params['la1_scale'] + params['la1_shift']
    t1 = t1 * jax.nn.sigmoid(t1)
    t1col = _im2col3x3(t1.reshape(B, H, W, C8))
    mask = jnp.tanh(jnp.einsum('bpk,kc->bpc', t1col,
                               params['w_la2'].reshape(9 * C8, C), precision=hp))
    out = feat + ctx * mask + ctx
    return jnp.transpose(out.reshape(B, H, W, C), (0, 3, 1, 2))


# ----------------------------------------------------------------- main
if __name__ == "__main__":
    # in_channels = 64 (inter = 64, local branch = 8), key_channels = 32,
    # PSP grids (6,3,2,1) on a 12x12 map -> S = 50 tokens (padded to 64 in-kernel).
    B, C, H, W = 2, 64, 12, 12
    params = init_params(C, H, W)
    x = jax.random.normal(jax.random.PRNGKey(0), (B, C, H, W), jnp.float32)

    # default: batch folded into one grid step, zero-initialized local mask skipped
    out_fast = jax.block_until_ready(cfc_crb_forward(x, params))
    # faithful path: full LocalAttenModule math (numerically identical here)
    out_full = jax.block_until_ready(cfc_crb_forward(x, params, skip_zero_mask=False))
    # per-batch grid fallback (for multi-TensorCore chips, e.g. v7x)
    out_grid = jax.block_until_ready(cfc_crb_forward(x, params, batch_block=1))
    assert out_fast.shape == (B, C, H, W)

    ref = reference_forward(x, params, H, W)
    errs = {name: float(jnp.max(jnp.abs(o - ref)))
            for name, o in (("fast", out_fast), ("full", out_full), ("grid", out_grid))}
    # bf16 MXU operands (f32 accumulation, f32 elementwise) + approx reciprocal vs a
    # HIGHEST-precision f32 reference: allow bf16-level absolute error.
    tol = 1e-1
    if not all(e < tol for e in errs.values()):
        raise AssertionError(f"Pallas output mismatch vs JAX reference: {errs}")

    print("KERNEL_OK")
</pallas_src>

<mosaic_0001>
module attributes {stable_mosaic.version = 11 : i64} {
  func.func @_cfc_crb_kernel(%arg0: i32, %arg1: memref<2x170x64xbf16, #tpu.memory_space<vmem>>, %arg2: memref<288x2xbf16, #tpu.memory_space<vmem>>, %arg3: memref<576x64xbf16, #tpu.memory_space<vmem>>, %arg4: memref<1x64xf32, #tpu.memory_space<vmem>>, %arg5: memref<1x64xf32, #tpu.memory_space<vmem>>, %arg6: memref<64x32xbf16, #tpu.memory_space<vmem>>, %arg7: memref<64x144xbf16, #tpu.memory_space<vmem>>, %arg8: memref<1x64xf32, #tpu.memory_space<vmem>>, %arg9: memref<64x96xbf16, #tpu.memory_space<vmem>>, %arg10: memref<64x8xbf16, #tpu.memory_space<vmem>>, %arg11: memref<1x8xf32, #tpu.memory_space<vmem>>, %arg12: memref<1x8xf32, #tpu.memory_space<vmem>>, %arg13: memref<72x64xbf16, #tpu.memory_space<vmem>>, %arg14: memref<2x144x64xf32, #tpu.memory_space<vmem>>, %arg15: memref<288x576xbf16, #tpu.memory_space<vmem>>) attributes {dimension_semantics = [#tpu.dimension_semantics<parallel>], iteration_bounds = array<i64: 1>, scalar_prefetch = 0 : i64, scratch_operands = 1 : i64, tpu.core_type = #tpu.core_type<tc>, window_params = [{transform_indices = @transform_0, window_bounds = array<i64: 2, 170, 64>}, {pipeline_mode = #tpu.pipeline_mode<synchronous>, transform_indices = @transform_1, window_bounds = array<i64: 288, 2>}, {pipeline_mode = #tpu.pipeline_mode<synchronous>, transform_indices = @transform_2, window_bounds = array<i64: 576, 64>}, {pipeline_mode = #tpu.pipeline_mode<synchronous>, transform_indices = @transform_3, window_bounds = array<i64: 1, 64>}, {pipeline_mode = #tpu.pipeline_mode<synchronous>, transform_indices = @transform_4, window_bounds = array<i64: 1, 64>}, {pipeline_mode = #tpu.pipeline_mode<synchronous>, transform_indices = @transform_5, window_bounds = array<i64: 64, 32>}, {pipeline_mode = #tpu.pipeline_mode<synchronous>, transform_indices = @transform_6, window_bounds = array<i64: 64, 144>}, {pipeline_mode = #tpu.pipeline_mode<synchronous>, transform_indices = @transform_7, window_bounds = array<i64: 1, 64>}, {pipeline_mode = #tpu.pipeline_mode<synchronous>, transform_indices = @transform_8, window_bounds = array<i64: 64, 96>}, {pipeline_mode = #tpu.pipeline_mode<synchronous>, transform_indices = @transform_9, window_bounds = array<i64: 64, 8>}, {pipeline_mode = #tpu.pipeline_mode<synchronous>, transform_indices = @transform_10, window_bounds = array<i64: 1, 8>}, {pipeline_mode = #tpu.pipeline_mode<synchronous>, transform_indices = @transform_11, window_bounds = array<i64: 1, 8>}, {pipeline_mode = #tpu.pipeline_mode<synchronous>, transform_indices = @transform_12, window_bounds = array<i64: 72, 64>}, {transform_indices = @transform_13, window_bounds = array<i64: 2, 144, 64>}]} {
    %c0 = arith.constant 0 : index
    %c0_0 = arith.constant 0 : index
    %0 = vector.load %arg2[%c0, %c0_0] : memref<288x2xbf16, #tpu.memory_space<vmem>>, vector<288x2xbf16>
    %c0_1 = arith.constant 0 : index
    %c0_2 = arith.constant 0 : index
    %c0_3 = arith.constant 0 : index
    %1 = vector.load %arg1[%c0_1, %c0_2, %c0_3] : memref<2x170x64xbf16, #tpu.memory_space<vmem>>, vector<1x170x64xbf16>
    %2 = vector.shape_cast %1 : vector<1x170x64xbf16> to vector<170x64xbf16>
    %c1 = arith.constant 1 : index
    %c0_4 = arith.constant 0 : index
    %c0_5 = arith.constant 0 : index
    %3 = vector.load %arg1[%c1, %c0_4, %c0_5] : memref<2x170x64xbf16, #tpu.memory_space<vmem>>, vector<1x170x64xbf16>
    %4 = vector.shape_cast %3 : vector<1x170x64xbf16> to vector<170x64xbf16>
    %c0_6 = arith.constant 0 : index
    %c0_7 = arith.constant 0 : index
    %5 = vector.load %arg3[%c0_6, %c0_7] : memref<576x64xbf16, #tpu.memory_space<vmem>>, vector<576x64xbf16>
    %6 = vector.extract_strided_slice %0 {offsets = [0, 0], sizes = [288, 1], strides = [1, 1]} : vector<288x2xbf16> to vector<288x1xbf16>
    %7 = vector.shape_cast %6 : vector<288x1xbf16> to vector<288x1xbf16>
    %8 = vector.broadcast %7 : vector<288x1xbf16> to vector<288x64xbf16>
    %9 = vector.extract_strided_slice %0 {offsets = [0, 1], sizes = [288, 1], strides = [1, 1]} : vector<288x2xbf16> to vector<288x1xbf16>
    %10 = vector.shape_cast %9 : vector<288x1xbf16> to vector<288x1xbf16>
    %11 = vector.broadcast %10 : vector<288x1xbf16> to vector<288x64xbf16>
    %12 = vector.extract_strided_slice %2 {offsets = [0, 0], sizes = [144, 64], strides = [1, 1]} : vector<170x64xbf16> to vector<144x64xbf16>
    %13 = vector.extract_strided_slice %4 {offsets = [0, 0], sizes = [144, 64], strides = [1, 1]} : vector<170x64xbf16> to vector<144x64xbf16>
    %14 = tpu.concatenate %12, %13 in 0 : vector<144x64xbf16>, vector<144x64xbf16> -> vector<288x64xbf16>
    %15 = arith.mulf %14, %8 : vector<288x64xbf16>
    %c0_8 = arith.constant 0 : index
    %c0_9 = arith.constant 0 : index
    %16 = vector.load %arg15[%c0_8, %c0_9] : memref<288x576xbf16, #tpu.memory_space<vmem>>, vector<288x64xbf16>
    tpu.vector_store %arg15[%c0_8, %c0_9], %15 {strides = array<i32>} : memref<288x576xbf16, #tpu.memory_space<vmem>>, vector<288x64xbf16>,
    %17 = vector.extract_strided_slice %2 {offsets = [1, 0], sizes = [144, 64], strides = [1, 1]} : vector<170x64xbf16> to vector<144x64xbf16>
    %18 = vector.extract_strided_slice %4 {offsets = [1, 0], sizes = [144, 64], strides = [1, 1]} : vector<170x64xbf16> to vector<144x64xbf16>
    %19 = tpu.concatenate %17, %18 in 0 : vector<144x64xbf16>, vector<144x64xbf16> -> vector<288x64xbf16>
    %c0_10 = arith.constant 0 : index
    %c64 = arith.constant 64 : index
    %20 = vector.load %arg15[%c0_10, %c64] : memref<288x576xbf16, #tpu.memory_space<vmem>>, vector<288x64xbf16>
    tpu.vector_store %arg15[%c0_10, %c64], %19 {strides = array<i32>} : memref<288x576xbf16, #tpu.memory_space<vmem>>, vector<288x64xbf16>,
    %21 = vector.extract_strided_slice %2 {offsets = [2, 0], sizes = [144, 64], strides = [1, 1]} : vector<170x64xbf16> to vector<144x64xbf16>
    %22 = vector.extract_strided_slice %4 {offsets = [2, 0], sizes = [144, 64], strides = [1, 1]} : vector<170x64xbf16> to vector<144x64xbf16>
    %23 = tpu.concatenate %21, %22 in 0 : vector<144x64xbf16>, vector<144x64xbf16> -> vector<288x64xbf16>
    %24 = arith.mulf %23, %11 : vector<288x64xbf16>
    %c0_11 = arith.constant 0 : index
    %c128 = arith.constant 128 : index
    %25 = vector.load %arg15[%c0_11, %c128] : memref<288x576xbf16, #tpu.memory_space<vmem>>, vector<288x64xbf16>
    tpu.vector_store %arg15[%c0_11, %c128], %24 {strides = array<i32>} : memref<288x576xbf16, #tpu.memory_space<vmem>>, vector<288x64xbf16>,
    %26 = vector.extract_strided_slice %2 {offsets = [12, 0], sizes = [144, 64], strides = [1, 1]} : vector<170x64xbf16> to vector<144x64xbf16>
    %27 = vector.extract_strided_slice %4 {offsets = [12, 0], sizes = [144, 64], strides = [1, 1]} : vector<170x64xbf16> to vector<144x64xbf16>
    %28 = tpu.concatenate %26, %27 in 0 : vector<144x64xbf16>, vector<144x64xbf16> -> vector<288x64xbf16>
    %29 = arith.mulf %28, %8 : vector<288x64xbf16>
    %c0_12 = arith.constant 0 : index
    %c192 = arith.constant 192 : index
    %30 = vector.load %arg15[%c0_12, %c192] : memref<288x576xbf16, #tpu.memory_space<vmem>>, vector<288x64xbf16>
    tpu.vector_store %arg15[%c0_12, %c192], %29 {strides = array<i32>} : memref<288x576xbf16, #tpu.memory_space<vmem>>, vector<288x64xbf16>,
    %31 = vector.extract_strided_slice %2 {offsets = [13, 0], sizes = [144, 64], strides = [1, 1]} : vector<170x64xbf16> to vector<144x64xbf16>
    %32 = vector.extract_strided_slice %4 {offsets = [13, 0], sizes = [144, 64], strides = [1, 1]} : vector<170x64xbf16> to vector<144x64xbf16>
    %33 = tpu.concatenate %31, %32 in 0 : vector<144x64xbf16>, vector<144x64xbf16> -> vector<288x64xbf16>
    %c0_13 = arith.constant 0 : index
    %c256 = arith.constant 256 : index
    %34 = vector.load %arg15[%c0_13, %c256] : memref<288x576xbf16, #tpu.memory_space<vmem>>, vector<288x64xbf16>
    tpu.vector_store %arg15[%c0_13, %c256], %33 {strides = array<i32>} : memref<288x576xbf16, #tpu.memory_space<vmem>>, vector<288x64xbf16>,
    %35 = vector.extract_strided_slice %2 {offsets = [14, 0], sizes = [144, 64], strides = [1, 1]} : vector<170x64xbf16> to vector<144x64xbf16>
    %36 = vector.extract_strided_slice %4 {offsets = [14, 0], sizes = [144, 64], strides = [1, 1]} : vector<170x64xbf16> to vector<144x64xbf16>
    %37 = tpu.concatenate %35, %36 in 0 : vector<144x64xbf16>, vector<144x64xbf16> -> vector<288x64xbf16>
    %38 = arith.mulf %37, %11 : vector<288x64xbf16>
    %c0_14 = arith.constant 0 : index
    %c320 = arith.constant 320 : index
    %39 = vector.load %arg15[%c0_14, %c320] : memref<288x576xbf16, #tpu.memory_space<vmem>>, vector<288x64xbf16>
    tpu.vector_store %arg15[%c0_14, %c320], %38 {strides = array<i32>} : memref<288x576xbf16, #tpu.memory_space<vmem>>, vector<288x64xbf16>,
    %40 = vector.extract_strided_slice %2 {offsets = [24, 0], sizes = [144, 64], strides = [1, 1]} : vector<170x64xbf16> to vector<144x64xbf16>
    %41 = vector.extract_strided_slice %4 {offsets = [24, 0], sizes = [144, 64], strides = [1, 1]} : vector<170x64xbf16> to vector<144x64xbf16>
    %42 = tpu.concatenate %40, %41 in 0 : vector<144x64xbf16>, vector<144x64xbf16> -> vector<288x64xbf16>
    %43 = arith.mulf %42, %8 : vector<288x64xbf16>
    %c0_15 = arith.constant 0 : index
    %c384 = arith.constant 384 : index
    %44 = vector.load %arg15[%c0_15, %c384] : memref<288x576xbf16, #tpu.memory_space<vmem>>, vector<288x64xbf16>
    tpu.vector_store %arg15[%c0_15, %c384], %43 {strides = array<i32>} : memref<288x576xbf16, #tpu.memory_space<vmem>>, vector<288x64xbf16>,
    %45 = vector.extract_strided_slice %2 {offsets = [25, 0], sizes = [144, 64], strides = [1, 1]} : vector<170x64xbf16> to vector<144x64xbf16>
    %46 = vector.extract_strided_slice %4 {offsets = [25, 0], sizes = [144, 64], strides = [1, 1]} : vector<170x64xbf16> to vector<144x64xbf16>
    %47 = tpu.concatenate %45, %46 in 0 : vector<144x64xbf16>, vector<144x64xbf16> -> vector<288x64xbf16>
    %c0_16 = arith.constant 0 : index
    %c448 = arith.constant 448 : index
    %48 = vector.load %arg15[%c0_16, %c448] : memref<288x576xbf16, #tpu.memory_space<vmem>>, vector<288x64xbf16>
    tpu.vector_store %arg15[%c0_16, %c448], %47 {strides = array<i32>} : memref<288x576xbf16, #tpu.memory_space<vmem>>, vector<288x64xbf16>,
    %49 = vector.extract_strided_slice %2 {offsets = [26, 0], sizes = [144, 64], strides = [1, 1]} : vector<170x64xbf16> to vector<144x64xbf16>
    %50 = vector.extract_strided_slice %4 {offsets = [26, 0], sizes = [144, 64], strides = [1, 1]} : vector<170x64xbf16> to vector<144x64xbf16>
    %51 = tpu.concatenate %49, %50 in 0 : vector<144x64xbf16>, vector<144x64xbf16> -> vector<288x64xbf16>
    %52 = arith.mulf %51, %11 : vector<288x64xbf16>
    %c0_17 = arith.constant 0 : index
    %c512 = arith.constant 512 : index
    %53 = vector.load %arg15[%c0_17, %c512] : memref<288x576xbf16, #tpu.memory_space<vmem>>, vector<288x64xbf16>
    tpu.vector_store %arg15[%c0_17, %c512], %52 {strides = array<i32>} : memref<288x576xbf16, #tpu.memory_space<vmem>>, vector<288x64xbf16>,
    %c0_18 = arith.constant 0 : index
    %c0_19 = arith.constant 0 : index
    %54 = vector.load %arg15[%c0_18, %c0_19] : memref<288x576xbf16, #tpu.memory_space<vmem>>, vector<288x576xbf16>
    %cst = arith.constant dense<0.000000e+00> : vector<288x64xf32>
    %55 = tpu.matmul %54, %5, %cst {dimension_numbers = #tpu.dot_dimension_numbers<[1], [0], [0], [1], [0, 0, 1, 1], [], []>} : vector<288x576xbf16>, vector<576x64xbf16>, vector<288x64xf32> -> vector<288x64xf32>
    %c0_20 = arith.constant 0 : index
    %c0_21 = arith.constant 0 : index
    %56 = vector.load %arg4[%c0_20, %c0_21] : memref<1x64xf32, #tpu.memory_space<vmem>>, vector<1x64xf32>
    %57 = vector.broadcast %56 : vector<1x64xf32> to vector<288x64xf32>
    %58 = arith.mulf %55, %57 : vector<288x64xf32>
    %c0_22 = arith.constant 0 : index
    %c0_23 = arith.constant 0 : index
    %59 = vector.load %arg5[%c0_22, %c0_23] : memref<1x64xf32, #tpu.memory_space<vmem>>, vector<1x64xf32>
    %60 = vector.broadcast %59 : vector<1x64xf32> to vector<288x64xf32>
    %61 = arith.addf %58, %60 : vector<288x64xf32>
    %62 = arith.negf %61 : vector<288x64xf32>
    %63 = math.exp %62 : vector<288x64xf32>
    %cst_24 = arith.constant 1.000000e+00 : f32
    %64 = vector.broadcast %cst_24 : f32 to vector<288x64xf32>
    %65 = arith.addf %64, %63 : vector<288x64xf32>
    %66 = arith.divf %64, %65 : vector<288x64xf32>
    %67 = arith.mulf %61, %66 : vector<288x64xf32>
    %68 = arith.truncf %67 : vector<288x64xf32> to vector<288x64xbf16>
    %c0_25 = arith.constant 0 : index
    %c0_26 = arith.constant 0 : index
    %69 = vector.load %arg6[%c0_25, %c0_26] : memref<64x32xbf16, #tpu.memory_space<vmem>>, vector<64x32xbf16>
    %cst_27 = arith.constant dense<0.000000e+00> : vector<288x32xf32>
    %70 = tpu.matmul %68, %69, %cst_27 {dimension_numbers = #tpu.dot_dimension_numbers<[1], [0], [0], [1], [0, 0, 1, 1], [], []>} : vector<288x64xbf16>, vector<64x32xbf16>, vector<288x32xf32> -> vector<288x32xf32>
    %c0_28 = arith.constant 0 : index
    %c0_29 = arith.constant 0 : index
    %71 = vector.load %arg7[%c0_28, %c0_29] : memref<64x144xbf16, #tpu.memory_space<vmem>>, vector<64x144xbf16>
    %c0_30 = arith.constant 0 : index
    %c0_31 = arith.constant 0 : index
    %72 = vector.load %arg9[%c0_30, %c0_31] : memref<64x96xbf16, #tpu.memory_space<vmem>>, vector<64x96xbf16>
    %c0_32 = arith.constant 0 : index
    %c0_33 = arith.constant 0 : index
    %73 = vector.load %arg8[%c0_32, %c0_33] : memref<1x64xf32, #tpu.memory_space<vmem>>, vector<1x64xf32>
    %74 = vector.extract_strided_slice %68 {offsets = [0, 0], sizes = [144, 64], strides = [1, 1]} : vector<288x64xbf16> to vector<144x64xbf16>
    %75 = vector.extract_strided_slice %70 {offsets = [0, 0], sizes = [144, 32], strides = [1, 1]} : vector<288x32xf32> to vector<144x32xf32>
    %cst_34 = arith.constant dense<0.000000e+00> : vector<64x64xf32>
    %76 = tpu.matmul %71, %74, %cst_34 {dimension_numbers = #tpu.dot_dimension_numbers<[1], [0], [0], [1], [0, 0, 1, 1], [], []>} : vector<64x144xbf16>, vector<144x64xbf16>, vector<64x64xf32> -> vector<64x64xf32>
    %77 = arith.truncf %76 : vector<64x64xf32> to vector<64x64xbf16>
    %cst_35 = arith.constant dense<0.000000e+00> : vector<64x96xf32>
    %78 = tpu.matmul %77, %72, %cst_35 {dimension_numbers = #tpu.dot_dimension_numbers<[1], [0], [0], [1], [0, 0, 1, 1], [], []>} : vector<64x64xbf16>, vector<64x96xbf16>, vector<64x96xf32> -> vector<64x96xf32>
    %79 = vector.extract_strided_slice %78 {offsets = [0, 0], sizes = [64, 64], strides = [1, 1]} : vector<64x96xf32> to vector<64x64xf32>
    %80 = vector.extract_strided_slice %78 {offsets = [0, 64], sizes = [64, 32], strides = [1, 1]} : vector<64x96xf32> to vector<64x32xf32>
    %81 = arith.truncf %75 : vector<144x32xf32> to vector<144x32xbf16>
    %82 = arith.truncf %80 : vector<64x32xf32> to vector<64x32xbf16>
    %cst_36 = arith.constant dense<0.000000e+00> : vector<144x64xf32>
    %83 = tpu.matmul %81, %82, %cst_36 {dimension_numbers = #tpu.dot_dimension_numbers<[1], [1], [0], [0], [0, 0, 1, 0], [], []>} : vector<144x32xbf16>, vector<64x32xbf16>, vector<144x64xf32> -> vector<144x64xf32>
    %84 = vector.broadcast %73 : vector<1x64xf32> to vector<144x64xf32>
    %85 = arith.addf %83, %84 : vector<144x64xf32>
    %cst_37 = arith.constant dense<0xFF800000> : vector<144xf32>
    %86 = vector.multi_reduction <maximumf>, %85, %cst_37 [1] : vector<144x64xf32> to vector<144xf32>
    %87 = vector.shape_cast %86 : vector<144xf32> to vector<144x1xf32>
    %88 = vector.broadcast %87 : vector<144x1xf32> to vector<144x64xf32>
    %89 = arith.subf %85, %88 : vector<144x64xf32>
    %90 = math.exp %89 : vector<144x64xf32>
    %cst_38 = arith.constant dense<0.000000e+00> : vector<144xf32>
    %91 = vector.multi_reduction <add>, %90, %cst_38 [1] : vector<144x64xf32> to vector<144xf32>
    %92 = vector.shape_cast %91 : vector<144xf32> to vector<144x1xf32>
    %93 = tpu.reciprocal %92 {approx = true} : vector<144x1xf32> -> vector<144x1xf32>
    %94 = vector.broadcast %93 : vector<144x1xf32> to vector<144x64xf32>
    %95 = arith.mulf %90, %94 : vector<144x64xf32>
    %96 = arith.truncf %95 : vector<144x64xf32> to vector<144x64xbf16>
    %97 = arith.truncf %79 : vector<64x64xf32> to vector<64x64xbf16>
    %cst_39 = arith.constant dense<0.000000e+00> : vector<144x64xf32>
    %98 = tpu.matmul %96, %97, %cst_39 {dimension_numbers = #tpu.dot_dimension_numbers<[1], [0], [0], [1], [0, 0, 1, 1], [], []>} : vector<144x64xbf16>, vector<64x64xbf16>, vector<144x64xf32> -> vector<144x64xf32>
    %99 = vector.extract_strided_slice %68 {offsets = [144, 0], sizes = [144, 64], strides = [1, 1]} : vector<288x64xbf16> to vector<144x64xbf16>
    %100 = vector.extract_strided_slice %70 {offsets = [144, 0], sizes = [144, 32], strides = [1, 1]} : vector<288x32xf32> to vector<144x32xf32>
    %cst_40 = arith.constant dense<0.000000e+00> : vector<64x64xf32>
    %101 = tpu.matmul %71, %99, %cst_40 {dimension_numbers = #tpu.dot_dimension_numbers<[1], [0], [0], [1], [0, 0, 1, 1], [], []>} : vector<64x144xbf16>, vector<144x64xbf16>, vector<64x64xf32> -> vector<64x64xf32>
    %102 = arith.truncf %101 : vector<64x64xf32> to vector<64x64xbf16>
    %cst_41 = arith.constant dense<0.000000e+00> : vector<64x96xf32>
    %103 = tpu.matmul %102, %72, %cst_41 {dimension_numbers = #tpu.dot_dimension_numbers<[1], [0], [0], [1], [0, 0, 1, 1], [], []>} : vector<64x64xbf16>, vector<64x96xbf16>, vector<64x96xf32> -> vector<64x96xf32>
    %104 = vector.extract_strided_slice %103 {offsets = [0, 0], sizes = [64, 64], strides = [1, 1]} : vector<64x96xf32> to vector<64x64xf32>
    %105 = vector.extract_strided_slice %103 {offsets = [0, 64], sizes = [64, 32], strides = [1, 1]} : vector<64x96xf32> to vector<64x32xf32>
    %106 = arith.truncf %100 : vector<144x32xf32> to vector<144x32xbf16>
    %107 = arith.truncf %105 : vector<64x32xf32> to vector<64x32xbf16>
    %cst_42 = arith.constant dense<0.000000e+00> : vector<144x64xf32>
    %108 = tpu.matmul %106, %107, %cst_42 {dimension_numbers = #tpu.dot_dimension_numbers<[1], [1], [0], [0], [0, 0, 1, 0], [], []>} : vector<144x32xbf16>, vector<64x32xbf16>, vector<144x64xf32> -> vector<144x64xf32>
    %109 = vector.broadcast %73 : vector<1x64xf32> to vector<144x64xf32>
    %110 = arith.addf %108, %109 : vector<144x64xf32>
    %cst_43 = arith.constant dense<0xFF800000> : vector<144xf32>
    %111 = vector.multi_reduction <maximumf>, %110, %cst_43 [1] : vector<144x64xf32> to vector<144xf32>
    %112 = vector.shape_cast %111 : vector<144xf32> to vector<144x1xf32>
    %113 = vector.broadcast %112 : vector<144x1xf32> to vector<144x64xf32>
    %114 = arith.subf %110, %113 : vector<144x64xf32>
    %115 = math.exp %114 : vector<144x64xf32>
    %cst_44 = arith.constant dense<0.000000e+00> : vector<144xf32>
    %116 = vector.multi_reduction <add>, %115, %cst_44 [1] : vector<144x64xf32> to vector<144xf32>
    %117 = vector.shape_cast %116 : vector<144xf32> to vector<144x1xf32>
    %118 = tpu.reciprocal %117 {approx = true} : vector<144x1xf32> -> vector<144x1xf32>
    %119 = vector.broadcast %118 : vector<144x1xf32> to vector<144x64xf32>
    %120 = arith.mulf %115, %119 : vector<144x64xf32>
    %121 = arith.truncf %120 : vector<144x64xf32> to vector<144x64xbf16>
    %122 = arith.truncf %104 : vector<64x64xf32> to vector<64x64xbf16>
    %cst_45 = arith.constant dense<0.000000e+00> : vector<144x64xf32>
    %123 = tpu.matmul %121, %122, %cst_45 {dimension_numbers = #tpu.dot_dimension_numbers<[1], [0], [0], [1], [0, 0, 1, 1], [], []>} : vector<144x64xbf16>, vector<64x64xbf16>, vector<144x64xf32> -> vector<144x64xf32>
    %124 = tpu.concatenate %98, %123 in 0 : vector<144x64xf32>, vector<144x64xf32> -> vector<288x64xf32>
    %125 = arith.addf %67, %124 : vector<288x64xf32>
    %126 = vector.extract_strided_slice %125 {offsets = [0, 0], sizes = [144, 64], strides = [1, 1]} : vector<288x64xf32> to vector<144x64xf32>
    %c0_46 = arith.constant 0 : index
    %c0_47 = arith.constant 0 : index
    %c0_48 = arith.constant 0 : index
    %127 = vector.load %arg14[%c0_46, %c0_47, %c0_48] : memref<2x144x64xf32, #tpu.memory_space<vmem>>, vector<1x144x64xf32>
    %128 = vector.shape_cast %127 : vector<1x144x64xf32> to vector<144x64xf32>
    %129 = vector.shape_cast %126 : vector<144x64xf32> to vector<1x144x64xf32>
    tpu.vector_store %arg14[%c0_46, %c0_47, %c0_48], %129 {strides = array<i32>} : memref<2x144x64xf32, #tpu.memory_space<vmem>>, vector<1x144x64xf32>,
    %130 = vector.extract_strided_slice %125 {offsets = [144, 0], sizes = [144, 64], strides = [1, 1]} : vector<288x64xf32> to vector<144x64xf32>
    %c1_49 = arith.constant 1 : index
    %c0_50 = arith.constant 0 : index
    %c0_51 = arith.constant 0 : index
    %131 = vector.load %arg14[%c1_49, %c0_50, %c0_51] : memref<2x144x64xf32, #tpu.memory_space<vmem>>, vector<1x144x64xf32>
    %132 = vector.shape_cast %131 : vector<1x144x64xf32> to vector<144x64xf32>
    %133 = vector.shape_cast %130 : vector<144x64xf32> to vector<1x144x64xf32>
    tpu.vector_store %arg14[%c1_49, %c0_50, %c0_51], %133 {strides = array<i32>} : memref<2x144x64xf32, #tpu.memory_space<vmem>>, vector<1x144x64xf32>,
    return
  }
  func.func @transform_0(%arg0: i32) -> (i32, i32, i32) {
    %c0_i32 = arith.constant 0 : i32
    %c0_i32_0 = arith.constant 0 : i32
    %c0_i32_1 = arith.constant 0 : i32
    return %arg0, %c0_i32, %c0_i32_0 : i32, i32, i32
  }
  func.func @transform_1(%arg0: i32) -> (i32, i32) {
    %c0_i32 = arith.constant 0 : i32
    %c0_i32_0 = arith.constant 0 : i32
    %c0_i32_1 = arith.constant 0 : i32
    return %c0_i32, %c0_i32_0 : i32, i32
  }
  func.func @transform_2(%arg0: i32) -> (i32, i32) {
    %c0_i32 = arith.constant 0 : i32
    %c0_i32_0 = arith.constant 0 : i32
    %c0_i32_1 = arith.constant 0 : i32
    return %c0_i32, %c0_i32_0 : i32, i32
  }
  func.func @transform_3(%arg0: i32) -> (i32, i32) {
    %c0_i32 = arith.constant 0 : i32
    %c0_i32_0 = arith.constant 0 : i32
    %c0_i32_1 = arith.constant 0 : i32
    return %c0_i32, %c0_i32_0 : i32, i32
  }
  func.func @transform_4(%arg0: i32) -> (i32, i32) {
    %c0_i32 = arith.constant 0 : i32
    %c0_i32_0 = arith.constant 0 : i32
    %c0_i32_1 = arith.constant 0 : i32
    return %c0_i32, %c0_i32_0 : i32, i32
  }
  func.func @transform_5(%arg0: i32) -> (i32, i32) {
    %c0_i32 = arith.constant 0 : i32
    %c0_i32_0 = arith.constant 0 : i32
    %c0_i32_1 = arith.constant 0 : i32
    return %c0_i32, %c0_i32_0 : i32, i32
  }
  func.func @transform_6(%arg0: i32) -> (i32, i32) {
    %c0_i32 = arith.constant 0 : i32
    %c0_i32_0 = arith.constant 0 : i32
    %c0_i32_1 = arith.constant 0 : i32
    return %c0_i32, %c0_i32_0 : i32, i32
  }
  func.func @transform_7(%arg0: i32) -> (i32, i32) {
    %c0_i32 = arith.constant 0 : i32
    %c0_i32_0 = arith.constant 0 : i32
    %c0_i32_1 = arith.constant 0 : i32
    return %c0_i32, %c0_i32_0 : i32, i32
  }
  func.func @transform_8(%arg0: i32) -> (i32, i32) {
    %c0_i32 = arith.constant 0 : i32
    %c0_i32_0 = arith.constant 0 : i32
    %c0_i32_1 = arith.constant 0 : i32
    return %c0_i32, %c0_i32_0 : i32, i32
  }
  func.func @transform_9(%arg0: i32) -> (i32, i32) {
    %c0_i32 = arith.constant 0 : i32
    %c0_i32_0 = arith.constant 0 : i32
    %c0_i32_1 = arith.constant 0 : i32
    return %c0_i32, %c0_i32_0 : i32, i32
  }
  func.func @transform_10(%arg0: i32) -> (i32, i32) {
    %c0_i32 = arith.constant 0 : i32
    %c0_i32_0 = arith.constant 0 : i32
    %c0_i32_1 = arith.constant 0 : i32
    return %c0_i32, %c0_i32_0 : i32, i32
  }
  func.func @transform_11(%arg0: i32) -> (i32, i32) {
    %c0_i32 = arith.constant 0 : i32
    %c0_i32_0 = arith.constant 0 : i32
    %c0_i32_1 = arith.constant 0 : i32
    return %c0_i32, %c0_i32_0 : i32, i32
  }
  func.func @transform_12(%arg0: i32) -> (i32, i32) {
    %c0_i32 = arith.constant 0 : i32
    %c0_i32_0 = arith.constant 0 : i32
    %c0_i32_1 = arith.constant 0 : i32
    return %c0_i32, %c0_i32_0 : i32, i32
  }
  func.func @transform_13(%arg0: i32) -> (i32, i32, i32) {
    %c0_i32 = arith.constant 0 : i32
    %c0_i32_0 = arith.constant 0 : i32
    %c0_i32_1 = arith.constant 0 : i32
    return %arg0, %c0_i32, %c0_i32_0 : i32, i32, i32
  }
}

</mosaic_0001>

<llo_original>
// kernel: tpu_custom_call.1
$region0: #{tpu_custom_call.1}
  #allocation0 [shape = 'u32[]', space=smem, size = 0x4, offset = 0x4, fixed_abs, tag = 'smem constant byte address 0x4 - core index']
  #allocation1 [shape = 'u32[72,128]{1,0:T(1,128)}', space=vmem, size = 0x9000, scoped, tag = 'internal scratch']
  #allocation2 [shape = 'bf16[288,576]{1,0:T(8,128)(2,1)}', space=vmem, size = 0x5a000, scoped, tag = 'scratch operand']
  %s0 = inlined_call_operand.vmem [shape: bf16[2,170,64], index: 0, kind: input, shape index: {}]
  %s1 = inlined_call_operand.vmem [shape: bf16[288,2], index: 1, kind: input, shape index: {}]
  %s2 = inlined_call_operand.vmem [shape: bf16[576,64], index: 2, kind: input, shape index: {}]
  %s3 = inlined_call_operand.vmem [shape: f32[1,64], index: 3, kind: input, shape index: {}]
  %s4 = inlined_call_operand.vmem [shape: f32[1,64], index: 4, kind: input, shape index: {}]
  %s5 = inlined_call_operand.vmem [shape: bf16[64,32], index: 5, kind: input, shape index: {}]
  %s6 = inlined_call_operand.vmem [shape: bf16[64,144], index: 6, kind: input, shape index: {}]
  %s7 = inlined_call_operand.vmem [shape: f32[1,64], index: 7, kind: input, shape index: {}]
  %s8 = inlined_call_operand.vmem [shape: bf16[64,96], index: 8, kind: input, shape index: {}]
  %s9 = inlined_call_operand.vmem [shape: bf16[64,8], index: 9, kind: input, shape index: {}]
  %s10 = inlined_call_operand.vmem [shape: f32[1,8], index: 10, kind: input, shape index: {}]
  %s11 = inlined_call_operand.vmem [shape: f32[1,8], index: 11, kind: input, shape index: {}]
  %s12 = inlined_call_operand.vmem [shape: bf16[72,64], index: 12, kind: input, shape index: {}]
  %s13 = inlined_call_operand.vmem [shape: f32[2,144,64], index: 13, kind: output, shape index: {}]
  %s14 = sld [smem:[#allocation0]]
  $region62: #{tpu_custom_call.1} parent=0
    _
  %s16 = ssub.s32 1, %s14
  %s17 = scalar_select 0, %s16, %s14
  // Predicated region
  $region2: #{tpu_custom_call.1} parent=0 // pred_check
    _
  $region3: #{tpu_custom_call.1} parent=0 // pred_check_branch
    %19 = sbr.rel (0) target = $region5
  $region4: #{tpu_custom_call.1} parent=0 // pred_region
    _
  $region5: #{tpu_custom_call.1} parent=0 // pred_fallthru
    _
  // Predicated region
  $region6: #{tpu_custom_call.1} parent=0 // pred_check
    _
  $region7: #{tpu_custom_call.1} parent=0 // pred_check_branch
    %21 = sbr.rel (0) target = $region9
  $region8: #{tpu_custom_call.1} parent=0 // pred_region
    _
  $region9: #{tpu_custom_call.1} parent=0 // pred_fallthru
    _
  // Predicated region
  $region10: #{tpu_custom_call.1} parent=0 // pred_check
    _
  $region11: #{tpu_custom_call.1} parent=0 // pred_check_branch
    %23 = sbr.rel (0) target = $region13
  $region12: #{tpu_custom_call.1} parent=0 // pred_region
    _
  $region13: #{tpu_custom_call.1} parent=0 // pred_fallthru
    _
  // Predicated region
  $region14: #{tpu_custom_call.1} parent=0 // pred_check
    _
  $region15: #{tpu_custom_call.1} parent=0 // pred_check_branch
    %25 = sbr.rel (0) target = $region17
  $region16: #{tpu_custom_call.1} parent=0 // pred_region
    _
  $region17: #{tpu_custom_call.1} parent=0 // pred_fallthru
    _
  // Predicated region
  $region18: #{tpu_custom_call.1} parent=0 // pred_check
    _
  $region19: #{tpu_custom_call.1} parent=0 // pred_check_branch
    %27 = sbr.rel (0) target = $region21
  $region20: #{tpu_custom_call.1} parent=0 // pred_region
    _
  $region21: #{tpu_custom_call.1} parent=0 // pred_fallthru
    _
  // Predicated region
  $region22: #{tpu_custom_call.1} parent=0 // pred_check
    _
  $region23: #{tpu_custom_call.1} parent=0 // pred_check_branch
    %29 = sbr.rel (0) target = $region25
  $region24: #{tpu_custom_call.1} parent=0 // pred_region
    _
  $region25: #{tpu_custom_call.1} parent=0 // pred_fallthru
    _
  // Predicated region
  $region26: #{tpu_custom_call.1} parent=0 // pred_check
    _
  $region27: #{tpu_custom_call.1} parent=0 // pred_check_branch
    %31 = sbr.rel (0) target = $region29
  $region28: #{tpu_custom_call.1} parent=0 // pred_region
    _
  $region29: #{tpu_custom_call.1} parent=0 // pred_fallthru
    _
  // Predicated region
  $region30: #{tpu_custom_call.1} parent=0 // pred_check
    _
  $region31: #{tpu_custom_call.1} parent=0 // pred_check_branch
    %33 = sbr.rel (0) target = $region33
  $region32: #{tpu_custom_call.1} parent=0 // pred_region
    _
  $region33: #{tpu_custom_call.1} parent=0 // pred_fallthru
    _
  // Predicated region
  $region34: #{tpu_custom_call.1} parent=0 // pred_check
    _
  $region35: #{tpu_custom_call.1} parent=0 // pred_check_branch
    %35 = sbr.rel (0) target = $region37
  $region36: #{tpu_custom_call.1} parent=0 // pred_region
    _
  $region37: #{tpu_custom_call.1} parent=0 // pred_fallthru
    _
  // Predicated region
  $region38: #{tpu_custom_call.1} parent=0 // pred_check
    _
  $region39: #{tpu_custom_call.1} parent=0 // pred_check_branch
    %37 = sbr.rel (0) target = $region41
  $region40: #{tpu_custom_call.1} parent=0 // pred_region
    _
  $region41: #{tpu_custom_call.1} parent=0 // pred_fallthru
    _
  // Predicated region
  $region42: #{tpu_custom_call.1} parent=0 // pred_check
    _
  $region43: #{tpu_custom_call.1} parent=0 // pred_check_branch
    %39 = sbr.rel (0) target = $region45
  $region44: #{tpu_custom_call.1} parent=0 // pred_region
    _
  $region45: #{tpu_custom_call.1} parent=0 // pred_fallthru
    _
  // Predicated region
  $region46: #{tpu_custom_call.1} parent=0 // pred_check
    _
  $region47: #{tpu_custom_call.1} parent=0 // pred_check_branch
    %41 = sbr.rel (0) target = $region49
  $region48: #{tpu_custom_call.1} parent=0 // pred_region
    _
  $region49: #{tpu_custom_call.1} parent=0 // pred_fallthru
    _
  // Predicated region
  $region50: #{tpu_custom_call.1} parent=0 // pred_check
    _
  $region51: #{tpu_custom_call.1} parent=0 // pred_check_branch
    %43 = sbr.rel (0) target = $region53
  $region52: #{tpu_custom_call.1} parent=0 // pred_region
    _
  $region53: #{tpu_custom_call.1} parent=0 // pred_fallthru
    _
  %v45 = vld [vmem:[%s1] sm:$0xf]
  %v46 = vld [vmem:[%s1 + $0x4] sm:$0xf]
  %v47 = vld [vmem:[%s1 + $0x8] sm:$0xf]
  %v48 = vld [vmem:[%s1 + $0xc] sm:$0xf]
  %v49 = vld [vmem:[%s1 + $0x10] sm:$0xf]
  %v50 = vld [vmem:[%s1 + $0x14] sm:$0xf]
  %v51 = vld [vmem:[%s1 + $0x18] sm:$0xf]
  %v52 = vld [vmem:[%s1 + $0x1c] sm:$0xf]
  %v53 = vld [vmem:[%s1 + $0x20] sm:$0xf]
  %v54 = vld [vmem:[%s1 + $0x24] sm:$0xf]
  %v55 = vld [vmem:[%s1 + $0x28] sm:$0xf]
  %v56 = vld [vmem:[%s1 + $0x2c] sm:$0xf]
  %v57 = vld [vmem:[%s1 + $0x30] sm:$0xf]
  %v58 = vld [vmem:[%s1 + $0x34] sm:$0xf]
  %v59 = vld [vmem:[%s1 + $0x38] sm:$0xf]
  %v60 = vld [vmem:[%s1 + $0x3c] sm:$0xf]
  %v61 = vld [vmem:[%s1 + $0x40] sm:$0xf]
  %v62 = vld [vmem:[%s1 + $0x44] sm:$0xf]
  %v63 = vld [vmem:[%s1 + $0x48] sm:$0xf]
  %v64 = vld [vmem:[%s1 + $0x4c] sm:$0xf]
  %v65 = vld [vmem:[%s1 + $0x50] sm:$0xf]
  %v66 = vld [vmem:[%s1 + $0x54] sm:$0xf]
  %v67 = vld [vmem:[%s1 + $0x58] sm:$0xf]
  %v68 = vld [vmem:[%s1 + $0x5c] sm:$0xf]
  %v69 = vld [vmem:[%s1 + $0x60] sm:$0xf]
  %v70 = vld [vmem:[%s1 + $0x64] sm:$0xf]
  %v71 = vld [vmem:[%s1 + $0x68] sm:$0xf]
  %v72 = vld [vmem:[%s1 + $0x6c] sm:$0xf]
  %v73 = vld [vmem:[%s1 + $0x70] sm:$0xf]
  %v74 = vld [vmem:[%s1 + $0x74] sm:$0xf]
  %v75 = vld [vmem:[%s1 + $0x78] sm:$0xf]
  %v76 = vld [vmem:[%s1 + $0x7c] sm:$0xf]
  %v77 = vld [vmem:[%s1 + $0x80] sm:$0xf]
  %v78 = vld [vmem:[%s1 + $0x84] sm:$0xf]
  %v79 = vld [vmem:[%s1 + $0x88] sm:$0xf]
  %v80 = vld [vmem:[%s1 + $0x8c] sm:$0xf]
  %v81 = vld [vmem:[%s0] sm:$0xf]
  %v82 = vld [vmem:[%s0 + $0x4] sm:$0xf]
  %v83 = vld [vmem:[%s0 + $0x8] sm:$0xf]
  %v84 = vld [vmem:[%s0 + $0xc] sm:$0xf]
  %v85 = vld [vmem:[%s0 + $0x10] sm:$0xf]
  %v86 = vld [vmem:[%s0 + $0x14] sm:$0xf]
  %v87 = vld [vmem:[%s0 + $0x18] sm:$0xf]
  %v88 = vld [vmem:[%s0 + $0x1c] sm:$0xf]
  %v89 = vld [vmem:[%s0 + $0x20] sm:$0xf]
  %v90 = vld [vmem:[%s0 + $0x24] sm:$0xf]
  %v91 = vld [vmem:[%s0 + $0x28] sm:$0xf]
  %v92 = vld [vmem:[%s0 + $0x2c] sm:$0xf]
  %v93 = vld [vmem:[%s0 + $0x30] sm:$0xf]
  %v94 = vld [vmem:[%s0 + $0x34] sm:$0xf]
  %v95 = vld [vmem:[%s0 + $0x38] sm:$0xf]
  %v96 = vld [vmem:[%s0 + $0x3c] sm:$0xf]
  %v97 = vld [vmem:[%s0 + $0x40] sm:$0xf]
  %v98 = vld [vmem:[%s0 + $0x44] sm:$0xf]
  %v99 = vld [vmem:[%s0 + $0x48] sm:$0xf]
  %v100 = vld [vmem:[%s0 + $0x4c] sm:$0xf]
  %v101 = vld [vmem:[%s0 + $0x50] sm:$0xf]
  %v102 = vld [vmem:[%s0 + $0x54] sm:$0x1]
  %s103 = scalar_lea.vmem %s0, 88
  %v104 = vld [vmem:[%s103] sm:$0xf]
  %v105 = vld [vmem:[%s103 + $0x4] sm:$0xf]
  %v106 = vld [vmem:[%s103 + $0x8] sm:$0xf]
  %v107 = vld [vmem:[%s103 + $0xc] sm:$0xf]
  %v108 = vld [vmem:[%s103 + $0x10] sm:$0xf]
  %v109 = vld [vmem:[%s103 + $0x14] sm:$0xf]
  %v110 = vld [vmem:[%s103 + $0x18] sm:$0xf]
  %v111 = vld [vmem:[%s103 + $0x1c] sm:$0xf]
  %v112 = vld [vmem:[%s103 + $0x20] sm:$0xf]
  %v113 = vld [vmem:[%s103 + $0x24] sm:$0xf]
  %v114 = vld [vmem:[%s103 + $0x28] sm:$0xf]
  %v115 = vld [vmem:[%s103 + $0x2c] sm:$0xf]
  %v116 = vld [vmem:[%s103 + $0x30] sm:$0xf]
  %v117 = vld [vmem:[%s103 + $0x34] sm:$0xf]
  %v118 = vld [vmem:[%s103 + $0x38] sm:$0xf]
  %v119 = vld [vmem:[%s103 + $0x3c] sm:$0xf]
  %v120 = vld [vmem:[%s103 + $0x40] sm:$0xf]
  %v121 = vld [vmem:[%s103 + $0x44] sm:$0xf]
  %v122 = vld [vmem:[%s103 + $0x48] sm:$0xf]
  %v123 = vld [vmem:[%s103 + $0x4c] sm:$0xf]
  %v124 = vld [vmem:[%s103 + $0x50] sm:$0xf]
  %v125 = vld [vmem:[%s103 + $0x54] sm:$0x1]
  %v126 = vld [vmem:[%s2] sm:$0xf]
  %v127 = vld [vmem:[%s2 + $0x4] sm:$0xf]
  %v128 = vld [vmem:[%s2 + $0x8] sm:$0xf]
  %v129 = vld [vmem:[%s2 + $0xc] sm:$0xf]
  %v130 = vld [vmem:[%s2 + $0x10] sm:$0xf]
  %v131 = vld [vmem:[%s2 + $0x14] sm:$0xf]
  %v132 = vld [vmem:[%s2 + $0x18] sm:$0xf]
  %v133 = vld [vmem:[%s2 + $0x1c] sm:$0xf]
  %v134 = vld [vmem:[%s2 + $0x20] sm:$0xf]
  %v135 = vld [vmem:[%s2 + $0x24] sm:$0xf]
  %v136 = vld [vmem:[%s2 + $0x28] sm:$0xf]
  %v137 = vld [vmem:[%s2 + $0x2c] sm:$0xf]
  %v138 = vld [vmem:[%s2 + $0x30] sm:$0xf]
  %v139 = vld [vmem:[%s2 + $0x34] sm:$0xf]
  %v140 = vld [vmem:[%s2 + $0x38] sm:$0xf]
  %v141 = vld [vmem:[%s2 + $0x3c] sm:$0xf]
  %v142 = vld [vmem:[%s2 + $0x40] sm:$0xf]
  %v143 = vld [vmem:[%s2 + $0x44] sm:$0xf]
  %v144 = vld [vmem:[%s2 + $0x48] sm:$0xf]
  %v145 = vld [vmem:[%s2 + $0x4c] sm:$0xf]
  %v146 = vld [vmem:[%s2 + $0x50] sm:$0xf]
  %v147 = vld [vmem:[%s2 + $0x54] sm:$0xf]
  %v148 = vld [vmem:[%s2 + $0x58] sm:$0xf]
  %v149 = vld [vmem:[%s2 + $0x5c] sm:$0xf]
  %v150 = vld [vmem:[%s2 + $0x60] sm:$0xf]
  %v151 = vld [vmem:[%s2 + $0x64] sm:$0xf]
  %v152 = vld [vmem:[%s2 + $0x68] sm:$0xf]
  %v153 = vld [vmem:[%s2 + $0x6c] sm:$0xf]
  %v154 = vld [vmem:[%s2 + $0x70] sm:$0xf]
  %v155 = vld [vmem:[%s2 + $0x74] sm:$0xf]
  %v156 = vld [vmem:[%s2 + $0x78] sm:$0xf]
  %v157 = vld [vmem:[%s2 + $0x7c] sm:$0xf]
  %v158 = vld [vmem:[%s2 + $0x80] sm:$0xf]
  %v159 = vld [vmem:[%s2 + $0x84] sm:$0xf]
  %v160 = vld [vmem:[%s2 + $0x88] sm:$0xf]
  %v161 = vld [vmem:[%s2 + $0x8c] sm:$0xf]
  %v162 = vld [vmem:[%s2 + $0x90] sm:$0xf]
  %v163 = vld [vmem:[%s2 + $0x94] sm:$0xf]
  %v164 = vld [vmem:[%s2 + $0x98] sm:$0xf]
  %v165 = vld [vmem:[%s2 + $0x9c] sm:$0xf]
  %v166 = vld [vmem:[%s2 + $0xa0] sm:$0xf]
  %v167 = vld [vmem:[%s2 + $0xa4] sm:$0xf]
  %v168 = vld [vmem:[%s2 + $0xa8] sm:$0xf]
  %v169 = vld [vmem:[%s2 + $0xac] sm:$0xf]
  %v170 = vld [vmem:[%s2 + $0xb0] sm:$0xf]
  %v171 = vld [vmem:[%s2 + $0xb4] sm:$0xf]
  %v172 = vld [vmem:[%s2 + $0xb8] sm:$0xf]
  %v173 = vld [vmem:[%s2 + $0xbc] sm:$0xf]
  %v174 = vld [vmem:[%s2 + $0xc0] sm:$0xf]
  %v175 = vld [vmem:[%s2 + $0xc4] sm:$0xf]
  %v176 = vld [vmem:[%s2 + $0xc8] sm:$0xf]
  %v177 = vld [vmem:[%s2 + $0xcc] sm:$0xf]
  %v178 = vld [vmem:[%s2 + $0xd0] sm:$0xf]
  %v179 = vld [vmem:[%s2 + $0xd4] sm:$0xf]
  %v180 = vld [vmem:[%s2 + $0xd8] sm:$0xf]
  %v181 = vld [vmem:[%s2 + $0xdc] sm:$0xf]
  %v182 = vld [vmem:[%s2 + $0xe0] sm:$0xf]
  %v183 = vld [vmem:[%s2 + $0xe4] sm:$0xf]
  %v184 = vld [vmem:[%s2 + $0xe8] sm:$0xf]
  %v185 = vld [vmem:[%s2 + $0xec] sm:$0xf]
  %v186 = vld [vmem:[%s2 + $0xf0] sm:$0xf]
  %v187 = vld [vmem:[%s2 + $0xf4] sm:$0xf]
  %v188 = vld [vmem:[%s2 + $0xf8] sm:$0xf]
  %v189 = vld [vmem:[%s2 + $0xfc] sm:$0xf]
  %v190 = vld [vmem:[%s2 + $0x100] sm:$0xf]
  %v191 = vld [vmem:[%s2 + $0x104] sm:$0xf]
  %v192 = vld [vmem:[%s2 + $0x108] sm:$0xf]
  %v193 = vld [vmem:[%s2 + $0x10c] sm:$0xf]
  %v194 = vld [vmem:[%s2 + $0x110] sm:$0xf]
  %v195 = vld [vmem:[%s2 + $0x114] sm:$0xf]
  %v196 = vld [vmem:[%s2 + $0x118] sm:$0xf]
  %v197 = vld [vmem:[%s2 + $0x11c] sm:$0xf]
  %199 = vset.pattern.permute.xlu0 0
  %200 = vperm.xlu0 %199, %v45
  %v201 = vpop.permute.xlu0 %200
  %v204 = vunpack.c.l.s4 839922192
  %v205 = vunpack.c.0.s8 %v204
  %v206 = vperm.slane %v201, %v205
  %208 = vset.pattern.permute.xlu0 0
  %209 = vperm.xlu0 %208, %v46
  %v210 = vpop.permute.xlu0 %209
  %v213 = vunpack.c.l.s4 839922192
  %v214 = vunpack.c.0.s8 %v213
  %v215 = vperm.slane %v210, %v214
  %217 = vset.pattern.permute.xlu0 0
  %218 = vperm.xlu0 %217, %v47
  %v219 = vpop.permute.xlu0 %218
  %v222 = vunpack.c.l.s4 839922192
  %v223 = vunpack.c.0.s8 %v222
  %v224 = vperm.slane %v219, %v223
  %226 = vset.pattern.permute.xlu0 0
  %227 = vperm.xlu0 %226, %v48
  %v228 = vpop.permute.xlu0 %227
  %v231 = vunpack.c.l.s4 839922192
  %v232 = vunpack.c.0.s8 %v231
  %v233 = vperm.slane %v228, %v232
  %235 = vset.pattern.permute.xlu0 0
  %236 = vperm.xlu0 %235, %v49
  %v237 = vpop.permute.xlu0 %236
  %v240 = vunpack.c.l.s4 839922192
  %v241 = vunpack.c.0.s8 %v240
  %v242 = vperm.slane %v237, %v241
  %244 = vset.pattern.permute.xlu0 0
  %245 = vperm.xlu0 %244, %v50
  %v246 = vpop.permute.xlu0 %245
  %v249 = vunpack.c.l.s4 839922192
  %v250 = vunpack.c.0.s8 %v249
  %v251 = vperm.slane %v246, %v250
  %253 = vset.pattern.permute.xlu0 0
  %254 = vperm.xlu0 %253, %v51
  %v255 = vpop.permute.xlu0 %254
  %v258 = vunpack.c.l.s4 839922192
  %v259 = vunpack.c.0.s8 %v258
  %v260 = vperm.slane %v255, %v259
  %262 = vset.pattern.permute.xlu0 0
  %263 = vperm.xlu0 %262, %v52
  %v264 = vpop.permute.xlu0 %263
  %v267 = vunpack.c.l.s4 839922192
  %v268 = vunpack.c.0.s8 %v267
  %v269 = vperm.slane %v264, %v268
  %271 = vset.pattern.permute.xlu0 0
  %272 = vperm.xlu0 %271, %v53
  %v273 = vpop.permute.xlu0 %272
  %v276 = vunpack.c.l.s4 839922192
  %v277 = vunpack.c.0.s8 %v276
  %v278 = vperm.slane %v273, %v277
  %280 = vset.pattern.permute.xlu0 0
  %281 = vperm.xlu0 %280, %v54
  %v282 = vpop.permute.xlu0 %281
  %v285 = vunpack.c.l.s4 839922192
  %v286 = vunpack.c.0.s8 %v285
  %v287 = vperm.slane %v282, %v286
  %289 = vset.pattern.permute.xlu0 0
  %290 = vperm.xlu0 %289, %v55
  %v291 = vpop.permute.xlu0 %290
  %v294 = vunpack.c.l.s4 839922192
  %v295 = vunpack.c.0.s8 %v294
  %v296 = vperm.slane %v291, %v295
  %298 = vset.pattern.permute.xlu0 0
  %299 = vperm.xlu0 %298, %v56
  %v300 = vpop.permute.xlu0 %299
  %v303 = vunpack.c.l.s4 839922192
  %v304 = vunpack.c.0.s8 %v303
  %v305 = vperm.slane %v300, %v304
  %307 = vset.pattern.permute.xlu0 0
  %308 = vperm.xlu0 %307, %v57
  %v309 = vpop.permute.xlu0 %308
  %v312 = vunpack.c.l.s4 839922192
  %v313 = vunpack.c.0.s8 %v312
  %v314 = vperm.slane %v309, %v313
  %316 = vset.pattern.permute.xlu0 0
  %317 = vperm.xlu0 %316, %v58
  %v318 = vpop.permute.xlu0 %317
  %v321 = vunpack.c.l.s4 839922192
  %v322 = vunpack.c.0.s8 %v321
  %v323 = vperm.slane %v318, %v322
  %325 = vset.pattern.permute.xlu0 0
  %326 = vperm.xlu0 %325, %v59
  %v327 = vpop.permute.xlu0 %326
  %v330 = vunpack.c.l.s4 839922192
  %v331 = vunpack.c.0.s8 %v330
  %v332 = vperm.slane %v327, %v331
  %334 = vset.pattern.permute.xlu0 0
  %335 = vperm.xlu0 %334, %v60
  %v336 = vpop.permute.xlu0 %335
  %v339 = vunpack.c.l.s4 839922192
  %v340 = vunpack.c.0.s8 %v339
  %v341 = vperm.slane %v336, %v340
  %343 = vset.pattern.permute.xlu0 0
  %344 = vperm.xlu0 %343, %v61
  %v345 = vpop.permute.xlu0 %344
  %v348 = vunpack.c.l.s4 839922192
  %v349 = vunpack.c.0.s8 %v348
  %v350 = vperm.slane %v345, %v349
  %352 = vset.pattern.permute.xlu0 0
  %353 = vperm.xlu0 %352, %v62
  %v354 = vpop.permute.xlu0 %353
  %v357 = vunpack.c.l.s4 839922192
  %v358 = vunpack.c.0.s8 %v357
  %v359 = vperm.slane %v354, %v358
  %361 = vset.pattern.permute.xlu0 0
  %362 = vperm.xlu0 %361, %v63
  %v363 = vpop.permute.xlu0 %362
  %v366 = vunpack.c.l.s4 839922192
  %v367 = vunpack.c.0.s8 %v366
  %v368 = vperm.slane %v363, %v367
  %370 = vset.pattern.permute.xlu0 0
  %371 = vperm.xlu0 %370, %v64
  %v372 = vpop.permute.xlu0 %371
  %v375 = vunpack.c.l.s4 839922192
  %v376 = vunpack.c.0.s8 %v375
  %v377 = vperm.slane %v372, %v376
  %379 = vset.pattern.permute.xlu0 0
  %380 = vperm.xlu0 %379, %v65
  %v381 = vpop.permute.xlu0 %380
  %v384 = vunpack.c.l.s4 839922192
  %v385 = vunpack.c.0.s8 %v384
  %v386 = vperm.slane %v381, %v385
  %388 = vset.pattern.permute.xlu0 0
  %389 = vperm.xlu0 %388, %v66
  %v390 = vpop.permute.xlu0 %389
  %v393 = vunpack.c.l.s4 839922192
  %v394 = vunpack.c.0.s8 %v393
  %v395 = vperm.slane %v390, %v394
  %397 = vset.pattern.permute.xlu0 0
  %398 = vperm.xlu0 %397, %v67
  %v399 = vpop.permute.xlu0 %398
  %v402 = vunpack.c.l.s4 839922192
  %v403 = vunpack.c.0.s8 %v402
  %v404 = vperm.slane %v399, %v403
  %406 = vset.pattern.permute.xlu0 0
  %407 = vperm.xlu0 %406, %v68
  %v408 = vpop.permute.xlu0 %407
  %v411 = vunpack.c.l.s4 839922192
  %v412 = vunpack.c.0.s8 %v411
  %v413 = vperm.slane %v408, %v412
  %415 = vset.pattern.permute.xlu0 0
  %416 = vperm.xlu0 %415, %v69
  %v417 = vpop.permute.xlu0 %416
  %v420 = vunpack.c.l.s4 839922192
  %v421 = vunpack.c.0.s8 %v420
  %v422 = vperm.slane %v417, %v421
  %424 = vset.pattern.permute.xlu0 0
  %425 = vperm.xlu0 %424, %v70
  %v426 = vpop.permute.xlu0 %425
  %v429 = vunpack.c.l.s4 839922192
  %v430 = vunpack.c.0.s8 %v429
  %v431 = vperm.slane %v426, %v430
  %433 = vset.pattern.permute.xlu0 0
  %434 = vperm.xlu0 %433, %v71
  %v435 = vpop.permute.xlu0 %434
  %v438 = vunpack.c.l.s4 839922192
  %v439 = vunpack.c.0.s8 %v438
  %v440 = vperm.slane %v435, %v439
  %442 = vset.pattern.permute.xlu0 0
  %443 = vperm.xlu0 %442, %v72
  %v444 = vpop.permute.xlu0 %443
  %v447 = vunpack.c.l.s4 839922192
  %v448 = vunpack.c.0.s8 %v447
  %v449 = vperm.slane %v444, %v448
  %451 = vset.pattern.permute.xlu0 0
  %452 = vperm.xlu0 %451, %v73
  %v453 = vpop.permute.xlu0 %452
  %v456 = vunpack.c.l.s4 839922192
  %v457 = vunpack.c.0.s8 %v456
  %v458 = vperm.slane %v453, %v457
  %460 = vset.pattern.permute.xlu0 0
  %461 = vperm.xlu0 %460, %v74
  %v462 = vpop.permute.xlu0 %461
  %v465 = vunpack.c.l.s4 839922192
  %v466 = vunpack.c.0.s8 %v465
  %v467 = vperm.slane %v462, %v466
  %469 = vset.pattern.permute.xlu0 0
  %470 = vperm.xlu0 %469, %v75
  %v471 = vpop.permute.xlu0 %470
  %v474 = vunpack.c.l.s4 839922192
  %v475 = vunpack.c.0.s8 %v474
  %v476 = vperm.slane %v471, %v475
  %478 = vset.pattern.permute.xlu0 0
  %479 = vperm.xlu0 %478, %v76
  %v480 = vpop.permute.xlu0 %479
  %v483 = vunpack.c.l.s4 839922192
  %v484 = vunpack.c.0.s8 %v483
  %v485 = vperm.slane %v480, %v484
  %487 = vset.pattern.permute.xlu0 0
  %488 = vperm.xlu0 %487, %v77
  %v489 = vpop.permute.xlu0 %488
  %v492 = vunpack.c.l.s4 839922192
  %v493 = vunpack.c.0.s8 %v492
  %v494 = vperm.slane %v489, %v493
  %496 = vset.pattern.permute.xlu0 0
  %497 = vperm.xlu0 %496, %v78
  %v498 = vpop.permute.xlu0 %497
  %v501 = vunpack.c.l.s4 839922192
  %v502 = vunpack.c.0.s8 %v501
  %v503 = vperm.slane %v498, %v502
  %505 = vset.pattern.permute.xlu0 0
  %506 = vperm.xlu0 %505, %v79
  %v507 = vpop.permute.xlu0 %506
  %v510 = vunpack.c.l.s4 839922192
  %v511 = vunpack.c.0.s8 %v510
  %v512 = vperm.slane %v507, %v511
  %514 = vset.pattern.permute.xlu0 0
  %515 = vperm.xlu0 %514, %v80
  %v516 = vpop.permute.xlu0 %515
  %v519 = vunpack.c.l.s4 839922192
  %v520 = vunpack.c.0.s8 %v519
  %v521 = vperm.slane %v516, %v520
  %522 = vset.pattern.permute.xlu0 1
  %523 = vperm.xlu0 %522, %v45
  %v524 = vpop.permute.xlu0 %523
  %v527 = vunpack.c.l.s4 839922192
  %v528 = vunpack.c.0.s8 %v527
  %v529 = vperm.slane %v524, %v528
  %530 = vset.pattern.permute.xlu0 1
  %531 = vperm.xlu0 %530, %v46
  %v532 = vpop.permute.xlu0 %531
  %v535 = vunpack.c.l.s4 839922192
  %v536 = vunpack.c.0.s8 %v535
  %v537 = vperm.slane %v532, %v536
  %538 = vset.pattern.permute.xlu0 1
  %539 = vperm.xlu0 %538, %v47
  %v540 = vpop.permute.xlu0 %539
  %v543 = vunpack.c.l.s4 839922192
  %v544 = vunpack.c.0.s8 %v543
  %v545 = vperm.slane %v540, %v544
  %546 = vset.pattern.permute.xlu0 1
  %547 = vperm.xlu0 %546, %v48
  %v548 = vpop.permute.xlu0 %547
  %v551 = vunpack.c.l.s4 839922192
  %v552 = vunpack.c.0.s8 %v551
  %v553 = vperm.slane %v548, %v552
  %554 = vset.pattern.permute.xlu0 1
  %555 = vperm.xlu0 %554, %v49
  %v556 = vpop.permute.xlu0 %555
  %v559 = vunpack.c.l.s4 839922192
  %v560 = vunpack.c.0.s8 %v559
  %v561 = vperm.slane %v556, %v560
  %562 = vset.pattern.permute.xlu0 1
  %563 = vperm.xlu0 %562, %v50
  %v564 = vpop.permute.xlu0 %563
  %v567 = vunpack.c.l.s4 839922192
  %v568 = vunpack.c.0.s8 %v567
  %v569 = vperm.slane %v564, %v568
  %570 = vset.pattern.permute.xlu0 1
  %571 = vperm.xlu0 %570, %v51
  %v572 = vpop.permute.xlu0 %571
  %v575 = vunpack.c.l.s4 839922192
  %v576 = vunpack.c.0.s8 %v575
  %v577 = vperm.slane %v572, %v576
  %578 = vset.pattern.permute.xlu0 1
  %579 = vperm.xlu0 %578, %v52
  %v580 = vpop.permute.xlu0 %579
  %v583 = vunpack.c.l.s4 839922192
  %v584 = vunpack.c.0.s8 %v583
  %v585 = vperm.slane %v580, %v584
  %586 = vset.pattern.permute.xlu0 1
  %587 = vperm.xlu0 %586, %v53
  %v588 = vpop.permute.xlu0 %587
  %v591 = vunpack.c.l.s4 839922192
  %v592 = vunpack.c.0.s8 %v591
  %v593 = vperm.slane %v588, %v592
  %594 = vset.pattern.permute.xlu0 1
  %595 = vperm.xlu0 %594, %v54
  %v596 = vpop.permute.xlu0 %595
  %v599 = vunpack.c.l.s4 839922192
  %v600 = vunpack.c.0.s8 %v599
  %v601 = vperm.slane %v596, %v600
  %602 = vset.pattern.permute.xlu0 1
  %603 = vperm.xlu0 %602, %v55
  %v604 = vpop.permute.xlu0 %603
  %v607 = vunpack.c.l.s4 839922192
  %v608 = vunpack.c.0.s8 %v607
  %v609 = vperm.slane %v604, %v608
  %610 = vset.pattern.permute.xlu0 1
  %611 = vperm.xlu0 %610, %v56
  %v612 = vpop.permute.xlu0 %611
  %v615 = vunpack.c.l.s4 839922192
  %v616 = vunpack.c.0.s8 %v615
  %v617 = vperm.slane %v612, %v616
  %618 = vset.pattern.permute.xlu0 1
  %619 = vperm.xlu0 %618, %v57
  %v620 = vpop.permute.xlu0 %619
  %v623 = vunpack.c.l.s4 839922192
  %v624 = vunpack.c.0.s8 %v623
  %v625 = vperm.slane %v620, %v624
  %626 = vset.pattern.permute.xlu0 1
  %627 = vperm.xlu0 %626, %v58
  %v628 = vpop.permute.xlu0 %627
  %v631 = vunpack.c.l.s4 839922192
  %v632 = vunpack.c.0.s8 %v631
  %v633 = vperm.slane %v628, %v632
  %634 = vset.pattern.permute.xlu0 1
  %635 = vperm.xlu0 %634, %v59
  %v636 = vpop.permute.xlu0 %635
  %v639 = vunpack.c.l.s4 839922192
  %v640 = vunpack.c.0.s8 %v639
  %v641 = vperm.slane %v636, %v640
  %642 = vset.pattern.permute.xlu0 1
  %643 = vperm.xlu0 %642, %v60
  %v644 = vpop.permute.xlu0 %643
  %v647 = vunpack.c.l.s4 839922192
  %v648 = vunpack.c.0.s8 %v647
  %v649 = vperm.slane %v644, %v648
  %650 = vset.pattern.permute.xlu0 1
  %651 = vperm.xlu0 %650, %v61
  %v652 = vpop.permute.xlu0 %651
  %v655 = vunpack.c.l.s4 839922192
  %v656 = vunpack.c.0.s8 %v655
  %v657 = vperm.slane %v652, %v656
  %658 = vset.pattern.permute.xlu0 1
  %659 = vperm.xlu0 %658, %v62
  %v660 = vpop.permute.xlu0 %659
  %v663 = vunpack.c.l.s4 839922192
  %v664 = vunpack.c.0.s8 %v663
  %v665 = vperm.slane %v660, %v664
  %666 = vset.pattern.permute.xlu0 1
  %667 = vperm.xlu0 %666, %v63
  %v668 = vpop.permute.xlu0 %667
  %v671 = vunpack.c.l.s4 839922192
  %v672 = vunpack.c.0.s8 %v671
  %v673 = vperm.slane %v668, %v672
  %674 = vset.pattern.permute.xlu0 1
  %675 = vperm.xlu0 %674, %v64
  %v676 = vpop.permute.xlu0 %675
  %v679 = vunpack.c.l.s4 839922192
  %v680 = vunpack.c.0.s8 %v679
  %v681 = vperm.slane %v676, %v680
  %682 = vset.pattern.permute.xlu0 1
  %683 = vperm.xlu0 %682, %v65
  %v684 = vpop.permute.xlu0 %683
  %v687 = vunpack.c.l.s4 839922192
  %v688 = vunpack.c.0.s8 %v687
  %v689 = vperm.slane %v684, %v688
  %690 = vset.pattern.permute.xlu0 1
  %691 = vperm.xlu0 %690, %v66
  %v692 = vpop.permute.xlu0 %691
  %v695 = vunpack.c.l.s4 839922192
  %v696 = vunpack.c.0.s8 %v695
  %v697 = vperm.slane %v692, %v696
  %698 = vset.pattern.permute.xlu0 1
  %699 = vperm.xlu0 %698, %v67
  %v700 = vpop.permute.xlu0 %699
  %v703 = vunpack.c.l.s4 839922192
  %v704 = vunpack.c.0.s8 %v703
  %v705 = vperm.slane %v700, %v704
  %706 = vset.pattern.permute.xlu0 1
  %707 = vperm.xlu0 %706, %v68
  %v708 = vpop.permute.xlu0 %707
  %v711 = vunpack.c.l.s4 839922192
  %v712 = vunpack.c.0.s8 %v711
  %v713 = vperm.slane %v708, %v712
  %714 = vset.pattern.permute.xlu0 1
  %715 = vperm.xlu0 %714, %v69
  %v716 = vpop.permute.xlu0 %715
  %v719 = vunpack.c.l.s4 839922192
  %v720 = vunpack.c.0.s8 %v719
  %v721 = vperm.slane %v716, %v720
  %722 = vset.pattern.permute.xlu0 1
  %723 = vperm.xlu0 %722, %v70
  %v724 = vpop.permute.xlu0 %723
  %v727 = vunpack.c.l.s4 839922192
  %v728 = vunpack.c.0.s8 %v727
  %v729 = vperm.slane %v724, %v728
  %730 = vset.pattern.permute.xlu0 1
  %731 = vperm.xlu0 %730, %v71
  %v732 = vpop.permute.xlu0 %731
  %v735 = vunpack.c.l.s4 839922192
  %v736 = vunpack.c.0.s8 %v735
  %v737 = vperm.slane %v732, %v736
  %738 = vset.pattern.permute.xlu0 1
  %739 = vperm.xlu0 %738, %v72
  %v740 = vpop.permute.xlu0 %739
  %v743 = vunpack.c.l.s4 839922192
  %v744 = vunpack.c.0.s8 %v743
  %v745 = vperm.slane %v740, %v744
  %746 = vset.pattern.permute.xlu0 1
  %747 = vperm.xlu0 %746, %v73
  %v748 = vpop.permute.xlu0 %747
  %v751 = vunpack.c.l.s4 839922192
  %v752 = vunpack.c.0.s8 %v751
  %v753 = vperm.slane %v748, %v752
  %754 = vset.pattern.permute.xlu0 1
  %755 = vperm.xlu0 %754, %v74
  %v756 = vpop.permute.xlu0 %755
  %v759 = vunpack.c.l.s4 839922192
  %v760 = vunpack.c.0.s8 %v759
  %v761 = vperm.slane %v756, %v760
  %762 = vset.pattern.permute.xlu0 1
  %763 = vperm.xlu0 %762, %v75
  %v764 = vpop.permute.xlu0 %763
  %v767 = vunpack.c.l.s4 839922192
  %v768 = vunpack.c.0.s8 %v767
  %v769 = vperm.slane %v764, %v768
  %770 = vset.pattern.permute.xlu0 1
  %771 = vperm.xlu0 %770, %v76
  %v772 = vpop.permute.xlu0 %771
  %v775 = vunpack.c.l.s4 839922192
  %v776 = vunpack.c.0.s8 %v775
  %v777 = vperm.slane %v772, %v776
  %778 = vset.pattern.permute.xlu0 1
  %779 = vperm.xlu0 %778, %v77
  %v780 = vpop.permute.xlu0 %779
  %v783 = vunpack.c.l.s4 839922192
  %v784 = vunpack.c.0.s8 %v783
  %v785 = vperm.slane %v780, %v784
  %786 = vset.pattern.permute.xlu0 1
  %787 = vperm.xlu0 %786, %v78
  %v788 = vpop.permute.xlu0 %787
  %v791 = vunpack.c.l.s4 839922192
  %v792 = vunpack.c.0.s8 %v791
  %v793 = vperm.slane %v788, %v792
  %794 = vset.pattern.permute.xlu0 1
  %795 = vperm.xlu0 %794, %v79
  %v796 = vpop.permute.xlu0 %795
  %v799 = vunpack.c.l.s4 839922192
  %v800 = vunpack.c.0.s8 %v799
  %v801 = vperm.slane %v796, %v800
  %802 = vset.pattern.permute.xlu0 1
  %803 = vperm.xlu0 %802, %v80
  %v804 = vpop.permute.xlu0 %803
  %v807 = vunpack.c.l.s4 839922192
  %v808 = vunpack.c.0.s8 %v807
  %v809 = vperm.slane %v804, %v808
  %v828 = vunpack.c.l.b16 %v81
  %v829 = vunpack.c.l.b16 %v82
  %v830 = vunpack.c.l.b16 %v83
  %v831 = vunpack.c.l.b16 %v84
  %v832 = vunpack.c.l.b16 %v85
  %v833 = vunpack.c.l.b16 %v86
  %v834 = vunpack.c.l.b16 %v87
  %v835 = vunpack.c.l.b16 %v88
  %v836 = vunpack.c.l.b16 %v89
  %v837 = vunpack.c.l.b16 %v90
  %v838 = vunpack.c.l.b16 %v91
  %v839 = vunpack.c.l.b16 %v92
  %v840 = vunpack.c.l.b16 %v93
  %v841 = vunpack.c.l.b16 %v94
  %v842 = vunpack.c.l.b16 %v95
  %v843 = vunpack.c.l.b16 %v96
  %v844 = vunpack.c.l.b16 %v97
  %v845 = vunpack.c.l.b16 %v98
  %v846 = vpack.c.b16 %v829, %v828
  %v847 = vpack.c.b16 %v831, %v830
  %v848 = vpack.c.b16 %v833, %v832
  %v849 = vpack.c.b16 %v835, %v834
  %v850 = vpack.c.b16 %v837, %v836
  %v851 = vpack.c.b16 %v839, %v838
  %v852 = vpack.c.b16 %v841, %v840
  %v853 = vpack.c.b16 %v843, %v842
  %v854 = vpack.c.b16 %v845, %v844
  %v882 = vunpack.c.l.b16 %v104
  %v883 = vunpack.c.l.b16 %v105
  %v884 = vunpack.c.l.b16 %v106
  %v885 = vunpack.c.l.b16 %v107
  %v886 = vunpack.c.l.b16 %v108
  %v887 = vunpack.c.l.b16 %v109
  %v888 = vunpack.c.l.b16 %v110
  %v889 = vunpack.c.l.b16 %v111
  %v890 = vunpack.c.l.b16 %v112
  %v891 = vunpack.c.l.b16 %v113
  %v892 = vunpack.c.l.b16 %v114
  %v893 = vunpack.c.l.b16 %v115
  %v894 = vunpack.c.l.b16 %v116
  %v895 = vunpack.c.l.b16 %v117
  %v896 = vunpack.c.l.b16 %v118
  %v897 = vunpack.c.l.b16 %v119
  %v898 = vunpack.c.l.b16 %v120
  %v899 = vunpack.c.l.b16 %v121
  %v900 = vpack.c.b16 %v883, %v882
  %v901 = vpack.c.b16 %v885, %v884
  %v902 = vpack.c.b16 %v887, %v886
  %v903 = vpack.c.b16 %v889, %v888
  %v904 = vpack.c.b16 %v891, %v890
  %v905 = vpack.c.b16 %v893, %v892
  %v906 = vpack.c.b16 %v895, %v894
  %v907 = vpack.c.b16 %v897, %v896
  %v908 = vpack.c.b16 %v899, %v898
  %v918 = vunpack.c.l.bf16 %v846
  %v919 = vunpack.c.h.bf16 %v846
  %v920 = vunpack.c.l.bf16 %v847
  %v921 = vunpack.c.h.bf16 %v847
  %v922 = vunpack.c.l.bf16 %v848
  %v923 = vunpack.c.h.bf16 %v848
  %v924 = vunpack.c.l.bf16 %v849
  %v925 = vunpack.c.h.bf16 %v849
  %v926 = vunpack.c.l.bf16 %v850
  %v927 = vunpack.c.h.bf16 %v850
  %v928 = vunpack.c.l.bf16 %v851
  %v929 = vunpack.c.h.bf16 %v851
  %v930 = vunpack.c.l.bf16 %v852
  %v931 = vunpack.c.h.bf16 %v852
  %v932 = vunpack.c.l.bf16 %v853
  %v933 = vunpack.c.h.bf16 %v853
  %v934 = vunpack.c.l.bf16 %v854
  %v935 = vunpack.c.h.bf16 %v854
  %v936 = vunpack.c.l.bf16 %v900
  %v937 = vunpack.c.h.bf16 %v900
  %v938 = vunpack.c.l.bf16 %v901
  %v939 = vunpack.c.h.bf16 %v901
  %v940 = vunpack.c.l.bf16 %v902
  %v941 = vunpack.c.h.bf16 %v902
  %v942 = vunpack.c.l.bf16 %v903
  %v943 = vunpack.c.h.bf16 %v903
  %v944 = vunpack.c.l.bf16 %v904
  %v945 = vunpack.c.h.bf16 %v904
  %v946 = vunpack.c.l.bf16 %v905
  %v947 = vunpack.c.h.bf16 %v905
  %v948 = vunpack.c.l.bf16 %v906
  %v949 = vunpack.c.h.bf16 %v906
  %v950 = vunpack.c.l.bf16 %v907
  %v951 = vunpack.c.h.bf16 %v907
  %v952 = vunpack.c.l.bf16 %v908
  %v953 = vunpack.c.h.bf16 %v908
  %v954 = vunpack.c.l.bf16 %v206
  %v955 = vunpack.c.l.bf16 %v215
  %v956 = vunpack.c.l.bf16 %v224
  %v957 = vunpack.c.l.bf16 %v233
  %v958 = vunpack.c.l.bf16 %v242
  %v959 = vunpack.c.l.bf16 %v251
  %v960 = vunpack.c.l.bf16 %v260
  %v961 = vunpack.c.l.bf16 %v269
  %v962 = vunpack.c.l.bf16 %v278
  %v963 = vunpack.c.l.bf16 %v287
  %v964 = vunpack.c.l.bf16 %v296
  %v965 = vunpack.c.l.bf16 %v305
  %v966 = vunpack.c.l.bf16 %v314
  %v967 = vunpack.c.l.bf16 %v323
  %v968 = vunpack.c.l.bf16 %v332
  %v969 = vunpack.c.l.bf16 %v341
  %v970 = vunpack.c.l.bf16 %v350
  %v971 = vunpack.c.l.bf16 %v359
  %v972 = vunpack.c.l.bf16 %v368
  %v973 = vunpack.c.l.bf16 %v377
  %v974 = vunpack.c.l.bf16 %v386
  %v975 = vunpack.c.l.bf16 %v395
  %v976 = vunpack.c.l.bf16 %v404
  %v977 = vunpack.c.l.bf16 %v413
  %v978 = vunpack.c.l.bf16 %v422
  %v979 = vunpack.c.l.bf16 %v431
  %v980 = vunpack.c.l.bf16 %v440
  %v981 = vunpack.c.l.bf16 %v449
  %v982 = vunpack.c.l.bf16 %v458
  %v983 = vunpack.c.l.bf16 %v467
  %v984 = vunpack.c.l.bf16 %v476
  %v985 = vunpack.c.l.bf16 %v485
  %v986 = vunpack.c.l.bf16 %v494
  %v987 = vunpack.c.l.bf16 %v503
  %v988 = vunpack.c.l.bf16 %v512
  %v989 = vunpack.c.l.bf16 %v521
  %v990 = vmul.f32 %v918, %v954
  %v991 = vmul.f32 %v919, %v955
  %v992 = vmul.f32 %v920, %v956
  %v993 = vmul.f32 %v921, %v957
  %v994 = vmul.f32 %v922, %v958
  %v995 = vmul.f32 %v923, %v959
  %v996 = vmul.f32 %v924, %v960
  %v997 = vmul.f32 %v925, %v961
  %v998 = vmul.f32 %v926, %v962
  %v999 = vmul.f32 %v927, %v963
  %v1000 = vmul.f32 %v928, %v964
  %v1001 = vmul.f32 %v929, %v965
  %v1002 = vmul.f32 %v930, %v966
  %v1003 = vmul.f32 %v931, %v967
  %v1004 = vmul.f32 %v932, %v968
  %v1005 = vmul.f32 %v933, %v969
  %v1006 = vmul.f32 %v934, %v970
  %v1007 = vmul.f32 %v935, %v971
  %v1008 = vmul.f32 %v936, %v972
  %v1009 = vmul.f32 %v937, %v973
  %v1010 = vmul.f32 %v938, %v974
  %v1011 = vmul.f32 %v939, %v975
  %v1012 = vmul.f32 %v940, %v976
  %v1013 = vmul.f32 %v941, %v977
  %v1014 = vmul.f32 %v942, %v978
  %v1015 = vmul.f32 %v943, %v979
  %v1016 = vmul.f32 %v944, %v980
  %v1017 = vmul.f32 %v945, %v981
  %v1018 = vmul.f32 %v946, %v982
  %v1019 = vmul.f32 %v947, %v983
  %v1020 = vmul.f32 %v948, %v984
  %v1021 = vmul.f32 %v949, %v985
  %v1022 = vmul.f32 %v950, %v986
  %v1023 = vmul.f32 %v951, %v987
  %v1024 = vmul.f32 %v952, %v988
  %v1025 = vmul.f32 %v953, %v989
  %v1026 = vpack.c.bf16 %v990, %v990
  %v1027 = vpack.c.bf16 %v991, %v991
  %v1028 = vpack.c.bf16 %v992, %v992
  %v1029 = vpack.c.bf16 %v993, %v993
  %v1030 = vpack.c.bf16 %v994, %v994
  %v1031 = vpack.c.bf16 %v995, %v995
  %v1032 = vpack.c.bf16 %v996, %v996
  %v1033 = vpack.c.bf16 %v997, %v997
  %v1034 = vpack.c.bf16 %v998, %v998
  %v1035 = vpack.c.bf16 %v999, %v999
  %v1036 = vpack.c.bf16 %v1000, %v1000
  %v1037 = vpack.c.bf16 %v1001, %v1001
  %v1038 = vpack.c.bf16 %v1002, %v1002
  %v1039 = vpack.c.bf16 %v1003, %v1003
  %v1040 = vpack.c.bf16 %v1004, %v1004
  %v1041 = vpack.c.bf16 %v1005, %v1005
  %v1042 = vpack.c.bf16 %v1006, %v1006
  %v1043 = vpack.c.bf16 %v1007, %v1007
  %v1044 = vpack.c.bf16 %v1008, %v1008
  %v1045 = vpack.c.bf16 %v1009, %v1009
  %v1046 = vpack.c.bf16 %v1010, %v1010
  %v1047 = vpack.c.bf16 %v1011, %v1011
  %v1048 = vpack.c.bf16 %v1012, %v1012
  %v1049 = vpack.c.bf16 %v1013, %v1013
  %v1050 = vpack.c.bf16 %v1014, %v1014
  %v1051 = vpack.c.bf16 %v1015, %v1015
  %v1052 = vpack.c.bf16 %v1016, %v1016
  %v1053 = vpack.c.bf16 %v1017, %v1017
  %v1054 = vpack.c.bf16 %v1018, %v1018
  %v1055 = vpack.c.bf16 %v1019, %v1019
  %v1056 = vpack.c.bf16 %v1020, %v1020
  %v1057 = vpack.c.bf16 %v1021, %v1021
  %v1058 = vpack.c.bf16 %v1022, %v1022
  %v1059 = vpack.c.bf16 %v1023, %v1023
  %v1060 = vpack.c.bf16 %v1024, %v1024
  %v1061 = vpack.c.bf16 %v1025, %v1025
  %vm1062 = vcmask 519168
  %1063 = vst.msk [vmem:[#allocation2] sm:$0xf] %vm1062, %v1026
  %1064 = vst.msk [vmem:[#allocation2 + $0x14] sm:$0xf] %vm1062, %v1027
  %1065 = vst.msk [vmem:[#allocation2 + $0x28] sm:$0xf] %vm1062, %v1028
  %1066 = vst.msk [vmem:[#allocation2 + $0x3c] sm:$0xf] %vm1062, %v1029
  %1067 = vst.msk [vmem:[#allocation2 + $0x50] sm:$0xf] %vm1062, %v1030
  %1068 = vst.msk [vmem:[#allocation2 + $0x64] sm:$0xf] %vm1062, %v1031
  %1069 = vst.msk [vmem:[#allocation2 + $0x78] sm:$0xf] %vm1062, %v1032
  %1070 = vst.msk [vmem:[#allocation2 + $0x8c] sm:$0xf] %vm1062, %v1033
  %1071 = vst.msk [vmem:[#allocation2 + $0xa0] sm:$0xf] %vm1062, %v1034
  %1072 = vst.msk [vmem:[#allocation2 + $0xb4] sm:$0xf] %vm1062, %v1035
  %1073 = vst.msk [vmem:[#allocation2 + $0xc8] sm:$0xf] %vm1062, %v1036
  %1074 = vst.msk [vmem:[#allocation2 + $0xdc] sm:$0xf] %vm1062, %v1037
  %1075 = vst.msk [vmem:[#allocation2 + $0xf0] sm:$0xf] %vm1062, %v1038
  %1076 = vst.msk [vmem:[#allocation2 + $0x104] sm:$0xf] %vm1062, %v1039
  %1077 = vst.msk [vmem:[#allocation2 + $0x118] sm:$0xf] %vm1062, %v1040
  %1078 = vst.msk [vmem:[#allocation2 + $0x12c] sm:$0xf] %vm1062, %v1041
  %1079 = vst.msk [vmem:[#allocation2 + $0x140] sm:$0xf] %vm1062, %v1042
  %1080 = vst.msk [vmem:[#allocation2 + $0x154] sm:$0xf] %vm1062, %v1043
  %1081 = vst.msk [vmem:[#allocation2 + $0x168] sm:$0xf] %vm1062, %v1044
  %1082 = vst.msk [vmem:[#allocation2 + $0x17c] sm:$0xf] %vm1062, %v1045
  %1083 = vst.msk [vmem:[#allocation2 + $0x190] sm:$0xf] %vm1062, %v1046
  %1084 = vst.msk [vmem:[#allocation2 + $0x1a4] sm:$0xf] %vm1062, %v1047
  %1085 = vst.msk [vmem:[#allocation2 + $0x1b8] sm:$0xf] %vm1062, %v1048
  %1086 = vst.msk [vmem:[#allocation2 + $0x1cc] sm:$0xf] %vm1062, %v1049
  %1087 = vst.msk [vmem:[#allocation2 + $0x1e0] sm:$0xf] %vm1062, %v1050
  %1088 = vst.msk [vmem:[#allocation2 + $0x1f4] sm:$0xf] %vm1062, %v1051
  %1089 = vst.msk [vmem:[#allocation2 + $0x208] sm:$0xf] %vm1062, %v1052
  %1090 = vst.msk [vmem:[#allocation2 + $0x21c] sm:$0xf] %vm1062, %v1053
  %1091 = vst.msk [vmem:[#allocation2 + $0x230] sm:$0xf] %vm1062, %v1054
  %1092 = vst.msk [vmem:[#allocation2 + $0x244] sm:$0xf] %vm1062, %v1055
  %1093 = vst.msk [vmem:[#allocation2 + $0x258] sm:$0xf] %vm1062, %v1056
  %1094 = vst.msk [vmem:[#allocation2 + $0x26c] sm:$0xf] %vm1062, %v1057
  %1095 = vst.msk [vmem:[#allocation2 + $0x280] sm:$0xf] %vm1062, %v1058
  %1096 = vst.msk [vmem:[#allocation2 + $0x294] sm:$0xf] %vm1062, %v1059
  %1097 = vst.msk [vmem:[#allocation2 + $0x2a8] sm:$0xf] %vm1062, %v1060
  %1098 = vst.msk [vmem:[#allocation2 + $0x2bc] sm:$0xf] %vm1062, %v1061
  %v1100 = vunpack.c.l.b16 %v99
  %v1101 = vpack.c.b16 %v1100, %v1100
  %vm1102 = vsmask.f32 7424
  %v1104 = vshrl.u32 %v846, 16
  %v1106 = vshll.u32 %v846, 16
  %v1108 = vrot.slane %v1106, 1
  %v1109 = vor.u32 %v1104, %v1108
  %v1111 = vshll.u32 %v847, 16
  %v1113 = vrot.slane %v1111, 1
  %v1114 = vsel %vm1102, %v1109, %v1113
  %v1115 = vshrl.u32 %v847, 16
  %v1117 = vor.u32 %v1115, %v1113
  %v1119 = vshll.u32 %v848, 16
  %v1121 = vrot.slane %v1119, 1
  %v1122 = vsel %vm1102, %v1117, %v1121
  %v1123 = vshrl.u32 %v848, 16
  %v1125 = vor.u32 %v1123, %v1121
  %v1127 = vshll.u32 %v849, 16
  %v1129 = vrot.slane %v1127, 1
  %v1130 = vsel %vm1102, %v1125, %v1129
  %v1131 = vshrl.u32 %v849, 16
  %v1133 = vor.u32 %v1131, %v1129
  %v1135 = vshll.u32 %v850, 16
  %v1137 = vrot.slane %v1135, 1
  %v1138 = vsel %vm1102, %v1133, %v1137
  %v1139 = vshrl.u32 %v850, 16
  %v1141 = vor.u32 %v1139, %v1137
  %v1143 = vshll.u32 %v851, 16
  %v1145 = vrot.slane %v1143, 1
  %v1146 = vsel %vm1102, %v1141, %v1145
  %v1147 = vshrl.u32 %v851, 16
  %v1149 = vor.u32 %v1147, %v1145
  %v1151 = vshll.u32 %v852, 16
  %v1153 = vrot.slane %v1151, 1
  %v1154 = vsel %vm1102, %v1149, %v1153
  %v1155 = vshrl.u32 %v852, 16
  %v1157 = vor.u32 %v1155, %v1153
  %v1159 = vshll.u32 %v853, 16
  %v1161 = vrot.slane %v1159, 1
  %v1162 = vsel %vm1102, %v1157, %v1161
  %v1163 = vshrl.u32 %v853, 16
  %v1165 = vor.u32 %v1163, %v1161
  %v1167 = vshll.u32 %v854, 16
  %v1169 = vrot.slane %v1167, 1
  %v1170 = vsel %vm1102, %v1165, %v1169
  %v1171 = vshrl.u32 %v854, 16
  %v1173 = vor.u32 %v1171, %v1169
  %v1175 = vshll.u32 %v1101, 16
  %v1177 = vrot.slane %v1175, 1
  %v1178 = vsel %vm1102, %v1173, %v1177
  %v1180 = vunpack.c.l.b16 %v122
  %v1181 = vpack.c.b16 %v1180, %v1180
  %v1183 = vshrl.u32 %v900, 16
  %v1185 = vshll.u32 %v900, 16
  %v1187 = vrot.slane %v1185, 1
  %v1188 = vor.u32 %v1183, %v1187
  %v1190 = vshll.u32 %v901, 16
  %v1192 = vrot.slane %v1190, 1
  %v1193 = vsel %vm1102, %v1188, %v1192
  %v1194 = vshrl.u32 %v901, 16
  %v1196 = vor.u32 %v1194, %v1192
  %v1198 = vshll.u32 %v902, 16
  %v1200 = vrot.slane %v1198, 1
  %v1201 = vsel %vm1102, %v1196, %v1200
  %v1202 = vshrl.u32 %v902, 16
  %v1204 = vor.u32 %v1202, %v1200
  %v1206 = vshll.u32 %v903, 16
  %v1208 = vrot.slane %v1206, 1
  %v1209 = vsel %vm1102, %v1204, %v1208
  %v1210 = vshrl.u32 %v903, 16
  %v1212 = vor.u32 %v1210, %v1208
  %v1214 = vshll.u32 %v904, 16
  %v1216 = vrot.slane %v1214, 1
  %v1217 = vsel %vm1102, %v1212, %v1216
  %v1218 = vshrl.u32 %v904, 16
  %v1220 = vor.u32 %v1218, %v1216
  %v1222 = vshll.u32 %v905, 16
  %v1224 = vrot.slane %v1222, 1
  %v1225 = vsel %vm1102, %v1220, %v1224
  %v1226 = vshrl.u32 %v905, 16
  %v1228 = vor.u32 %v1226, %v1224
  %v1230 = vshll.u32 %v906, 16
  %v1232 = vrot.slane %v1230, 1
  %v1233 = vsel %vm1102, %v1228, %v1232
  %v1234 = vshrl.u32 %v906, 16
  %v1236 = vor.u32 %v1234, %v1232
  %v1238 = vshll.u32 %v907, 16
  %v1240 = vrot.slane %v1238, 1
  %v1241 = vsel %vm1102, %v1236, %v1240
  %v1242 = vshrl.u32 %v907, 16
  %v1244 = vor.u32 %v1242, %v1240
  %v1246 = vshll.u32 %v908, 16
  %v1248 = vrot.slane %v1246, 1
  %v1249 = vsel %vm1102, %v1244, %v1248
  %v1250 = vshrl.u32 %v908, 16
  %v1252 = vor.u32 %v1250, %v1248
  %v1254 = vshll.u32 %v1181, 16
  %v1256 = vrot.slane %v1254, 1
  %v1257 = vsel %vm1102, %v1252, %v1256
  %v1258 = vunpack.c.l.b16 %v1114
  %v1259 = vunpack.c.h.b16 %v1114
  %v1260 = vunpack.c.l.b16 %v1122
  %v1261 = vunpack.c.h.b16 %v1122
  %v1262 = vunpack.c.l.b16 %v1130
  %v1263 = vunpack.c.h.b16 %v1130
  %v1264 = vunpack.c.l.b16 %v1138
  %v1265 = vunpack.c.h.b16 %v1138
  %v1266 = vunpack.c.l.b16 %v1146
  %v1267 = vunpack.c.h.b16 %v1146
  %v1268 = vunpack.c.l.b16 %v1154
  %v1269 = vunpack.c.h.b16 %v1154
  %v1270 = vunpack.c.l.b16 %v1162
  %v1271 = vunpack.c.h.b16 %v1162
  %v1272 = vunpack.c.l.b16 %v1170
  %v1273 = vunpack.c.h.b16 %v1170
  %v1274 = vunpack.c.l.b16 %v1178
  %v1275 = vunpack.c.h.b16 %v1178
  %v1276 = vunpack.c.l.b16 %v1193
  %v1277 = vunpack.c.h.b16 %v1193
  %v1278 = vunpack.c.l.b16 %v1201
  %v1279 = vunpack.c.h.b16 %v1201
  %v1280 = vunpack.c.l.b16 %v1209
  %v1281 = vunpack.c.h.b16 %v1209
  %v1282 = vunpack.c.l.b16 %v1217
  %v1283 = vunpack.c.h.b16 %v1217
  %v1284 = vunpack.c.l.b16 %v1225
  %v1285 = vunpack.c.h.b16 %v1225
  %v1286 = vunpack.c.l.b16 %v1233
  %v1287 = vunpack.c.h.b16 %v1233
  %v1288 = vunpack.c.l.b16 %v1241
  %v1289 = vunpack.c.h.b16 %v1241
  %v1290 = vunpack.c.l.b16 %v1249
  %v1291 = vunpack.c.h.b16 %v1249
  %v1292 = vunpack.c.l.b16 %v1257
  %v1293 = vunpack.c.h.b16 %v1257
  %v1294 = vpack.c.b16 %v1258, %v1258
  %v1295 = vpack.c.b16 %v1259, %v1259
  %v1296 = vpack.c.b16 %v1260, %v1260
  %v1297 = vpack.c.b16 %v1261, %v1261
  %v1298 = vpack.c.b16 %v1262, %v1262
  %v1299 = vpack.c.b16 %v1263, %v1263
  %v1300 = vpack.c.b16 %v1264, %v1264
  %v1301 = vpack.c.b16 %v1265, %v1265
  %v1302 = vpack.c.b16 %v1266, %v1266
  %v1303 = vpack.c.b16 %v1267, %v1267
  %v1304 = vpack.c.b16 %v1268, %v1268
  %v1305 = vpack.c.b16 %v1269, %v1269
  %v1306 = vpack.c.b16 %v1270, %v1270
  %v1307 = vpack.c.b16 %v1271, %v1271
  %v1308 = vpack.c.b16 %v1272, %v1272
  %v1309 = vpack.c.b16 %v1273, %v1273
  %v1310 = vpack.c.b16 %v1274, %v1274
  %v1311 = vpack.c.b16 %v1275, %v1275
  %v1312 = vpack.c.b16 %v1276, %v1276
  %v1313 = vpack.c.b16 %v1277, %v1277
  %v1314 = vpack.c.b16 %v1278, %v1278
  %v1315 = vpack.c.b16 %v1279, %v1279
  %v1316 = vpack.c.b16 %v1280, %v1280
  %v1317 = vpack.c.b16 %v1281, %v1281
  %v1318 = vpack.c.b16 %v1282, %v1282
  %v1319 = vpack.c.b16 %v1283, %v1283
  %v1320 = vpack.c.b16 %v1284, %v1284
  %v1321 = vpack.c.b16 %v1285, %v1285
  %v1322 = vpack.c.b16 %v1286, %v1286
  %v1323 = vpack.c.b16 %v1287, %v1287
  %v1324 = vpack.c.b16 %v1288, %v1288
  %v1325 = vpack.c.b16 %v1289, %v1289
  %v1326 = vpack.c.b16 %v1290, %v1290
  %v1327 = vpack.c.b16 %v1291, %v1291
  %v1328 = vpack.c.b16 %v1292, %v1292
  %v1329 = vpack.c.b16 %v1293, %v1293
  %1330 = vrot.lane.b32.xlu0 %v1294, 64
  %v1331 = vpop.permute.xlu0 %1330
  %1332 = vrot.lane.b32.xlu0 %v1295, 64
  %v1333 = vpop.permute.xlu0 %1332
  %1334 = vrot.lane.b32.xlu0 %v1296, 64
  %v1335 = vpop.permute.xlu0 %1334
  %1336 = vrot.lane.b32.xlu0 %v1297, 64
  %v1337 = vpop.permute.xlu0 %1336
  %1338 = vrot.lane.b32.xlu0 %v1298, 64
  %v1339 = vpop.permute.xlu0 %1338
  %1340 = vrot.lane.b32.xlu0 %v1299, 64
  %v1341 = vpop.permute.xlu0 %1340
  %1342 = vrot.lane.b32.xlu0 %v1300, 64
  %v1343 = vpop.permute.xlu0 %1342
  %1344 = vrot.lane.b32.xlu0 %v1301, 64
  %v1345 = vpop.permute.xlu0 %1344
  %1346 = vrot.lane.b32.xlu0 %v1302, 64
  %v1347 = vpop.permute.xlu0 %1346
  %1348 = vrot.lane.b32.xlu0 %v1303, 64
  %v1349 = vpop.permute.xlu0 %1348
  %1350 = vrot.lane.b32.xlu0 %v1304, 64
  %v1351 = vpop.permute.xlu0 %1350
  %1352 = vrot.lane.b32.xlu0 %v1305, 64
  %v1353 = vpop.permute.xlu0 %1352
  %1354 = vrot.lane.b32.xlu0 %v1306, 64
  %v1355 = vpop.permute.xlu0 %1354
  %1356 = vrot.lane.b32.xlu0 %v1307, 64
  %v1357 = vpop.permute.xlu0 %1356
  %1358 = vrot.lane.b32.xlu0 %v1308, 64
  %v1359 = vpop.permute.xlu0 %1358
  %1360 = vrot.lane.b32.xlu0 %v1309, 64
  %v1361 = vpop.permute.xlu0 %1360
  %1362 = vrot.lane.b32.xlu0 %v1310, 64
  %v1363 = vpop.permute.xlu0 %1362
  %1364 = vrot.lane.b32.xlu0 %v1311, 64
  %v1365 = vpop.permute.xlu0 %1364
  %1366 = vrot.lane.b32.xlu0 %v1312, 64
  %v1367 = vpop.permute.xlu0 %1366
  %1368 = vrot.lane.b32.xlu0 %v1313, 64
  %v1369 = vpop.permute.xlu0 %1368
  %1370 = vrot.lane.b32.xlu0 %v1314, 64
  %v1371 = vpop.permute.xlu0 %1370
  %1372 = vrot.lane.b32.xlu0 %v1315, 64
  %v1373 = vpop.permute.xlu0 %1372
  %1374 = vrot.lane.b32.xlu0 %v1316, 64
  %v1375 = vpop.permute.xlu0 %1374
  %1376 = vrot.lane.b32.xlu0 %v1317, 64
  %v1377 = vpop.permute.xlu0 %1376
  %1378 = vrot.lane.b32.xlu0 %v1318, 64
  %v1379 = vpop.permute.xlu0 %1378
  %1380 = vrot.lane.b32.xlu0 %v1319, 64
  %v1381 = vpop.permute.xlu0 %1380
  %1382 = vrot.lane.b32.xlu0 %v1320, 64
  %v1383 = vpop.permute.xlu0 %1382
  %1384 = vrot.lane.b32.xlu0 %v1321, 64
  %v1385 = vpop.permute.xlu0 %1384
  %1386 = vrot.lane.b32.xlu0 %v1322, 64
  %v1387 = vpop.permute.xlu0 %1386
  %1388 = vrot.lane.b32.xlu0 %v1323, 64
  %v1389 = vpop.permute.xlu0 %1388
  %1390 = vrot.lane.b32.xlu0 %v1324, 64
  %v1391 = vpop.permute.xlu0 %1390
  %1392 = vrot.lane.b32.xlu0 %v1325, 64
  %v1393 = vpop.permute.xlu0 %1392
  %1394 = vrot.lane.b32.xlu0 %v1326, 64
  %v1395 = vpop.permute.xlu0 %1394
  %1396 = vrot.lane.b32.xlu0 %v1327, 64
  %v1397 = vpop.permute.xlu0 %1396
  %1398 = vrot.lane.b32.xlu0 %v1328, 64
  %v1399 = vpop.permute.xlu0 %1398
  %1400 = vrot.lane.b32.xlu0 %v1329, 64
  %v1401 = vpop.permute.xlu0 %1400
  %vm1438 = vcmask 1043968
  %1439 = vst.msk [vmem:[#allocation2] sm:$0xf] %vm1438, %v1331
  %1440 = vst.msk [vmem:[#allocation2 + $0x14] sm:$0xf] %vm1438, %v1333
  %1441 = vst.msk [vmem:[#allocation2 + $0x28] sm:$0xf] %vm1438, %v1335
  %1442 = vst.msk [vmem:[#allocation2 + $0x3c] sm:$0xf] %vm1438, %v1337
  %1443 = vst.msk [vmem:[#allocation2 + $0x50] sm:$0xf] %vm1438, %v1339
  %1444 = vst.msk [vmem:[#allocation2 + $0x64] sm:$0xf] %vm1438, %v1341
  %1445 = vst.msk [vmem:[#allocation2 + $0x78] sm:$0xf] %vm1438, %v1343
  %1446 = vst.msk [vmem:[#allocation2 + $0x8c] sm:$0xf] %vm1438, %v1345
  %1447 = vst.msk [vmem:[#allocation2 + $0xa0] sm:$0xf] %vm1438, %v1347
  %1448 = vst.msk [vmem:[#allocation2 + $0xb4] sm:$0xf] %vm1438, %v1349
  %1449 = vst.msk [vmem:[#allocation2 + $0xc8] sm:$0xf] %vm1438, %v1351
  %1450 = vst.msk [vmem:[#allocation2 + $0xdc] sm:$0xf] %vm1438, %v1353
  %1451 = vst.msk [vmem:[#allocation2 + $0xf0] sm:$0xf] %vm1438, %v1355
  %1452 = vst.msk [vmem:[#allocation2 + $0x104] sm:$0xf] %vm1438, %v1357
  %1453 = vst.msk [vmem:[#allocation2 + $0x118] sm:$0xf] %vm1438, %v1359
  %1454 = vst.msk [vmem:[#allocation2 + $0x12c] sm:$0xf] %vm1438, %v1361
  %1455 = vst.msk [vmem:[#allocation2 + $0x140] sm:$0xf] %vm1438, %v1363
  %1456 = vst.msk [vmem:[#allocation2 + $0x154] sm:$0xf] %vm1438, %v1365
  %1457 = vst.msk [vmem:[#allocation2 + $0x168] sm:$0xf] %vm1438, %v1367
  %1458 = vst.msk [vmem:[#allocation2 + $0x17c] sm:$0xf] %vm1438, %v1369
  %1459 = vst.msk [vmem:[#allocation2 + $0x190] sm:$0xf] %vm1438, %v1371
  %1460 = vst.msk [vmem:[#allocation2 + $0x1a4] sm:$0xf] %vm1438, %v1373
  %1461 = vst.msk [vmem:[#allocation2 + $0x1b8] sm:$0xf] %vm1438, %v1375
  %1462 = vst.msk [vmem:[#allocation2 + $0x1cc] sm:$0xf] %vm1438, %v1377
  %1463 = vst.msk [vmem:[#allocation2 + $0x1e0] sm:$0xf] %vm1438, %v1379
  %1464 = vst.msk [vmem:[#allocation2 + $0x1f4] sm:$0xf] %vm1438, %v1381
  %1465 = vst.msk [vmem:[#allocation2 + $0x208] sm:$0xf] %vm1438, %v1383
  %1466 = vst.msk [vmem:[#allocation2 + $0x21c] sm:$0xf] %vm1438, %v1385
  %1467 = vst.msk [vmem:[#allocation2 + $0x230] sm:$0xf] %vm1438, %v1387
  %1468 = vst.msk [vmem:[#allocation2 + $0x244] sm:$0xf] %vm1438, %v1389
  %1469 = vst.msk [vmem:[#allocation2 + $0x258] sm:$0xf] %vm1438, %v1391
  %1470 = vst.msk [vmem:[#allocation2 + $0x26c] sm:$0xf] %vm1438, %v1393
  %1471 = vst.msk [vmem:[#allocation2 + $0x280] sm:$0xf] %vm1438, %v1395
  %1472 = vst.msk [vmem:[#allocation2 + $0x294] sm:$0xf] %vm1438, %v1397
  %1473 = vst.msk [vmem:[#allocation2 + $0x2a8] sm:$0xf] %vm1438, %v1399
  %1474 = vst.msk [vmem:[#allocation2 + $0x2bc] sm:$0xf] %vm1438, %v1401
  %vm1475 = vcmask 1046528
  %v1476 = vrot.slane %v846, 1
  %v1477 = vrot.slane %v847, 1
  %v1478 = vsel %vm1475, %v1476, %v1477
  %v1479 = vrot.slane %v848, 1
  %v1480 = vsel %vm1475, %v1477, %v1479
  %v1481 = vrot.slane %v849, 1
  %v1482 = vsel %vm1475, %v1479, %v1481
  %v1483 = vrot.slane %v850, 1
  %v1484 = vsel %vm1475, %v1481, %v1483
  %v1485 = vrot.slane %v851, 1
  %v1486 = vsel %vm1475, %v1483, %v1485
  %v1487 = vrot.slane %v852, 1
  %v1488 = vsel %vm1475, %v1485, %v1487
  %v1489 = vrot.slane %v853, 1
  %v1490 = vsel %vm1475, %v1487, %v1489
  %v1491 = vrot.slane %v854, 1
  %v1492 = vsel %vm1475, %v1489, %v1491
  %v1493 = vrot.slane %v1101, 1
  %v1494 = vsel %vm1475, %v1491, %v1493
  %v1504 = vrot.slane %v900, 1
  %v1505 = vrot.slane %v901, 1
  %v1506 = vsel %vm1475, %v1504, %v1505
  %v1507 = vrot.slane %v902, 1
  %v1508 = vsel %vm1475, %v1505, %v1507
  %v1509 = vrot.slane %v903, 1
  %v1510 = vsel %vm1475, %v1507, %v1509
  %v1511 = vrot.slane %v904, 1
  %v1512 = vsel %vm1475, %v1509, %v1511
  %v1513 = vrot.slane %v905, 1
  %v1514 = vsel %vm1475, %v1511, %v1513
  %v1515 = vrot.slane %v906, 1
  %v1516 = vsel %vm1475, %v1513, %v1515
  %v1517 = vrot.slane %v907, 1
  %v1518 = vsel %vm1475, %v1515, %v1517
  %v1519 = vrot.slane %v908, 1
  %v1520 = vsel %vm1475, %v1517, %v1519
  %v1521 = vrot.slane %v1181, 1
  %v1522 = vsel %vm1475, %v1519, %v1521
  %v1532 = vunpack.c.l.bf16 %v1478
  %v1533 = vunpack.c.h.bf16 %v1478
  %v1534 = vunpack.c.l.bf16 %v1480
  %v1535 = vunpack.c.h.bf16 %v1480
  %v1536 = vunpack.c.l.bf16 %v1482
  %v1537 = vunpack.c.h.bf16 %v1482
  %v1538 = vunpack.c.l.bf16 %v1484
  %v1539 = vunpack.c.h.bf16 %v1484
  %v1540 = vunpack.c.l.bf16 %v1486
  %v1541 = vunpack.c.h.bf16 %v1486
  %v1542 = vunpack.c.l.bf16 %v1488
  %v1543 = vunpack.c.h.bf16 %v1488
  %v1544 = vunpack.c.l.bf16 %v1490
  %v1545 = vunpack.c.h.bf16 %v1490
  %v1546 = vunpack.c.l.bf16 %v1492
  %v1547 = vunpack.c.h.bf16 %v1492
  %v1548 = vunpack.c.l.bf16 %v1494
  %v1549 = vunpack.c.h.bf16 %v1494
  %v1550 = vunpack.c.l.bf16 %v1506
  %v1551 = vunpack.c.h.bf16 %v1506
  %v1552 = vunpack.c.l.bf16 %v1508
  %v1553 = vunpack.c.h.bf16 %v1508
  %v1554 = vunpack.c.l.bf16 %v1510
  %v1555 = vunpack.c.h.bf16 %v1510
  %v1556 = vunpack.c.l.bf16 %v1512
  %v1557 = vunpack.c.h.bf16 %v1512
  %v1558 = vunpack.c.l.bf16 %v1514
  %v1559 = vunpack.c.h.bf16 %v1514
  %v1560 = vunpack.c.l.bf16 %v1516
  %v1561 = vunpack.c.h.bf16 %v1516
  %v1562 = vunpack.c.l.bf16 %v1518
  %v1563 = vunpack.c.h.bf16 %v1518
  %v1564 = vunpack.c.l.bf16 %v1520
  %v1565 = vunpack.c.h.bf16 %v1520
  %v1566 = vunpack.c.l.bf16 %v1522
  %v1567 = vunpack.c.h.bf16 %v1522
  %v1568 = vunpack.c.l.bf16 %v529
  %v1569 = vunpack.c.l.bf16 %v537
  %v1570 = vunpack.c.l.bf16 %v545
  %v1571 = vunpack.c.l.bf16 %v553
  %v1572 = vunpack.c.l.bf16 %v561
  %v1573 = vunpack.c.l.bf16 %v569
  %v1574 = vunpack.c.l.bf16 %v577
  %v1575 = vunpack.c.l.bf16 %v585
  %v1576 = vunpack.c.l.bf16 %v593
  %v1577 = vunpack.c.l.bf16 %v601
  %v1578 = vunpack.c.l.bf16 %v609
  %v1579 = vunpack.c.l.bf16 %v617
  %v1580 = vunpack.c.l.bf16 %v625
  %v1581 = vunpack.c.l.bf16 %v633
  %v1582 = vunpack.c.l.bf16 %v641
  %v1583 = vunpack.c.l.bf16 %v649
  %v1584 = vunpack.c.l.bf16 %v657
  %v1585 = vunpack.c.l.bf16 %v665
  %v1586 = vunpack.c.l.bf16 %v673
  %v1587 = vunpack.c.l.bf16 %v681
  %v1588 = vunpack.c.l.bf16 %v689
  %v1589 = vunpack.c.l.bf16 %v697
  %v1590 = vunpack.c.l.bf16 %v705
  %v1591 = vunpack.c.l.bf16 %v713
  %v1592 = vunpack.c.l.bf16 %v721
  %v1593 = vunpack.c.l.bf16 %v729
  %v1594 = vunpack.c.l.bf16 %v737
  %v1595 = vunpack.c.l.bf16 %v745
  %v1596 = vunpack.c.l.bf16 %v753
  %v1597 = vunpack.c.l.bf16 %v761
  %v1598 = vunpack.c.l.bf16 %v769
  %v1599 = vunpack.c.l.bf16 %v777
  %v1600 = vunpack.c.l.bf16 %v785
  %v1601 = vunpack.c.l.bf16 %v793
  %v1602 = vunpack.c.l.bf16 %v801
  %v1603 = vunpack.c.l.bf16 %v809
  %v1604 = vmul.f32 %v1532, %v1568
  %v1605 = vmul.f32 %v1533, %v1569
  %v1606 = vmul.f32 %v1534, %v1570
  %v1607 = vmul.f32 %v1535, %v1571
  %v1608 = vmul.f32 %v1536, %v1572
  %v1609 = vmul.f32 %v1537, %v1573
  %v1610 = vmul.f32 %v1538, %v1574
  %v1611 = vmul.f32 %v1539, %v1575
  %v1612 = vmul.f32 %v1540, %v1576
  %v1613 = vmul.f32 %v1541, %v1577
  %v1614 = vmul.f32 %v1542, %v1578
  %v1615 = vmul.f32 %v1543, %v1579
  %v1616 = vmul.f32 %v1544, %v1580
  %v1617 = vmul.f32 %v1545, %v1581
  %v1618 = vmul.f32 %v1546, %v1582
  %v1619 = vmul.f32 %v1547, %v1583
  %v1620 = vmul.f32 %v1548, %v1584
  %v1621 = vmul.f32 %v1549, %v1585
  %v1622 = vmul.f32 %v1550, %v1586
  %v1623 = vmul.f32 %v1551, %v1587
  %v1624 = vmul.f32 %v1552, %v1588
  %v1625 = vmul.f32 %v1553, %v1589
  %v1626 = vmul.f32 %v1554, %v1590
  %v1627 = vmul.f32 %v1555, %v1591
  %v1628 = vmul.f32 %v1556, %v1592
  %v1629 = vmul.f32 %v1557, %v1593
  %v1630 = vmul.f32 %v1558, %v1594
  %v1631 = vmul.f32 %v1559, %v1595
  %v1632 = vmul.f32 %v1560, %v1596
  %v1633 = vmul.f32 %v1561, %v1597
  %v1634 = vmul.f32 %v1562, %v1598
  %v1635 = vmul.f32 %v1563, %v1599
  %v1636 = vmul.f32 %v1564, %v1600
  %v1637 = vmul.f32 %v1565, %v1601
  %v1638 = vmul.f32 %v1566, %v1602
  %v1639 = vmul.f32 %v1567, %v1603
  %v1640 = vpack.c.bf16 %v1604, %v1604
  %v1641 = vpack.c.bf16 %v1605, %v1605
  %v1642 = vpack.c.bf16 %v1606, %v1606
  %v1643 = vpack.c.bf16 %v1607, %v1607
  %v1644 = vpack.c.bf16 %v1608, %v1608
  %v1645 = vpack.c.bf16 %v1609, %v1609
  %v1646 = vpack.c.bf16 %v1610, %v1610
  %v1647 = vpack.c.bf16 %v1611, %v1611
  %v1648 = vpack.c.bf16 %v1612, %v1612
  %v1649 = vpack.c.bf16 %v1613, %v1613
  %v1650 = vpack.c.bf16 %v1614, %v1614
  %v1651 = vpack.c.bf16 %v1615, %v1615
  %v1652 = vpack.c.bf16 %v1616, %v1616
  %v1653 = vpack.c.bf16 %v1617, %v1617
  %v1654 = vpack.c.bf16 %v1618, %v1618
  %v1655 = vpack.c.bf16 %v1619, %v1619
  %v1656 = vpack.c.bf16 %v1620, %v1620
  %v1657 = vpack.c.bf16 %v1621, %v1621
  %v1658 = vpack.c.bf16 %v1622, %v1622
  %v1659 = vpack.c.bf16 %v1623, %v1623
  %v1660 = vpack.c.bf16 %v1624, %v1624
  %v1661 = vpack.c.bf16 %v1625, %v1625
  %v1662 = vpack.c.bf16 %v1626, %v1626
  %v1663 = vpack.c.bf16 %v1627, %v1627
  %v1664 = vpack.c.bf16 %v1628, %v1628
  %v1665 = vpack.c.bf16 %v1629, %v1629
  %v1666 = vpack.c.bf16 %v1630, %v1630
  %v1667 = vpack.c.bf16 %v1631, %v1631
  %v1668 = vpack.c.bf16 %v1632, %v1632
  %v1669 = vpack.c.bf16 %v1633, %v1633
  %v1670 = vpack.c.bf16 %v1634, %v1634
  %v1671 = vpack.c.bf16 %v1635, %v1635
  %v1672 = vpack.c.bf16 %v1636, %v1636
  %v1673 = vpack.c.bf16 %v1637, %v1637
  %v1674 = vpack.c.bf16 %v1638, %v1638
  %v1675 = vpack.c.bf16 %v1639, %v1639
  %1676 = vst.msk [vmem:[#allocation2 + $0x4] sm:$0xf] %vm1062, %v1640
  %1677 = vst.msk [vmem:[#allocation2 + $0x18] sm:$0xf] %vm1062, %v1641
  %1678 = vst.msk [vmem:[#allocation2 + $0x2c] sm:$0xf] %vm1062, %v1642
  %1679 = vst.msk [vmem:[#allocation2 + $0x40] sm:$0xf] %vm1062, %v1643
  %1680 = vst.msk [vmem:[#allocation2 + $0x54] sm:$0xf] %vm1062, %v1644
  %1681 = vst.msk [vmem:[#allocation2 + $0x68] sm:$0xf] %vm1062, %v1645
  %1682 = vst.msk [vmem:[#allocation2 + $0x7c] sm:$0xf] %vm1062, %v1646
  %1683 = vst.msk [vmem:[#allocation2 + $0x90] sm:$0xf] %vm1062, %v1647
  %1684 = vst.msk [vmem:[#allocation2 + $0xa4] sm:$0xf] %vm1062, %v1648
  %1685 = vst.msk [vmem:[#allocation2 + $0xb8] sm:$0xf] %vm1062, %v1649
  %1686 = vst.msk [vmem:[#allocation2 + $0xcc] sm:$0xf] %vm1062, %v1650
  %1687 = vst.msk [vmem:[#allocation2 + $0xe0] sm:$0xf] %vm1062, %v1651
  %1688 = vst.msk [vmem:[#allocation2 + $0xf4] sm:$0xf] %vm1062, %v1652
  %1689 = vst.msk [vmem:[#allocation2 + $0x108] sm:$0xf] %vm1062, %v1653
  %1690 = vst.msk [vmem:[#allocation2 + $0x11c] sm:$0xf] %vm1062, %v1654
  %1691 = vst.msk [vmem:[#allocation2 + $0x130] sm:$0xf] %vm1062, %v1655
  %1692 = vst.msk [vmem:[#allocation2 + $0x144] sm:$0xf] %vm1062, %v1656
  %1693 = vst.msk [vmem:[#allocation2 + $0x158] sm:$0xf] %vm1062, %v1657
  %1694 = vst.msk [vmem:[#allocation2 + $0x16c] sm:$0xf] %vm1062, %v1658
  %1695 = vst.msk [vmem:[#allocation2 + $0x180] sm:$0xf] %vm1062, %v1659
  %1696 = vst.msk [vmem:[#allocation2 + $0x194] sm:$0xf] %vm1062, %v1660
  %1697 = vst.msk [vmem:[#allocation2 + $0x1a8] sm:$0xf] %vm1062, %v1661
  %1698 = vst.msk [vmem:[#allocation2 + $0x1bc] sm:$0xf] %vm1062, %v1662
  %1699 = vst.msk [vmem:[#allocation2 + $0x1d0] sm:$0xf] %vm1062, %v1663
  %1700 = vst.msk [vmem:[#allocation2 + $0x1e4] sm:$0xf] %vm1062, %v1664
  %1701 = vst.msk [vmem:[#allocation2 + $0x1f8] sm:$0xf] %vm1062, %v1665
  %1702 = vst.msk [vmem:[#allocation2 + $0x20c] sm:$0xf] %vm1062, %v1666
  %1703 = vst.msk [vmem:[#allocation2 + $0x220] sm:$0xf] %vm1062, %v1667
  %1704 = vst.msk [vmem:[#allocation2 + $0x234] sm:$0xf] %vm1062, %v1668
  %1705 = vst.msk [vmem:[#allocation2 + $0x248] sm:$0xf] %vm1062, %v1669
  %1706 = vst.msk [vmem:[#allocation2 + $0x25c] sm:$0xf] %vm1062, %v1670
  %1707 = vst.msk [vmem:[#allocation2 + $0x270] sm:$0xf] %vm1062, %v1671
  %1708 = vst.msk [vmem:[#allocation2 + $0x284] sm:$0xf] %vm1062, %v1672
  %1709 = vst.msk [vmem:[#allocation2 + $0x298] sm:$0xf] %vm1062, %v1673
  %1710 = vst.msk [vmem:[#allocation2 + $0x2ac] sm:$0xf] %vm1062, %v1674
  %1711 = vst.msk [vmem:[#allocation2 + $0x2c0] sm:$0xf] %vm1062, %v1675
  %v1713 = vunpack.c.l.b16 %v100
  %v1714 = vpack.c.b16 %v830, %v829
  %v1715 = vpack.c.b16 %v832, %v831
  %v1716 = vpack.c.b16 %v834, %v833
  %v1717 = vpack.c.b16 %v836, %v835
  %v1718 = vpack.c.b16 %v838, %v837
  %v1719 = vpack.c.b16 %v840, %v839
  %v1720 = vpack.c.b16 %v842, %v841
  %v1721 = vpack.c.b16 %v844, %v843
  %v1722 = vpack.c.b16 %v1100, %v845
  %v1723 = vpack.c.b16 %v1713, %v1713
  %vm1724 = vcmask 1045504
  %v1725 = vrot.slane %v1714, 2
  %v1726 = vrot.slane %v1715, 2
  %v1727 = vsel %vm1724, %v1725, %v1726
  %v1728 = vrot.slane %v1716, 2
  %v1729 = vsel %vm1724, %v1726, %v1728
  %v1730 = vrot.slane %v1717, 2
  %v1731 = vsel %vm1724, %v1728, %v1730
  %v1732 = vrot.slane %v1718, 2
  %v1733 = vsel %vm1724, %v1730, %v1732
  %v1734 = vrot.slane %v1719, 2
  %v1735 = vsel %vm1724, %v1732, %v1734
  %v1736 = vrot.slane %v1720, 2
  %v1737 = vsel %vm1724, %v1734, %v1736
  %v1738 = vrot.slane %v1721, 2
  %v1739 = vsel %vm1724, %v1736, %v1738
  %v1740 = vrot.slane %v1722, 2
  %v1741 = vsel %vm1724, %v1738, %v1740
  %v1742 = vrot.slane %v1723, 2
  %v1743 = vsel %vm1724, %v1740, %v1742
  %v1754 = vunpack.c.l.b16 %v123
  %v1755 = vpack.c.b16 %v884, %v883
  %v1756 = vpack.c.b16 %v886, %v885
  %v1757 = vpack.c.b16 %v888, %v887
  %v1758 = vpack.c.b16 %v890, %v889
  %v1759 = vpack.c.b16 %v892, %v891
  %v1760 = vpack.c.b16 %v894, %v893
  %v1761 = vpack.c.b16 %v896, %v895
  %v1762 = vpack.c.b16 %v898, %v897
  %v1763 = vpack.c.b16 %v1180, %v899
  %v1764 = vpack.c.b16 %v1754, %v1754
  %v1765 = vrot.slane %v1755, 2
  %v1766 = vrot.slane %v1756, 2
  %v1767 = vsel %vm1724, %v1765, %v1766
  %v1768 = vrot.slane %v1757, 2
  %v1769 = vsel %vm1724, %v1766, %v1768
  %v1770 = vrot.slane %v1758, 2
  %v1771 = vsel %vm1724, %v1768, %v1770
  %v1772 = vrot.slane %v1759, 2
  %v1773 = vsel %vm1724, %v1770, %v1772
  %v1774 = vrot.slane %v1760, 2
  %v1775 = vsel %vm1724, %v1772, %v1774
  %v1776 = vrot.slane %v1761, 2
  %v1777 = vsel %vm1724, %v1774, %v1776
  %v1778 = vrot.slane %v1762, 2
  %v1779 = vsel %vm1724, %v1776, %v1778
  %v1780 = vrot.slane %v1763, 2
  %v1781 = vsel %vm1724, %v1778, %v1780
  %v1782 = vrot.slane %v1764, 2
  %v1783 = vsel %vm1724, %v1780, %v1782
  %v1793 = vunpack.c.l.bf16 %v1727
  %v1794 = vunpack.c.h.bf16 %v1727
  %v1795 = vunpack.c.l.bf16 %v1729
  %v1796 = vunpack.c.h.bf16 %v1729
  %v1797 = vunpack.c.l.bf16 %v1731
  %v1798 = vunpack.c.h.bf16 %v1731
  %v1799 = vunpack.c.l.bf16 %v1733
  %v1800 = vunpack.c.h.bf16 %v1733
  %v1801 = vunpack.c.l.bf16 %v1735
  %v1802 = vunpack.c.h.bf16 %v1735
  %v1803 = vunpack.c.l.bf16 %v1737
  %v1804 = vunpack.c.h.bf16 %v1737
  %v1805 = vunpack.c.l.bf16 %v1739
  %v1806 = vunpack.c.h.bf16 %v1739
  %v1807 = vunpack.c.l.bf16 %v1741
  %v1808 = vunpack.c.h.bf16 %v1741
  %v1809 = vunpack.c.l.bf16 %v1743
  %v1810 = vunpack.c.h.bf16 %v1743
  %v1811 = vunpack.c.l.bf16 %v1767
  %v1812 = vunpack.c.h.bf16 %v1767
  %v1813 = vunpack.c.l.bf16 %v1769
  %v1814 = vunpack.c.h.bf16 %v1769
  %v1815 = vunpack.c.l.bf16 %v1771
  %v1816 = vunpack.c.h.bf16 %v1771
  %v1817 = vunpack.c.l.bf16 %v1773
  %v1818 = vunpack.c.h.bf16 %v1773
  %v1819 = vunpack.c.l.bf16 %v1775
  %v1820 = vunpack.c.h.bf16 %v1775
  %v1821 = vunpack.c.l.bf16 %v1777
  %v1822 = vunpack.c.h.bf16 %v1777
  %v1823 = vunpack.c.l.bf16 %v1779
  %v1824 = vunpack.c.h.bf16 %v1779
  %v1825 = vunpack.c.l.bf16 %v1781
  %v1826 = vunpack.c.h.bf16 %v1781
  %v1827 = vunpack.c.l.bf16 %v1783
  %v1828 = vunpack.c.h.bf16 %v1783
  %v1829 = vmul.f32 %v1793, %v954
  %v1830 = vmul.f32 %v1794, %v955
  %v1831 = vmul.f32 %v1795, %v956
  %v1832 = vmul.f32 %v1796, %v957
  %v1833 = vmul.f32 %v1797, %v958
  %v1834 = vmul.f32 %v1798, %v959
  %v1835 = vmul.f32 %v1799, %v960
  %v1836 = vmul.f32 %v1800, %v961
  %v1837 = vmul.f32 %v1801, %v962
  %v1838 = vmul.f32 %v1802, %v963
  %v1839 = vmul.f32 %v1803, %v964
  %v1840 = vmul.f32 %v1804, %v965
  %v1841 = vmul.f32 %v1805, %v966
  %v1842 = vmul.f32 %v1806, %v967
  %v1843 = vmul.f32 %v1807, %v968
  %v1844 = vmul.f32 %v1808, %v969
  %v1845 = vmul.f32 %v1809, %v970
  %v1846 = vmul.f32 %v1810, %v971
  %v1847 = vmul.f32 %v1811, %v972
  %v1848 = vmul.f32 %v1812, %v973
  %v1849 = vmul.f32 %v1813, %v974
  %v1850 = vmul.f32 %v1814, %v975
  %v1851 = vmul.f32 %v1815, %v976
  %v1852 = vmul.f32 %v1816, %v977
  %v1853 = vmul.f32 %v1817, %v978
  %v1854 = vmul.f32 %v1818, %v979
  %v1855 = vmul.f32 %v1819, %v980
  %v1856 = vmul.f32 %v1820, %v981
  %v1857 = vmul.f32 %v1821, %v982
  %v1858 = vmul.f32 %v1822, %v983
  %v1859 = vmul.f32 %v1823, %v984
  %v1860 = vmul.f32 %v1824, %v985
  %v1861 = vmul.f32 %v1825, %v986
  %v1862 = vmul.f32 %v1826, %v987
  %v1863 = vmul.f32 %v1827, %v988
  %v1864 = vmul.f32 %v1828, %v989
  %v1865 = vpack.c.bf16 %v1829, %v1829
  %v1866 = vpack.c.bf16 %v1830, %v1830
  %v1867 = vpack.c.bf16 %v1831, %v1831
  %v1868 = vpack.c.bf16 %v1832, %v1832
  %v1869 = vpack.c.bf16 %v1833, %v1833
  %v1870 = vpack.c.bf16 %v1834, %v1834
  %v1871 = vpack.c.bf16 %v1835, %v1835
  %v1872 = vpack.c.bf16 %v1836, %v1836
  %v1873 = vpack.c.bf16 %v1837, %v1837
  %v1874 = vpack.c.bf16 %v1838, %v1838
  %v1875 = vpack.c.bf16 %v1839, %v1839
  %v1876 = vpack.c.bf16 %v1840, %v1840
  %v1877 = vpack.c.bf16 %v1841, %v1841
  %v1878 = vpack.c.bf16 %v1842, %v1842
  %v1879 = vpack.c.bf16 %v1843, %v1843
  %v1880 = vpack.c.bf16 %v1844, %v1844
  %v1881 = vpack.c.bf16 %v1845, %v1845
  %v1882 = vpack.c.bf16 %v1846, %v1846
  %v1883 = vpack.c.bf16 %v1847, %v1847
  %v1884 = vpack.c.bf16 %v1848, %v1848
  %v1885 = vpack.c.bf16 %v1849, %v1849
  %v1886 = vpack.c.bf16 %v1850, %v1850
  %v1887 = vpack.c.bf16 %v1851, %v1851
  %v1888 = vpack.c.bf16 %v1852, %v1852
  %v1889 = vpack.c.bf16 %v1853, %v1853
  %v1890 = vpack.c.bf16 %v1854, %v1854
  %v1891 = vpack.c.bf16 %v1855, %v1855
  %v1892 = vpack.c.bf16 %v1856, %v1856
  %v1893 = vpack.c.bf16 %v1857, %v1857
  %v1894 = vpack.c.bf16 %v1858, %v1858
  %v1895 = vpack.c.bf16 %v1859, %v1859
  %v1896 = vpack.c.bf16 %v1860, %v1860
  %v1897 = vpack.c.bf16 %v1861, %v1861
  %v1898 = vpack.c.bf16 %v1862, %v1862
  %v1899 = vpack.c.bf16 %v1863, %v1863
  %v1900 = vpack.c.bf16 %v1864, %v1864
  %1937 = vrot.lane.b32.xlu0 %v1865, 64
  %v1938 = vpop.permute.xlu0 %1937
  %1939 = vrot.lane.b32.xlu0 %v1866, 64
  %v1940 = vpop.permute.xlu0 %1939
  %1941 = vrot.lane.b32.xlu0 %v1867, 64
  %v1942 = vpop.permute.xlu0 %1941
  %1943 = vrot.lane.b32.xlu0 %v1868, 64
  %v1944 = vpop.permute.xlu0 %1943
  %1945 = vrot.lane.b32.xlu0 %v1869, 64
  %v1946 = vpop.permute.xlu0 %1945
  %1947 = vrot.lane.b32.xlu0 %v1870, 64
  %v1948 = vpop.permute.xlu0 %1947
  %1949 = vrot.lane.b32.xlu0 %v1871, 64
  %v1950 = vpop.permute.xlu0 %1949
  %1951 = vrot.lane.b32.xlu0 %v1872, 64
  %v1952 = vpop.permute.xlu0 %1951
  %1953 = vrot.lane.b32.xlu0 %v1873, 64
  %v1954 = vpop.permute.xlu0 %1953
  %1955 = vrot.lane.b32.xlu0 %v1874, 64
  %v1956 = vpop.permute.xlu0 %1955
  %1957 = vrot.lane.b32.xlu0 %v1875, 64
  %v1958 = vpop.permute.xlu0 %1957
  %1959 = vrot.lane.b32.xlu0 %v1876, 64
  %v1960 = vpop.permute.xlu0 %1959
  %1961 = vrot.lane.b32.xlu0 %v1877, 64
  %v1962 = vpop.permute.xlu0 %1961
  %1963 = vrot.lane.b32.xlu0 %v1878, 64
  %v1964 = vpop.permute.xlu0 %1963
  %1965 = vrot.lane.b32.xlu0 %v1879, 64
  %v1966 = vpop.permute.xlu0 %1965
  %1967 = vrot.lane.b32.xlu0 %v1880, 64
  %v1968 = vpop.permute.xlu0 %1967
  %1969 = vrot.lane.b32.xlu0 %v1881, 64
  %v1970 = vpop.permute.xlu0 %1969
  %1971 = vrot.lane.b32.xlu0 %v1882, 64
  %v1972 = vpop.permute.xlu0 %1971
  %1973 = vrot.lane.b32.xlu0 %v1883, 64
  %v1974 = vpop.permute.xlu0 %1973
  %1975 = vrot.lane.b32.xlu0 %v1884, 64
  %v1976 = vpop.permute.xlu0 %1975
  %1977 = vrot.lane.b32.xlu0 %v1885, 64
  %v1978 = vpop.permute.xlu0 %1977
  %1979 = vrot.lane.b32.xlu0 %v1886, 64
  %v1980 = vpop.permute.xlu0 %1979
  %1981 = vrot.lane.b32.xlu0 %v1887, 64
  %v1982 = vpop.permute.xlu0 %1981
  %1983 = vrot.lane.b32.xlu0 %v1888, 64
  %v1984 = vpop.permute.xlu0 %1983
  %1985 = vrot.lane.b32.xlu0 %v1889, 64
  %v1986 = vpop.permute.xlu0 %1985
  %1987 = vrot.lane.b32.xlu0 %v1890, 64
  %v1988 = vpop.permute.xlu0 %1987
  %1989 = vrot.lane.b32.xlu0 %v1891, 64
  %v1990 = vpop.permute.xlu0 %1989
  %1991 = vrot.lane.b32.xlu0 %v1892, 64
  %v1992 = vpop.permute.xlu0 %1991
  %1993 = vrot.lane.b32.xlu0 %v1893, 64
  %v1994 = vpop.permute.xlu0 %1993
  %1995 = vrot.lane.b32.xlu0 %v1894, 64
  %v1996 = vpop.permute.xlu0 %1995
  %1997 = vrot.lane.b32.xlu0 %v1895, 64
  %v1998 = vpop.permute.xlu0 %1997
  %1999 = vrot.lane.b32.xlu0 %v1896, 64
  %v2000 = vpop.permute.xlu0 %1999
  %2001 = vrot.lane.b32.xlu0 %v1897, 64
  %v2002 = vpop.permute.xlu0 %2001
  %2003 = vrot.lane.b32.xlu0 %v1898, 64
  %v2004 = vpop.permute.xlu0 %2003
  %2005 = vrot.lane.b32.xlu0 %v1899, 64
  %v2006 = vpop.permute.xlu0 %2005
  %2007 = vrot.lane.b32.xlu0 %v1900, 64
  %v2008 = vpop.permute.xlu0 %2007
  %2045 = vst.msk [vmem:[#allocation2 + $0x4] sm:$0xf] %vm1438, %v1938
  %2046 = vst.msk [vmem:[#allocation2 + $0x18] sm:$0xf] %vm1438, %v1940
  %2047 = vst.msk [vmem:[#allocation2 + $0x2c] sm:$0xf] %vm1438, %v1942
  %2048 = vst.msk [vmem:[#allocation2 + $0x40] sm:$0xf] %vm1438, %v1944
  %2049 = vst.msk [vmem:[#allocation2 + $0x54] sm:$0xf] %vm1438, %v1946
  %2050 = vst.msk [vmem:[#allocation2 + $0x68] sm:$0xf] %vm1438, %v1948
  %2051 = vst.msk [vmem:[#allocation2 + $0x7c] sm:$0xf] %vm1438, %v1950
  %2052 = vst.msk [vmem:[#allocation2 + $0x90] sm:$0xf] %vm1438, %v1952
  %2053 = vst.msk [vmem:[#allocation2 + $0xa4] sm:$0xf] %vm1438, %v1954
  %2054 = vst.msk [vmem:[#allocation2 + $0xb8] sm:$0xf] %vm1438, %v1956
  %2055 = vst.msk [vmem:[#allocation2 + $0xcc] sm:$0xf] %vm1438, %v1958
  %2056 = vst.msk [vmem:[#allocation2 + $0xe0] sm:$0xf] %vm1438, %v1960
  %2057 = vst.msk [vmem:[#allocation2 + $0xf4] sm:$0xf] %vm1438, %v1962
  %2058 = vst.msk [vmem:[#allocation2 + $0x108] sm:$0xf] %vm1438, %v1964
  %2059 = vst.msk [vmem:[#allocation2 + $0x11c] sm:$0xf] %vm1438, %v1966
  %2060 = vst.msk [vmem:[#allocation2 + $0x130] sm:$0xf] %vm1438, %v1968
  %2061 = vst.msk [vmem:[#allocation2 + $0x144] sm:$0xf] %vm1438, %v1970
  %2062 = vst.msk [vmem:[#allocation2 + $0x158] sm:$0xf] %vm1438, %v1972
  %2063 = vst.msk [vmem:[#allocation2 + $0x16c] sm:$0xf] %vm1438, %v1974
  %2064 = vst.msk [vmem:[#allocation2 + $0x180] sm:$0xf] %vm1438, %v1976
  %2065 = vst.msk [vmem:[#allocation2 + $0x194] sm:$0xf] %vm1438, %v1978
  %2066 = vst.msk [vmem:[#allocation2 + $0x1a8] sm:$0xf] %vm1438, %v1980
  %2067 = vst.msk [vmem:[#allocation2 + $0x1bc] sm:$0xf] %vm1438, %v1982
  %2068 = vst.msk [vmem:[#allocation2 + $0x1d0] sm:$0xf] %vm1438, %v1984
  %2069 = vst.msk [vmem:[#allocation2 + $0x1e4] sm:$0xf] %vm1438, %v1986
  %2070 = vst.msk [vmem:[#allocation2 + $0x1f8] sm:$0xf] %vm1438, %v1988
  %2071 = vst.msk [vmem:[#allocation2 + $0x20c] sm:$0xf] %vm1438, %v1990
  %2072 = vst.msk [vmem:[#allocation2 + $0x220] sm:$0xf] %vm1438, %v1992
  %2073 = vst.msk [vmem:[#allocation2 + $0x234] sm:$0xf] %vm1438, %v1994
  %2074 = vst.msk [vmem:[#allocation2 + $0x248] sm:$0xf] %vm1438, %v1996
  %2075 = vst.msk [vmem:[#allocation2 + $0x25c] sm:$0xf] %vm1438, %v1998
  %2076 = vst.msk [vmem:[#allocation2 + $0x270] sm:$0xf] %vm1438, %v2000
  %2077 = vst.msk [vmem:[#allocation2 + $0x284] sm:$0xf] %vm1438, %v2002
  %2078 = vst.msk [vmem:[#allocation2 + $0x298] sm:$0xf] %vm1438, %v2004
  %2079 = vst.msk [vmem:[#allocation2 + $0x2ac] sm:$0xf] %vm1438, %v2006
  %2080 = vst.msk [vmem:[#allocation2 + $0x2c0] sm:$0xf] %vm1438, %v2008
  %vm2081 = vsmask.f32 5376
  %v2083 = vshrl.u32 %v1714, 16
  %v2085 = vrot.slane %v2083, 2
  %v2086 = vshll.u32 %v1714, 16
  %v2088 = vrot.slane %v2086, 3
  %v2089 = vor.u32 %v2085, %v2088
  %v2091 = vshrl.u32 %v1715, 16
  %v2093 = vrot.slane %v2091, 2
  %v2094 = vshll.u32 %v1715, 16
  %v2096 = vrot.slane %v2094, 3
  %v2097 = vor.u32 %v2093, %v2096
  %v2098 = vsel %vm2081, %v2089, %v2097
  %v2100 = vshrl.u32 %v1716, 16
  %v2102 = vrot.slane %v2100, 2
  %v2103 = vshll.u32 %v1716, 16
  %v2105 = vrot.slane %v2103, 3
  %v2106 = vor.u32 %v2102, %v2105
  %v2107 = vsel %vm2081, %v2097, %v2106
  %v2109 = vshrl.u32 %v1717, 16
  %v2111 = vrot.slane %v2109, 2
  %v2112 = vshll.u32 %v1717, 16
  %v2114 = vrot.slane %v2112, 3
  %v2115 = vor.u32 %v2111, %v2114
  %v2116 = vsel %vm2081, %v2106, %v2115
  %v2118 = vshrl.u32 %v1718, 16
  %v2120 = vrot.slane %v2118, 2
  %v2121 = vshll.u32 %v1718, 16
  %v2123 = vrot.slane %v2121, 3
  %v2124 = vor.u32 %v2120, %v2123
  %v2125 = vsel %vm2081, %v2115, %v2124
  %v2127 = vshrl.u32 %v1719, 16
  %v2129 = vrot.slane %v2127, 2
  %v2130 = vshll.u32 %v1719, 16
  %v2132 = vrot.slane %v2130, 3
  %v2133 = vor.u32 %v2129, %v2132
  %v2134 = vsel %vm2081, %v2124, %v2133
  %v2136 = vshrl.u32 %v1720, 16
  %v2138 = vrot.slane %v2136, 2
  %v2139 = vshll.u32 %v1720, 16
  %v2141 = vrot.slane %v2139, 3
  %v2142 = vor.u32 %v2138, %v2141
  %v2143 = vsel %vm2081, %v2133, %v2142
  %v2145 = vshrl.u32 %v1721, 16
  %v2147 = vrot.slane %v2145, 2
  %v2148 = vshll.u32 %v1721, 16
  %v2150 = vrot.slane %v2148, 3
  %v2151 = vor.u32 %v2147, %v2150
  %v2152 = vsel %vm2081, %v2142, %v2151
  %v2154 = vshrl.u32 %v1722, 16
  %v2156 = vrot.slane %v2154, 2
  %v2157 = vshll.u32 %v1722, 16
  %v2159 = vrot.slane %v2157, 3
  %v2160 = vor.u32 %v2156, %v2159
  %v2161 = vsel %vm2081, %v2151, %v2160
  %v2163 = vshrl.u32 %v1723, 16
  %v2165 = vrot.slane %v2163, 2
  %v2166 = vshll.u32 %v1723, 16
  %v2168 = vrot.slane %v2166, 3
  %v2169 = vor.u32 %v2165, %v2168
  %v2170 = vsel %vm2081, %v2160, %v2169
  %v2172 = vshrl.u32 %v1755, 16
  %v2174 = vrot.slane %v2172, 2
  %v2175 = vshll.u32 %v1755, 16
  %v2177 = vrot.slane %v2175, 3
  %v2178 = vor.u32 %v2174, %v2177
  %v2180 = vshrl.u32 %v1756, 16
  %v2182 = vrot.slane %v2180, 2
  %v2183 = vshll.u32 %v1756, 16
  %v2185 = vrot.slane %v2183, 3
  %v2186 = vor.u32 %v2182, %v2185
  %v2187 = vsel %vm2081, %v2178, %v2186
  %v2189 = vshrl.u32 %v1757, 16
  %v2191 = vrot.slane %v2189, 2
  %v2192 = vshll.u32 %v1757, 16
  %v2194 = vrot.slane %v2192, 3
  %v2195 = vor.u32 %v2191, %v2194
  %v2196 = vsel %vm2081, %v2186, %v2195
  %v2198 = vshrl.u32 %v1758, 16
  %v2200 = vrot.slane %v2198, 2
  %v2201 = vshll.u32 %v1758, 16
  %v2203 = vrot.slane %v2201, 3
  %v2204 = vor.u32 %v2200, %v2203
  %v2205 = vsel %vm2081, %v2195, %v2204
  %v2207 = vshrl.u32 %v1759, 16
  %v2209 = vrot.slane %v2207, 2
  %v2210 = vshll.u32 %v1759, 16
  %v2212 = vrot.slane %v2210, 3
  %v2213 = vor.u32 %v2209, %v2212
  %v2214 = vsel %vm2081, %v2204, %v2213
  %v2216 = vshrl.u32 %v1760, 16
  %v2218 = vrot.slane %v2216, 2
  %v2219 = vshll.u32 %v1760, 16
  %v2221 = vrot.slane %v2219, 3
  %v2222 = vor.u32 %v2218, %v2221
  %v2223 = vsel %vm2081, %v2213, %v2222
  %v2225 = vshrl.u32 %v1761, 16
  %v2227 = vrot.slane %v2225, 2
  %v2228 = vshll.u32 %v1761, 16
  %v2230 = vrot.slane %v2228, 3
  %v2231 = vor.u32 %v2227, %v2230
  %v2232 = vsel %vm2081, %v2222, %v2231
  %v2234 = vshrl.u32 %v1762, 16
  %v2236 = vrot.slane %v2234, 2
  %v2237 = vshll.u32 %v1762, 16
  %v2239 = vrot.slane %v2237, 3
  %v2240 = vor.u32 %v2236, %v2239
  %v2241 = vsel %vm2081, %v2231, %v2240
  %v2243 = vshrl.u32 %v1763, 16
  %v2245 = vrot.slane %v2243, 2
  %v2246 = vshll.u32 %v1763, 16
  %v2248 = vrot.slane %v2246, 3
  %v2249 = vor.u32 %v2245, %v2248
  %v2250 = vsel %vm2081, %v2240, %v2249
  %v2252 = vshrl.u32 %v1764, 16
  %v2254 = vrot.slane %v2252, 2
  %v2255 = vshll.u32 %v1764, 16
  %v2257 = vrot.slane %v2255, 3
  %v2258 = vor.u32 %v2254, %v2257
  %v2259 = vsel %vm2081, %v2249, %v2258
  %v2260 = vunpack.c.l.b16 %v2098
  %v2261 = vunpack.c.h.b16 %v2098
  %v2262 = vunpack.c.l.b16 %v2107
  %v2263 = vunpack.c.h.b16 %v2107
  %v2264 = vunpack.c.l.b16 %v2116
  %v2265 = vunpack.c.h.b16 %v2116
  %v2266 = vunpack.c.l.b16 %v2125
  %v2267 = vunpack.c.h.b16 %v2125
  %v2268 = vunpack.c.l.b16 %v2134
  %v2269 = vunpack.c.h.b16 %v2134
  %v2270 = vunpack.c.l.b16 %v2143
  %v2271 = vunpack.c.h.b16 %v2143
  %v2272 = vunpack.c.l.b16 %v2152
  %v2273 = vunpack.c.h.b16 %v2152
  %v2274 = vunpack.c.l.b16 %v2161
  %v2275 = vunpack.c.h.b16 %v2161
  %v2276 = vunpack.c.l.b16 %v2170
  %v2277 = vunpack.c.h.b16 %v2170
  %v2278 = vunpack.c.l.b16 %v2187
  %v2279 = vunpack.c.h.b16 %v2187
  %v2280 = vunpack.c.l.b16 %v2196
  %v2281 = vunpack.c.h.b16 %v2196
  %v2282 = vunpack.c.l.b16 %v2205
  %v2283 = vunpack.c.h.b16 %v2205
  %v2284 = vunpack.c.l.b16 %v2214
  %v2285 = vunpack.c.h.b16 %v2214
  %v2286 = vunpack.c.l.b16 %v2223
  %v2287 = vunpack.c.h.b16 %v2223
  %v2288 = vunpack.c.l.b16 %v2232
  %v2289 = vunpack.c.h.b16 %v2232
  %v2290 = vunpack.c.l.b16 %v2241
  %v2291 = vunpack.c.h.b16 %v2241
  %v2292 = vunpack.c.l.b16 %v2250
  %v2293 = vunpack.c.h.b16 %v2250
  %v2294 = vunpack.c.l.b16 %v2259
  %v2295 = vunpack.c.h.b16 %v2259
  %v2296 = vpack.c.b16 %v2260, %v2260
  %v2297 = vpack.c.b16 %v2261, %v2261
  %v2298 = vpack.c.b16 %v2262, %v2262
  %v2299 = vpack.c.b16 %v2263, %v2263
  %v2300 = vpack.c.b16 %v2264, %v2264
  %v2301 = vpack.c.b16 %v2265, %v2265
  %v2302 = vpack.c.b16 %v2266, %v2266
  %v2303 = vpack.c.b16 %v2267, %v2267
  %v2304 = vpack.c.b16 %v2268, %v2268
  %v2305 = vpack.c.b16 %v2269, %v2269
  %v2306 = vpack.c.b16 %v2270, %v2270
  %v2307 = vpack.c.b16 %v2271, %v2271
  %v2308 = vpack.c.b16 %v2272, %v2272
  %v2309 = vpack.c.b16 %v2273, %v2273
  %v2310 = vpack.c.b16 %v2274, %v2274
  %v2311 = vpack.c.b16 %v2275, %v2275
  %v2312 = vpack.c.b16 %v2276, %v2276
  %v2313 = vpack.c.b16 %v2277, %v2277
  %v2314 = vpack.c.b16 %v2278, %v2278
  %v2315 = vpack.c.b16 %v2279, %v2279
  %v2316 = vpack.c.b16 %v2280, %v2280
  %v2317 = vpack.c.b16 %v2281, %v2281
  %v2318 = vpack.c.b16 %v2282, %v2282
  %v2319 = vpack.c.b16 %v2283, %v2283
  %v2320 = vpack.c.b16 %v2284, %v2284
  %v2321 = vpack.c.b16 %v2285, %v2285
  %v2322 = vpack.c.b16 %v2286, %v2286
  %v2323 = vpack.c.b16 %v2287, %v2287
  %v2324 = vpack.c.b16 %v2288, %v2288
  %v2325 = vpack.c.b16 %v2289, %v2289
  %v2326 = vpack.c.b16 %v2290, %v2290
  %v2327 = vpack.c.b16 %v2291, %v2291
  %v2328 = vpack.c.b16 %v2292, %v2292
  %v2329 = vpack.c.b16 %v2293, %v2293
  %v2330 = vpack.c.b16 %v2294, %v2294
  %v2331 = vpack.c.b16 %v2295, %v2295
  %2368 = vst.msk [vmem:[#allocation2 + $0x8] sm:$0xf] %vm1062, %v2296
  %2369 = vst.msk [vmem:[#allocation2 + $0x1c] sm:$0xf] %vm1062, %v2297
  %2370 = vst.msk [vmem:[#allocation2 + $0x30] sm:$0xf] %vm1062, %v2298
  %2371 = vst.msk [vmem:[#allocation2 + $0x44] sm:$0xf] %vm1062, %v2299
  %2372 = vst.msk [vmem:[#allocation2 + $0x58] sm:$0xf] %vm1062, %v2300
  %2373 = vst.msk [vmem:[#allocation2 + $0x6c] sm:$0xf] %vm1062, %v2301
  %2374 = vst.msk [vmem:[#allocation2 + $0x80] sm:$0xf] %vm1062, %v2302
  %2375 = vst.msk [vmem:[#allocation2 + $0x94] sm:$0xf] %vm1062, %v2303
  %2376 = vst.msk [vmem:[#allocation2 + $0xa8] sm:$0xf] %vm1062, %v2304
  %2377 = vst.msk [vmem:[#allocation2 + $0xbc] sm:$0xf] %vm1062, %v2305
  %2378 = vst.msk [vmem:[#allocation2 + $0xd0] sm:$0xf] %vm1062, %v2306
  %2379 = vst.msk [vmem:[#allocation2 + $0xe4] sm:$0xf] %vm1062, %v2307
  %2380 = vst.msk [vmem:[#allocation2 + $0xf8] sm:$0xf] %vm1062, %v2308
  %2381 = vst.msk [vmem:[#allocation2 + $0x10c] sm:$0xf] %vm1062, %v2309
  %2382 = vst.msk [vmem:[#allocation2 + $0x120] sm:$0xf] %vm1062, %v2310
  %2383 = vst.msk [vmem:[#allocation2 + $0x134] sm:$0xf] %vm1062, %v2311
  %2384 = vst.msk [vmem:[#allocation2 + $0x148] sm:$0xf] %vm1062, %v2312
  %2385 = vst.msk [vmem:[#allocation2 + $0x15c] sm:$0xf] %vm1062, %v2313
  %2386 = vst.msk [vmem:[#allocation2 + $0x170] sm:$0xf] %vm1062, %v2314
  %2387 = vst.msk [vmem:[#allocation2 + $0x184] sm:$0xf] %vm1062, %v2315
  %2388 = vst.msk [vmem:[#allocation2 + $0x198] sm:$0xf] %vm1062, %v2316
  %2389 = vst.msk [vmem:[#allocation2 + $0x1ac] sm:$0xf] %vm1062, %v2317
  %2390 = vst.msk [vmem:[#allocation2 + $0x1c0] sm:$0xf] %vm1062, %v2318
  %2391 = vst.msk [vmem:[#allocation2 + $0x1d4] sm:$0xf] %vm1062, %v2319
  %2392 = vst.msk [vmem:[#allocation2 + $0x1e8] sm:$0xf] %vm1062, %v2320
  %2393 = vst.msk [vmem:[#allocation2 + $0x1fc] sm:$0xf] %vm1062, %v2321
  %2394 = vst.msk [vmem:[#allocation2 + $0x210] sm:$0xf] %vm1062, %v2322
  %2395 = vst.msk [vmem:[#allocation2 + $0x224] sm:$0xf] %vm1062, %v2323
  %2396 = vst.msk [vmem:[#allocation2 + $0x238] sm:$0xf] %vm1062, %v2324
  %2397 = vst.msk [vmem:[#allocation2 + $0x24c] sm:$0xf] %vm1062, %v2325
  %2398 = vst.msk [vmem:[#allocation2 + $0x260] sm:$0xf] %vm1062, %v2326
  %2399 = vst.msk [vmem:[#allocation2 + $0x274] sm:$0xf] %vm1062, %v2327
  %2400 = vst.msk [vmem:[#allocation2 + $0x288] sm:$0xf] %vm1062, %v2328
  %2401 = vst.msk [vmem:[#allocation2 + $0x29c] sm:$0xf] %vm1062, %v2329
  %2402 = vst.msk [vmem:[#allocation2 + $0x2b0] sm:$0xf] %vm1062, %v2330
  %2403 = vst.msk [vmem:[#allocation2 + $0x2c4] sm:$0xf] %vm1062, %v2331
  %vm2404 = vcmask 1044480
  %v2405 = vrot.slane %v1714, 3
  %v2406 = vrot.slane %v1715, 3
  %v2407 = vsel %vm2404, %v2405, %v2406
  %v2408 = vrot.slane %v1716, 3
  %v2409 = vsel %vm2404, %v2406, %v2408
  %v2410 = vrot.slane %v1717, 3
  %v2411 = vsel %vm2404, %v2408, %v2410
  %v2412 = vrot.slane %v1718, 3
  %v2413 = vsel %vm2404, %v2410, %v2412
  %v2414 = vrot.slane %v1719, 3
  %v2415 = vsel %vm2404, %v2412, %v2414
  %v2416 = vrot.slane %v1720, 3
  %v2417 = vsel %vm2404, %v2414, %v2416
  %v2418 = vrot.slane %v1721, 3
  %v2419 = vsel %vm2404, %v2416, %v2418
  %v2420 = vrot.slane %v1722, 3
  %v2421 = vsel %vm2404, %v2418, %v2420
  %v2422 = vrot.slane %v1723, 3
  %v2423 = vsel %vm2404, %v2420, %v2422
  %v2433 = vrot.slane %v1755, 3
  %v2434 = vrot.slane %v1756, 3
  %v2435 = vsel %vm2404, %v2433, %v2434
  %v2436 = vrot.slane %v1757, 3
  %v2437 = vsel %vm2404, %v2434, %v2436
  %v2438 = vrot.slane %v1758, 3
  %v2439 = vsel %vm2404, %v2436, %v2438
  %v2440 = vrot.slane %v1759, 3
  %v2441 = vsel %vm2404, %v2438, %v2440
  %v2442 = vrot.slane %v1760, 3
  %v2443 = vsel %vm2404, %v2440, %v2442
  %v2444 = vrot.slane %v1761, 3
  %v2445 = vsel %vm2404, %v2442, %v2444
  %v2446 = vrot.slane %v1762, 3
  %v2447 = vsel %vm2404, %v2444, %v2446
  %v2448 = vrot.slane %v1763, 3
  %v2449 = vsel %vm2404, %v2446, %v2448
  %v2450 = vrot.slane %v1764, 3
  %v2451 = vsel %vm2404, %v2448, %v2450
  %v2461 = vunpack.c.l.bf16 %v2407
  %v2462 = vunpack.c.h.bf16 %v2407
  %v2463 = vunpack.c.l.bf16 %v2409
  %v2464 = vunpack.c.h.bf16 %v2409
  %v2465 = vunpack.c.l.bf16 %v2411
  %v2466 = vunpack.c.h.bf16 %v2411
  %v2467 = vunpack.c.l.bf16 %v2413
  %v2468 = vunpack.c.h.bf16 %v2413
  %v2469 = vunpack.c.l.bf16 %v2415
  %v2470 = vunpack.c.h.bf16 %v2415
  %v2471 = vunpack.c.l.bf16 %v2417
  %v2472 = vunpack.c.h.bf16 %v2417
  %v2473 = vunpack.c.l.bf16 %v2419
  %v2474 = vunpack.c.h.bf16 %v2419
  %v2475 = vunpack.c.l.bf16 %v2421
  %v2476 = vunpack.c.h.bf16 %v2421
  %v2477 = vunpack.c.l.bf16 %v2423
  %v2478 = vunpack.c.h.bf16 %v2423
  %v2479 = vunpack.c.l.bf16 %v2435
  %v2480 = vunpack.c.h.bf16 %v2435
  %v2481 = vunpack.c.l.bf16 %v2437
  %v2482 = vunpack.c.h.bf16 %v2437
  %v2483 = vunpack.c.l.bf16 %v2439
  %v2484 = vunpack.c.h.bf16 %v2439
  %v2485 = vunpack.c.l.bf16 %v2441
  %v2486 = vunpack.c.h.bf16 %v2441
  %v2487 = vunpack.c.l.bf16 %v2443
  %v2488 = vunpack.c.h.bf16 %v2443
  %v2489 = vunpack.c.l.bf16 %v2445
  %v2490 = vunpack.c.h.bf16 %v2445
  %v2491 = vunpack.c.l.bf16 %v2447
  %v2492 = vunpack.c.h.bf16 %v2447
  %v2493 = vunpack.c.l.bf16 %v2449
  %v2494 = vunpack.c.h.bf16 %v2449
  %v2495 = vunpack.c.l.bf16 %v2451
  %v2496 = vunpack.c.h.bf16 %v2451
  %v2497 = vmul.f32 %v2461, %v1568
  %v2498 = vmul.f32 %v2462, %v1569
  %v2499 = vmul.f32 %v2463, %v1570
  %v2500 = vmul.f32 %v2464, %v1571
  %v2501 = vmul.f32 %v2465, %v1572
  %v2502 = vmul.f32 %v2466, %v1573
  %v2503 = vmul.f32 %v2467, %v1574
  %v2504 = vmul.f32 %v2468, %v1575
  %v2505 = vmul.f32 %v2469, %v1576
  %v2506 = vmul.f32 %v2470, %v1577
  %v2507 = vmul.f32 %v2471, %v1578
  %v2508 = vmul.f32 %v2472, %v1579
  %v2509 = vmul.f32 %v2473, %v1580
  %v2510 = vmul.f32 %v2474, %v1581
  %v2511 = vmul.f32 %v2475, %v1582
  %v2512 = vmul.f32 %v2476, %v1583
  %v2513 = vmul.f32 %v2477, %v1584
  %v2514 = vmul.f32 %v2478, %v1585
  %v2515 = vmul.f32 %v2479, %v1586
  %v2516 = vmul.f32 %v2480, %v1587
  %v2517 = vmul.f32 %v2481, %v1588
  %v2518 = vmul.f32 %v2482, %v1589
  %v2519 = vmul.f32 %v2483, %v1590
  %v2520 = vmul.f32 %v2484, %v1591
  %v2521 = vmul.f32 %v2485, %v1592
  %v2522 = vmul.f32 %v2486, %v1593
  %v2523 = vmul.f32 %v2487, %v1594
  %v2524 = vmul.f32 %v2488, %v1595
  %v2525 = vmul.f32 %v2489, %v1596
  %v2526 = vmul.f32 %v2490, %v1597
  %v2527 = vmul.f32 %v2491, %v1598
  %v2528 = vmul.f32 %v2492, %v1599
  %v2529 = vmul.f32 %v2493, %v1600
  %v2530 = vmul.f32 %v2494, %v1601
  %v2531 = vmul.f32 %v2495, %v1602
  %v2532 = vmul.f32 %v2496, %v1603
  %v2533 = vpack.c.bf16 %v2497, %v2497
  %v2534 = vpack.c.bf16 %v2498, %v2498
  %v2535 = vpack.c.bf16 %v2499, %v2499
  %v2536 = vpack.c.bf16 %v2500, %v2500
  %v2537 = vpack.c.bf16 %v2501, %v2501
  %v2538 = vpack.c.bf16 %v2502, %v2502
  %v2539 = vpack.c.bf16 %v2503, %v2503
  %v2540 = vpack.c.bf16 %v2504, %v2504
  %v2541 = vpack.c.bf16 %v2505, %v2505
  %v2542 = vpack.c.bf16 %v2506, %v2506
  %v2543 = vpack.c.bf16 %v2507, %v2507
  %v2544 = vpack.c.bf16 %v2508, %v2508
  %v2545 = vpack.c.bf16 %v2509, %v2509
  %v2546 = vpack.c.bf16 %v2510, %v2510
  %v2547 = vpack.c.bf16 %v2511, %v2511
  %v2548 = vpack.c.bf16 %v2512, %v2512
  %v2549 = vpack.c.bf16 %v2513, %v2513
  %v2550 = vpack.c.bf16 %v2514, %v2514
  %v2551 = vpack.c.bf16 %v2515, %v2515
  %v2552 = vpack.c.bf16 %v2516, %v2516
  %v2553 = vpack.c.bf16 %v2517, %v2517
  %v2554 = vpack.c.bf16 %v2518, %v2518
  %v2555 = vpack.c.bf16 %v2519, %v2519
  %v2556 = vpack.c.bf16 %v2520, %v2520
  %v2557 = vpack.c.bf16 %v2521, %v2521
  %v2558 = vpack.c.bf16 %v2522, %v2522
  %v2559 = vpack.c.bf16 %v2523, %v2523
  %v2560 = vpack.c.bf16 %v2524, %v2524
  %v2561 = vpack.c.bf16 %v2525, %v2525
  %v2562 = vpack.c.bf16 %v2526, %v2526
  %v2563 = vpack.c.bf16 %v2527, %v2527
  %v2564 = vpack.c.bf16 %v2528, %v2528
  %v2565 = vpack.c.bf16 %v2529, %v2529
  %v2566 = vpack.c.bf16 %v2530, %v2530
  %v2567 = vpack.c.bf16 %v2531, %v2531
  %v2568 = vpack.c.bf16 %v2532, %v2532
  %2605 = vrot.lane.b32.xlu0 %v2533, 64
  %v2606 = vpop.permute.xlu0 %2605
  %2607 = vrot.lane.b32.xlu0 %v2534, 64
  %v2608 = vpop.permute.xlu0 %2607
  %2609 = vrot.lane.b32.xlu0 %v2535, 64
  %v2610 = vpop.permute.xlu0 %2609
  %2611 = vrot.lane.b32.xlu0 %v2536, 64
  %v2612 = vpop.permute.xlu0 %2611
  %2613 = vrot.lane.b32.xlu0 %v2537, 64
  %v2614 = vpop.permute.xlu0 %2613
  %2615 = vrot.lane.b32.xlu0 %v2538, 64
  %v2616 = vpop.permute.xlu0 %2615
  %2617 = vrot.lane.b32.xlu0 %v2539, 64
  %v2618 = vpop.permute.xlu0 %2617
  %2619 = vrot.lane.b32.xlu0 %v2540, 64
  %v2620 = vpop.permute.xlu0 %2619
  %2621 = vrot.lane.b32.xlu0 %v2541, 64
  %v2622 = vpop.permute.xlu0 %2621
  %2623 = vrot.lane.b32.xlu0 %v2542, 64
  %v2624 = vpop.permute.xlu0 %2623
  %2625 = vrot.lane.b32.xlu0 %v2543, 64
  %v2626 = vpop.permute.xlu0 %2625
  %2627 = vrot.lane.b32.xlu0 %v2544, 64
  %v2628 = vpop.permute.xlu0 %2627
  %2629 = vrot.lane.b32.xlu0 %v2545, 64
  %v2630 = vpop.permute.xlu0 %2629
  %2631 = vrot.lane.b32.xlu0 %v2546, 64
  %v2632 = vpop.permute.xlu0 %2631
  %2633 = vrot.lane.b32.xlu0 %v2547, 64
  %v2634 = vpop.permute.xlu0 %2633
  %2635 = vrot.lane.b32.xlu0 %v2548, 64
  %v2636 = vpop.permute.xlu0 %2635
  %2637 = vrot.lane.b32.xlu0 %v2549, 64
  %v2638 = vpop.permute.xlu0 %2637
  %2639 = vrot.lane.b32.xlu0 %v2550, 64
  %v2640 = vpop.permute.xlu0 %2639
  %2641 = vrot.lane.b32.xlu0 %v2551, 64
  %v2642 = vpop.permute.xlu0 %2641
  %2643 = vrot.lane.b32.xlu0 %v2552, 64
  %v2644 = vpop.permute.xlu0 %2643
  %2645 = vrot.lane.b32.xlu0 %v2553, 64
  %v2646 = vpop.permute.xlu0 %2645
  %2647 = vrot.lane.b32.xlu0 %v2554, 64
  %v2648 = vpop.permute.xlu0 %2647
  %2649 = vrot.lane.b32.xlu0 %v2555, 64
  %v2650 = vpop.permute.xlu0 %2649
  %2651 = vrot.lane.b32.xlu0 %v2556, 64
  %v2652 = vpop.permute.xlu0 %2651
  %2653 = vrot.lane.b32.xlu0 %v2557, 64
  %v2654 = vpop.permute.xlu0 %2653
  %2655 = vrot.lane.b32.xlu0 %v2558, 64
  %v2656 = vpop.permute.xlu0 %2655
  %2657 = vrot.lane.b32.xlu0 %v2559, 64
  %v2658 = vpop.permute.xlu0 %2657
  %2659 = vrot.lane.b32.xlu0 %v2560, 64
  %v2660 = vpop.permute.xlu0 %2659
  %2661 = vrot.lane.b32.xlu0 %v2561, 64
  %v2662 = vpop.permute.xlu0 %2661
  %2663 = vrot.lane.b32.xlu0 %v2562, 64
  %v2664 = vpop.permute.xlu0 %2663
  %2665 = vrot.lane.b32.xlu0 %v2563, 64
  %v2666 = vpop.permute.xlu0 %2665
  %2667 = vrot.lane.b32.xlu0 %v2564, 64
  %v2668 = vpop.permute.xlu0 %2667
  %2669 = vrot.lane.b32.xlu0 %v2565, 64
  %v2670 = vpop.permute.xlu0 %2669
  %2671 = vrot.lane.b32.xlu0 %v2566, 64
  %v2672 = vpop.permute.xlu0 %2671
  %2673 = vrot.lane.b32.xlu0 %v2567, 64
  %v2674 = vpop.permute.xlu0 %2673
  %2675 = vrot.lane.b32.xlu0 %v2568, 64
  %v2676 = vpop.permute.xlu0 %2675
  %2713 = vst.msk [vmem:[#allocation2 + $0x8] sm:$0xf] %vm1438, %v2606
  %2714 = vst.msk [vmem:[#allocation2 + $0x1c] sm:$0xf] %vm1438, %v2608
  %2715 = vst.msk [vmem:[#allocation2 + $0x30] sm:$0xf] %vm1438, %v2610
  %2716 = vst.msk [vmem:[#allocation2 + $0x44] sm:$0xf] %vm1438, %v2612
  %2717 = vst.msk [vmem:[#allocation2 + $0x58] sm:$0xf] %vm1438, %v2614
  %2718 = vst.msk [vmem:[#allocation2 + $0x6c] sm:$0xf] %vm1438, %v2616
  %2719 = vst.msk [vmem:[#allocation2 + $0x80] sm:$0xf] %vm1438, %v2618
  %2720 = vst.msk [vmem:[#allocation2 + $0x94] sm:$0xf] %vm1438, %v2620
  %2721 = vst.msk [vmem:[#allocation2 + $0xa8] sm:$0xf] %vm1438, %v2622
  %2722 = vst.msk [vmem:[#allocation2 + $0xbc] sm:$0xf] %vm1438, %v2624
  %2723 = vst.msk [vmem:[#allocation2 + $0xd0] sm:$0xf] %vm1438, %v2626
  %2724 = vst.msk [vmem:[#allocation2 + $0xe4] sm:$0xf] %vm1438, %v2628
  %2725 = vst.msk [vmem:[#allocation2 + $0xf8] sm:$0xf] %vm1438, %v2630
  %2726 = vst.msk [vmem:[#allocation2 + $0x10c] sm:$0xf] %vm1438, %v2632
  %2727 = vst.msk [vmem:[#allocation2 + $0x120] sm:$0xf] %vm1438, %v2634
  %2728 = vst.msk [vmem:[#allocation2 + $0x134] sm:$0xf] %vm1438, %v2636
  %2729 = vst.msk [vmem:[#allocation2 + $0x148] sm:$0xf] %vm1438, %v2638
  %2730 = vst.msk [vmem:[#allocation2 + $0x15c] sm:$0xf] %vm1438, %v2640
  %2731 = vst.msk [vmem:[#allocation2 + $0x170] sm:$0xf] %vm1438, %v2642
  %2732 = vst.msk [vmem:[#allocation2 + $0x184] sm:$0xf] %vm1438, %v2644
  %2733 = vst.msk [vmem:[#allocation2 + $0x198] sm:$0xf] %vm1438, %v2646
  %2734 = vst.msk [vmem:[#allocation2 + $0x1ac] sm:$0xf] %vm1438, %v2648
  %2735 = vst.msk [vmem:[#allocation2 + $0x1c0] sm:$0xf] %vm1438, %v2650
  %2736 = vst.msk [vmem:[#allocation2 + $0x1d4] sm:$0xf] %vm1438, %v2652
  %2737 = vst.msk [vmem:[#allocation2 + $0x1e8] sm:$0xf] %vm1438, %v2654
  %2738 = vst.msk [vmem:[#allocation2 + $0x1fc] sm:$0xf] %vm1438, %v2656
  %2739 = vst.msk [vmem:[#allocation2 + $0x210] sm:$0xf] %vm1438, %v2658
  %2740 = vst.msk [vmem:[#allocation2 + $0x224] sm:$0xf] %vm1438, %v2660
  %2741 = vst.msk [vmem:[#allocation2 + $0x238] sm:$0xf] %vm1438, %v2662
  %2742 = vst.msk [vmem:[#allocation2 + $0x24c] sm:$0xf] %vm1438, %v2664
  %2743 = vst.msk [vmem:[#allocation2 + $0x260] sm:$0xf] %vm1438, %v2666
  %2744 = vst.msk [vmem:[#allocation2 + $0x274] sm:$0xf] %vm1438, %v2668
  %2745 = vst.msk [vmem:[#allocation2 + $0x288] sm:$0xf] %vm1438, %v2670
  %2746 = vst.msk [vmem:[#allocation2 + $0x29c] sm:$0xf] %vm1438, %v2672
  %2747 = vst.msk [vmem:[#allocation2 + $0x2b0] sm:$0xf] %vm1438, %v2674
  %2748 = vst.msk [vmem:[#allocation2 + $0x2c4] sm:$0xf] %vm1438, %v2676
  %v2750 = vunpack.c.l.b16 %v101
  %v2751 = vpack.c.b16 %v2750, %v1713
  %v2762 = vunpack.c.l.b16 %v124
  %v2763 = vpack.c.b16 %v2762, %v1754
  %v2773 = vunpack.c.l.bf16 %v1715
  %v2774 = vunpack.c.h.bf16 %v1715
  %v2775 = vunpack.c.l.bf16 %v1716
  %v2776 = vunpack.c.h.bf16 %v1716
  %v2777 = vunpack.c.l.bf16 %v1717
  %v2778 = vunpack.c.h.bf16 %v1717
  %v2779 = vunpack.c.l.bf16 %v1718
  %v2780 = vunpack.c.h.bf16 %v1718
  %v2781 = vunpack.c.l.bf16 %v1719
  %v2782 = vunpack.c.h.bf16 %v1719
  %v2783 = vunpack.c.l.bf16 %v1720
  %v2784 = vunpack.c.h.bf16 %v1720
  %v2785 = vunpack.c.l.bf16 %v1721
  %v2786 = vunpack.c.h.bf16 %v1721
  %v2787 = vunpack.c.l.bf16 %v1722
  %v2788 = vunpack.c.h.bf16 %v1722
  %v2789 = vunpack.c.l.bf16 %v2751
  %v2790 = vunpack.c.h.bf16 %v2751
  %v2791 = vunpack.c.l.bf16 %v1756
  %v2792 = vunpack.c.h.bf16 %v1756
  %v2793 = vunpack.c.l.bf16 %v1757
  %v2794 = vunpack.c.h.bf16 %v1757
  %v2795 = vunpack.c.l.bf16 %v1758
  %v2796 = vunpack.c.h.bf16 %v1758
  %v2797 = vunpack.c.l.bf16 %v1759
  %v2798 = vunpack.c.h.bf16 %v1759
  %v2799 = vunpack.c.l.bf16 %v1760
  %v2800 = vunpack.c.h.bf16 %v1760
  %v2801 = vunpack.c.l.bf16 %v1761
  %v2802 = vunpack.c.h.bf16 %v1761
  %v2803 = vunpack.c.l.bf16 %v1762
  %v2804 = vunpack.c.h.bf16 %v1762
  %v2805 = vunpack.c.l.bf16 %v1763
  %v2806 = vunpack.c.h.bf16 %v1763
  %v2807 = vunpack.c.l.bf16 %v2763
  %v2808 = vunpack.c.h.bf16 %v2763
  %v2809 = vmul.f32 %v2773, %v954
  %v2810 = vmul.f32 %v2774, %v955
  %v2811 = vmul.f32 %v2775, %v956
  %v2812 = vmul.f32 %v2776, %v957
  %v2813 = vmul.f32 %v2777, %v958
  %v2814 = vmul.f32 %v2778, %v959
  %v2815 = vmul.f32 %v2779, %v960
  %v2816 = vmul.f32 %v2780, %v961
  %v2817 = vmul.f32 %v2781, %v962
  %v2818 = vmul.f32 %v2782, %v963
  %v2819 = vmul.f32 %v2783, %v964
  %v2820 = vmul.f32 %v2784, %v965
  %v2821 = vmul.f32 %v2785, %v966
  %v2822 = vmul.f32 %v2786, %v967
  %v2823 = vmul.f32 %v2787, %v968
  %v2824 = vmul.f32 %v2788, %v969
  %v2825 = vmul.f32 %v2789, %v970
  %v2826 = vmul.f32 %v2790, %v971
  %v2827 = vmul.f32 %v2791, %v972
  %v2828 = vmul.f32 %v2792, %v973
  %v2829 = vmul.f32 %v2793, %v974
  %v2830 = vmul.f32 %v2794, %v975
  %v2831 = vmul.f32 %v2795, %v976
  %v2832 = vmul.f32 %v2796, %v977
  %v2833 = vmul.f32 %v2797, %v978
  %v2834 = vmul.f32 %v2798, %v979
  %v2835 = vmul.f32 %v2799, %v980
  %v2836 = vmul.f32 %v2800, %v981
  %v2837 = vmul.f32 %v2801, %v982
  %v2838 = vmul.f32 %v2802, %v983
  %v2839 = vmul.f32 %v2803, %v984
  %v2840 = vmul.f32 %v2804, %v985
  %v2841 = vmul.f32 %v2805, %v986
  %v2842 = vmul.f32 %v2806, %v987
  %v2843 = vmul.f32 %v2807, %v988
  %v2844 = vmul.f32 %v2808, %v989
  %v2845 = vpack.c.bf16 %v2809, %v2809
  %v2846 = vpack.c.bf16 %v2810, %v2810
  %v2847 = vpack.c.bf16 %v2811, %v2811
  %v2848 = vpack.c.bf16 %v2812, %v2812
  %v2849 = vpack.c.bf16 %v2813, %v2813
  %v2850 = vpack.c.bf16 %v2814, %v2814
  %v2851 = vpack.c.bf16 %v2815, %v2815
  %v2852 = vpack.c.bf16 %v2816, %v2816
  %v2853 = vpack.c.bf16 %v2817, %v2817
  %v2854 = vpack.c.bf16 %v2818, %v2818
  %v2855 = vpack.c.bf16 %v2819, %v2819
  %v2856 = vpack.c.bf16 %v2820, %v2820
  %v2857 = vpack.c.bf16 %v2821, %v2821
  %v2858 = vpack.c.bf16 %v2822, %v2822
  %v2859 = vpack.c.bf16 %v2823, %v2823
  %v2860 = vpack.c.bf16 %v2824, %v2824
  %v2861 = vpack.c.bf16 %v2825, %v2825
  %v2862 = vpack.c.bf16 %v2826, %v2826
  %v2863 = vpack.c.bf16 %v2827, %v2827
  %v2864 = vpack.c.bf16 %v2828, %v2828
  %v2865 = vpack.c.bf16 %v2829, %v2829
  %v2866 = vpack.c.bf16 %v2830, %v2830
  %v2867 = vpack.c.bf16 %v2831, %v2831
  %v2868 = vpack.c.bf16 %v2832, %v2832
  %v2869 = vpack.c.bf16 %v2833, %v2833
  %v2870 = vpack.c.bf16 %v2834, %v2834
  %v2871 = vpack.c.bf16 %v2835, %v2835
  %v2872 = vpack.c.bf16 %v2836, %v2836
  %v2873 = vpack.c.bf16 %v2837, %v2837
  %v2874 = vpack.c.bf16 %v2838, %v2838
  %v2875 = vpack.c.bf16 %v2839, %v2839
  %v2876 = vpack.c.bf16 %v2840, %v2840
  %v2877 = vpack.c.bf16 %v2841, %v2841
  %v2878 = vpack.c.bf16 %v2842, %v2842
  %v2879 = vpack.c.bf16 %v2843, %v2843
  %v2880 = vpack.c.bf16 %v2844, %v2844
  %2881 = vst.msk [vmem:[#allocation2 + $0xc] sm:$0xf] %vm1062, %v2845
  %2882 = vst.msk [vmem:[#allocation2 + $0x20] sm:$0xf] %vm1062, %v2846
  %2883 = vst.msk [vmem:[#allocation2 + $0x34] sm:$0xf] %vm1062, %v2847
  %2884 = vst.msk [vmem:[#allocation2 + $0x48] sm:$0xf] %vm1062, %v2848
  %2885 = vst.msk [vmem:[#allocation2 + $0x5c] sm:$0xf] %vm1062, %v2849
  %2886 = vst.msk [vmem:[#allocation2 + $0x70] sm:$0xf] %vm1062, %v2850
  %2887 = vst.msk [vmem:[#allocation2 + $0x84] sm:$0xf] %vm1062, %v2851
  %2888 = vst.msk [vmem:[#allocation2 + $0x98] sm:$0xf] %vm1062, %v2852
  %2889 = vst.msk [vmem:[#allocation2 + $0xac] sm:$0xf] %vm1062, %v2853
  %2890 = vst.msk [vmem:[#allocation2 + $0xc0] sm:$0xf] %vm1062, %v2854
  %2891 = vst.msk [vmem:[#allocation2 + $0xd4] sm:$0xf] %vm1062, %v2855
  %2892 = vst.msk [vmem:[#allocation2 + $0xe8] sm:$0xf] %vm1062, %v2856
  %2893 = vst.msk [vmem:[#allocation2 + $0xfc] sm:$0xf] %vm1062, %v2857
  %2894 = vst.msk [vmem:[#allocation2 + $0x110] sm:$0xf] %vm1062, %v2858
  %2895 = vst.msk [vmem:[#allocation2 + $0x124] sm:$0xf] %vm1062, %v2859
  %2896 = vst.msk [vmem:[#allocation2 + $0x138] sm:$0xf] %vm1062, %v2860
  %2897 = vst.msk [vmem:[#allocation2 + $0x14c] sm:$0xf] %vm1062, %v2861
  %2898 = vst.msk [vmem:[#allocation2 + $0x160] sm:$0xf] %vm1062, %v2862
  %2899 = vst.msk [vmem:[#allocation2 + $0x174] sm:$0xf] %vm1062, %v2863
  %2900 = vst.msk [vmem:[#allocation2 + $0x188] sm:$0xf] %vm1062, %v2864
  %2901 = vst.msk [vmem:[#allocation2 + $0x19c] sm:$0xf] %vm1062, %v2865
  %2902 = vst.msk [vmem:[#allocation2 + $0x1b0] sm:$0xf] %vm1062, %v2866
  %2903 = vst.msk [vmem:[#allocation2 + $0x1c4] sm:$0xf] %vm1062, %v2867
  %2904 = vst.msk [vmem:[#allocation2 + $0x1d8] sm:$0xf] %vm1062, %v2868
  %2905 = vst.msk [vmem:[#allocation2 + $0x1ec] sm:$0xf] %vm1062, %v2869
  %2906 = vst.msk [vmem:[#allocation2 + $0x200] sm:$0xf] %vm1062, %v2870
  %2907 = vst.msk [vmem:[#allocation2 + $0x214] sm:$0xf] %vm1062, %v2871
  %2908 = vst.msk [vmem:[#allocation2 + $0x228] sm:$0xf] %vm1062, %v2872
  %2909 = vst.msk [vmem:[#allocation2 + $0x23c] sm:$0xf] %vm1062, %v2873
  %2910 = vst.msk [vmem:[#allocation2 + $0x250] sm:$0xf] %vm1062, %v2874
  %2911 = vst.msk [vmem:[#allocation2 + $0x264] sm:$0xf] %vm1062, %v2875
  %2912 = vst.msk [vmem:[#allocation2 + $0x278] sm:$0xf] %vm1062, %v2876
  %2913 = vst.msk [vmem:[#allocation2 + $0x28c] sm:$0xf] %vm1062, %v2877
  %2914 = vst.msk [vmem:[#allocation2 + $0x2a0] sm:$0xf] %vm1062, %v2878
  %2915 = vst.msk [vmem:[#allocation2 + $0x2b4] sm:$0xf] %vm1062, %v2879
  %2916 = vst.msk [vmem:[#allocation2 + $0x2c8] sm:$0xf] %vm1062, %v2880
  %v2918 = vunpack.c.l.b16 %v102
  %v2919 = vpack.c.b16 %v2918, %v2918
  %v2920 = vrot.slane %v2094, 1
  %v2921 = vor.u32 %v2091, %v2920
  %v2922 = vrot.slane %v2103, 1
  %v2923 = vsel %vm1102, %v2921, %v2922
  %v2924 = vor.u32 %v2100, %v2922
  %v2925 = vrot.slane %v2112, 1
  %v2926 = vsel %vm1102, %v2924, %v2925
  %v2927 = vor.u32 %v2109, %v2925
  %v2928 = vrot.slane %v2121, 1
  %v2929 = vsel %vm1102, %v2927, %v2928
  %v2930 = vor.u32 %v2118, %v2928
  %v2931 = vrot.slane %v2130, 1
  %v2932 = vsel %vm1102, %v2930, %v2931
  %v2933 = vor.u32 %v2127, %v2931
  %v2934 = vrot.slane %v2139, 1
  %v2935 = vsel %vm1102, %v2933, %v2934
  %v2936 = vor.u32 %v2136, %v2934
  %v2937 = vrot.slane %v2148, 1
  %v2938 = vsel %vm1102, %v2936, %v2937
  %v2939 = vor.u32 %v2145, %v2937
  %v2940 = vrot.slane %v2157, 1
  %v2941 = vsel %vm1102, %v2939, %v2940
  %v2942 = vor.u32 %v2154, %v2940
  %v2944 = vshll.u32 %v2751, 16
  %v2946 = vrot.slane %v2944, 1
  %v2947 = vsel %vm1102, %v2942, %v2946
  %v2948 = vshrl.u32 %v2751, 16
  %v2950 = vor.u32 %v2948, %v2946
  %v2952 = vshll.u32 %v2919, 16
  %v2954 = vrot.slane %v2952, 1
  %v2955 = vsel %vm1102, %v2950, %v2954
  %v2957 = vunpack.c.l.b16 %v125
  %v2958 = vpack.c.b16 %v2957, %v2957
  %v2959 = vrot.slane %v2183, 1
  %v2960 = vor.u32 %v2180, %v2959
  %v2961 = vrot.slane %v2192, 1
  %v2962 = vsel %vm1102, %v2960, %v2961
  %v2963 = vor.u32 %v2189, %v2961
  %v2964 = vrot.slane %v2201, 1
  %v2965 = vsel %vm1102, %v2963, %v2964
  %v2966 = vor.u32 %v2198, %v2964
  %v2967 = vrot.slane %v2210, 1
  %v2968 = vsel %vm1102, %v2966, %v2967
  %v2969 = vor.u32 %v2207, %v2967
  %v2970 = vrot.slane %v2219, 1
  %v2971 = vsel %vm1102, %v2969, %v2970
  %v2972 = vor.u32 %v2216, %v2970
  %v2973 = vrot.slane %v2228, 1
  %v2974 = vsel %vm1102, %v2972, %v2973
  %v2975 = vor.u32 %v2225, %v2973
  %v2976 = vrot.slane %v2237, 1
  %v2977 = vsel %vm1102, %v2975, %v2976
  %v2978 = vor.u32 %v2234, %v2976
  %v2979 = vrot.slane %v2246, 1
  %v2980 = vsel %vm1102, %v2978, %v2979
  %v2981 = vor.u32 %v2243, %v2979
  %v2983 = vshll.u32 %v2763, 16
  %v2985 = vrot.slane %v2983, 1
  %v2986 = vsel %vm1102, %v2981, %v2985
  %v2987 = vshrl.u32 %v2763, 16
  %v2989 = vor.u32 %v2987, %v2985
  %v2991 = vshll.u32 %v2958, 16
  %v2993 = vrot.slane %v2991, 1
  %v2994 = vsel %vm1102, %v2989, %v2993
  %v2995 = vunpack.c.l.b16 %v2923
  %v2996 = vunpack.c.h.b16 %v2923
  %v2997 = vunpack.c.l.b16 %v2926
  %v2998 = vunpack.c.h.b16 %v2926
  %v2999 = vunpack.c.l.b16 %v2929
  %v3000 = vunpack.c.h.b16 %v2929
  %v3001 = vunpack.c.l.b16 %v2932
  %v3002 = vunpack.c.h.b16 %v2932
  %v3003 = vunpack.c.l.b16 %v2935
  %v3004 = vunpack.c.h.b16 %v2935
  %v3005 = vunpack.c.l.b16 %v2938
  %v3006 = vunpack.c.h.b16 %v2938
  %v3007 = vunpack.c.l.b16 %v2941
  %v3008 = vunpack.c.h.b16 %v2941
  %v3009 = vunpack.c.l.b16 %v2947
  %v3010 = vunpack.c.h.b16 %v2947
  %v3011 = vunpack.c.l.b16 %v2955
  %v3012 = vunpack.c.h.b16 %v2955
  %v3013 = vunpack.c.l.b16 %v2962
  %v3014 = vunpack.c.h.b16 %v2962
  %v3015 = vunpack.c.l.b16 %v2965
  %v3016 = vunpack.c.h.b16 %v2965
  %v3017 = vunpack.c.l.b16 %v2968
  %v3018 = vunpack.c.h.b16 %v2968
  %v3019 = vunpack.c.l.b16 %v2971
  %v3020 = vunpack.c.h.b16 %v2971
  %v3021 = vunpack.c.l.b16 %v2974
  %v3022 = vunpack.c.h.b16 %v2974
  %v3023 = vunpack.c.l.b16 %v2977
  %v3024 = vunpack.c.h.b16 %v2977
  %v3025 = vunpack.c.l.b16 %v2980
  %v3026 = vunpack.c.h.b16 %v2980
  %v3027 = vunpack.c.l.b16 %v2986
  %v3028 = vunpack.c.h.b16 %v2986
  %v3029 = vunpack.c.l.b16 %v2994
  %v3030 = vunpack.c.h.b16 %v2994
  %v3031 = vpack.c.b16 %v2995, %v2995
  %v3032 = vpack.c.b16 %v2996, %v2996
  %v3033 = vpack.c.b16 %v2997, %v2997
  %v3034 = vpack.c.b16 %v2998, %v2998
  %v3035 = vpack.c.b16 %v2999, %v2999
  %v3036 = vpack.c.b16 %v3000, %v3000
  %v3037 = vpack.c.b16 %v3001, %v3001
  %v3038 = vpack.c.b16 %v3002, %v3002
  %v3039 = vpack.c.b16 %v3003, %v3003
  %v3040 = vpack.c.b16 %v3004, %v3004
  %v3041 = vpack.c.b16 %v3005, %v3005
  %v3042 = vpack.c.b16 %v3006, %v3006
  %v3043 = vpack.c.b16 %v3007, %v3007
  %v3044 = vpack.c.b16 %v3008, %v3008
  %v3045 = vpack.c.b16 %v3009, %v3009
  %v3046 = vpack.c.b16 %v3010, %v3010
  %v3047 = vpack.c.b16 %v3011, %v3011
  %v3048 = vpack.c.b16 %v3012, %v3012
  %v3049 = vpack.c.b16 %v3013, %v3013
  %v3050 = vpack.c.b16 %v3014, %v3014
  %v3051 = vpack.c.b16 %v3015, %v3015
  %v3052 = vpack.c.b16 %v3016, %v3016
  %v3053 = vpack.c.b16 %v3017, %v3017
  %v3054 = vpack.c.b16 %v3018, %v3018
  %v3055 = vpack.c.b16 %v3019, %v3019
  %v3056 = vpack.c.b16 %v3020, %v3020
  %v3057 = vpack.c.b16 %v3021, %v3021
  %v3058 = vpack.c.b16 %v3022, %v3022
  %v3059 = vpack.c.b16 %v3023, %v3023
  %v3060 = vpack.c.b16 %v3024, %v3024
  %v3061 = vpack.c.b16 %v3025, %v3025
  %v3062 = vpack.c.b16 %v3026, %v3026
  %v3063 = vpack.c.b16 %v3027, %v3027
  %v3064 = vpack.c.b16 %v3028, %v3028
  %v3065 = vpack.c.b16 %v3029, %v3029
  %v3066 = vpack.c.b16 %v3030, %v3030
  %3067 = vrot.lane.b32.xlu0 %v3031, 64
  %v3068 = vpop.permute.xlu0 %3067
  %3069 = vrot.lane.b32.xlu0 %v3032, 64
  %v3070 = vpop.permute.xlu0 %3069
  %3071 = vrot.lane.b32.xlu0 %v3033, 64
  %v3072 = vpop.permute.xlu0 %3071
  %3073 = vrot.lane.b32.xlu0 %v3034, 64
  %v3074 = vpop.permute.xlu0 %3073
  %3075 = vrot.lane.b32.xlu0 %v3035, 64
  %v3076 = vpop.permute.xlu0 %3075
  %3077 = vrot.lane.b32.xlu0 %v3036, 64
  %v3078 = vpop.permute.xlu0 %3077
  %3079 = vrot.lane.b32.xlu0 %v3037, 64
  %v3080 = vpop.permute.xlu0 %3079
  %3081 = vrot.lane.b32.xlu0 %v3038, 64
  %v3082 = vpop.permute.xlu0 %3081
  %3083 = vrot.lane.b32.xlu0 %v3039, 64
  %v3084 = vpop.permute.xlu0 %3083
  %3085 = vrot.lane.b32.xlu0 %v3040, 64
  %v3086 = vpop.permute.xlu0 %3085
  %3087 = vrot.lane.b32.xlu0 %v3041, 64
  %v3088 = vpop.permute.xlu0 %3087
  %3089 = vrot.lane.b32.xlu0 %v3042, 64
  %v3090 = vpop.permute.xlu0 %3089
  %3091 = vrot.lane.b32.xlu0 %v3043, 64
  %v3092 = vpop.permute.xlu0 %3091
  %3093 = vrot.lane.b32.xlu0 %v3044, 64
  %v3094 = vpop.permute.xlu0 %3093
  %3095 = vrot.lane.b32.xlu0 %v3045, 64
  %v3096 = vpop.permute.xlu0 %3095
  %3097 = vrot.lane.b32.xlu0 %v3046, 64
  %v3098 = vpop.permute.xlu0 %3097
  %3099 = vrot.lane.b32.xlu0 %v3047, 64
  %v3100 = vpop.permute.xlu0 %3099
  %3101 = vrot.lane.b32.xlu0 %v3048, 64
  %v3102 = vpop.permute.xlu0 %3101
  %3103 = vrot.lane.b32.xlu0 %v3049, 64
  %v3104 = vpop.permute.xlu0 %3103
  %3105 = vrot.lane.b32.xlu0 %v3050, 64
  %v3106 = vpop.permute.xlu0 %3105
  %3107 = vrot.lane.b32.xlu0 %v3051, 64
  %v3108 = vpop.permute.xlu0 %3107
  %3109 = vrot.lane.b32.xlu0 %v3052, 64
  %v3110 = vpop.permute.xlu0 %3109
  %3111 = vrot.lane.b32.xlu0 %v3053, 64
  %v3112 = vpop.permute.xlu0 %3111
  %3113 = vrot.lane.b32.xlu0 %v3054, 64
  %v3114 = vpop.permute.xlu0 %3113
  %3115 = vrot.lane.b32.xlu0 %v3055, 64
  %v3116 = vpop.permute.xlu0 %3115
  %3117 = vrot.lane.b32.xlu0 %v3056, 64
  %v3118 = vpop.permute.xlu0 %3117
  %3119 = vrot.lane.b32.xlu0 %v3057, 64
  %v3120 = vpop.permute.xlu0 %3119
  %3121 = vrot.lane.b32.xlu0 %v3058, 64
  %v3122 = vpop.permute.xlu0 %3121
  %3123 = vrot.lane.b32.xlu0 %v3059, 64
  %v3124 = vpop.permute.xlu0 %3123
  %3125 = vrot.lane.b32.xlu0 %v3060, 64
  %v3126 = vpop.permute.xlu0 %3125
  %3127 = vrot.lane.b32.xlu0 %v3061, 64
  %v3128 = vpop.permute.xlu0 %3127
  %3129 = vrot.lane.b32.xlu0 %v3062, 64
  %v3130 = vpop.permute.xlu0 %3129
  %3131 = vrot.lane.b32.xlu0 %v3063, 64
  %v3132 = vpop.permute.xlu0 %3131
  %3133 = vrot.lane.b32.xlu0 %v3064, 64
  %v3134 = vpop.permute.xlu0 %3133
  %3135 = vrot.lane.b32.xlu0 %v3065, 64
  %v3136 = vpop.permute.xlu0 %3135
  %3137 = vrot.lane.b32.xlu0 %v3066, 64
  %v3138 = vpop.permute.xlu0 %3137
  %3175 = vst.msk [vmem:[#allocation2 + $0xc] sm:$0xf] %vm1438, %v3068
  %3176 = vst.msk [vmem:[#allocation2 + $0x20] sm:$0xf] %vm1438, %v3070
  %3177 = vst.msk [vmem:[#allocation2 + $0x34] sm:$0xf] %vm1438, %v3072
  %3178 = vst.msk [vmem:[#allocation2 + $0x48] sm:$0xf] %vm1438, %v3074
  %3179 = vst.msk [vmem:[#allocation2 + $0x5c] sm:$0xf] %vm1438, %v3076
  %3180 = vst.msk [vmem:[#allocation2 + $0x70] sm:$0xf] %vm1438, %v3078
  %3181 = vst.msk [vmem:[#allocation2 + $0x84] sm:$0xf] %vm1438, %v3080
  %3182 = vst.msk [vmem:[#allocation2 + $0x98] sm:$0xf] %vm1438, %v3082
  %3183 = vst.msk [vmem:[#allocation2 + $0xac] sm:$0xf] %vm1438, %v3084
  %3184 = vst.msk [vmem:[#allocation2 + $0xc0] sm:$0xf] %vm1438, %v3086
  %3185 = vst.msk [vmem:[#allocation2 + $0xd4] sm:$0xf] %vm1438, %v3088
  %3186 = vst.msk [vmem:[#allocation2 + $0xe8] sm:$0xf] %vm1438, %v3090
  %3187 = vst.msk [vmem:[#allocation2 + $0xfc] sm:$0xf] %vm1438, %v3092
  %3188 = vst.msk [vmem:[#allocation2 + $0x110] sm:$0xf] %vm1438, %v3094
  %3189 = vst.msk [vmem:[#allocation2 + $0x124] sm:$0xf] %vm1438, %v3096
  %3190 = vst.msk [vmem:[#allocation2 + $0x138] sm:$0xf] %vm1438, %v3098
  %3191 = vst.msk [vmem:[#allocation2 + $0x14c] sm:$0xf] %vm1438, %v3100
  %3192 = vst.msk [vmem:[#allocation2 + $0x160] sm:$0xf] %vm1438, %v3102
  %3193 = vst.msk [vmem:[#allocation2 + $0x174] sm:$0xf] %vm1438, %v3104
  %3194 = vst.msk [vmem:[#allocation2 + $0x188] sm:$0xf] %vm1438, %v3106
  %3195 = vst.msk [vmem:[#allocation2 + $0x19c] sm:$0xf] %vm1438, %v3108
  %3196 = vst.msk [vmem:[#allocation2 + $0x1b0] sm:$0xf] %vm1438, %v3110
  %3197 = vst.msk [vmem:[#allocation2 + $0x1c4] sm:$0xf] %vm1438, %v3112
  %3198 = vst.msk [vmem:[#allocation2 + $0x1d8] sm:$0xf] %vm1438, %v3114
  %3199 = vst.msk [vmem:[#allocation2 + $0x1ec] sm:$0xf] %vm1438, %v3116
  %3200 = vst.msk [vmem:[#allocation2 + $0x200] sm:$0xf] %vm1438, %v3118
  %3201 = vst.msk [vmem:[#allocation2 + $0x214] sm:$0xf] %vm1438, %v3120
  %3202 = vst.msk [vmem:[#allocation2 + $0x228] sm:$0xf] %vm1438, %v3122
  %3203 = vst.msk [vmem:[#allocation2 + $0x23c] sm:$0xf] %vm1438, %v3124
  %3204 = vst.msk [vmem:[#allocation2 + $0x250] sm:$0xf] %vm1438, %v3126
  %3205 = vst.msk [vmem:[#allocation2 + $0x264] sm:$0xf] %vm1438, %v3128
  %3206 = vst.msk [vmem:[#allocation2 + $0x278] sm:$0xf] %vm1438, %v3130
  %3207 = vst.msk [vmem:[#allocation2 + $0x28c] sm:$0xf] %vm1438, %v3132
  %3208 = vst.msk [vmem:[#allocation2 + $0x2a0] sm:$0xf] %vm1438, %v3134
  %3209 = vst.msk [vmem:[#allocation2 + $0x2b4] sm:$0xf] %vm1438, %v3136
  %3210 = vst.msk [vmem:[#allocation2 + $0x2c8] sm:$0xf] %vm1438, %v3138
  %v3211 = vrot.slane %v1715, 1
  %v3212 = vrot.slane %v1716, 1
  %v3213 = vsel %vm1475, %v3211, %v3212
  %v3214 = vrot.slane %v1717, 1
  %v3215 = vsel %vm1475, %v3212, %v3214
  %v3216 = vrot.slane %v1718, 1
  %v3217 = vsel %vm1475, %v3214, %v3216
  %v3218 = vrot.slane %v1719, 1
  %v3219 = vsel %vm1475, %v3216, %v3218
  %v3220 = vrot.slane %v1720, 1
  %v3221 = vsel %vm1475, %v3218, %v3220
  %v3222 = vrot.slane %v1721, 1
  %v3223 = vsel %vm1475, %v3220, %v3222
  %v3224 = vrot.slane %v1722, 1
  %v3225 = vsel %vm1475, %v3222, %v3224
  %v3226 = vrot.slane %v2751, 1
  %v3227 = vsel %vm1475, %v3224, %v3226
  %v3228 = vrot.slane %v2919, 1
  %v3229 = vsel %vm1475, %v3226, %v3228
  %v3239 = vrot.slane %v1756, 1
  %v3240 = vrot.slane %v1757, 1
  %v3241 = vsel %vm1475, %v3239, %v3240
  %v3242 = vrot.slane %v1758, 1
  %v3243 = vsel %vm1475, %v3240, %v3242
  %v3244 = vrot.slane %v1759, 1
  %v3245 = vsel %vm1475, %v3242, %v3244
  %v3246 = vrot.slane %v1760, 1
  %v3247 = vsel %vm1475, %v3244, %v3246
  %v3248 = vrot.slane %v1761, 1
  %v3249 = vsel %vm1475, %v3246, %v3248
  %v3250 = vrot.slane %v1762, 1
  %v3251 = vsel %vm1475, %v3248, %v3250
  %v3252 = vrot.slane %v1763, 1
  %v3253 = vsel %vm1475, %v3250, %v3252
  %v3254 = vrot.slane %v2763, 1
  %v3255 = vsel %vm1475, %v3252, %v3254
  %v3256 = vrot.slane %v2958, 1
  %v3257 = vsel %vm1475, %v3254, %v3256
  %v3267 = vunpack.c.l.bf16 %v3213
  %v3268 = vunpack.c.h.bf16 %v3213
  %v3269 = vunpack.c.l.bf16 %v3215
  %v3270 = vunpack.c.h.bf16 %v3215
  %v3271 = vunpack.c.l.bf16 %v3217
  %v3272 = vunpack.c.h.bf16 %v3217
  %v3273 = vunpack.c.l.bf16 %v3219
  %v3274 = vunpack.c.h.bf16 %v3219
  %v3275 = vunpack.c.l.bf16 %v3221
  %v3276 = vunpack.c.h.bf16 %v3221
  %v3277 = vunpack.c.l.bf16 %v3223
  %v3278 = vunpack.c.h.bf16 %v3223
  %v3279 = vunpack.c.l.bf16 %v3225
  %v3280 = vunpack.c.h.bf16 %v3225
  %v3281 = vunpack.c.l.bf16 %v3227
  %v3282 = vunpack.c.h.bf16 %v3227
  %v3283 = vunpack.c.l.bf16 %v3229
  %v3284 = vunpack.c.h.bf16 %v3229
  %v3285 = vunpack.c.l.bf16 %v3241
  %v3286 = vunpack.c.h.bf16 %v3241
  %v3287 = vunpack.c.l.bf16 %v3243
  %v3288 = vunpack.c.h.bf16 %v3243
  %v3289 = vunpack.c.l.bf16 %v3245
  %v3290 = vunpack.c.h.bf16 %v3245
  %v3291 = vunpack.c.l.bf16 %v3247
  %v3292 = vunpack.c.h.bf16 %v3247
  %v3293 = vunpack.c.l.bf16 %v3249
  %v3294 = vunpack.c.h.bf16 %v3249
  %v3295 = vunpack.c.l.bf16 %v3251
  %v3296 = vunpack.c.h.bf16 %v3251
  %v3297 = vunpack.c.l.bf16 %v3253
  %v3298 = vunpack.c.h.bf16 %v3253
  %v3299 = vunpack.c.l.bf16 %v3255
  %v3300 = vunpack.c.h.bf16 %v3255
  %v3301 = vunpack.c.l.bf16 %v3257
  %v3302 = vunpack.c.h.bf16 %v3257
  %v3303 = vmul.f32 %v3267, %v1568
  %v3304 = vmul.f32 %v3268, %v1569
  %v3305 = vmul.f32 %v3269, %v1570
  %v3306 = vmul.f32 %v3270, %v1571
  %v3307 = vmul.f32 %v3271, %v1572
  %v3308 = vmul.f32 %v3272, %v1573
  %v3309 = vmul.f32 %v3273, %v1574
  %v3310 = vmul.f32 %v3274, %v1575
  %v3311 = vmul.f32 %v3275, %v1576
  %v3312 = vmul.f32 %v3276, %v1577
  %v3313 = vmul.f32 %v3277, %v1578
  %v3314 = vmul.f32 %v3278, %v1579
  %v3315 = vmul.f32 %v3279, %v1580
  %v3316 = vmul.f32 %v3280, %v1581
  %v3317 = vmul.f32 %v3281, %v1582
  %v3318 = vmul.f32 %v3282, %v1583
  %v3319 = vmul.f32 %v3283, %v1584
  %v3320 = vmul.f32 %v3284, %v1585
  %v3321 = vmul.f32 %v3285, %v1586
  %v3322 = vmul.f32 %v3286, %v1587
  %v3323 = vmul.f32 %v3287, %v1588
  %v3324 = vmul.f32 %v3288, %v1589
  %v3325 = vmul.f32 %v3289, %v1590
  %v3326 = vmul.f32 %v3290, %v1591
  %v3327 = vmul.f32 %v3291, %v1592
  %v3328 = vmul.f32 %v3292, %v1593
  %v3329 = vmul.f32 %v3293, %v1594
  %v3330 = vmul.f32 %v3294, %v1595
  %v3331 = vmul.f32 %v3295, %v1596
  %v3332 = vmul.f32 %v3296, %v1597
  %v3333 = vmul.f32 %v3297, %v1598
  %v3334 = vmul.f32 %v3298, %v1599
  %v3335 = vmul.f32 %v3299, %v1600
  %v3336 = vmul.f32 %v3300, %v1601
  %v3337 = vmul.f32 %v3301, %v1602
  %v3338 = vmul.f32 %v3302, %v1603
  %v3339 = vpack.c.bf16 %v3303, %v3303
  %v3340 = vpack.c.bf16 %v3304, %v3304
  %v3341 = vpack.c.bf16 %v3305, %v3305
  %v3342 = vpack.c.bf16 %v3306, %v3306
  %v3343 = vpack.c.bf16 %v3307, %v3307
  %v3344 = vpack.c.bf16 %v3308, %v3308
  %v3345 = vpack.c.bf16 %v3309, %v3309
  %v3346 = vpack.c.bf16 %v3310, %v3310
  %v3347 = vpack.c.bf16 %v3311, %v3311
  %v3348 = vpack.c.bf16 %v3312, %v3312
  %v3349 = vpack.c.bf16 %v3313, %v3313
  %v3350 = vpack.c.bf16 %v3314, %v3314
  %v3351 = vpack.c.bf16 %v3315, %v3315
  %v3352 = vpack.c.bf16 %v3316, %v3316
  %v3353 = vpack.c.bf16 %v3317, %v3317
  %v3354 = vpack.c.bf16 %v3318, %v3318
  %v3355 = vpack.c.bf16 %v3319, %v3319
  %v3356 = vpack.c.bf16 %v3320, %v3320
  %v3357 = vpack.c.bf16 %v3321, %v3321
  %v3358 = vpack.c.bf16 %v3322, %v3322
  %v3359 = vpack.c.bf16 %v3323, %v3323
  %v3360 = vpack.c.bf16 %v3324, %v3324
  %v3361 = vpack.c.bf16 %v3325, %v3325
  %v3362 = vpack.c.bf16 %v3326, %v3326
  %v3363 = vpack.c.bf16 %v3327, %v3327
  %v3364 = vpack.c.bf16 %v3328, %v3328
  %v3365 = vpack.c.bf16 %v3329, %v3329
  %v3366 = vpack.c.bf16 %v3330, %v3330
  %v3367 = vpack.c.bf16 %v3331, %v3331
  %v3368 = vpack.c.bf16 %v3332, %v3332
  %v3369 = vpack.c.bf16 %v3333, %v3333
  %v3370 = vpack.c.bf16 %v3334, %v3334
  %v3371 = vpack.c.bf16 %v3335, %v3335
  %v3372 = vpack.c.bf16 %v3336, %v3336
  %v3373 = vpack.c.bf16 %v3337, %v3337
  %v3374 = vpack.c.bf16 %v3338, %v3338
  %3375 = vst.msk [vmem:[#allocation2 + $0x10] sm:$0xf] %vm1062, %v3339
  %3376 = vst.msk [vmem:[#allocation2 + $0x24] sm:$0xf] %vm1062, %v3340
  %3377 = vst.msk [vmem:[#allocation2 + $0x38] sm:$0xf] %vm1062, %v3341
  %3378 = vst.msk [vmem:[#allocation2 + $0x4c] sm:$0xf] %vm1062, %v3342
  %3379 = vst.msk [vmem:[#allocation2 + $0x60] sm:$0xf] %vm1062, %v3343
  %3380 = vst.msk [vmem:[#allocation2 + $0x74] sm:$0xf] %vm1062, %v3344
  %3381 = vst.msk [vmem:[#allocation2 + $0x88] sm:$0xf] %vm1062, %v3345
  %3382 = vst.msk [vmem:[#allocation2 + $0x9c] sm:$0xf] %vm1062, %v3346
  %3383 = vst.msk [vmem:[#allocation2 + $0xb0] sm:$0xf] %vm1062, %v3347
  %3384 = vst.msk [vmem:[#allocation2 + $0xc4] sm:$0xf] %vm1062, %v3348
  %3385 = vst.msk [vmem:[#allocation2 + $0xd8] sm:$0xf] %vm1062, %v3349
  %3386 = vst.msk [vmem:[#allocation2 + $0xec] sm:$0xf] %vm1062, %v3350
  %3387 = vst.msk [vmem:[#allocation2 + $0x100] sm:$0xf] %vm1062, %v3351
  %3388 = vst.msk [vmem:[#allocation2 + $0x114] sm:$0xf] %vm1062, %v3352
  %3389 = vst.msk [vmem:[#allocation2 + $0x128] sm:$0xf] %vm1062, %v3353
  %3390 = vst.msk [vmem:[#allocation2 + $0x13c] sm:$0xf] %vm1062, %v3354
  %3391 = vst.msk [vmem:[#allocation2 + $0x150] sm:$0xf] %vm1062, %v3355
  %3392 = vst.msk [vmem:[#allocation2 + $0x164] sm:$0xf] %vm1062, %v3356
  %3393 = vst.msk [vmem:[#allocation2 + $0x178] sm:$0xf] %vm1062, %v3357
  %3394 = vst.msk [vmem:[#allocation2 + $0x18c] sm:$0xf] %vm1062, %v3358
  %3395 = vst.msk [vmem:[#allocation2 + $0x1a0] sm:$0xf] %vm1062, %v3359
  %3396 = vst.msk [vmem:[#allocation2 + $0x1b4] sm:$0xf] %vm1062, %v3360
  %3397 = vst.msk [vmem:[#allocation2 + $0x1c8] sm:$0xf] %vm1062, %v3361
  %3398 = vst.msk [vmem:[#allocation2 + $0x1dc] sm:$0xf] %vm1062, %v3362
  %3399 = vst.msk [vmem:[#allocation2 + $0x1f0] sm:$0xf] %vm1062, %v3363
  %3400 = vst.msk [vmem:[#allocation2 + $0x204] sm:$0xf] %vm1062, %v3364
  %3401 = vst.msk [vmem:[#allocation2 + $0x218] sm:$0xf] %vm1062, %v3365
  %3402 = vst.msk [vmem:[#allocation2 + $0x22c] sm:$0xf] %vm1062, %v3366
  %3403 = vst.msk [vmem:[#allocation2 + $0x240] sm:$0xf] %vm1062, %v3367
  %3404 = vst.msk [vmem:[#allocation2 + $0x254] sm:$0xf] %vm1062, %v3368
  %3405 = vst.msk [vmem:[#allocation2 + $0x268] sm:$0xf] %vm1062, %v3369
  %3406 = vst.msk [vmem:[#allocation2 + $0x27c] sm:$0xf] %vm1062, %v3370
  %3407 = vst.msk [vmem:[#allocation2 + $0x290] sm:$0xf] %vm1062, %v3371
  %3408 = vst.msk [vmem:[#allocation2 + $0x2a4] sm:$0xf] %vm1062, %v3372
  %3409 = vst.msk [vmem:[#allocation2 + $0x2b8] sm:$0xf] %vm1062, %v3373
  %3410 = vst.msk [vmem:[#allocation2 + $0x2cc] sm:$0xf] %vm1062, %v3374
  %v3411 = vld [vmem:[#allocation2] sm:$0xff]
  %v3412 = vld [vmem:[#allocation2 + $0x8] sm:$0xff]
  %v3413 = vld [vmem:[#allocation2 + $0x10] sm:$0xf]
  %v3414 = vld [vmem:[#allocation2 + $0x14] sm:$0xff]
  %v3415 = vld [vmem:[#allocation2 + $0x1c] sm:$0xff]
  %v3416 = vld [vmem:[#allocation2 + $0x24] sm:$0xf]
  %v3417 = vld [vmem:[#allocation2 + $0x28] sm:$0xff]
  %v3418 = vld [vmem:[#allocation2 + $0x30] sm:$0xff]
  %v3419 = vld [vmem:[#allocation2 + $0x38] sm:$0xf]
  %v3420 = vld [vmem:[#allocation2 + $0x3c] sm:$0xff]
  %v3421 = vld [vmem:[#allocation2 + $0x44] sm:$0xff]
  %v3422 = vld [vmem:[#allocation2 + $0x4c] sm:$0xf]
  %v3423 = vld [vmem:[#allocation2 + $0x50] sm:$0xff]
  %v3424 = vld [vmem:[#allocation2 + $0x58] sm:$0xff]
  %v3425 = vld [vmem:[#allocation2 + $0x60] sm:$0xf]
  %v3426 = vld [vmem:[#allocation2 + $0x64] sm:$0xff]
  %v3427 = vld [vmem:[#allocation2 + $0x6c] sm:$0xff]
  %v3428 = vld [vmem:[#allocation2 + $0x74] sm:$0xf]
  %v3429 = vld [vmem:[#allocation2 + $0x78] sm:$0xff]
  %v3430 = vld [vmem:[#allocation2 + $0x80] sm:$0xff]
  %v3431 = vld [vmem:[#allocation2 + $0x88] sm:$0xf]
  %v3432 = vld [vmem:[#allocation2 + $0x8c] sm:$0xff]
  %v3433 = vld [vmem:[#allocation2 + $0x94] sm:$0xff]
  %v3434 = vld [vmem:[#allocation2 + $0x9c] sm:$0xf]
  %v3435 = vld [vmem:[#allocation2 + $0xa0] sm:$0xff]
  %v3436 = vld [vmem:[#allocation2 + $0xa8] sm:$0xff]
  %v3437 = vld [vmem:[#allocation2 + $0xb0] sm:$0xf]
  %v3438 = vld [vmem:[#allocation2 + $0xb4] sm:$0xff]
  %v3439 = vld [vmem:[#allocation2 + $0xbc] sm:$0xff]
  %v3440 = vld [vmem:[#allocation2 + $0xc4] sm:$0xf]
  %v3441 = vld [vmem:[#allocation2 + $0xc8] sm:$0xff]
  %v3442 = vld [vmem:[#allocation2 + $0xd0] sm:$0xff]
  %v3443 = vld [vmem:[#allocation2 + $0xd8] sm:$0xf]
  %v3444 = vld [vmem:[#allocation2 + $0xdc] sm:$0xff]
  %v3445 = vld [vmem:[#allocation2 + $0xe4] sm:$0xff]
  %v3446 = vld [vmem:[#allocation2 + $0xec] sm:$0xf]
  %v3447 = vld [vmem:[#allocation2 + $0xf0] sm:$0xff]
  %v3448 = vld [vmem:[#allocation2 + $0xf8] sm:$0xff]
  %v3449 = vld [vmem:[#allocation2 + $0x100] sm:$0xf]
  %v3450 = vld [vmem:[#allocation2 + $0x104] sm:$0xff]
  %v3451 = vld [vmem:[#allocation2 + $0x10c] sm:$0xff]
  %v3452 = vld [vmem:[#allocation2 + $0x114] sm:$0xf]
  %v3453 = vld [vmem:[#allocation2 + $0x118] sm:$0xff]
  %v3454 = vld [vmem:[#allocation2 + $0x120] sm:$0xff]
  %v3455 = vld [vmem:[#allocation2 + $0x128] sm:$0xf]
  %v3456 = vld [vmem:[#allocation2 + $0x12c] sm:$0xff]
  %v3457 = vld [vmem:[#allocation2 + $0x134] sm:$0xff]
  %v3458 = vld [vmem:[#allocation2 + $0x13c] sm:$0xf]
  %v3459 = vld [vmem:[#allocation2 + $0x140] sm:$0xff]
  %v3460 = vld [vmem:[#allocation2 + $0x148] sm:$0xff]
  %v3461 = vld [vmem:[#allocation2 + $0x150] sm:$0xf]
  %v3462 = vld [vmem:[#allocation2 + $0x154] sm:$0xff]
  %v3463 = vld [vmem:[#allocation2 + $0x15c] sm:$0xff]
  %v3464 = vld [vmem:[#allocation2 + $0x164] sm:$0xf]
  %v3465 = vld [vmem:[#allocation2 + $0x168] sm:$0xff]
  %v3466 = vld [vmem:[#allocation2 + $0x170] sm:$0xff]
  %v3467 = vld [vmem:[#allocation2 + $0x178] sm:$0xf]
  %v3468 = vld [vmem:[#allocation2 + $0x17c] sm:$0xff]
  %v3469 = vld [vmem:[#allocation2 + $0x184] sm:$0xff]
  %v3470 = vld [vmem:[#allocation2 + $0x18c] sm:$0xf]
  %v3471 = vld [vmem:[#allocation2 + $0x190] sm:$0xff]
  %v3472 = vld [vmem:[#allocation2 + $0x198] sm:$0xff]
  %v3473 = vld [vmem:[#allocation2 + $0x1a0] sm:$0xf]
  %v3474 = vld [vmem:[#allocation2 + $0x1a4] sm:$0xff]
  %v3475 = vld [vmem:[#allocation2 + $0x1ac] sm:$0xff]
  %v3476 = vld [vmem:[#allocation2 + $0x1b4] sm:$0xf]
  %v3477 = vld [vmem:[#allocation2 + $0x1b8] sm:$0xff]
  %v3478 = vld [vmem:[#allocation2 + $0x1c0] sm:$0xff]
  %v3479 = vld [vmem:[#allocation2 + $0x1c8] sm:$0xf]
  %v3480 = vld [vmem:[#allocation2 + $0x1cc] sm:$0xff]
  %v3481 = vld [vmem:[#allocation2 + $0x1d4] sm:$0xff]
  %v3482 = vld [vmem:[#allocation2 + $0x1dc] sm:$0xf]
  %v3483 = vld [vmem:[#allocation2 + $0x1e0] sm:$0xff]
  %v3484 = vld [vmem:[#allocation2 + $0x1e8] sm:$0xff]
  %v3485 = vld [vmem:[#allocation2 + $0x1f0] sm:$0xf]
  %v3486 = vld [vmem:[#allocation2 + $0x1f4] sm:$0xff]
  %v3487 = vld [vmem:[#allocation2 + $0x1fc] sm:$0xff]
  %v3488 = vld [vmem:[#allocation2 + $0x204] sm:$0xf]
  %v3489 = vld [vmem:[#allocation2 + $0x208] sm:$0xff]
  %v3490 = vld [vmem:[#allocation2 + $0x210] sm:$0xff]
  %v3491 = vld [vmem:[#allocation2 + $0x218] sm:$0xf]
  %v3492 = vld [vmem:[#allocation2 + $0x21c] sm:$0xff]
  %v3493 = vld [vmem:[#allocation2 + $0x224] sm:$0xff]
  %v3494 = vld [vmem:[#allocation2 + $0x22c] sm:$0xf]
  %v3495 = vld [vmem:[#allocation2 + $0x230] sm:$0xff]
  %v3496 = vld [vmem:[#allocation2 + $0x238] sm:$0xff]
  %v3497 = vld [vmem:[#allocation2 + $0x240] sm:$0xf]
  %v3498 = vld [vmem:[#allocation2 + $0x244] sm:$0xff]
  %v3499 = vld [vmem:[#allocation2 + $0x24c] sm:$0xff]
  %v3500 = vld [vmem:[#allocation2 + $0x254] sm:$0xf]
  %v3501 = vld [vmem:[#allocation2 + $0x258] sm:$0xff]
  %v3502 = vld [vmem:[#allocation2 + $0x260] sm:$0xff]
  %v3503 = vld [vmem:[#allocation2 + $0x268] sm:$0xf]
  %v3504 = vld [vmem:[#allocation2 + $0x26c] sm:$0xff]
  %v3505 = vld [vmem:[#allocation2 + $0x274] sm:$0xff]
  %v3506 = vld [vmem:[#allocation2 + $0x27c] sm:$0xf]
  %v3507 = vld [vmem:[#allocation2 + $0x280] sm:$0xff]
  %v3508 = vld [vmem:[#allocation2 + $0x288] sm:$0xff]
  %v3509 = vld [vmem:[#allocation2 + $0x290] sm:$0xf]
  %v3510 = vld [vmem:[#allocation2 + $0x294] sm:$0xff]
  %v3511 = vld [vmem:[#allocation2 + $0x29c] sm:$0xff]
  %v3512 = vld [vmem:[#allocation2 + $0x2a4] sm:$0xf]
  %v3513 = vld [vmem:[#allocation2 + $0x2a8] sm:$0xff]
  %v3514 = vld [vmem:[#allocation2 + $0x2b0] sm:$0xff]
  %v3515 = vld [vmem:[#allocation2 + $0x2b8] sm:$0xf]
  %v3516 = vld [vmem:[#allocation2 + $0x2bc] sm:$0xff]
  %v3517 = vld [vmem:[#allocation2 + $0x2c4] sm:$0xff]
  %v3518 = vld [vmem:[#allocation2 + $0x2cc] sm:$0xf]
  %v3627 = vunpack.c.l.b16 %v3411
  %v3628 = vunpack.c.h.b16 %v3411
  %v3629 = vunpack.c.l.b16 %v3412
  %v3630 = vunpack.c.h.b16 %v3412
  %v3631 = vunpack.c.l.b16 %v3413
  %v3632 = vunpack.c.l.b16 %v3414
  %v3633 = vunpack.c.h.b16 %v3414
  %v3634 = vunpack.c.l.b16 %v3415
  %v3635 = vunpack.c.h.b16 %v3415
  %v3636 = vunpack.c.l.b16 %v3416
  %v3637 = vunpack.c.l.b16 %v3417
  %v3638 = vunpack.c.h.b16 %v3417
  %v3639 = vunpack.c.l.b16 %v3418
  %v3640 = vunpack.c.h.b16 %v3418
  %v3641 = vunpack.c.l.b16 %v3419
  %v3642 = vunpack.c.l.b16 %v3420
  %v3643 = vunpack.c.h.b16 %v3420
  %v3644 = vunpack.c.l.b16 %v3421
  %v3645 = vunpack.c.h.b16 %v3421
  %v3646 = vunpack.c.l.b16 %v3422
  %v3647 = vunpack.c.l.b16 %v3423
  %v3648 = vunpack.c.h.b16 %v3423
  %v3649 = vunpack.c.l.b16 %v3424
  %v3650 = vunpack.c.h.b16 %v3424
  %v3651 = vunpack.c.l.b16 %v3425
  %v3652 = vunpack.c.l.b16 %v3426
  %v3653 = vunpack.c.h.b16 %v3426
  %v3654 = vunpack.c.l.b16 %v3427
  %v3655 = vunpack.c.h.b16 %v3427
  %v3656 = vunpack.c.l.b16 %v3428
  %v3657 = vunpack.c.l.b16 %v3429
  %v3658 = vunpack.c.h.b16 %v3429
  %v3659 = vunpack.c.l.b16 %v3430
  %v3660 = vunpack.c.h.b16 %v3430
  %v3661 = vunpack.c.l.b16 %v3431
  %v3662 = vunpack.c.l.b16 %v3432
  %v3663 = vunpack.c.h.b16 %v3432
  %v3664 = vunpack.c.l.b16 %v3433
  %v3665 = vunpack.c.h.b16 %v3433
  %v3666 = vunpack.c.l.b16 %v3434
  %v3667 = vunpack.c.l.b16 %v3435
  %v3668 = vunpack.c.h.b16 %v3435
  %v3669 = vunpack.c.l.b16 %v3436
  %v3670 = vunpack.c.h.b16 %v3436
  %v3671 = vunpack.c.l.b16 %v3437
  %v3672 = vunpack.c.l.b16 %v3438
  %v3673 = vunpack.c.h.b16 %v3438
  %v3674 = vunpack.c.l.b16 %v3439
  %v3675 = vunpack.c.h.b16 %v3439
  %v3676 = vunpack.c.l.b16 %v3440
  %v3677 = vunpack.c.l.b16 %v3441
  %v3678 = vunpack.c.h.b16 %v3441
  %v3679 = vunpack.c.l.b16 %v3442
  %v3680 = vunpack.c.h.b16 %v3442
  %v3681 = vunpack.c.l.b16 %v3443
  %v3682 = vunpack.c.l.b16 %v3444
  %v3683 = vunpack.c.h.b16 %v3444
  %v3684 = vunpack.c.l.b16 %v3445
  %v3685 = vunpack.c.h.b16 %v3445
  %v3686 = vunpack.c.l.b16 %v3446
  %v3687 = vunpack.c.l.b16 %v3447
  %v3688 = vunpack.c.h.b16 %v3447
  %v3689 = vunpack.c.l.b16 %v3448
  %v3690 = vunpack.c.h.b16 %v3448
  %v3691 = vunpack.c.l.b16 %v3449
  %v3692 = vunpack.c.l.b16 %v3450
  %v3693 = vunpack.c.h.b16 %v3450
  %v3694 = vunpack.c.l.b16 %v3451
  %v3695 = vunpack.c.h.b16 %v3451
  %v3696 = vunpack.c.l.b16 %v3452
  %v3697 = vunpack.c.l.b16 %v3453
  %v3698 = vunpack.c.h.b16 %v3453
  %v3699 = vunpack.c.l.b16 %v3454
  %v3700 = vunpack.c.h.b16 %v3454
  %v3701 = vunpack.c.l.b16 %v3455
  %v3702 = vunpack.c.l.b16 %v3456
  %v3703 = vunpack.c.h.b16 %v3456
  %v3704 = vunpack.c.l.b16 %v3457
  %v3705 = vunpack.c.h.b16 %v3457
  %v3706 = vunpack.c.l.b16 %v3458
  %v3707 = vunpack.c.l.b16 %v3459
  %v3708 = vunpack.c.h.b16 %v3459
  %v3709 = vunpack.c.l.b16 %v3460
  %v3710 = vunpack.c.h.b16 %v3460
  %v3711 = vunpack.c.l.b16 %v3461
  %v3712 = vunpack.c.l.b16 %v3462
  %v3713 = vunpack.c.h.b16 %v3462
  %v3714 = vunpack.c.l.b16 %v3463
  %v3715 = vunpack.c.h.b16 %v3463
  %v3716 = vunpack.c.l.b16 %v3464
  %v3717 = vunpack.c.l.b16 %v3465
  %v3718 = vunpack.c.h.b16 %v3465
  %v3719 = vunpack.c.l.b16 %v3466
  %v3720 = vunpack.c.h.b16 %v3466
  %v3721 = vunpack.c.l.b16 %v3467
  %v3722 = vunpack.c.l.b16 %v3468
  %v3723 = vunpack.c.h.b16 %v3468
  %v3724 = vunpack.c.l.b16 %v3469
  %v3725 = vunpack.c.h.b16 %v3469
  %v3726 = vunpack.c.l.b16 %v3470
  %v3727 = vunpack.c.l.b16 %v3471
  %v3728 = vunpack.c.h.b16 %v3471
  %v3729 = vunpack.c.l.b16 %v3472
  %v3730 = vunpack.c.h.b16 %v3472
  %v3731 = vunpack.c.l.b16 %v3473
  %v3732 = vunpack.c.l.b16 %v3474
  %v3733 = vunpack.c.h.b16 %v3474
  %v3734 = vunpack.c.l.b16 %v3475
  %v3735 = vunpack.c.h.b16 %v3475
  %v3736 = vunpack.c.l.b16 %v3476
  %v3737 = vunpack.c.l.b16 %v3477
  %v3738 = vunpack.c.h.b16 %v3477
  %v3739 = vunpack.c.l.b16 %v3478
  %v3740 = vunpack.c.h.b16 %v3478
  %v3741 = vunpack.c.l.b16 %v3479
  %v3742 = vunpack.c.l.b16 %v3480
  %v3743 = vunpack.c.h.b16 %v3480
  %v3744 = vunpack.c.l.b16 %v3481
  %v3745 = vunpack.c.h.b16 %v3481
  %v3746 = vunpack.c.l.b16 %v3482
  %v3747 = vunpack.c.l.b16 %v3483
  %v3748 = vunpack.c.h.b16 %v3483
  %v3749 = vunpack.c.l.b16 %v3484
  %v3750 = vunpack.c.h.b16 %v3484
  %v3751 = vunpack.c.l.b16 %v3485
  %v3752 = vunpack.c.l.b16 %v3486
  %v3753 = vunpack.c.h.b16 %v3486
  %v3754 = vunpack.c.l.b16 %v3487
  %v3755 = vunpack.c.h.b16 %v3487
  %v3756 = vunpack.c.l.b16 %v3488
  %v3757 = vunpack.c.l.b16 %v3489
  %v3758 = vunpack.c.h.b16 %v3489
  %v3759 = vunpack.c.l.b16 %v3490
  %v3760 = vunpack.c.h.b16 %v3490
  %v3761 = vunpack.c.l.b16 %v3491
  %v3762 = vunpack.c.l.b16 %v3492
  %v3763 = vunpack.c.h.b16 %v3492
  %v3764 = vunpack.c.l.b16 %v3493
  %v3765 = vunpack.c.h.b16 %v3493
  %v3766 = vunpack.c.l.b16 %v3494
  %v3767 = vunpack.c.l.b16 %v3495
  %v3768 = vunpack.c.h.b16 %v3495
  %v3769 = vunpack.c.l.b16 %v3496
  %v3770 = vunpack.c.h.b16 %v3496
  %v3771 = vunpack.c.l.b16 %v3497
  %v3772 = vunpack.c.l.b16 %v3498
  %v3773 = vunpack.c.h.b16 %v3498
  %v3774 = vunpack.c.l.b16 %v3499
  %v3775 = vunpack.c.h.b16 %v3499
  %v3776 = vunpack.c.l.b16 %v3500
  %v3777 = vunpack.c.l.b16 %v3501
  %v3778 = vunpack.c.h.b16 %v3501
  %v3779 = vunpack.c.l.b16 %v3502
  %v3780 = vunpack.c.h.b16 %v3502
  %v3781 = vunpack.c.l.b16 %v3503
  %v3782 = vunpack.c.l.b16 %v3504
  %v3783 = vunpack.c.h.b16 %v3504
  %v3784 = vunpack.c.l.b16 %v3505
  %v3785 = vunpack.c.h.b16 %v3505
  %v3786 = vunpack.c.l.b16 %v3506
  %v3787 = vunpack.c.l.b16 %v3507
  %v3788 = vunpack.c.h.b16 %v3507
  %v3789 = vunpack.c.l.b16 %v3508
  %v3790 = vunpack.c.h.b16 %v3508
  %v3791 = vunpack.c.l.b16 %v3509
  %v3792 = vunpack.c.l.b16 %v3510
  %v3793 = vunpack.c.h.b16 %v3510
  %v3794 = vunpack.c.l.b16 %v3511
  %v3795 = vunpack.c.h.b16 %v3511
  %v3796 = vunpack.c.l.b16 %v3512
  %v3797 = vunpack.c.l.b16 %v3513
  %v3798 = vunpack.c.h.b16 %v3513
  %v3799 = vunpack.c.l.b16 %v3514
  %v3800 = vunpack.c.h.b16 %v3514
  %v3801 = vunpack.c.l.b16 %v3515
  %v3802 = vunpack.c.l.b16 %v3516
  %v3803 = vunpack.c.h.b16 %v3516
  %v3804 = vunpack.c.l.b16 %v3517
  %v3805 = vunpack.c.h.b16 %v3517
  %v3806 = vunpack.c.l.b16 %v3518
  %v3807 = vpack.c.b16 %v3632, %v3627
  %v3808 = vpack.c.b16 %v3633, %v3628
  %v3809 = vpack.c.b16 %v3634, %v3629
  %v3810 = vpack.c.b16 %v3635, %v3630
  %v3811 = vpack.c.b16 %v3636, %v3631
  %v3812 = vpack.c.b16 %v3642, %v3637
  %v3813 = vpack.c.b16 %v3643, %v3638
  %v3814 = vpack.c.b16 %v3644, %v3639
  %v3815 = vpack.c.b16 %v3645, %v3640
  %v3816 = vpack.c.b16 %v3646, %v3641
  %v3817 = vpack.c.b16 %v3652, %v3647
  %v3818 = vpack.c.b16 %v3653, %v3648
  %v3819 = vpack.c.b16 %v3654, %v3649
  %v3820 = vpack.c.b16 %v3655, %v3650
  %v3821 = vpack.c.b16 %v3656, %v3651
  %v3822 = vpack.c.b16 %v3662, %v3657
  %v3823 = vpack.c.b16 %v3663, %v3658
  %v3824 = vpack.c.b16 %v3664, %v3659
  %v3825 = vpack.c.b16 %v3665, %v3660
  %v3826 = vpack.c.b16 %v3666, %v3661
  %v3827 = vpack.c.b16 %v3672, %v3667
  %v3828 = vpack.c.b16 %v3673, %v3668
  %v3829 = vpack.c.b16 %v3674, %v3669
  %v3830 = vpack.c.b16 %v3675, %v3670
  %v3831 = vpack.c.b16 %v3676, %v3671
  %v3832 = vpack.c.b16 %v3682, %v3677
  %v3833 = vpack.c.b16 %v3683, %v3678
  %v3834 = vpack.c.b16 %v3684, %v3679
  %v3835 = vpack.c.b16 %v3685, %v3680
  %v3836 = vpack.c.b16 %v3686, %v3681
  %v3837 = vpack.c.b16 %v3692, %v3687
  %v3838 = vpack.c.b16 %v3693, %v3688
  %v3839 = vpack.c.b16 %v3694, %v3689
  %v3840 = vpack.c.b16 %v3695, %v3690
  %v3841 = vpack.c.b16 %v3696, %v3691
  %v3842 = vpack.c.b16 %v3702, %v3697
  %v3843 = vpack.c.b16 %v3703, %v3698
  %v3844 = vpack.c.b16 %v3704, %v3699
  %v3845 = vpack.c.b16 %v3705, %v3700
  %v3846 = vpack.c.b16 %v3706, %v3701
  %v3847 = vpack.c.b16 %v3712, %v3707
  %v3848 = vpack.c.b16 %v3713, %v3708
  %v3849 = vpack.c.b16 %v3714, %v3709
  %v3850 = vpack.c.b16 %v3715, %v3710
  %v3851 = vpack.c.b16 %v3716, %v3711
  %v3852 = vpack.c.b16 %v3722, %v3717
  %v3853 = vpack.c.b16 %v3723, %v3718
  %v3854 = vpack.c.b16 %v3724, %v3719
  %v3855 = vpack.c.b16 %v3725, %v3720
  %v3856 = vpack.c.b16 %v3726, %v3721
  %v3857 = vpack.c.b16 %v3732, %v3727
  %v3858 = vpack.c.b16 %v3733, %v3728
  %v3859 = vpack.c.b16 %v3734, %v3729
  %v3860 = vpack.c.b16 %v3735, %v3730
  %v3861 = vpack.c.b16 %v3736, %v3731
  %v3862 = vpack.c.b16 %v3742, %v3737
  %v3863 = vpack.c.b16 %v3743, %v3738
  %v3864 = vpack.c.b16 %v3744, %v3739
  %v3865 = vpack.c.b16 %v3745, %v3740
  %v3866 = vpack.c.b16 %v3746, %v3741
  %v3867 = vpack.c.b16 %v3752, %v3747
  %v3868 = vpack.c.b16 %v3753, %v3748
  %v3869 = vpack.c.b16 %v3754, %v3749
  %v3870 = vpack.c.b16 %v3755, %v3750
  %v3871 = vpack.c.b16 %v3756, %v3751
  %v3872 = vpack.c.b16 %v3762, %v3757
  %v3873 = vpack.c.b16 %v3763, %v3758
  %v3874 = vpack.c.b16 %v3764, %v3759
  %v3875 = vpack.c.b16 %v3765, %v3760
  %v3876 = vpack.c.b16 %v3766, %v3761
  %v3877 = vpack.c.b16 %v3772, %v3767
  %v3878 = vpack.c.b16 %v3773, %v3768
  %v3879 = vpack.c.b16 %v3774, %v3769
  %v3880 = vpack.c.b16 %v3775, %v3770
  %v3881 = vpack.c.b16 %v3776, %v3771
  %v3882 = vpack.c.b16 %v3782, %v3777
  %v3883 = vpack.c.b16 %v3783, %v3778
  %v3884 = vpack.c.b16 %v3784, %v3779
  %v3885 = vpack.c.b16 %v3785, %v3780
  %v3886 = vpack.c.b16 %v3786, %v3781
  %v3887 = vpack.c.b16 %v3792, %v3787
  %v3888 = vpack.c.b16 %v3793, %v3788
  %v3889 = vpack.c.b16 %v3794, %v3789
  %v3890 = vpack.c.b16 %v3795, %v3790
  %v3891 = vpack.c.b16 %v3796, %v3791
  %v3892 = vpack.c.b16 %v3802, %v3797
  %v3893 = vpack.c.b16 %v3803, %v3798
  %v3894 = vpack.c.b16 %v3804, %v3799
  %v3895 = vpack.c.b16 %v3805, %v3800
  %v3896 = vpack.c.b16 %v3806, %v3801
  %v4041 = vunpack.c.l.b16 %v126
  %v4042 = vunpack.c.l.b16 %v127
  %v4043 = vunpack.c.l.b16 %v128
  %v4044 = vunpack.c.l.b16 %v129
  %v4045 = vunpack.c.l.b16 %v130
  %v4046 = vunpack.c.l.b16 %v131
  %v4047 = vunpack.c.l.b16 %v132
  %v4048 = vunpack.c.l.b16 %v133
  %v4049 = vunpack.c.l.b16 %v134
  %v4050 = vunpack.c.l.b16 %v135
  %v4051 = vunpack.c.l.b16 %v136
  %v4052 = vunpack.c.l.b16 %v137
  %v4053 = vunpack.c.l.b16 %v138
  %v4054 = vunpack.c.l.b16 %v139
  %v4055 = vunpack.c.l.b16 %v140
  %v4056 = vunpack.c.l.b16 %v141
  %v4057 = vunpack.c.l.b16 %v142
  %v4058 = vunpack.c.l.b16 %v143
  %v4059 = vunpack.c.l.b16 %v144
  %v4060 = vunpack.c.l.b16 %v145
  %v4061 = vunpack.c.l.b16 %v146
  %v4062 = vunpack.c.l.b16 %v147
  %v4063 = vunpack.c.l.b16 %v148
  %v4064 = vunpack.c.l.b16 %v149
  %v4065 = vunpack.c.l.b16 %v150
  %v4066 = vunpack.c.l.b16 %v151
  %v4067 = vunpack.c.l.b16 %v152
  %v4068 = vunpack.c.l.b16 %v153
  %v4069 = vunpack.c.l.b16 %v154
  %v4070 = vunpack.c.l.b16 %v155
  %v4071 = vunpack.c.l.b16 %v156
  %v4072 = vunpack.c.l.b16 %v157
  %v4073 = vunpack.c.l.b16 %v158
  %v4074 = vunpack.c.l.b16 %v159
  %v4075 = vunpack.c.l.b16 %v160
  %v4076 = vunpack.c.l.b16 %v161
  %v4077 = vunpack.c.l.b16 %v162
  %v4078 = vunpack.c.l.b16 %v163
  %v4079 = vunpack.c.l.b16 %v164
  %v4080 = vunpack.c.l.b16 %v165
  %v4081 = vunpack.c.l.b16 %v166
  %v4082 = vunpack.c.l.b16 %v167
  %v4083 = vunpack.c.l.b16 %v168
  %v4084 = vunpack.c.l.b16 %v169
  %v4085 = vunpack.c.l.b16 %v170
  %v4086 = vunpack.c.l.b16 %v171
  %v4087 = vunpack.c.l.b16 %v172
  %v4088 = vunpack.c.l.b16 %v173
  %v4089 = vunpack.c.l.b16 %v174
  %v4090 = vunpack.c.l.b16 %v175
  %v4091 = vunpack.c.l.b16 %v176
  %v4092 = vunpack.c.l.b16 %v177
  %v4093 = vunpack.c.l.b16 %v178
  %v4094 = vunpack.c.l.b16 %v179
  %v4095 = vunpack.c.l.b16 %v180
  %v4096 = vunpack.c.l.b16 %v181
  %v4097 = vunpack.c.l.b16 %v182
  %v4098 = vunpack.c.l.b16 %v183
  %v4099 = vunpack.c.l.b16 %v184
  %v4100 = vunpack.c.l.b16 %v185
  %v4101 = vunpack.c.l.b16 %v186
  %v4102 = vunpack.c.l.b16 %v187
  %v4103 = vunpack.c.l.b16 %v188
  %v4104 = vunpack.c.l.b16 %v189
  %v4105 = vunpack.c.l.b16 %v190
  %v4106 = vunpack.c.l.b16 %v191
  %v4107 = vunpack.c.l.b16 %v192
  %v4108 = vunpack.c.l.b16 %v193
  %v4109 = vunpack.c.l.b16 %v194
  %v4110 = vunpack.c.l.b16 %v195
  %v4111 = vunpack.c.l.b16 %v196
  %v4112 = vunpack.c.l.b16 %v197
  %v4113 = vpack.c.b16 %v4042, %v4041
  %v4114 = vpack.c.b16 %v4044, %v4043
  %v4115 = vpack.c.b16 %v4046, %v4045
  %v4116 = vpack.c.b16 %v4048, %v4047
  %v4117 = vpack.c.b16 %v4050, %v4049
  %v4118 = vpack.c.b16 %v4052, %v4051
  %v4119 = vpack.c.b16 %v4054, %v4053
  %v4120 = vpack.c.b16 %v4056, %v4055
  %v4121 = vpack.c.b16 %v4058, %v4057
  %v4122 = vpack.c.b16 %v4060, %v4059
  %v4123 = vpack.c.b16 %v4062, %v4061
  %v4124 = vpack.c.b16 %v4064, %v4063
  %v4125 = vpack.c.b16 %v4066, %v4065
  %v4126 = vpack.c.b16 %v4068, %v4067
  %v4127 = vpack.c.b16 %v4070, %v4069
  %v4128 = vpack.c.b16 %v4072, %v4071
  %v4129 = vpack.c.b16 %v4074, %v4073
  %v4130 = vpack.c.b16 %v4076, %v4075
  %v4131 = vpack.c.b16 %v4078, %v4077
  %v4132 = vpack.c.b16 %v4080, %v4079
  %v4133 = vpack.c.b16 %v4082, %v4081
  %v4134 = vpack.c.b16 %v4084, %v4083
  %v4135 = vpack.c.b16 %v4086, %v4085
  %v4136 = vpack.c.b16 %v4088, %v4087
  %v4137 = vpack.c.b16 %v4090, %v4089
  %v4138 = vpack.c.b16 %v4092, %v4091
  %v4139 = vpack.c.b16 %v4094, %v4093
  %v4140 = vpack.c.b16 %v4096, %v4095
  %v4141 = vpack.c.b16 %v4098, %v4097
  %v4142 = vpack.c.b16 %v4100, %v4099
  %v4143 = vpack.c.b16 %v4102, %v4101
  %v4144 = vpack.c.b16 %v4104, %v4103
  %v4145 = vpack.c.b16 %v4106, %v4105
  %v4146 = vpack.c.b16 %v4108, %v4107
  %v4147 = vpack.c.b16 %v4110, %v4109
  %v4148 = vpack.c.b16 %v4112, %v4111
  %vm4185 = vcmask 523264
  %v4187 = vsel %vm4185, %v3811, 0
  %v4190 = vsel %vm4185, %v3816, 0
  %v4193 = vsel %vm4185, %v3821, 0
  %v4196 = vsel %vm4185, %v3826, 0
  %v4199 = vsel %vm4185, %v3831, 0
  %v4202 = vsel %vm4185, %v3836, 0
  %v4205 = vsel %vm4185, %v3841, 0
  %v4208 = vsel %vm4185, %v3846, 0
  %v4211 = vsel %vm4185, %v3851, 0
  %v4214 = vsel %vm4185, %v3856, 0
  %v4217 = vsel %vm4185, %v3861, 0
  %v4220 = vsel %vm4185, %v3866, 0
  %v4223 = vsel %vm4185, %v3871, 0
  %v4226 = vsel %vm4185, %v3876, 0
  %v4229 = vsel %vm4185, %v3881, 0
  %v4232 = vsel %vm4185, %v3886, 0
  %v4235 = vsel %vm4185, %v3891, 0
  %v4238 = vsel %vm4185, %v3896, 0
  %4240 = vmatpush.bf16.msra.mxu0 %v4120
  %4241 = vmatpush.bf16.msra.mxu0 %v4119
  %4242 = vmatpush.bf16.msra.mxu0 %v4118
  %4243 = vmatpush.bf16.msra.mxu0 %v4117
  %4244 = vmatpush.bf16.msra.mxu0 %v4116
  %4245 = vmatpush.bf16.msra.mxu0 %v4115
  %4246 = vmatpush.bf16.msra.mxu0 %v4114
  %4247 = vmatpush.bf16.msra.mxu0 %v4113
  %4248 = vmatmul.bf16.gmra.mxu0 %v3807
  %v4249 = vpop.f32.mrf.mxu0
  %v4250 = vadd.f32 0.0, %v4249
  %v4251 = vpop.f32.mrf.mxu0
  %v4252 = vadd.f32 0.0, %v4251
  %4253 = vmatmul.bf16.gmra.mxu0 %v3812
  %v4254 = vpop.f32.mrf.mxu0
  %v4255 = vadd.f32 0.0, %v4254
  %v4256 = vpop.f32.mrf.mxu0
  %v4257 = vadd.f32 0.0, %v4256
  %4258 = vmatmul.bf16.gmra.mxu0 %v3817
  %v4259 = vpop.f32.mrf.mxu0
  %v4260 = vadd.f32 0.0, %v4259
  %v4261 = vpop.f32.mrf.mxu0
  %v4262 = vadd.f32 0.0, %v4261
  %4263 = vmatmul.bf16.gmra.mxu0 %v3822
  %v4264 = vpop.f32.mrf.mxu0
  %v4265 = vadd.f32 0.0, %v4264
  %v4266 = vpop.f32.mrf.mxu0
  %v4267 = vadd.f32 0.0, %v4266
  %4268 = vmatmul.bf16.gmra.mxu0 %v3827
  %v4269 = vpop.f32.mrf.mxu0
  %v4270 = vadd.f32 0.0, %v4269
  %v4271 = vpop.f32.mrf.mxu0
  %v4272 = vadd.f32 0.0, %v4271
  %4273 = vmatmul.bf16.gmra.mxu0 %v3832
  %v4274 = vpop.f32.mrf.mxu0
  %v4275 = vadd.f32 0.0, %v4274
  %v4276 = vpop.f32.mrf.mxu0
  %v4277 = vadd.f32 0.0, %v4276
  %4278 = vmatmul.bf16.gmra.mxu0 %v3837
  %v4279 = vpop.f32.mrf.mxu0
  %v4280 = vadd.f32 0.0, %v4279
  %v4281 = vpop.f32.mrf.mxu0
  %v4282 = vadd.f32 0.0, %v4281
  %4283 = vmatmul.bf16.gmra.mxu0 %v3842
  %v4284 = vpop.f32.mrf.mxu0
  %v4285 = vadd.f32 0.0, %v4284
  %v4286 = vpop.f32.mrf.mxu0
  %v4287 = vadd.f32 0.0, %v4286
  %4288 = vmatmul.bf16.gmra.mxu0 %v3847
  %v4289 = vpop.f32.mrf.mxu0
  %v4290 = vadd.f32 0.0, %v4289
  %v4291 = vpop.f32.mrf.mxu0
  %v4292 = vadd.f32 0.0, %v4291
  %4293 = vmatmul.bf16.gmra.mxu0 %v3852
  %v4294 = vpop.f32.mrf.mxu0
  %v4295 = vadd.f32 0.0, %v4294
  %v4296 = vpop.f32.mrf.mxu0
  %v4297 = vadd.f32 0.0, %v4296
  %4298 = vmatmul.bf16.gmra.mxu0 %v3857
  %v4299 = vpop.f32.mrf.mxu0
  %v4300 = vadd.f32 0.0, %v4299
  %v4301 = vpop.f32.mrf.mxu0
  %v4302 = vadd.f32 0.0, %v4301
  %4303 = vmatmul.bf16.gmra.mxu0 %v3862
  %v4304 = vpop.f32.mrf.mxu0
  %v4305 = vadd.f32 0.0, %v4304
  %v4306 = vpop.f32.mrf.mxu0
  %v4307 = vadd.f32 0.0, %v4306
  %4308 = vmatmul.bf16.gmra.mxu0 %v3867
  %v4309 = vpop.f32.mrf.mxu0
  %v4310 = vadd.f32 0.0, %v4309
  %v4311 = vpop.f32.mrf.mxu0
  %v4312 = vadd.f32 0.0, %v4311
  %4313 = vmatmul.bf16.gmra.mxu0 %v3872
  %v4314 = vpop.f32.mrf.mxu0
  %v4315 = vadd.f32 0.0, %v4314
  %v4316 = vpop.f32.mrf.mxu0
  %v4317 = vadd.f32 0.0, %v4316
  %4318 = vmatmul.bf16.gmra.mxu0 %v3877
  %v4319 = vpop.f32.mrf.mxu0
  %v4320 = vadd.f32 0.0, %v4319
  %v4321 = vpop.f32.mrf.mxu0
  %v4322 = vadd.f32 0.0, %v4321
  %4323 = vmatmul.bf16.gmra.mxu0 %v3882
  %v4324 = vpop.f32.mrf.mxu0
  %v4325 = vadd.f32 0.0, %v4324
  %v4326 = vpop.f32.mrf.mxu0
  %v4327 = vadd.f32 0.0, %v4326
  %4328 = vmatmul.bf16.gmra.mxu0 %v3887
  %v4329 = vpop.f32.mrf.mxu0
  %v4330 = vadd.f32 0.0, %v4329
  %v4331 = vpop.f32.mrf.mxu0
  %v4332 = vadd.f32 0.0, %v4331
  %4333 = vmatmul.bf16.gmra.mxu0 %v3892
  %v4334 = vpop.f32.mrf.mxu0
  %v4335 = vadd.f32 0.0, %v4334
  %v4336 = vpop.f32.mrf.mxu0
  %v4337 = vadd.f32 0.0, %v4336
  %4338 = vdwg.mxu0
  %4339 = vmatpush.bf16.msra.mxu0 %v4128
  %4340 = vmatpush.bf16.msra.mxu0 %v4127
  %4341 = vmatpush.bf16.msra.mxu0 %v4126
  %4342 = vmatpush.bf16.msra.mxu0 %v4125
  %4343 = vmatpush.bf16.msra.mxu0 %v4124
  %4344 = vmatpush.bf16.msra.mxu0 %v4123
  %4345 = vmatpush.bf16.msra.mxu0 %v4122
  %4346 = vmatpush.bf16.msra.mxu0 %v4121
  %4347 = vmatmul.bf16.gmra.mxu0 %v3808
  %v4348 = vpop.f32.mrf.mxu0
  %v4349 = vadd.f32 %v4250, %v4348
  %v4350 = vpop.f32.mrf.mxu0
  %v4351 = vadd.f32 %v4252, %v4350
  %4352 = vmatmul.bf16.gmra.mxu0 %v3813
  %v4353 = vpop.f32.mrf.mxu0
  %v4354 = vadd.f32 %v4255, %v4353
  %v4355 = vpop.f32.mrf.mxu0
  %v4356 = vadd.f32 %v4257, %v4355
  %4357 = vmatmul.bf16.gmra.mxu0 %v3818
  %v4358 = vpop.f32.mrf.mxu0
  %v4359 = vadd.f32 %v4260, %v4358
  %v4360 = vpop.f32.mrf.mxu0
  %v4361 = vadd.f32 %v4262, %v4360
  %4362 = vmatmul.bf16.gmra.mxu0 %v3823
  %v4363 = vpop.f32.mrf.mxu0
  %v4364 = vadd.f32 %v4265, %v4363
  %v4365 = vpop.f32.mrf.mxu0
  %v4366 = vadd.f32 %v4267, %v4365
  %4367 = vmatmul.bf16.gmra.mxu0 %v3828
  %v4368 = vpop.f32.mrf.mxu0
  %v4369 = vadd.f32 %v4270, %v4368
  %v4370 = vpop.f32.mrf.mxu0
  %v4371 = vadd.f32 %v4272, %v4370
  %4372 = vmatmul.bf16.gmra.mxu0 %v3833
  %v4373 = vpop.f32.mrf.mxu0
  %v4374 = vadd.f32 %v4275, %v4373
  %v4375 = vpop.f32.mrf.mxu0
  %v4376 = vadd.f32 %v4277, %v4375
  %4377 = vmatmul.bf16.gmra.mxu0 %v3838
  %v4378 = vpop.f32.mrf.mxu0
  %v4379 = vadd.f32 %v4280, %v4378
  %v4380 = vpop.f32.mrf.mxu0
  %v4381 = vadd.f32 %v4282, %v4380
  %4382 = vmatmul.bf16.gmra.mxu0 %v3843
  %v4383 = vpop.f32.mrf.mxu0
  %v4384 = vadd.f32 %v4285, %v4383
  %v4385 = vpop.f32.mrf.mxu0
  %v4386 = vadd.f32 %v4287, %v4385
  %4387 = vmatmul.bf16.gmra.mxu0 %v3848
  %v4388 = vpop.f32.mrf.mxu0
  %v4389 = vadd.f32 %v4290, %v4388
  %v4390 = vpop.f32.mrf.mxu0
  %v4391 = vadd.f32 %v4292, %v4390
  %4392 = vmatmul.bf16.gmra.mxu0 %v3853
  %v4393 = vpop.f32.mrf.mxu0
  %v4394 = vadd.f32 %v4295, %v4393
  %v4395 = vpop.f32.mrf.mxu0
  %v4396 = vadd.f32 %v4297, %v4395
  %4397 = vmatmul.bf16.gmra.mxu0 %v3858
  %v4398 = vpop.f32.mrf.mxu0
  %v4399 = vadd.f32 %v4300, %v4398
  %v4400 = vpop.f32.mrf.mxu0
  %v4401 = vadd.f32 %v4302, %v4400
  %4402 = vmatmul.bf16.gmra.mxu0 %v3863
  %v4403 = vpop.f32.mrf.mxu0
  %v4404 = vadd.f32 %v4305, %v4403
  %v4405 = vpop.f32.mrf.mxu0
  %v4406 = vadd.f32 %v4307, %v4405
  %4407 = vmatmul.bf16.gmra.mxu0 %v3868
  %v4408 = vpop.f32.mrf.mxu0
  %v4409 = vadd.f32 %v4310, %v4408
  %v4410 = vpop.f32.mrf.mxu0
  %v4411 = vadd.f32 %v4312, %v4410
  %4412 = vmatmul.bf16.gmra.mxu0 %v3873
  %v4413 = vpop.f32.mrf.mxu0
  %v4414 = vadd.f32 %v4315, %v4413
  %v4415 = vpop.f32.mrf.mxu0
  %v4416 = vadd.f32 %v4317, %v4415
  %4417 = vmatmul.bf16.gmra.mxu0 %v3878
  %v4418 = vpop.f32.mrf.mxu0
  %v4419 = vadd.f32 %v4320, %v4418
  %v4420 = vpop.f32.mrf.mxu0
  %v4421 = vadd.f32 %v4322, %v4420
  %4422 = vmatmul.bf16.gmra.mxu0 %v3883
  %v4423 = vpop.f32.mrf.mxu0
  %v4424 = vadd.f32 %v4325, %v4423
  %v4425 = vpop.f32.mrf.mxu0
  %v4426 = vadd.f32 %v4327, %v4425
  %4427 = vmatmul.bf16.gmra.mxu0 %v3888
  %v4428 = vpop.f32.mrf.mxu0
  %v4429 = vadd.f32 %v4330, %v4428
  %v4430 = vpop.f32.mrf.mxu0
  %v4431 = vadd.f32 %v4332, %v4430
  %4432 = vmatmul.bf16.gmra.mxu0 %v3893
  %v4433 = vpop.f32.mrf.mxu0
  %v4434 = vadd.f32 %v4335, %v4433
  %v4435 = vpop.f32.mrf.mxu0
  %v4436 = vadd.f32 %v4337, %v4435
  %4437 = vdwg.mxu0
  %4438 = vmatpush.bf16.msra.mxu0 %v4136
  %4439 = vmatpush.bf16.msra.mxu0 %v4135
  %4440 = vmatpush.bf16.msra.mxu0 %v4134
  %4441 = vmatpush.bf16.msra.mxu0 %v4133
  %4442 = vmatpush.bf16.msra.mxu0 %v4132
  %4443 = vmatpush.bf16.msra.mxu0 %v4131
  %4444 = vmatpush.bf16.msra.mxu0 %v4130
  %4445 = vmatpush.bf16.msra.mxu0 %v4129
  %4446 = vmatmul.bf16.gmra.mxu0 %v3809
  %v4447 = vpop.f32.mrf.mxu0
  %v4448 = vadd.f32 %v4349, %v4447
  %v4449 = vpop.f32.mrf.mxu0
  %v4450 = vadd.f32 %v4351, %v4449
  %4451 = vmatmul.bf16.gmra.mxu0 %v3814
  %v4452 = vpop.f32.mrf.mxu0
  %v4453 = vadd.f32 %v4354, %v4452
  %v4454 = vpop.f32.mrf.mxu0
  %v4455 = vadd.f32 %v4356, %v4454
  %4456 = vmatmul.bf16.gmra.mxu0 %v3819
  %v4457 = vpop.f32.mrf.mxu0
  %v4458 = vadd.f32 %v4359, %v4457
  %v4459 = vpop.f32.mrf.mxu0
  %v4460 = vadd.f32 %v4361, %v4459
  %4461 = vmatmul.bf16.gmra.mxu0 %v3824
  %v4462 = vpop.f32.mrf.mxu0
  %v4463 = vadd.f32 %v4364, %v4462
  %v4464 = vpop.f32.mrf.mxu0
  %v4465 = vadd.f32 %v4366, %v4464
  %4466 = vmatmul.bf16.gmra.mxu0 %v3829
  %v4467 = vpop.f32.mrf.mxu0
  %v4468 = vadd.f32 %v4369, %v4467
  %v4469 = vpop.f32.mrf.mxu0
  %v4470 = vadd.f32 %v4371, %v4469
  %4471 = vmatmul.bf16.gmra.mxu0 %v3834
  %v4472 = vpop.f32.mrf.mxu0
  %v4473 = vadd.f32 %v4374, %v4472
  %v4474 = vpop.f32.mrf.mxu0
  %v4475 = vadd.f32 %v4376, %v4474
  %4476 = vmatmul.bf16.gmra.mxu0 %v3839
  %v4477 = vpop.f32.mrf.mxu0
  %v4478 = vadd.f32 %v4379, %v4477
  %v4479 = vpop.f32.mrf.mxu0
  %v4480 = vadd.f32 %v4381, %v4479
  %4481 = vmatmul.bf16.gmra.mxu0 %v3844
  %v4482 = vpop.f32.mrf.mxu0
  %v4483 = vadd.f32 %v4384, %v4482
  %v4484 = vpop.f32.mrf.mxu0
  %v4485 = vadd.f32 %v4386, %v4484
  %4486 = vmatmul.bf16.gmra.mxu0 %v3849
  %v4487 = vpop.f32.mrf.mxu0
  %v4488 = vadd.f32 %v4389, %v4487
  %v4489 = vpop.f32.mrf.mxu0
  %v4490 = vadd.f32 %v4391, %v4489
  %4491 = vmatmul.bf16.gmra.mxu0 %v3854
  %v4492 = vpop.f32.mrf.mxu0
  %v4493 = vadd.f32 %v4394, %v4492
  %v4494 = vpop.f32.mrf.mxu0
  %v4495 = vadd.f32 %v4396, %v4494
  %4496 = vmatmul.bf16.gmra.mxu0 %v3859
  %v4497 = vpop.f32.mrf.mxu0
  %v4498 = vadd.f32 %v4399, %v4497
  %v4499 = vpop.f32.mrf.mxu0
  %v4500 = vadd.f32 %v4401, %v4499
  %4501 = vmatmul.bf16.gmra.mxu0 %v3864
  %v4502 = vpop.f32.mrf.mxu0
  %v4503 = vadd.f32 %v4404, %v4502
  %v4504 = vpop.f32.mrf.mxu0
  %v4505 = vadd.f32 %v4406, %v4504
  %4506 = vmatmul.bf16.gmra.mxu0 %v3869
  %v4507 = vpop.f32.mrf.mxu0
  %v4508 = vadd.f32 %v4409, %v4507
  %v4509 = vpop.f32.mrf.mxu0
  %v4510 = vadd.f32 %v4411, %v4509
  %4511 = vmatmul.bf16.gmra.mxu0 %v3874
  %v4512 = vpop.f32.mrf.mxu0
  %v4513 = vadd.f32 %v4414, %v4512
  %v4514 = vpop.f32.mrf.mxu0
  %v4515 = vadd.f32 %v4416, %v4514
  %4516 = vmatmul.bf16.gmra.mxu0 %v3879
  %v4517 = vpop.f32.mrf.mxu0
  %v4518 = vadd.f32 %v4419, %v4517
  %v4519 = vpop.f32.mrf.mxu0
  %v4520 = vadd.f32 %v4421, %v4519
  %4521 = vmatmul.bf16.gmra.mxu0 %v3884
  %v4522 = vpop.f32.mrf.mxu0
  %v4523 = vadd.f32 %v4424, %v4522
  %v4524 = vpop.f32.mrf.mxu0
  %v4525 = vadd.f32 %v4426, %v4524
  %4526 = vmatmul.bf16.gmra.mxu0 %v3889
  %v4527 = vpop.f32.mrf.mxu0
  %v4528 = vadd.f32 %v4429, %v4527
  %v4529 = vpop.f32.mrf.mxu0
  %v4530 = vadd.f32 %v4431, %v4529
  %4531 = vmatmul.bf16.gmra.mxu0 %v3894
  %v4532 = vpop.f32.mrf.mxu0
  %v4533 = vadd.f32 %v4434, %v4532
  %v4534 = vpop.f32.mrf.mxu0
  %v4535 = vadd.f32 %v4436, %v4534
  %4536 = vdwg.mxu0
  %4537 = vmatpush.bf16.msra.mxu0 %v4144
  %4538 = vmatpush.bf16.msra.mxu0 %v4143
  %4539 = vmatpush.bf16.msra.mxu0 %v4142
  %4540 = vmatpush.bf16.msra.mxu0 %v4141
  %4541 = vmatpush.bf16.msra.mxu0 %v4140
  %4542 = vmatpush.bf16.msra.mxu0 %v4139
  %4543 = vmatpush.bf16.msra.mxu0 %v4138
  %4544 = vmatpush.bf16.msra.mxu0 %v4137
  %4545 = vmatmul.bf16.gmra.mxu0 %v3810
  %v4546 = vpop.f32.mrf.mxu0
  %v4547 = vadd.f32 %v4448, %v4546
  %v4548 = vpop.f32.mrf.mxu0
  %v4549 = vadd.f32 %v4450, %v4548
  %4550 = vmatmul.bf16.gmra.mxu0 %v3815
  %v4551 = vpop.f32.mrf.mxu0
  %v4552 = vadd.f32 %v4453, %v4551
  %v4553 = vpop.f32.mrf.mxu0
  %v4554 = vadd.f32 %v4455, %v4553
  %4555 = vmatmul.bf16.gmra.mxu0 %v3820
  %v4556 = vpop.f32.mrf.mxu0
  %v4557 = vadd.f32 %v4458, %v4556
  %v4558 = vpop.f32.mrf.mxu0
  %v4559 = vadd.f32 %v4460, %v4558
  %4560 = vmatmul.bf16.gmra.mxu0 %v3825
  %v4561 = vpop.f32.mrf.mxu0
  %v4562 = vadd.f32 %v4463, %v4561
  %v4563 = vpop.f32.mrf.mxu0
  %v4564 = vadd.f32 %v4465, %v4563
  %4565 = vmatmul.bf16.gmra.mxu0 %v3830
  %v4566 = vpop.f32.mrf.mxu0
  %v4567 = vadd.f32 %v4468, %v4566
  %v4568 = vpop.f32.mrf.mxu0
  %v4569 = vadd.f32 %v4470, %v4568
  %4570 = vmatmul.bf16.gmra.mxu0 %v3835
  %v4571 = vpop.f32.mrf.mxu0
  %v4572 = vadd.f32 %v4473, %v4571
  %v4573 = vpop.f32.mrf.mxu0
  %v4574 = vadd.f32 %v4475, %v4573
  %4575 = vmatmul.bf16.gmra.mxu0 %v3840
  %v4576 = vpop.f32.mrf.mxu0
  %v4577 = vadd.f32 %v4478, %v4576
  %v4578 = vpop.f32.mrf.mxu0
  %v4579 = vadd.f32 %v4480, %v4578
  %4580 = vmatmul.bf16.gmra.mxu0 %v3845
  %v4581 = vpop.f32.mrf.mxu0
  %v4582 = vadd.f32 %v4483, %v4581
  %v4583 = vpop.f32.mrf.mxu0
  %v4584 = vadd.f32 %v4485, %v4583
  %4585 = vmatmul.bf16.gmra.mxu0 %v3850
  %v4586 = vpop.f32.mrf.mxu0
  %v4587 = vadd.f32 %v4488, %v4586
  %v4588 = vpop.f32.mrf.mxu0
  %v4589 = vadd.f32 %v4490, %v4588
  %4590 = vmatmul.bf16.gmra.mxu0 %v3855
  %v4591 = vpop.f32.mrf.mxu0
  %v4592 = vadd.f32 %v4493, %v4591
  %v4593 = vpop.f32.mrf.mxu0
  %v4594 = vadd.f32 %v4495, %v4593
  %4595 = vmatmul.bf16.gmra.mxu0 %v3860
  %v4596 = vpop.f32.mrf.mxu0
  %v4597 = vadd.f32 %v4498, %v4596
  %v4598 = vpop.f32.mrf.mxu0
  %v4599 = vadd.f32 %v4500, %v4598
  %4600 = vmatmul.bf16.gmra.mxu0 %v3865
  %v4601 = vpop.f32.mrf.mxu0
  %v4602 = vadd.f32 %v4503, %v4601
  %v4603 = vpop.f32.mrf.mxu0
  %v4604 = vadd.f32 %v4505, %v4603
  %4605 = vmatmul.bf16.gmra.mxu0 %v3870
  %v4606 = vpop.f32.mrf.mxu0
  %v4607 = vadd.f32 %v4508, %v4606
  %v4608 = vpop.f32.mrf.mxu0
  %v4609 = vadd.f32 %v4510, %v4608
  %4610 = vmatmul.bf16.gmra.mxu0 %v3875
  %v4611 = vpop.f32.mrf.mxu0
  %v4612 = vadd.f32 %v4513, %v4611
  %v4613 = vpop.f32.mrf.mxu0
  %v4614 = vadd.f32 %v4515, %v4613
  %4615 = vmatmul.bf16.gmra.mxu0 %v3880
  %v4616 = vpop.f32.mrf.mxu0
  %v4617 = vadd.f32 %v4518, %v4616
  %v4618 = vpop.f32.mrf.mxu0
  %v4619 = vadd.f32 %v4520, %v4618
  %4620 = vmatmul.bf16.gmra.mxu0 %v3885
  %v4621 = vpop.f32.mrf.mxu0
  %v4622 = vadd.f32 %v4523, %v4621
  %v4623 = vpop.f32.mrf.mxu0
  %v4624 = vadd.f32 %v4525, %v4623
  %4625 = vmatmul.bf16.gmra.mxu0 %v3890
  %v4626 = vpop.f32.mrf.mxu0
  %v4627 = vadd.f32 %v4528, %v4626
  %v4628 = vpop.f32.mrf.mxu0
  %v4629 = vadd.f32 %v4530, %v4628
  %4630 = vmatmul.bf16.gmra.mxu0 %v3895
  %v4631 = vpop.f32.mrf.mxu0
  %v4632 = vadd.f32 %v4533, %v4631
  %v4633 = vpop.f32.mrf.mxu0
  %v4634 = vadd.f32 %v4535, %v4633
  %4635 = vdwg.mxu0
  %4636 = vmatpush.bf16.msra.mxu0 0
  %4637 = vmatpush.bf16.msra.mxu0 0
  %4638 = vmatpush.bf16.msra.mxu0 0
  %4639 = vmatpush.bf16.msra.mxu0 0
  %4640 = vmatpush.bf16.msra.mxu0 %v4148
  %4641 = vmatpush.bf16.msra.mxu0 %v4147
  %4642 = vmatpush.bf16.msra.mxu0 %v4146
  %4643 = vmatpush.bf16.msra.mxu0 %v4145
  %4644 = vmatmul.bf16.gmra.mxu0 %v4187
  %v4645 = vpop.f32.mrf.mxu0
  %v4646 = vadd.f32 %v4547, %v4645
  %v4647 = vpop.f32.mrf.mxu0
  %v4648 = vadd.f32 %v4549, %v4647
  %4649 = vmatmul.bf16.gmra.mxu0 %v4190
  %v4650 = vpop.f32.mrf.mxu0
  %v4651 = vadd.f32 %v4552, %v4650
  %v4652 = vpop.f32.mrf.mxu0
  %v4653 = vadd.f32 %v4554, %v4652
  %4654 = vmatmul.bf16.gmra.mxu0 %v4193
  %v4655 = vpop.f32.mrf.mxu0
  %v4656 = vadd.f32 %v4557, %v4655
  %v4657 = vpop.f32.mrf.mxu0
  %v4658 = vadd.f32 %v4559, %v4657
  %4659 = vmatmul.bf16.gmra.mxu0 %v4196
  %v4660 = vpop.f32.mrf.mxu0
  %v4661 = vadd.f32 %v4562, %v4660
  %v4662 = vpop.f32.mrf.mxu0
  %v4663 = vadd.f32 %v4564, %v4662
  %4664 = vmatmul.bf16.gmra.mxu0 %v4199
  %v4665 = vpop.f32.mrf.mxu0
  %v4666 = vadd.f32 %v4567, %v4665
  %v4667 = vpop.f32.mrf.mxu0
  %v4668 = vadd.f32 %v4569, %v4667
  %4669 = vmatmul.bf16.gmra.mxu0 %v4202
  %v4670 = vpop.f32.mrf.mxu0
  %v4671 = vadd.f32 %v4572, %v4670
  %v4672 = vpop.f32.mrf.mxu0
  %v4673 = vadd.f32 %v4574, %v4672
  %4674 = vmatmul.bf16.gmra.mxu0 %v4205
  %v4675 = vpop.f32.mrf.mxu0
  %v4676 = vadd.f32 %v4577, %v4675
  %v4677 = vpop.f32.mrf.mxu0
  %v4678 = vadd.f32 %v4579, %v4677
  %4679 = vmatmul.bf16.gmra.mxu0 %v4208
  %v4680 = vpop.f32.mrf.mxu0
  %v4681 = vadd.f32 %v4582, %v4680
  %v4682 = vpop.f32.mrf.mxu0
  %v4683 = vadd.f32 %v4584, %v4682
  %4684 = vmatmul.bf16.gmra.mxu0 %v4211
  %v4685 = vpop.f32.mrf.mxu0
  %v4686 = vadd.f32 %v4587, %v4685
  %v4687 = vpop.f32.mrf.mxu0
  %v4688 = vadd.f32 %v4589, %v4687
  %4689 = vmatmul.bf16.gmra.mxu0 %v4214
  %v4690 = vpop.f32.mrf.mxu0
  %v4691 = vadd.f32 %v4592, %v4690
  %v4692 = vpop.f32.mrf.mxu0
  %v4693 = vadd.f32 %v4594, %v4692
  %4694 = vmatmul.bf16.gmra.mxu0 %v4217
  %v4695 = vpop.f32.mrf.mxu0
  %v4696 = vadd.f32 %v4597, %v4695
  %v4697 = vpop.f32.mrf.mxu0
  %v4698 = vadd.f32 %v4599, %v4697
  %4699 = vmatmul.bf16.gmra.mxu0 %v4220
  %v4700 = vpop.f32.mrf.mxu0
  %v4701 = vadd.f32 %v4602, %v4700
  %v4702 = vpop.f32.mrf.mxu0
  %v4703 = vadd.f32 %v4604, %v4702
  %4704 = vmatmul.bf16.gmra.mxu0 %v4223
  %v4705 = vpop.f32.mrf.mxu0
  %v4706 = vadd.f32 %v4607, %v4705
  %v4707 = vpop.f32.mrf.mxu0
  %v4708 = vadd.f32 %v4609, %v4707
  %4709 = vmatmul.bf16.gmra.mxu0 %v4226
  %v4710 = vpop.f32.mrf.mxu0
  %v4711 = vadd.f32 %v4612, %v4710
  %v4712 = vpop.f32.mrf.mxu0
  %v4713 = vadd.f32 %v4614, %v4712
  %4714 = vmatmul.bf16.gmra.mxu0 %v4229
  %v4715 = vpop.f32.mrf.mxu0
  %v4716 = vadd.f32 %v4617, %v4715
  %v4717 = vpop.f32.mrf.mxu0
  %v4718 = vadd.f32 %v4619, %v4717
  %4719 = vmatmul.bf16.gmra.mxu0 %v4232
  %v4720 = vpop.f32.mrf.mxu0
  %v4721 = vadd.f32 %v4622, %v4720
  %v4722 = vpop.f32.mrf.mxu0
  %v4723 = vadd.f32 %v4624, %v4722
  %4724 = vmatmul.bf16.gmra.mxu0 %v4235
  %v4725 = vpop.f32.mrf.mxu0
  %v4726 = vadd.f32 %v4627, %v4725
  %v4727 = vpop.f32.mrf.mxu0
  %v4728 = vadd.f32 %v4629, %v4727
  %4729 = vmatmul.bf16.gmra.mxu0 %v4238
  %v4730 = vpop.f32.mrf.mxu0
  %v4731 = vadd.f32 %v4632, %v4730
  %v4732 = vpop.f32.mrf.mxu0
  %v4733 = vadd.f32 %v4634, %v4732
  %4734 = vdwg.mxu0
  %v4735 = vld [vmem:[%s3] sm:$0x1]
  %v4737 = vperm.slane %v4735, 0
  %v4739 = vmul.f32 %v4646, %v4737
  %v4740 = vmul.f32 %v4648, %v4737
  %v4741 = vmul.f32 %v4651, %v4737
  %v4742 = vmul.f32 %v4653, %v4737
  %v4743 = vmul.f32 %v4656, %v4737
  %v4744 = vmul.f32 %v4658, %v4737
  %v4745 = vmul.f32 %v4661, %v4737
  %v4746 = vmul.f32 %v4663, %v4737
  %v4747 = vmul.f32 %v4666, %v4737
  %v4748 = vmul.f32 %v4668, %v4737
  %v4749 = vmul.f32 %v4671, %v4737
  %v4750 = vmul.f32 %v4673, %v4737
  %v4751 = vmul.f32 %v4676, %v4737
  %v4752 = vmul.f32 %v4678, %v4737
  %v4753 = vmul.f32 %v4681, %v4737
  %v4754 = vmul.f32 %v4683, %v4737
  %v4755 = vmul.f32 %v4686, %v4737
  %v4756 = vmul.f32 %v4688, %v4737
  %v4757 = vmul.f32 %v4691, %v4737
  %v4758 = vmul.f32 %v4693, %v4737
  %v4759 = vmul.f32 %v4696, %v4737
  %v4760 = vmul.f32 %v4698, %v4737
  %v4761 = vmul.f32 %v4701, %v4737
  %v4762 = vmul.f32 %v4703, %v4737
  %v4763 = vmul.f32 %v4706, %v4737
  %v4764 = vmul.f32 %v4708, %v4737
  %v4765 = vmul.f32 %v4711, %v4737
  %v4766 = vmul.f32 %v4713, %v4737
  %v4767 = vmul.f32 %v4716, %v4737
  %v4768 = vmul.f32 %v4718, %v4737
  %v4769 = vmul.f32 %v4721, %v4737
  %v4770 = vmul.f32 %v4723, %v4737
  %v4771 = vmul.f32 %v4726, %v4737
  %v4772 = vmul.f32 %v4728, %v4737
  %v4773 = vmul.f32 %v4731, %v4737
  %v4774 = vmul.f32 %v4733, %v4737
  %v4775 = vld [vmem:[%s4] sm:$0x1]
  %v4777 = vperm.slane %v4775, 0
  %v4779 = vadd.f32 %v4739, %v4777
  %v4780 = vadd.f32 %v4740, %v4777
  %v4781 = vadd.f32 %v4741, %v4777
  %v4782 = vadd.f32 %v4742, %v4777
  %v4783 = vadd.f32 %v4743, %v4777
  %v4784 = vadd.f32 %v4744, %v4777
  %v4785 = vadd.f32 %v4745, %v4777
  %v4786 = vadd.f32 %v4746, %v4777
  %v4787 = vadd.f32 %v4747, %v4777
  %v4788 = vadd.f32 %v4748, %v4777
  %v4789 = vadd.f32 %v4749, %v4777
  %v4790 = vadd.f32 %v4750, %v4777
  %v4791 = vadd.f32 %v4751, %v4777
  %v4792 = vadd.f32 %v4752, %v4777
  %v4793 = vadd.f32 %v4753, %v4777
  %v4794 = vadd.f32 %v4754, %v4777
  %v4795 = vadd.f32 %v4755, %v4777
  %v4796 = vadd.f32 %v4756, %v4777
  %v4797 = vadd.f32 %v4757, %v4777
  %v4798 = vadd.f32 %v4758, %v4777
  %v4799 = vadd.f32 %v4759, %v4777
  %v4800 = vadd.f32 %v4760, %v4777
  %v4801 = vadd.f32 %v4761, %v4777
  %v4802 = vadd.f32 %v4762, %v4777
  %v4803 = vadd.f32 %v4763, %v4777
  %v4804 = vadd.f32 %v4764, %v4777
  %v4805 = vadd.f32 %v4765, %v4777
  %v4806 = vadd.f32 %v4766, %v4777
  %v4807 = vadd.f32 %v4767, %v4777
  %v4808 = vadd.f32 %v4768, %v4777
  %v4809 = vadd.f32 %v4769, %v4777
  %v4810 = vadd.f32 %v4770, %v4777
  %v4811 = vadd.f32 %v4771, %v4777
  %v4812 = vadd.f32 %v4772, %v4777
  %v4813 = vadd.f32 %v4773, %v4777
  %v4814 = vadd.f32 %v4774, %v4777
  %v4815 = vxor.u32 %v4779, 2147483648
  %v4816 = vxor.u32 %v4780, 2147483648
  %v4817 = vxor.u32 %v4781, 2147483648
  %v4818 = vxor.u32 %v4782, 2147483648
  %v4819 = vxor.u32 %v4783, 2147483648
  %v4820 = vxor.u32 %v4784, 2147483648
  %v4821 = vxor.u32 %v4785, 2147483648
  %v4822 = vxor.u32 %v4786, 2147483648
  %v4823 = vxor.u32 %v4787, 2147483648
  %v4824 = vxor.u32 %v4788, 2147483648
  %v4825 = vxor.u32 %v4789, 2147483648
  %v4826 = vxor.u32 %v4790, 2147483648
  %v4827 = vxor.u32 %v4791, 2147483648
  %v4828 = vxor.u32 %v4792, 2147483648
  %v4829 = vxor.u32 %v4793, 2147483648
  %v4830 = vxor.u32 %v4794, 2147483648
  %v4831 = vxor.u32 %v4795, 2147483648
  %v4832 = vxor.u32 %v4796, 2147483648
  %v4833 = vxor.u32 %v4797, 2147483648
  %v4834 = vxor.u32 %v4798, 2147483648
  %v4835 = vxor.u32 %v4799, 2147483648
  %v4836 = vxor.u32 %v4800, 2147483648
  %v4837 = vxor.u32 %v4801, 2147483648
  %v4838 = vxor.u32 %v4802, 2147483648
  %v4839 = vxor.u32 %v4803, 2147483648
  %v4840 = vxor.u32 %v4804, 2147483648
  %v4841 = vxor.u32 %v4805, 2147483648
  %v4842 = vxor.u32 %v4806, 2147483648
  %v4843 = vxor.u32 %v4807, 2147483648
  %v4844 = vxor.u32 %v4808, 2147483648
  %v4845 = vxor.u32 %v4809, 2147483648
  %v4846 = vxor.u32 %v4810, 2147483648
  %v4847 = vxor.u32 %v4811, 2147483648
  %v4848 = vxor.u32 %v4812, 2147483648
  %v4849 = vxor.u32 %v4813, 2147483648
  %v4850 = vxor.u32 %v4814, 2147483648
  %v4851 = vmul.f32 %v4815, 1.442695
  %v4852 = vpow.pop %v4851
  %v4853 = vmul.f32 %v4816, 1.442695
  %v4854 = vpow.pop %v4853
  %v4855 = vmul.f32 %v4817, 1.442695
  %v4856 = vpow.pop %v4855
  %v4857 = vmul.f32 %v4818, 1.442695
  %v4858 = vpow.pop %v4857
  %v4859 = vmul.f32 %v4819, 1.442695
  %v4860 = vpow.pop %v4859
  %v4861 = vmul.f32 %v4820, 1.442695
  %v4862 = vpow.pop %v4861
  %v4863 = vmul.f32 %v4821, 1.442695
  %v4864 = vpow.pop %v4863
  %v4865 = vmul.f32 %v4822, 1.442695
  %v4866 = vpow.pop %v4865
  %v4867 = vmul.f32 %v4823, 1.442695
  %v4868 = vpow.pop %v4867
  %v4869 = vmul.f32 %v4824, 1.442695
  %v4870 = vpow.pop %v4869
  %v4871 = vmul.f32 %v4825, 1.442695
  %v4872 = vpow.pop %v4871
  %v4873 = vmul.f32 %v4826, 1.442695
  %v4874 = vpow.pop %v4873
  %v4875 = vmul.f32 %v4827, 1.442695
  %v4876 = vpow.pop %v4875
  %v4877 = vmul.f32 %v4828, 1.442695
  %v4878 = vpow.pop %v4877
  %v4879 = vmul.f32 %v4829, 1.442695
  %v4880 = vpow.pop %v4879
  %v4881 = vmul.f32 %v4830, 1.442695
  %v4882 = vpow.pop %v4881
  %v4883 = vmul.f32 %v4831, 1.442695
  %v4884 = vpow.pop %v4883
  %v4885 = vmul.f32 %v4832, 1.442695
  %v4886 = vpow.pop %v4885
  %v4887 = vmul.f32 %v4833, 1.442695
  %v4888 = vpow.pop %v4887
  %v4889 = vmul.f32 %v4834, 1.442695
  %v4890 = vpow.pop %v4889
  %v4891 = vmul.f32 %v4835, 1.442695
  %v4892 = vpow.pop %v4891
  %v4893 = vmul.f32 %v4836, 1.442695
  %v4894 = vpow.pop %v4893
  %v4895 = vmul.f32 %v4837, 1.442695
  %v4896 = vpow.pop %v4895
  %v4897 = vmul.f32 %v4838, 1.442695
  %v4898 = vpow.pop %v4897
  %v4899 = vmul.f32 %v4839, 1.442695
  %v4900 = vpow.pop %v4899
  %v4901 = vmul.f32 %v4840, 1.442695
  %v4902 = vpow.pop %v4901
  %v4903 = vmul.f32 %v4841, 1.442695
  %v4904 = vpow.pop %v4903
  %v4905 = vmul.f32 %v4842, 1.442695
  %v4906 = vpow.pop %v4905
  %v4907 = vmul.f32 %v4843, 1.442695
  %v4908 = vpow.pop %v4907
  %v4909 = vmul.f32 %v4844, 1.442695
  %v4910 = vpow.pop %v4909
  %v4911 = vmul.f32 %v4845, 1.442695
  %v4912 = vpow.pop %v4911
  %v4913 = vmul.f32 %v4846, 1.442695
  %v4914 = vpow.pop %v4913
  %v4915 = vmul.f32 %v4847, 1.442695
  %v4916 = vpow.pop %v4915
  %v4917 = vmul.f32 %v4848, 1.442695
  %v4918 = vpow.pop %v4917
  %v4919 = vmul.f32 %v4849, 1.442695
  %v4920 = vpow.pop %v4919
  %v4921 = vmul.f32 %v4850, 1.442695
  %v4922 = vpow.pop %v4921
  %v4923 = vadd.f32 %v4852, 1.0
  %v4924 = vadd.f32 %v4854, 1.0
  %v4925 = vadd.f32 %v4856, 1.0
  %v4926 = vadd.f32 %v4858, 1.0
  %v4927 = vadd.f32 %v4860, 1.0
  %v4928 = vadd.f32 %v4862, 1.0
  %v4929 = vadd.f32 %v4864, 1.0
  %v4930 = vadd.f32 %v4866, 1.0
  %v4931 = vadd.f32 %v4868, 1.0
  %v4932 = vadd.f32 %v4870, 1.0
  %v4933 = vadd.f32 %v4872, 1.0
  %v4934 = vadd.f32 %v4874, 1.0
  %v4935 = vadd.f32 %v4876, 1.0
  %v4936 = vadd.f32 %v4878, 1.0
  %v4937 = vadd.f32 %v4880, 1.0
  %v4938 = vadd.f32 %v4882, 1.0
  %v4939 = vadd.f32 %v4884, 1.0
  %v4940 = vadd.f32 %v4886, 1.0
  %v4941 = vadd.f32 %v4888, 1.0
  %v4942 = vadd.f32 %v4890, 1.0
  %v4943 = vadd.f32 %v4892, 1.0
  %v4944 = vadd.f32 %v4894, 1.0
  %v4945 = vadd.f32 %v4896, 1.0
  %v4946 = vadd.f32 %v4898, 1.0
  %v4947 = vadd.f32 %v4900, 1.0
  %v4948 = vadd.f32 %v4902, 1.0
  %v4949 = vadd.f32 %v4904, 1.0
  %v4950 = vadd.f32 %v4906, 1.0
  %v4951 = vadd.f32 %v4908, 1.0
  %v4952 = vadd.f32 %v4910, 1.0
  %v4953 = vadd.f32 %v4912, 1.0
  %v4954 = vadd.f32 %v4914, 1.0
  %v4955 = vadd.f32 %v4916, 1.0
  %v4956 = vadd.f32 %v4918, 1.0
  %v4957 = vadd.f32 %v4920, 1.0
  %v4958 = vadd.f32 %v4922, 1.0
  %v4959 = vrcp.pop %v4923
  %v4960 = vmul.f32 %v4923, %v4959
  %v4961 = vsub.f32 1.0, %v4960
  %v4962 = vmul.f32 %v4959, %v4961
  %v4963 = vadd.f32 %v4959, %v4962
  %vm4964 = vweird.f32 %v4923
  %vm4965 = vweird.f32 %v4959
  %vm4966 = vmor %vm4964, %vm4965
  %v4967 = vsel %vm4966, %v4959, %v4963
  %v4968 = vand.u32 2147483647, %v4923
  %vm4969 = vcmp.eq.f32.partialorder %v4968, 8.507059e+37
  %v4970 = vand.u32 %v4923, 2147483648
  %v4971 = vor.u32 1.1754944e-38, %v4970
  %v4972 = vsel %vm4969, %v4971, %v4967
  %v4973 = vmul.f32 1.0, %v4972
  %v4974 = vrcp.pop %v4924
  %v4975 = vmul.f32 %v4924, %v4974
  %v4976 = vsub.f32 1.0, %v4975
  %v4977 = vmul.f32 %v4974, %v4976
  %v4978 = vadd.f32 %v4974, %v4977
  %vm4979 = vweird.f32 %v4924
  %vm4980 = vweird.f32 %v4974
  %vm4981 = vmor %vm4979, %vm4980
  %v4982 = vsel %vm4981, %v4974, %v4978
  %v4983 = vand.u32 2147483647, %v4924
  %vm4984 = vcmp.eq.f32.partialorder %v4983, 8.507059e+37
  %v4985 = vand.u32 %v4924, 2147483648
  %v4986 = vor.u32 1.1754944e-38, %v4985
  %v4987 = vsel %vm4984, %v4986, %v4982
  %v4988 = vmul.f32 1.0, %v4987
  %v4989 = vrcp.pop %v4925
  %v4990 = vmul.f32 %v4925, %v4989
  %v4991 = vsub.f32 1.0, %v4990
  %v4992 = vmul.f32 %v4989, %v4991
  %v4993 = vadd.f32 %v4989, %v4992
  %vm4994 = vweird.f32 %v4925
  %vm4995 = vweird.f32 %v4989
  %vm4996 = vmor %vm4994, %vm4995
  %v4997 = vsel %vm4996, %v4989, %v4993
  %v4998 = vand.u32 2147483647, %v4925
  %vm4999 = vcmp.eq.f32.partialorder %v4998, 8.507059e+37
  %v5000 = vand.u32 %v4925, 2147483648
  %v5001 = vor.u32 1.1754944e-38, %v5000
  %v5002 = vsel %vm4999, %v5001, %v4997
  %v5003 = vmul.f32 1.0, %v5002
  %v5004 = vrcp.pop %v4926
  %v5005 = vmul.f32 %v4926, %v5004
  %v5006 = vsub.f32 1.0, %v5005
  %v5007 = vmul.f32 %v5004, %v5006
  %v5008 = vadd.f32 %v5004, %v5007
  %vm5009 = vweird.f32 %v4926
  %vm5010 = vweird.f32 %v5004
  %vm5011 = vmor %vm5009, %vm5010
  %v5012 = vsel %vm5011, %v5004, %v5008
  %v5013 = vand.u32 2147483647, %v4926
  %vm5014 = vcmp.eq.f32.partialorder %v5013, 8.507059e+37
  %v5015 = vand.u32 %v4926, 2147483648
  %v5016 = vor.u32 1.1754944e-38, %v5015
  %v5017 = vsel %vm5014, %v5016, %v5012
  %v5018 = vmul.f32 1.0, %v5017
  %v5019 = vrcp.pop %v4927
  %v5020 = vmul.f32 %v4927, %v5019
  %v5021 = vsub.f32 1.0, %v5020
  %v5022 = vmul.f32 %v5019, %v5021
  %v5023 = vadd.f32 %v5019, %v5022
  %vm5024 = vweird.f32 %v4927
  %vm5025 = vweird.f32 %v5019
  %vm5026 = vmor %vm5024, %vm5025
  %v5027 = vsel %vm5026, %v5019, %v5023
  %v5028 = vand.u32 2147483647, %v4927
  %vm5029 = vcmp.eq.f32.partialorder %v5028, 8.507059e+37
  %v5030 = vand.u32 %v4927, 2147483648
  %v5031 = vor.u32 1.1754944e-38, %v5030
  %v5032 = vsel %vm5029, %v5031, %v5027
  %v5033 = vmul.f32 1.0, %v5032
  %v5034 = vrcp.pop %v4928
  %v5035 = vmul.f32 %v4928, %v5034
  %v5036 = vsub.f32 1.0, %v5035
  %v5037 = vmul.f32 %v5034, %v5036
  %v5038 = vadd.f32 %v5034, %v5037
  %vm5039 = vweird.f32 %v4928
  %vm5040 = vweird.f32 %v5034
  %vm5041 = vmor %vm5039, %vm5040
  %v5042 = vsel %vm5041, %v5034, %v5038
  %v5043 = vand.u32 2147483647, %v4928
  %vm5044 = vcmp.eq.f32.partialorder %v5043, 8.507059e+37
  %v5045 = vand.u32 %v4928, 2147483648
  %v5046 = vor.u32 1.1754944e-38, %v5045
  %v5047 = vsel %vm5044, %v5046, %v5042
  %v5048 = vmul.f32 1.0, %v5047
  %v5049 = vrcp.pop %v4929
  %v5050 = vmul.f32 %v4929, %v5049
  %v5051 = vsub.f32 1.0, %v5050
  %v5052 = vmul.f32 %v5049, %v5051
  %v5053 = vadd.f32 %v5049, %v5052
  %vm5054 = vweird.f32 %v4929
  %vm5055 = vweird.f32 %v5049
  %vm5056 = vmor %vm5054, %vm5055
  %v5057 = vsel %vm5056, %v5049, %v5053
  %v5058 = vand.u32 2147483647, %v4929
  %vm5059 = vcmp.eq.f32.partialorder %v5058, 8.507059e+37
  %v5060 = vand.u32 %v4929, 2147483648
  %v5061 = vor.u32 1.1754944e-38, %v5060
  %v5062 = vsel %vm5059, %v5061, %v5057
  %v5063 = vmul.f32 1.0, %v5062
  %v5064 = vrcp.pop %v4930
  %v5065 = vmul.f32 %v4930, %v5064
  %v5066 = vsub.f32 1.0, %v5065
  %v5067 = vmul.f32 %v5064, %v5066
  %v5068 = vadd.f32 %v5064, %v5067
  %vm5069 = vweird.f32 %v4930
  %vm5070 = vweird.f32 %v5064
  %vm5071 = vmor %vm5069, %vm5070
  %v5072 = vsel %vm5071, %v5064, %v5068
  %v5073 = vand.u32 2147483647, %v4930
  %vm5074 = vcmp.eq.f32.partialorder %v5073, 8.507059e+37
  %v5075 = vand.u32 %v4930, 2147483648
  %v5076 = vor.u32 1.1754944e-38, %v5075
  %v5077 = vsel %vm5074, %v5076, %v5072
  %v5078 = vmul.f32 1.0, %v5077
  %v5079 = vrcp.pop %v4931
  %v5080 = vmul.f32 %v4931, %v5079
  %v5081 = vsub.f32 1.0, %v5080
  %v5082 = vmul.f32 %v5079, %v5081
  %v5083 = vadd.f32 %v5079, %v5082
  %vm5084 = vweird.f32 %v4931
  %vm5085 = vweird.f32 %v5079
  %vm5086 = vmor %vm5084, %vm5085
  %v5087 = vsel %vm5086, %v5079, %v5083
  %v5088 = vand.u32 2147483647, %v4931
  %vm5089 = vcmp.eq.f32.partialorder %v5088, 8.507059e+37
  %v5090 = vand.u32 %v4931, 2147483648
  %v5091 = vor.u32 1.1754944e-38, %v5090
  %v5092 = vsel %vm5089, %v5091, %v5087
  %v5093 = vmul.f32 1.0, %v5092
  %v5094 = vrcp.pop %v4932
  %v5095 = vmul.f32 %v4932, %v5094
  %v5096 = vsub.f32 1.0, %v5095
  %v5097 = vmul.f32 %v5094, %v5096
  %v5098 = vadd.f32 %v5094, %v5097
  %vm5099 = vweird.f32 %v4932
  %vm5100 = vweird.f32 %v5094
  %vm5101 = vmor %vm5099, %vm5100
  %v5102 = vsel %vm5101, %v5094, %v5098
  %v5103 = vand.u32 2147483647, %v4932
  %vm5104 = vcmp.eq.f32.partialorder %v5103, 8.507059e+37
  %v5105 = vand.u32 %v4932, 2147483648
  %v5106 = vor.u32 1.1754944e-38, %v5105
  %v5107 = vsel %vm5104, %v5106, %v5102
  %v5108 = vmul.f32 1.0, %v5107
  %v5109 = vrcp.pop %v4933
  %v5110 = vmul.f32 %v4933, %v5109
  %v5111 = vsub.f32 1.0, %v5110
  %v5112 = vmul.f32 %v5109, %v5111
  %v5113 = vadd.f32 %v5109, %v5112
  %vm5114 = vweird.f32 %v4933
  %vm5115 = vweird.f32 %v5109
  %vm5116 = vmor %vm5114, %vm5115
  %v5117 = vsel %vm5116, %v5109, %v5113
  %v5118 = vand.u32 2147483647, %v4933
  %vm5119 = vcmp.eq.f32.partialorder %v5118, 8.507059e+37
  %v5120 = vand.u32 %v4933, 2147483648
  %v5121 = vor.u32 1.1754944e-38, %v5120
  %v5122 = vsel %vm5119, %v5121, %v5117
  %v5123 = vmul.f32 1.0, %v5122
  %v5124 = vrcp.pop %v4934
  %v5125 = vmul.f32 %v4934, %v5124
  %v5126 = vsub.f32 1.0, %v5125
  %v5127 = vmul.f32 %v5124, %v5126
  %v5128 = vadd.f32 %v5124, %v5127
  %vm5129 = vweird.f32 %v4934
  %vm5130 = vweird.f32 %v5124
  %vm5131 = vmor %vm5129, %vm5130
  %v5132 = vsel %vm5131, %v5124, %v5128
  %v5133 = vand.u32 2147483647, %v4934
  %vm5134 = vcmp.eq.f32.partialorder %v5133, 8.507059e+37
  %v5135 = vand.u32 %v4934, 2147483648
  %v5136 = vor.u32 1.1754944e-38, %v5135
  %v5137 = vsel %vm5134, %v5136, %v5132
  %v5138 = vmul.f32 1.0, %v5137
  %v5139 = vrcp.pop %v4935
  %v5140 = vmul.f32 %v4935, %v5139
  %v5141 = vsub.f32 1.0, %v5140
  %v5142 = vmul.f32 %v5139, %v5141
  %v5143 = vadd.f32 %v5139, %v5142
  %vm5144 = vweird.f32 %v4935
  %vm5145 = vweird.f32 %v5139
  %vm5146 = vmor %vm5144, %vm5145
  %v5147 = vsel %vm5146, %v5139, %v5143
  %v5148 = vand.u32 2147483647, %v4935
  %vm5149 = vcmp.eq.f32.partialorder %v5148, 8.507059e+37
  %v5150 = vand.u32 %v4935, 2147483648
  %v5151 = vor.u32 1.1754944e-38, %v5150
  %v5152 = vsel %vm5149, %v5151, %v5147
  %v5153 = vmul.f32 1.0, %v5152
  %v5154 = vrcp.pop %v4936
  %v5155 = vmul.f32 %v4936, %v5154
  %v5156 = vsub.f32 1.0, %v5155
  %v5157 = vmul.f32 %v5154, %v5156
  %v5158 = vadd.f32 %v5154, %v5157
  %vm5159 = vweird.f32 %v4936
  %vm5160 = vweird.f32 %v5154
  %vm5161 = vmor %vm5159, %vm5160
  %v5162 = vsel %vm5161, %v5154, %v5158
  %v5163 = vand.u32 2147483647, %v4936
  %vm5164 = vcmp.eq.f32.partialorder %v5163, 8.507059e+37
  %v5165 = vand.u32 %v4936, 2147483648
  %v5166 = vor.u32 1.1754944e-38, %v5165
  %v5167 = vsel %vm5164, %v5166, %v5162
  %v5168 = vmul.f32 1.0, %v5167
  %v5169 = vrcp.pop %v4937
  %v5170 = vmul.f32 %v4937, %v5169
  %v5171 = vsub.f32 1.0, %v5170
  %v5172 = vmul.f32 %v5169, %v5171
  %v5173 = vadd.f32 %v5169, %v5172
  %vm5174 = vweird.f32 %v4937
  %vm5175 = vweird.f32 %v5169
  %vm5176 = vmor %vm5174, %vm5175
  %v5177 = vsel %vm5176, %v5169, %v5173
  %v5178 = vand.u32 2147483647, %v4937
  %vm5179 = vcmp.eq.f32.partialorder %v5178, 8.507059e+37
  %v5180 = vand.u32 %v4937, 2147483648
  %v5181 = vor.u32 1.1754944e-38, %v5180
  %v5182 = vsel %vm5179, %v5181, %v5177
  %v5183 = vmul.f32 1.0, %v5182
  %v5184 = vrcp.pop %v4938
  %v5185 = vmul.f32 %v4938, %v5184
  %v5186 = vsub.f32 1.0, %v5185
  %v5187 = vmul.f32 %v5184, %v5186
  %v5188 = vadd.f32 %v5184, %v5187
  %vm5189 = vweird.f32 %v4938
  %vm5190 = vweird.f32 %v5184
  %vm5191 = vmor %vm5189, %vm5190
  %v5192 = vsel %vm5191, %v5184, %v5188
  %v5193 = vand.u32 2147483647, %v4938
  %vm5194 = vcmp.eq.f32.partialorder %v5193, 8.507059e+37
  %v5195 = vand.u32 %v4938, 2147483648
  %v5196 = vor.u32 1.1754944e-38, %v5195
  %v5197 = vsel %vm5194, %v5196, %v5192
  %v5198 = vmul.f32 1.0, %v5197
  %v5199 = vrcp.pop %v4939
  %v5200 = vmul.f32 %v4939, %v5199
  %v5201 = vsub.f32 1.0, %v5200
  %v5202 = vmul.f32 %v5199, %v5201
  %v5203 = vadd.f32 %v5199, %v5202
  %vm5204 = vweird.f32 %v4939
  %vm5205 = vweird.f32 %v5199
  %vm5206 = vmor %vm5204, %vm5205
  %v5207 = vsel %vm5206, %v5199, %v5203
  %v5208 = vand.u32 2147483647, %v4939
  %vm5209 = vcmp.eq.f32.partialorder %v5208, 8.507059e+37
  %v5210 = vand.u32 %v4939, 2147483648
  %v5211 = vor.u32 1.1754944e-38, %v5210
  %v5212 = vsel %vm5209, %v5211, %v5207
  %v5213 = vmul.f32 1.0, %v5212
  %v5214 = vrcp.pop %v4940
  %v5215 = vmul.f32 %v4940, %v5214
  %v5216 = vsub.f32 1.0, %v5215
  %v5217 = vmul.f32 %v5214, %v5216
  %v5218 = vadd.f32 %v5214, %v5217
  %vm5219 = vweird.f32 %v4940
  %vm5220 = vweird.f32 %v5214
  %vm5221 = vmor %vm5219, %vm5220
  %v5222 = vsel %vm5221, %v5214, %v5218
  %v5223 = vand.u32 2147483647, %v4940
  %vm5224 = vcmp.eq.f32.partialorder %v5223, 8.507059e+37
  %v5225 = vand.u32 %v4940, 2147483648
  %v5226 = vor.u32 1.1754944e-38, %v5225
  %v5227 = vsel %vm5224, %v5226, %v5222
  %v5228 = vmul.f32 1.0, %v5227
  %v5229 = vrcp.pop %v4941
  %v5230 = vmul.f32 %v4941, %v5229
  %v5231 = vsub.f32 1.0, %v5230
  %v5232 = vmul.f32 %v5229, %v5231
  %v5233 = vadd.f32 %v5229, %v5232
  %vm5234 = vweird.f32 %v4941
  %vm5235 = vweird.f32 %v5229
  %vm5236 = vmor %vm5234, %vm5235
  %v5237 = vsel %vm5236, %v5229, %v5233
  %v5238 = vand.u32 2147483647, %v4941
  %vm5239 = vcmp.eq.f32.partialorder %v5238, 8.507059e+37
  %v5240 = vand.u32 %v4941, 2147483648
  %v5241 = vor.u32 1.1754944e-38, %v5240
  %v5242 = vsel %vm5239, %v5241, %v5237
  %v5243 = vmul.f32 1.0, %v5242
  %v5244 = vrcp.pop %v4942
  %v5245 = vmul.f32 %v4942, %v5244
  %v5246 = vsub.f32 1.0, %v5245
  %v5247 = vmul.f32 %v5244, %v5246
  %v5248 = vadd.f32 %v5244, %v5247
  %vm5249 = vweird.f32 %v4942
  %vm5250 = vweird.f32 %v5244
  %vm5251 = vmor %vm5249, %vm5250
  %v5252 = vsel %vm5251, %v5244, %v5248
  %v5253 = vand.u32 2147483647, %v4942
  %vm5254 = vcmp.eq.f32.partialorder %v5253, 8.507059e+37
  %v5255 = vand.u32 %v4942, 2147483648
  %v5256 = vor.u32 1.1754944e-38, %v5255
  %v5257 = vsel %vm5254, %v5256, %v5252
  %v5258 = vmul.f32 1.0, %v5257
  %v5259 = vrcp.pop %v4943
  %v5260 = vmul.f32 %v4943, %v5259
  %v5261 = vsub.f32 1.0, %v5260
  %v5262 = vmul.f32 %v5259, %v5261
  %v5263 = vadd.f32 %v5259, %v5262
  %vm5264 = vweird.f32 %v4943
  %vm5265 = vweird.f32 %v5259
  %vm5266 = vmor %vm5264, %vm5265
  %v5267 = vsel %vm5266, %v5259, %v5263
  %v5268 = vand.u32 2147483647, %v4943
  %vm5269 = vcmp.eq.f32.partialorder %v5268, 8.507059e+37
  %v5270 = vand.u32 %v4943, 2147483648
  %v5271 = vor.u32 1.1754944e-38, %v5270
  %v5272 = vsel %vm5269, %v5271, %v5267
  %v5273 = vmul.f32 1.0, %v5272
  %v5274 = vrcp.pop %v4944
  %v5275 = vmul.f32 %v4944, %v5274
  %v5276 = vsub.f32 1.0, %v5275
  %v5277 = vmul.f32 %v5274, %v5276
  %v5278 = vadd.f32 %v5274, %v5277
  %vm5279 = vweird.f32 %v4944
  %vm5280 = vweird.f32 %v5274
  %vm5281 = vmor %vm5279, %vm5280
  %v5282 = vsel %vm5281, %v5274, %v5278
  %v5283 = vand.u32 2147483647, %v4944
  %vm5284 = vcmp.eq.f32.partialorder %v5283, 8.507059e+37
  %v5285 = vand.u32 %v4944, 2147483648
  %v5286 = vor.u32 1.1754944e-38, %v5285
  %v5287 = vsel %vm5284, %v5286, %v5282
  %v5288 = vmul.f32 1.0, %v5287
  %v5289 = vrcp.pop %v4945
  %v5290 = vmul.f32 %v4945, %v5289
  %v5291 = vsub.f32 1.0, %v5290
  %v5292 = vmul.f32 %v5289, %v5291
  %v5293 = vadd.f32 %v5289, %v5292
  %vm5294 = vweird.f32 %v4945
  %vm5295 = vweird.f32 %v5289
  %vm5296 = vmor %vm5294, %vm5295
  %v5297 = vsel %vm5296, %v5289, %v5293
  %v5298 = vand.u32 2147483647, %v4945
  %vm5299 = vcmp.eq.f32.partialorder %v5298, 8.507059e+37
  %v5300 = vand.u32 %v4945, 2147483648
  %v5301 = vor.u32 1.1754944e-38, %v5300
  %v5302 = vsel %vm5299, %v5301, %v5297
  %v5303 = vmul.f32 1.0, %v5302
  %v5304 = vrcp.pop %v4946
  %v5305 = vmul.f32 %v4946, %v5304
  %v5306 = vsub.f32 1.0, %v5305
  %v5307 = vmul.f32 %v5304, %v5306
  %v5308 = vadd.f32 %v5304, %v5307
  %vm5309 = vweird.f32 %v4946
  %vm5310 = vweird.f32 %v5304
  %vm5311 = vmor %vm5309, %vm5310
  %v5312 = vsel %vm5311, %v5304, %v5308
  %v5313 = vand.u32 2147483647, %v4946
  %vm5314 = vcmp.eq.f32.partialorder %v5313, 8.507059e+37
  %v5315 = vand.u32 %v4946, 2147483648
  %v5316 = vor.u32 1.1754944e-38, %v5315
  %v5317 = vsel %vm5314, %v5316, %v5312
  %v5318 = vmul.f32 1.0, %v5317
  %v5319 = vrcp.pop %v4947
  %v5320 = vmul.f32 %v4947, %v5319
  %v5321 = vsub.f32 1.0, %v5320
  %v5322 = vmul.f32 %v5319, %v5321
  %v5323 = vadd.f32 %v5319, %v5322
  %vm5324 = vweird.f32 %v4947
  %vm5325 = vweird.f32 %v5319
  %vm5326 = vmor %vm5324, %vm5325
  %v5327 = vsel %vm5326, %v5319, %v5323
  %v5328 = vand.u32 2147483647, %v4947
  %vm5329 = vcmp.eq.f32.partialorder %v5328, 8.507059e+37
  %v5330 = vand.u32 %v4947, 2147483648
  %v5331 = vor.u32 1.1754944e-38, %v5330
  %v5332 = vsel %vm5329, %v5331, %v5327
  %v5333 = vmul.f32 1.0, %v5332
  %v5334 = vrcp.pop %v4948
  %v5335 = vmul.f32 %v4948, %v5334
  %v5336 = vsub.f32 1.0, %v5335
  %v5337 = vmul.f32 %v5334, %v5336
  %v5338 = vadd.f32 %v5334, %v5337
  %vm5339 = vweird.f32 %v4948
  %vm5340 = vweird.f32 %v5334
  %vm5341 = vmor %vm5339, %vm5340
  %v5342 = vsel %vm5341, %v5334, %v5338
  %v5343 = vand.u32 2147483647, %v4948
  %vm5344 = vcmp.eq.f32.partialorder %v5343, 8.507059e+37
  %v5345 = vand.u32 %v4948, 2147483648
  %v5346 = vor.u32 1.1754944e-38, %v5345
  %v5347 = vsel %vm5344, %v5346, %v5342
  %v5348 = vmul.f32 1.0, %v5347
  %v5349 = vrcp.pop %v4949
  %v5350 = vmul.f32 %v4949, %v5349
  %v5351 = vsub.f32 1.0, %v5350
  %v5352 = vmul.f32 %v5349, %v5351
  %v5353 = vadd.f32 %v5349, %v5352
  %vm5354 = vweird.f32 %v4949
  %vm5355 = vweird.f32 %v5349
  %vm5356 = vmor %vm5354, %vm5355
  %v5357 = vsel %vm5356, %v5349, %v5353
  %v5358 = vand.u32 2147483647, %v4949
  %vm5359 = vcmp.eq.f32.partialorder %v5358, 8.507059e+37
  %v5360 = vand.u32 %v4949, 2147483648
  %v5361 = vor.u32 1.1754944e-38, %v5360
  %v5362 = vsel %vm5359, %v5361, %v5357
  %v5363 = vmul.f32 1.0, %v5362
  %v5364 = vrcp.pop %v4950
  %v5365 = vmul.f32 %v4950, %v5364
  %v5366 = vsub.f32 1.0, %v5365
  %v5367 = vmul.f32 %v5364, %v5366
  %v5368 = vadd.f32 %v5364, %v5367
  %vm5369 = vweird.f32 %v4950
  %vm5370 = vweird.f32 %v5364
  %vm5371 = vmor %vm5369, %vm5370
  %v5372 = vsel %vm5371, %v5364, %v5368
  %v5373 = vand.u32 2147483647, %v4950
  %vm5374 = vcmp.eq.f32.partialorder %v5373, 8.507059e+37
  %v5375 = vand.u32 %v4950, 2147483648
  %v5376 = vor.u32 1.1754944e-38, %v5375
  %v5377 = vsel %vm5374, %v5376, %v5372
  %v5378 = vmul.f32 1.0, %v5377
  %v5379 = vrcp.pop %v4951
  %v5380 = vmul.f32 %v4951, %v5379
  %v5381 = vsub.f32 1.0, %v5380
  %v5382 = vmul.f32 %v5379, %v5381
  %v5383 = vadd.f32 %v5379, %v5382
  %vm5384 = vweird.f32 %v4951
  %vm5385 = vweird.f32 %v5379
  %vm5386 = vmor %vm5384, %vm5385
  %v5387 = vsel %vm5386, %v5379, %v5383
  %v5388 = vand.u32 2147483647, %v4951
  %vm5389 = vcmp.eq.f32.partialorder %v5388, 8.507059e+37
  %v5390 = vand.u32 %v4951, 2147483648
  %v5391 = vor.u32 1.1754944e-38, %v5390
  %v5392 = vsel %vm5389, %v5391, %v5387
  %v5393 = vmul.f32 1.0, %v5392
  %v5394 = vrcp.pop %v4952
  %v5395 = vmul.f32 %v4952, %v5394
  %v5396 = vsub.f32 1.0, %v5395
  %v5397 = vmul.f32 %v5394, %v5396
  %v5398 = vadd.f32 %v5394, %v5397
  %vm5399 = vweird.f32 %v4952
  %vm5400 = vweird.f32 %v5394
  %vm5401 = vmor %vm5399, %vm5400
  %v5402 = vsel %vm5401, %v5394, %v5398
  %v5403 = vand.u32 2147483647, %v4952
  %vm5404 = vcmp.eq.f32.partialorder %v5403, 8.507059e+37
  %v5405 = vand.u32 %v4952, 2147483648
  %v5406 = vor.u32 1.1754944e-38, %v5405
  %v5407 = vsel %vm5404, %v5406, %v5402
  %v5408 = vmul.f32 1.0, %v5407
  %v5409 = vrcp.pop %v4953
  %v5410 = vmul.f32 %v4953, %v5409
  %v5411 = vsub.f32 1.0, %v5410
  %v5412 = vmul.f32 %v5409, %v5411
  %v5413 = vadd.f32 %v5409, %v5412
  %vm5414 = vweird.f32 %v4953
  %vm5415 = vweird.f32 %v5409
  %vm5416 = vmor %vm5414, %vm5415
  %v5417 = vsel %vm5416, %v5409, %v5413
  %v5418 = vand.u32 2147483647, %v4953
  %vm5419 = vcmp.eq.f32.partialorder %v5418, 8.507059e+37
  %v5420 = vand.u32 %v4953, 2147483648
  %v5421 = vor.u32 1.1754944e-38, %v5420
  %v5422 = vsel %vm5419, %v5421, %v5417
  %v5423 = vmul.f32 1.0, %v5422
  %v5424 = vrcp.pop %v4954
  %v5425 = vmul.f32 %v4954, %v5424
  %v5426 = vsub.f32 1.0, %v5425
  %v5427 = vmul.f32 %v5424, %v5426
  %v5428 = vadd.f32 %v5424, %v5427
  %vm5429 = vweird.f32 %v4954
  %vm5430 = vweird.f32 %v5424
  %vm5431 = vmor %vm5429, %vm5430
  %v5432 = vsel %vm5431, %v5424, %v5428
  %v5433 = vand.u32 2147483647, %v4954
  %vm5434 = vcmp.eq.f32.partialorder %v5433, 8.507059e+37
  %v5435 = vand.u32 %v4954, 2147483648
  %v5436 = vor.u32 1.1754944e-38, %v5435
  %v5437 = vsel %vm5434, %v5436, %v5432
  %v5438 = vmul.f32 1.0, %v5437
  %v5439 = vrcp.pop %v4955
  %v5440 = vmul.f32 %v4955, %v5439
  %v5441 = vsub.f32 1.0, %v5440
  %v5442 = vmul.f32 %v5439, %v5441
  %v5443 = vadd.f32 %v5439, %v5442
  %vm5444 = vweird.f32 %v4955
  %vm5445 = vweird.f32 %v5439
  %vm5446 = vmor %vm5444, %vm5445
  %v5447 = vsel %vm5446, %v5439, %v5443
  %v5448 = vand.u32 2147483647, %v4955
  %vm5449 = vcmp.eq.f32.partialorder %v5448, 8.507059e+37
  %v5450 = vand.u32 %v4955, 2147483648
  %v5451 = vor.u32 1.1754944e-38, %v5450
  %v5452 = vsel %vm5449, %v5451, %v5447
  %v5453 = vmul.f32 1.0, %v5452
  %v5454 = vrcp.pop %v4956
  %v5455 = vmul.f32 %v4956, %v5454
  %v5456 = vsub.f32 1.0, %v5455
  %v5457 = vmul.f32 %v5454, %v5456
  %v5458 = vadd.f32 %v5454, %v5457
  %vm5459 = vweird.f32 %v4956
  %vm5460 = vweird.f32 %v5454
  %vm5461 = vmor %vm5459, %vm5460
  %v5462 = vsel %vm5461, %v5454, %v5458
  %v5463 = vand.u32 2147483647, %v4956
  %vm5464 = vcmp.eq.f32.partialorder %v5463, 8.507059e+37
  %v5465 = vand.u32 %v4956, 2147483648
  %v5466 = vor.u32 1.1754944e-38, %v5465
  %v5467 = vsel %vm5464, %v5466, %v5462
  %v5468 = vmul.f32 1.0, %v5467
  %v5469 = vrcp.pop %v4957
  %v5470 = vmul.f32 %v4957, %v5469
  %v5471 = vsub.f32 1.0, %v5470
  %v5472 = vmul.f32 %v5469, %v5471
  %v5473 = vadd.f32 %v5469, %v5472
  %vm5474 = vweird.f32 %v4957
  %vm5475 = vweird.f32 %v5469
  %vm5476 = vmor %vm5474, %vm5475
  %v5477 = vsel %vm5476, %v5469, %v5473
  %v5478 = vand.u32 2147483647, %v4957
  %vm5479 = vcmp.eq.f32.partialorder %v5478, 8.507059e+37
  %v5480 = vand.u32 %v4957, 2147483648
  %v5481 = vor.u32 1.1754944e-38, %v5480
  %v5482 = vsel %vm5479, %v5481, %v5477
  %v5483 = vmul.f32 1.0, %v5482
  %v5484 = vrcp.pop %v4958
  %v5485 = vmul.f32 %v4958, %v5484
  %v5486 = vsub.f32 1.0, %v5485
  %v5487 = vmul.f32 %v5484, %v5486
  %v5488 = vadd.f32 %v5484, %v5487
  %vm5489 = vweird.f32 %v4958
  %vm5490 = vweird.f32 %v5484
  %vm5491 = vmor %vm5489, %vm5490
  %v5492 = vsel %vm5491, %v5484, %v5488
  %v5493 = vand.u32 2147483647, %v4958
  %vm5494 = vcmp.eq.f32.partialorder %v5493, 8.507059e+37
  %v5495 = vand.u32 %v4958, 2147483648
  %v5496 = vor.u32 1.1754944e-38, %v5495
  %v5497 = vsel %vm5494, %v5496, %v5492
  %v5498 = vmul.f32 1.0, %v5497
  %v5499 = vmul.f32 %v4779, %v4973
  %v5500 = vmul.f32 %v4780, %v4988
  %v5501 = vmul.f32 %v4781, %v5003
  %v5502 = vmul.f32 %v4782, %v5018
  %v5503 = vmul.f32 %v4783, %v5033
  %v5504 = vmul.f32 %v4784, %v5048
  %v5505 = vmul.f32 %v4785, %v5063
  %v5506 = vmul.f32 %v4786, %v5078
  %v5507 = vmul.f32 %v4787, %v5093
  %v5508 = vmul.f32 %v4788, %v5108
  %v5509 = vmul.f32 %v4789, %v5123
  %v5510 = vmul.f32 %v4790, %v5138
  %v5511 = vmul.f32 %v4791, %v5153
  %v5512 = vmul.f32 %v4792, %v5168
  %v5513 = vmul.f32 %v4793, %v5183
  %v5514 = vmul.f32 %v4794, %v5198
  %v5515 = vmul.f32 %v4795, %v5213
  %v5516 = vmul.f32 %v4796, %v5228
  %v5517 = vmul.f32 %v4797, %v5243
  %v5518 = vmul.f32 %v4798, %v5258
  %v5519 = vmul.f32 %v4799, %v5273
  %v5520 = vmul.f32 %v4800, %v5288
  %v5521 = vmul.f32 %v4801, %v5303
  %v5522 = vmul.f32 %v4802, %v5318
  %v5523 = vmul.f32 %v4803, %v5333
  %v5524 = vmul.f32 %v4804, %v5348
  %v5525 = vmul.f32 %v4805, %v5363
  %v5526 = vmul.f32 %v4806, %v5378
  %v5527 = vmul.f32 %v4807, %v5393
  %v5528 = vmul.f32 %v4808, %v5408
  %v5529 = vmul.f32 %v4809, %v5423
  %v5530 = vmul.f32 %v4810, %v5438
  %v5531 = vmul.f32 %v4811, %v5453
  %v5532 = vmul.f32 %v4812, %v5468
  %v5533 = vmul.f32 %v4813, %v5483
  %v5534 = vmul.f32 %v4814, %v5498
  %v5535 = vpack.c.bf16 %v5499, %v5499
  %v5536 = vpack.c.bf16 %v5500, %v5500
  %v5537 = vpack.c.bf16 %v5501, %v5501
  %v5538 = vpack.c.bf16 %v5502, %v5502
  %v5539 = vpack.c.bf16 %v5503, %v5503
  %v5540 = vpack.c.bf16 %v5504, %v5504
  %v5541 = vpack.c.bf16 %v5505, %v5505
  %v5542 = vpack.c.bf16 %v5506, %v5506
  %v5543 = vpack.c.bf16 %v5507, %v5507
  %v5544 = vpack.c.bf16 %v5508, %v5508
  %v5545 = vpack.c.bf16 %v5509, %v5509
  %v5546 = vpack.c.bf16 %v5510, %v5510
  %v5547 = vpack.c.bf16 %v5511, %v5511
  %v5548 = vpack.c.bf16 %v5512, %v5512
  %v5549 = vpack.c.bf16 %v5513, %v5513
  %v5550 = vpack.c.bf16 %v5514, %v5514
  %v5551 = vpack.c.bf16 %v5515, %v5515
  %v5552 = vpack.c.bf16 %v5516, %v5516
  %v5553 = vpack.c.bf16 %v5517, %v5517
  %v5554 = vpack.c.bf16 %v5518, %v5518
  %v5555 = vpack.c.bf16 %v5519, %v5519
  %v5556 = vpack.c.bf16 %v5520, %v5520
  %v5557 = vpack.c.bf16 %v5521, %v5521
  %v5558 = vpack.c.bf16 %v5522, %v5522
  %v5559 = vpack.c.bf16 %v5523, %v5523
  %v5560 = vpack.c.bf16 %v5524, %v5524
  %v5561 = vpack.c.bf16 %v5525, %v5525
  %v5562 = vpack.c.bf16 %v5526, %v5526
  %v5563 = vpack.c.bf16 %v5527, %v5527
  %v5564 = vpack.c.bf16 %v5528, %v5528
  %v5565 = vpack.c.bf16 %v5529, %v5529
  %v5566 = vpack.c.bf16 %v5530, %v5530
  %v5567 = vpack.c.bf16 %v5531, %v5531
  %v5568 = vpack.c.bf16 %v5532, %v5532
  %v5569 = vpack.c.bf16 %v5533, %v5533
  %v5570 = vpack.c.bf16 %v5534, %v5534
  %v5571 = vld [vmem:[%s5] sm:$0xf]
  %v5572 = vld [vmem:[%s5 + $0x4] sm:$0xf]
  %v5573 = vld [vmem:[%s5 + $0x8] sm:$0xf]
  %v5574 = vld [vmem:[%s5 + $0xc] sm:$0xf]
  %v5575 = vld [vmem:[%s5 + $0x10] sm:$0xf]
  %v5576 = vld [vmem:[%s5 + $0x14] sm:$0xf]
  %v5577 = vld [vmem:[%s5 + $0x18] sm:$0xf]
  %v5578 = vld [vmem:[%s5 + $0x1c] sm:$0xf]
  %v5615 = vunpack.c.l.b16 %v5535
  %v5616 = vunpack.c.l.b16 %v5536
  %v5617 = vunpack.c.l.b16 %v5537
  %v5618 = vunpack.c.l.b16 %v5538
  %v5619 = vunpack.c.l.b16 %v5539
  %v5620 = vunpack.c.l.b16 %v5540
  %v5621 = vunpack.c.l.b16 %v5541
  %v5622 = vunpack.c.l.b16 %v5542
  %v5623 = vunpack.c.l.b16 %v5543
  %v5624 = vunpack.c.l.b16 %v5544
  %v5625 = vunpack.c.l.b16 %v5545
  %v5626 = vunpack.c.l.b16 %v5546
  %v5627 = vunpack.c.l.b16 %v5547
  %v5628 = vunpack.c.l.b16 %v5548
  %v5629 = vunpack.c.l.b16 %v5549
  %v5630 = vunpack.c.l.b16 %v5550
  %v5631 = vunpack.c.l.b16 %v5551
  %v5632 = vunpack.c.l.b16 %v5552
  %v5633 = vunpack.c.l.b16 %v5553
  %v5634 = vunpack.c.l.b16 %v5554
  %v5635 = vunpack.c.l.b16 %v5555
  %v5636 = vunpack.c.l.b16 %v5556
  %v5637 = vunpack.c.l.b16 %v5557
  %v5638 = vunpack.c.l.b16 %v5558
  %v5639 = vunpack.c.l.b16 %v5559
  %v5640 = vunpack.c.l.b16 %v5560
  %v5641 = vunpack.c.l.b16 %v5561
  %v5642 = vunpack.c.l.b16 %v5562
  %v5643 = vunpack.c.l.b16 %v5563
  %v5644 = vunpack.c.l.b16 %v5564
  %v5645 = vunpack.c.l.b16 %v5565
  %v5646 = vunpack.c.l.b16 %v5566
  %v5647 = vunpack.c.l.b16 %v5567
  %v5648 = vunpack.c.l.b16 %v5568
  %v5649 = vunpack.c.l.b16 %v5569
  %v5650 = vunpack.c.l.b16 %v5570
  %v5651 = vpack.c.b16 %v5616, %v5615
  %v5652 = vpack.c.b16 %v5618, %v5617
  %v5653 = vpack.c.b16 %v5620, %v5619
  %v5654 = vpack.c.b16 %v5622, %v5621
  %v5655 = vpack.c.b16 %v5624, %v5623
  %v5656 = vpack.c.b16 %v5626, %v5625
  %v5657 = vpack.c.b16 %v5628, %v5627
  %v5658 = vpack.c.b16 %v5630, %v5629
  %v5659 = vpack.c.b16 %v5632, %v5631
  %v5660 = vpack.c.b16 %v5634, %v5633
  %v5661 = vpack.c.b16 %v5636, %v5635
  %v5662 = vpack.c.b16 %v5638, %v5637
  %v5663 = vpack.c.b16 %v5640, %v5639
  %v5664 = vpack.c.b16 %v5642, %v5641
  %v5665 = vpack.c.b16 %v5644, %v5643
  %v5666 = vpack.c.b16 %v5646, %v5645
  %v5667 = vpack.c.b16 %v5648, %v5647
  %v5668 = vpack.c.b16 %v5650, %v5649
  %v5677 = vunpack.c.l.b16 %v5571
  %v5678 = vunpack.c.l.b16 %v5572
  %v5679 = vunpack.c.l.b16 %v5573
  %v5680 = vunpack.c.l.b16 %v5574
  %v5681 = vunpack.c.l.b16 %v5575
  %v5682 = vunpack.c.l.b16 %v5576
  %v5683 = vunpack.c.l.b16 %v5577
  %v5684 = vunpack.c.l.b16 %v5578
  %v5685 = vpack.c.b16 %v5678, %v5677
  %v5686 = vpack.c.b16 %v5680, %v5679
  %v5687 = vpack.c.b16 %v5682, %v5681
  %v5688 = vpack.c.b16 %v5684, %v5683
  %v5694 = vsel %vm4185, %v5651, 0
  %v5697 = vsel %vm4185, %v5652, 0
  %v5700 = vsel %vm4185, %v5653, 0
  %v5703 = vsel %vm4185, %v5654, 0
  %v5706 = vsel %vm4185, %v5655, 0
  %v5709 = vsel %vm4185, %v5656, 0
  %v5712 = vsel %vm4185, %v5657, 0
  %v5715 = vsel %vm4185, %v5658, 0
  %v5718 = vsel %vm4185, %v5659, 0
  %v5721 = vsel %vm4185, %v5660, 0
  %v5724 = vsel %vm4185, %v5661, 0
  %v5727 = vsel %vm4185, %v5662, 0
  %v5730 = vsel %vm4185, %v5663, 0
  %v5733 = vsel %vm4185, %v5664, 0
  %v5736 = vsel %vm4185, %v5665, 0
  %v5739 = vsel %vm4185, %v5666, 0
  %v5742 = vsel %vm4185, %v5667, 0
  %v5745 = vsel %vm4185, %v5668, 0
  %5747 = vmatpush.bf16.msra.mxu0 0
  %5748 = vmatpush.bf16.msra.mxu0 0
  %5749 = vmatpush.bf16.msra.mxu0 0
  %5750 = vmatpush.bf16.msra.mxu0 0
  %5751 = vmatpush.bf16.msra.mxu0 %v5688
  %5752 = vmatpush.bf16.msra.mxu0 %v5687
  %5753 = vmatpush.bf16.msra.mxu0 %v5686
  %5754 = vmatpush.bf16.msra.mxu0 %v5685
  %5755 = vmatmul.bf16.gmra.mxu0 %v5694
  %v5756 = vpop.f32.mrf.mxu0
  %v5757 = vadd.f32 0.0, %v5756
  %v5758 = vpop.f32.mrf.mxu0
  %v5759 = vadd.f32 0.0, %v5758
  %5760 = vmatmul.bf16.gmra.mxu0 %v5697
  %v5761 = vpop.f32.mrf.mxu0
  %v5762 = vadd.f32 0.0, %v5761
  %v5763 = vpop.f32.mrf.mxu0
  %v5764 = vadd.f32 0.0, %v5763
  %5765 = vmatmul.bf16.gmra.mxu0 %v5700
  %v5766 = vpop.f32.mrf.mxu0
  %v5767 = vadd.f32 0.0, %v5766
  %v5768 = vpop.f32.mrf.mxu0
  %v5769 = vadd.f32 0.0, %v5768
  %5770 = vmatmul.bf16.gmra.mxu0 %v5703
  %v5771 = vpop.f32.mrf.mxu0
  %v5772 = vadd.f32 0.0, %v5771
  %v5773 = vpop.f32.mrf.mxu0
  %v5774 = vadd.f32 0.0, %v5773
  %5775 = vmatmul.bf16.gmra.mxu0 %v5706
  %v5776 = vpop.f32.mrf.mxu0
  %v5777 = vadd.f32 0.0, %v5776
  %v5778 = vpop.f32.mrf.mxu0
  %v5779 = vadd.f32 0.0, %v5778
  %5780 = vmatmul.bf16.gmra.mxu0 %v5709
  %v5781 = vpop.f32.mrf.mxu0
  %v5782 = vadd.f32 0.0, %v5781
  %v5783 = vpop.f32.mrf.mxu0
  %v5784 = vadd.f32 0.0, %v5783
  %5785 = vmatmul.bf16.gmra.mxu0 %v5712
  %v5786 = vpop.f32.mrf.mxu0
  %v5787 = vadd.f32 0.0, %v5786
  %v5788 = vpop.f32.mrf.mxu0
  %v5789 = vadd.f32 0.0, %v5788
  %5790 = vmatmul.bf16.gmra.mxu0 %v5715
  %v5791 = vpop.f32.mrf.mxu0
  %v5792 = vadd.f32 0.0, %v5791
  %v5793 = vpop.f32.mrf.mxu0
  %v5794 = vadd.f32 0.0, %v5793
  %5795 = vmatmul.bf16.gmra.mxu0 %v5718
  %v5796 = vpop.f32.mrf.mxu0
  %v5797 = vadd.f32 0.0, %v5796
  %v5798 = vpop.f32.mrf.mxu0
  %v5799 = vadd.f32 0.0, %v5798
  %5800 = vmatmul.bf16.gmra.mxu0 %v5721
  %v5801 = vpop.f32.mrf.mxu0
  %v5802 = vadd.f32 0.0, %v5801
  %v5803 = vpop.f32.mrf.mxu0
  %v5804 = vadd.f32 0.0, %v5803
  %5805 = vmatmul.bf16.gmra.mxu0 %v5724
  %v5806 = vpop.f32.mrf.mxu0
  %v5807 = vadd.f32 0.0, %v5806
  %v5808 = vpop.f32.mrf.mxu0
  %v5809 = vadd.f32 0.0, %v5808
  %5810 = vmatmul.bf16.gmra.mxu0 %v5727
  %v5811 = vpop.f32.mrf.mxu0
  %v5812 = vadd.f32 0.0, %v5811
  %v5813 = vpop.f32.mrf.mxu0
  %v5814 = vadd.f32 0.0, %v5813
  %5815 = vmatmul.bf16.gmra.mxu0 %v5730
  %v5816 = vpop.f32.mrf.mxu0
  %v5817 = vadd.f32 0.0, %v5816
  %v5818 = vpop.f32.mrf.mxu0
  %v5819 = vadd.f32 0.0, %v5818
  %5820 = vmatmul.bf16.gmra.mxu0 %v5733
  %v5821 = vpop.f32.mrf.mxu0
  %v5822 = vadd.f32 0.0, %v5821
  %v5823 = vpop.f32.mrf.mxu0
  %v5824 = vadd.f32 0.0, %v5823
  %5825 = vmatmul.bf16.gmra.mxu0 %v5736
  %v5826 = vpop.f32.mrf.mxu0
  %v5827 = vadd.f32 0.0, %v5826
  %v5828 = vpop.f32.mrf.mxu0
  %v5829 = vadd.f32 0.0, %v5828
  %5830 = vmatmul.bf16.gmra.mxu0 %v5739
  %v5831 = vpop.f32.mrf.mxu0
  %v5832 = vadd.f32 0.0, %v5831
  %v5833 = vpop.f32.mrf.mxu0
  %v5834 = vadd.f32 0.0, %v5833
  %5835 = vmatmul.bf16.gmra.mxu0 %v5742
  %v5836 = vpop.f32.mrf.mxu0
  %v5837 = vadd.f32 0.0, %v5836
  %v5838 = vpop.f32.mrf.mxu0
  %v5839 = vadd.f32 0.0, %v5838
  %5840 = vmatmul.bf16.gmra.mxu0 %v5745
  %v5841 = vpop.f32.mrf.mxu0
  %v5842 = vadd.f32 0.0, %v5841
  %v5843 = vpop.f32.mrf.mxu0
  %v5844 = vadd.f32 0.0, %v5843
  %5845 = vdwg.mxu0
  %v5846 = vld [vmem:[%s6] sm:$0xff]
  %v5847 = vld [vmem:[%s6 + $0x8] sm:$0xff]
  %v5848 = vld [vmem:[%s6 + $0x10] sm:$0xff]
  %v5849 = vld [vmem:[%s6 + $0x18] sm:$0xff]
  %v5850 = vld [vmem:[%s6 + $0x20] sm:$0xff]
  %v5851 = vld [vmem:[%s6 + $0x28] sm:$0xff]
  %v5852 = vld [vmem:[%s6 + $0x30] sm:$0xff]
  %v5853 = vld [vmem:[%s6 + $0x38] sm:$0xff]
  %v5854 = vld [vmem:[%s8] sm:$0xf]
  %v5855 = vld [vmem:[%s8 + $0x4] sm:$0xf]
  %v5856 = vld [vmem:[%s8 + $0x8] sm:$0xf]
  %v5857 = vld [vmem:[%s8 + $0xc] sm:$0xf]
  %v5858 = vld [vmem:[%s8 + $0x10] sm:$0xf]
  %v5859 = vld [vmem:[%s8 + $0x14] sm:$0xf]
  %v5860 = vld [vmem:[%s8 + $0x18] sm:$0xf]
  %v5861 = vld [vmem:[%s8 + $0x1c] sm:$0xf]
  %v5862 = vld [vmem:[%s7] sm:$0x1]
  %v5871 = vunpack.c.l.b16 %v5846
  %v5872 = vunpack.c.h.b16 %v5846
  %v5873 = vunpack.c.l.b16 %v5847
  %v5874 = vunpack.c.h.b16 %v5847
  %v5875 = vunpack.c.l.b16 %v5848
  %v5876 = vunpack.c.h.b16 %v5848
  %v5877 = vunpack.c.l.b16 %v5849
  %v5878 = vunpack.c.h.b16 %v5849
  %v5879 = vunpack.c.l.b16 %v5850
  %v5880 = vunpack.c.h.b16 %v5850
  %v5881 = vunpack.c.l.b16 %v5851
  %v5882 = vunpack.c.h.b16 %v5851
  %v5883 = vunpack.c.l.b16 %v5852
  %v5884 = vunpack.c.h.b16 %v5852
  %v5885 = vunpack.c.l.b16 %v5853
  %v5886 = vunpack.c.h.b16 %v5853
  %v5887 = vpack.c.b16 %v5873, %v5871
  %v5888 = vpack.c.b16 %v5874, %v5872
  %v5889 = vpack.c.b16 %v5877, %v5875
  %v5890 = vpack.c.b16 %v5878, %v5876
  %v5891 = vpack.c.b16 %v5881, %v5879
  %v5892 = vpack.c.b16 %v5882, %v5880
  %v5893 = vpack.c.b16 %v5885, %v5883
  %v5894 = vpack.c.b16 %v5886, %v5884
  %vm5908 = vcmask 130048
  %v5910 = vsel %vm5908, %v5888, 0
  %v5913 = vsel %vm5908, %v5890, 0
  %v5916 = vsel %vm5908, %v5892, 0
  %v5919 = vsel %vm5908, %v5894, 0
  %5921 = vmatpush.bf16.msra.mxu0 %v5658
  %5922 = vmatpush.bf16.msra.mxu0 %v5657
  %5923 = vmatpush.bf16.msra.mxu0 %v5656
  %5924 = vmatpush.bf16.msra.mxu0 %v5655
  %5925 = vmatpush.bf16.msra.mxu0 %v5654
  %5926 = vmatpush.bf16.msra.mxu0 %v5653
  %5927 = vmatpush.bf16.msra.mxu0 %v5652
  %5928 = vmatpush.bf16.msra.mxu0 %v5651
  %5929 = vmatmul.bf16.gmra.mxu0 %v5887
  %v5930 = vpop.f32.mrf.mxu0
  %v5931 = vadd.f32 0.0, %v5930
  %v5932 = vpop.f32.mrf.mxu0
  %v5933 = vadd.f32 0.0, %v5932
  %5934 = vmatmul.bf16.gmra.mxu0 %v5889
  %v5935 = vpop.f32.mrf.mxu0
  %v5936 = vadd.f32 0.0, %v5935
  %v5937 = vpop.f32.mrf.mxu0
  %v5938 = vadd.f32 0.0, %v5937
  %5939 = vmatmul.bf16.gmra.mxu0 %v5891
  %v5940 = vpop.f32.mrf.mxu0
  %v5941 = vadd.f32 0.0, %v5940
  %v5942 = vpop.f32.mrf.mxu0
  %v5943 = vadd.f32 0.0, %v5942
  %5944 = vmatmul.bf16.gmra.mxu0 %v5893
  %v5945 = vpop.f32.mrf.mxu0
  %v5946 = vadd.f32 0.0, %v5945
  %v5947 = vpop.f32.mrf.mxu0
  %v5948 = vadd.f32 0.0, %v5947
  %5949 = vdwg.mxu0
  %5950 = vmatpush.bf16.msra.mxu0 0
  %5951 = vmatpush.bf16.msra.mxu0 0
  %5952 = vmatpush.bf16.msra.mxu0 0
  %5953 = vmatpush.bf16.msra.mxu0 0
  %5954 = vmatpush.bf16.msra.mxu0 0
  %5955 = vmatpush.bf16.msra.mxu0 0
  %5956 = vmatpush.bf16.msra.mxu0 0
  %5957 = vmatpush.bf16.msra.mxu0 %v5659
  %5958 = vmatmul.bf16.gmra.mxu0 %v5910
  %v5959 = vpop.f32.mrf.mxu0
  %v5960 = vadd.f32 %v5931, %v5959
  %v5961 = vpop.f32.mrf.mxu0
  %v5962 = vadd.f32 %v5933, %v5961
  %5963 = vmatmul.bf16.gmra.mxu0 %v5913
  %v5964 = vpop.f32.mrf.mxu0
  %v5965 = vadd.f32 %v5936, %v5964
  %v5966 = vpop.f32.mrf.mxu0
  %v5967 = vadd.f32 %v5938, %v5966
  %5968 = vmatmul.bf16.gmra.mxu0 %v5916
  %v5969 = vpop.f32.mrf.mxu0
  %v5970 = vadd.f32 %v5941, %v5969
  %v5971 = vpop.f32.mrf.mxu0
  %v5972 = vadd.f32 %v5943, %v5971
  %5973 = vmatmul.bf16.gmra.mxu0 %v5919
  %v5974 = vpop.f32.mrf.mxu0
  %v5975 = vadd.f32 %v5946, %v5974
  %v5976 = vpop.f32.mrf.mxu0
  %v5977 = vadd.f32 %v5948, %v5976
  %5978 = vdwg.mxu0
  %v5979 = vpack.c.bf16 %v5962, %v5960
  %v5980 = vpack.c.bf16 %v5967, %v5965
  %v5981 = vpack.c.bf16 %v5972, %v5970
  %v5982 = vpack.c.bf16 %v5977, %v5975
  %v5991 = vunpack.c.l.b16 %v5854
  %v5992 = vunpack.c.l.b16 %v5855
  %v5993 = vunpack.c.l.b16 %v5856
  %v5994 = vunpack.c.l.b16 %v5857
  %v5995 = vunpack.c.l.b16 %v5858
  %v5996 = vunpack.c.l.b16 %v5859
  %v5997 = vunpack.c.l.b16 %v5860
  %v5998 = vunpack.c.l.b16 %v5861
  %v5999 = vpack.c.b16 %v5992, %v5991
  %v6000 = vpack.c.b16 %v5994, %v5993
  %v6001 = vpack.c.b16 %v5996, %v5995
  %v6002 = vpack.c.b16 %v5998, %v5997
  %v6008 = vsel %vm4185, %v5979, 0
  %v6011 = vsel %vm4185, %v5980, 0
  %v6014 = vsel %vm4185, %v5981, 0
  %v6017 = vsel %vm4185, %v5982, 0
  %6019 = vmatpush.bf16.msra.mxu0 0
  %6020 = vmatpush.bf16.msra.mxu0 0
  %6021 = vmatpush.bf16.msra.mxu0 0
  %6022 = vmatpush.bf16.msra.mxu0 0
  %6023 = vmatpush.bf16.msra.mxu0 %v6002
  %6024 = vmatpush.bf16.msra.mxu0 %v6001
  %6025 = vmatpush.bf16.msra.mxu0 %v6000
  %6026 = vmatpush.bf16.msra.mxu0 %v5999
  %6027 = vmatmul.bf16.gmra.mxu0 %v6008
  %v6028 = vpop.f32.mrf.mxu0
  %v6029 = vadd.f32 0.0, %v6028
  %v6030 = vpop.f32.mrf.mxu0
  %v6031 = vadd.f32 0.0, %v6030
  %6032 = vmatmul.bf16.gmra.mxu0 %v6011
  %v6033 = vpop.f32.mrf.mxu0
  %v6034 = vadd.f32 0.0, %v6033
  %v6035 = vpop.f32.mrf.mxu0
  %v6036 = vadd.f32 0.0, %v6035
  %6037 = vmatmul.bf16.gmra.mxu0 %v6014
  %v6038 = vpop.f32.mrf.mxu0
  %v6039 = vadd.f32 0.0, %v6038
  %v6040 = vpop.f32.mrf.mxu0
  %v6041 = vadd.f32 0.0, %v6040
  %6042 = vmatmul.bf16.gmra.mxu0 %v6017
  %v6043 = vpop.f32.mrf.mxu0
  %v6044 = vadd.f32 0.0, %v6043
  %v6045 = vpop.f32.mrf.mxu0
  %v6046 = vadd.f32 0.0, %v6045
  %6047 = vdwg.mxu0
  %v6048 = vpack.c.bf16 %v5759, %v5757
  %v6049 = vpack.c.bf16 %v5764, %v5762
  %v6050 = vpack.c.bf16 %v5769, %v5767
  %v6051 = vpack.c.bf16 %v5774, %v5772
  %v6052 = vpack.c.bf16 %v5779, %v5777
  %v6053 = vpack.c.bf16 %v5784, %v5782
  %v6054 = vpack.c.bf16 %v5789, %v5787
  %v6055 = vpack.c.bf16 %v5794, %v5792
  %v6056 = vpack.c.bf16 %v5799, %v5797
  %v6057 = vpack.c.bf16 %v6031, %v6029
  %v6058 = vpack.c.bf16 %v6036, %v6034
  %v6059 = vpack.c.bf16 %v6041, %v6039
  %v6060 = vpack.c.bf16 %v6046, %v6044
  %v6062 = vperm.slane %v5862, 0
  %6068 = vrot.lane.b32.xlu0 %v6057, 64
  %v6069 = vpop.permute.xlu0 %6068
  %6070 = vrot.lane.b32.xlu0 %v6058, 64
  %v6071 = vpop.permute.xlu0 %6070
  %6072 = vrot.lane.b32.xlu0 %v6059, 64
  %v6073 = vpop.permute.xlu0 %6072
  %6074 = vrot.lane.b32.xlu0 %v6060, 64
  %v6075 = vpop.permute.xlu0 %6074
  %vm6076 = vcmask 261120
  %v6078 = vsel %vm6076, %v6048, 0
  %v6081 = vsel %vm6076, %v6049, 0
  %v6084 = vsel %vm6076, %v6050, 0
  %v6087 = vsel %vm6076, %v6051, 0
  %v6090 = vsel %vm6076, %v6052, 0
  %v6093 = vsel %vm6076, %v6053, 0
  %v6096 = vsel %vm6076, %v6054, 0
  %v6099 = vsel %vm6076, %v6055, 0
  %v6102 = vsel %vm6076, %v6056, 0
  %v6105 = vsel %vm6076, %v6069, 0
  %v6108 = vsel %vm6076, %v6071, 0
  %v6111 = vsel %vm6076, %v6073, 0
  %v6114 = vsel %vm6076, %v6075, 0
  %6116 = vmatpush.bf16.xpose.msra.mxu0 0
  %6117 = vmatpush.bf16.xpose.msra.mxu0 0
  %6118 = vmatpush.bf16.xpose.msra.mxu0 0
  %6119 = vmatpush.bf16.xpose.msra.mxu0 0
  %6120 = vmatpush.bf16.xpose.msra.mxu0 %v6114
  %6121 = vmatpush.bf16.xpose.msra.mxu0 %v6111
  %6122 = vmatpush.bf16.xpose.msra.mxu0 %v6108
  %6123 = vmatpush.bf16.xpose.msra.mxu0 %v6105
  %6124 = vmatmul.bf16.gmra.mxu0 %v6078
  %v6125 = vpop.f32.mrf.mxu0
  %v6126 = vadd.f32 %v6062, %v6125
  %v6127 = vpop.f32.mrf.mxu0
  %v6128 = vadd.f32 %v6062, %v6127
  %6129 = vmatmul.bf16.gmra.mxu0 %v6081
  %v6130 = vpop.f32.mrf.mxu0
  %v6131 = vadd.f32 %v6062, %v6130
  %v6132 = vpop.f32.mrf.mxu0
  %v6133 = vadd.f32 %v6062, %v6132
  %6134 = vmatmul.bf16.gmra.mxu0 %v6084
  %v6135 = vpop.f32.mrf.mxu0
  %v6136 = vadd.f32 %v6062, %v6135
  %v6137 = vpop.f32.mrf.mxu0
  %v6138 = vadd.f32 %v6062, %v6137
  %6139 = vmatmul.bf16.gmra.mxu0 %v6087
  %v6140 = vpop.f32.mrf.mxu0
  %v6141 = vadd.f32 %v6062, %v6140
  %v6142 = vpop.f32.mrf.mxu0
  %v6143 = vadd.f32 %v6062, %v6142
  %6144 = vmatmul.bf16.gmra.mxu0 %v6090
  %v6145 = vpop.f32.mrf.mxu0
  %v6146 = vadd.f32 %v6062, %v6145
  %v6147 = vpop.f32.mrf.mxu0
  %v6148 = vadd.f32 %v6062, %v6147
  %6149 = vmatmul.bf16.gmra.mxu0 %v6093
  %v6150 = vpop.f32.mrf.mxu0
  %v6151 = vadd.f32 %v6062, %v6150
  %v6152 = vpop.f32.mrf.mxu0
  %v6153 = vadd.f32 %v6062, %v6152
  %6154 = vmatmul.bf16.gmra.mxu0 %v6096
  %v6155 = vpop.f32.mrf.mxu0
  %v6156 = vadd.f32 %v6062, %v6155
  %v6157 = vpop.f32.mrf.mxu0
  %v6158 = vadd.f32 %v6062, %v6157
  %6159 = vmatmul.bf16.gmra.mxu0 %v6099
  %v6160 = vpop.f32.mrf.mxu0
  %v6161 = vadd.f32 %v6062, %v6160
  %v6162 = vpop.f32.mrf.mxu0
  %v6163 = vadd.f32 %v6062, %v6162
  %6164 = vmatmul.bf16.gmra.mxu0 %v6102
  %v6165 = vpop.f32.mrf.mxu0
  %v6166 = vadd.f32 %v6062, %v6165
  %v6167 = vpop.f32.mrf.mxu0
  %v6168 = vadd.f32 %v6062, %v6167
  %6169 = vdwg.mxu0
  %v6170 = vsel %vm4185, %v6126, -inf
  %6171 = vmax.xlane.f32.xlu0 %v6170
  %v6172 = vpop.xlane.xlu0 %6171
  %v6173 = vsel %vm4185, %v6128, -inf
  %6174 = vmax.xlane.f32.xlu0 %v6173
  %v6175 = vpop.xlane.xlu0 %6174
  %v6176 = vsel %vm4185, %v6131, -inf
  %6177 = vmax.xlane.f32.xlu0 %v6176
  %v6178 = vpop.xlane.xlu0 %6177
  %v6179 = vsel %vm4185, %v6133, -inf
  %6180 = vmax.xlane.f32.xlu0 %v6179
  %v6181 = vpop.xlane.xlu0 %6180
  %v6182 = vsel %vm4185, %v6136, -inf
  %6183 = vmax.xlane.f32.xlu0 %v6182
  %v6184 = vpop.xlane.xlu0 %6183
  %v6185 = vsel %vm4185, %v6138, -inf
  %6186 = vmax.xlane.f32.xlu0 %v6185
  %v6187 = vpop.xlane.xlu0 %6186
  %v6188 = vsel %vm4185, %v6141, -inf
  %6189 = vmax.xlane.f32.xlu0 %v6188
  %v6190 = vpop.xlane.xlu0 %6189
  %v6191 = vsel %vm4185, %v6143, -inf
  %6192 = vmax.xlane.f32.xlu0 %v6191
  %v6193 = vpop.xlane.xlu0 %6192
  %v6194 = vsel %vm4185, %v6146, -inf
  %6195 = vmax.xlane.f32.xlu0 %v6194
  %v6196 = vpop.xlane.xlu0 %6195
  %v6197 = vsel %vm4185, %v6148, -inf
  %6198 = vmax.xlane.f32.xlu0 %v6197
  %v6199 = vpop.xlane.xlu0 %6198
  %v6200 = vsel %vm4185, %v6151, -inf
  %6201 = vmax.xlane.f32.xlu0 %v6200
  %v6202 = vpop.xlane.xlu0 %6201
  %v6203 = vsel %vm4185, %v6153, -inf
  %6204 = vmax.xlane.f32.xlu0 %v6203
  %v6205 = vpop.xlane.xlu0 %6204
  %v6206 = vsel %vm4185, %v6156, -inf
  %6207 = vmax.xlane.f32.xlu0 %v6206
  %v6208 = vpop.xlane.xlu0 %6207
  %v6209 = vsel %vm4185, %v6158, -inf
  %6210 = vmax.xlane.f32.xlu0 %v6209
  %v6211 = vpop.xlane.xlu0 %6210
  %v6212 = vsel %vm4185, %v6161, -inf
  %6213 = vmax.xlane.f32.xlu0 %v6212
  %v6214 = vpop.xlane.xlu0 %6213
  %v6215 = vsel %vm4185, %v6163, -inf
  %6216 = vmax.xlane.f32.xlu0 %v6215
  %v6217 = vpop.xlane.xlu0 %6216
  %v6218 = vsel %vm4185, %v6166, -inf
  %6219 = vmax.xlane.f32.xlu0 %v6218
  %v6220 = vpop.xlane.xlu0 %6219
  %v6221 = vsel %vm4185, %v6168, -inf
  %6222 = vmax.xlane.f32.xlu0 %v6221
  %v6223 = vpop.xlane.xlu0 %6222
  %v6224 = vsub.f32 %v6126, %v6172
  %v6225 = vsub.f32 %v6128, %v6175
  %v6226 = vsub.f32 %v6131, %v6178
  %v6227 = vsub.f32 %v6133, %v6181
  %v6228 = vsub.f32 %v6136, %v6184
  %v6229 = vsub.f32 %v6138, %v6187
  %v6230 = vsub.f32 %v6141, %v6190
  %v6231 = vsub.f32 %v6143, %v6193
  %v6232 = vsub.f32 %v6146, %v6196
  %v6233 = vsub.f32 %v6148, %v6199
  %v6234 = vsub.f32 %v6151, %v6202
  %v6235 = vsub.f32 %v6153, %v6205
  %v6236 = vsub.f32 %v6156, %v6208
  %v6237 = vsub.f32 %v6158, %v6211
  %v6238 = vsub.f32 %v6161, %v6214
  %v6239 = vsub.f32 %v6163, %v6217
  %v6240 = vsub.f32 %v6166, %v6220
  %v6241 = vsub.f32 %v6168, %v6223
  %v6242 = vmul.f32 %v6224, 1.442695
  %v6243 = vpow.pop %v6242
  %v6244 = vmul.f32 %v6225, 1.442695
  %v6245 = vpow.pop %v6244
  %v6246 = vmul.f32 %v6226, 1.442695
  %v6247 = vpow.pop %v6246
  %v6248 = vmul.f32 %v6227, 1.442695
  %v6249 = vpow.pop %v6248
  %v6250 = vmul.f32 %v6228, 1.442695
  %v6251 = vpow.pop %v6250
  %v6252 = vmul.f32 %v6229, 1.442695
  %v6253 = vpow.pop %v6252
  %v6254 = vmul.f32 %v6230, 1.442695
  %v6255 = vpow.pop %v6254
  %v6256 = vmul.f32 %v6231, 1.442695
  %v6257 = vpow.pop %v6256
  %v6258 = vmul.f32 %v6232, 1.442695
  %v6259 = vpow.pop %v6258
  %v6260 = vmul.f32 %v6233, 1.442695
  %v6261 = vpow.pop %v6260
  %v6262 = vmul.f32 %v6234, 1.442695
  %v6263 = vpow.pop %v6262
  %v6264 = vmul.f32 %v6235, 1.442695
  %v6265 = vpow.pop %v6264
  %v6266 = vmul.f32 %v6236, 1.442695
  %v6267 = vpow.pop %v6266
  %v6268 = vmul.f32 %v6237, 1.442695
  %v6269 = vpow.pop %v6268
  %v6270 = vmul.f32 %v6238, 1.442695
  %v6271 = vpow.pop %v6270
  %v6272 = vmul.f32 %v6239, 1.442695
  %v6273 = vpow.pop %v6272
  %v6274 = vmul.f32 %v6240, 1.442695
  %v6275 = vpow.pop %v6274
  %v6276 = vmul.f32 %v6241, 1.442695
  %v6277 = vpow.pop %v6276
  %v6278 = vsel %vm4185, %v6243, 0.0
  %6279 = vadd.xlane.f32.xlu0 %v6278
  %v6280 = vpop.xlane.xlu0 %6279
  %v6281 = vsel %vm4185, %v6245, 0.0
  %6282 = vadd.xlane.f32.xlu0 %v6281
  %v6283 = vpop.xlane.xlu0 %6282
  %v6284 = vsel %vm4185, %v6247, 0.0
  %6285 = vadd.xlane.f32.xlu0 %v6284
  %v6286 = vpop.xlane.xlu0 %6285
  %v6287 = vsel %vm4185, %v6249, 0.0
  %6288 = vadd.xlane.f32.xlu0 %v6287
  %v6289 = vpop.xlane.xlu0 %6288
  %v6290 = vsel %vm4185, %v6251, 0.0
  %6291 = vadd.xlane.f32.xlu0 %v6290
  %v6292 = vpop.xlane.xlu0 %6291
  %v6293 = vsel %vm4185, %v6253, 0.0
  %6294 = vadd.xlane.f32.xlu0 %v6293
  %v6295 = vpop.xlane.xlu0 %6294
  %v6296 = vsel %vm4185, %v6255, 0.0
  %6297 = vadd.xlane.f32.xlu0 %v6296
  %v6298 = vpop.xlane.xlu0 %6297
  %v6299 = vsel %vm4185, %v6257, 0.0
  %6300 = vadd.xlane.f32.xlu0 %v6299
  %v6301 = vpop.xlane.xlu0 %6300
  %v6302 = vsel %vm4185, %v6259, 0.0
  %6303 = vadd.xlane.f32.xlu0 %v6302
  %v6304 = vpop.xlane.xlu0 %6303
  %v6305 = vsel %vm4185, %v6261, 0.0
  %6306 = vadd.xlane.f32.xlu0 %v6305
  %v6307 = vpop.xlane.xlu0 %6306
  %v6308 = vsel %vm4185, %v6263, 0.0
  %6309 = vadd.xlane.f32.xlu0 %v6308
  %v6310 = vpop.xlane.xlu0 %6309
  %v6311 = vsel %vm4185, %v6265, 0.0
  %6312 = vadd.xlane.f32.xlu0 %v6311
  %v6313 = vpop.xlane.xlu0 %6312
  %v6314 = vsel %vm4185, %v6267, 0.0
  %6315 = vadd.xlane.f32.xlu0 %v6314
  %v6316 = vpop.xlane.xlu0 %6315
  %v6317 = vsel %vm4185, %v6269, 0.0
  %6318 = vadd.xlane.f32.xlu0 %v6317
  %v6319 = vpop.xlane.xlu0 %6318
  %v6320 = vsel %vm4185, %v6271, 0.0
  %6321 = vadd.xlane.f32.xlu0 %v6320
  %v6322 = vpop.xlane.xlu0 %6321
  %v6323 = vsel %vm4185, %v6273, 0.0
  %6324 = vadd.xlane.f32.xlu0 %v6323
  %v6325 = vpop.xlane.xlu0 %6324
  %v6326 = vsel %vm4185, %v6275, 0.0
  %6327 = vadd.xlane.f32.xlu0 %v6326
  %v6328 = vpop.xlane.xlu0 %6327
  %v6329 = vsel %vm4185, %v6277, 0.0
  %6330 = vadd.xlane.f32.xlu0 %v6329
  %v6331 = vpop.xlane.xlu0 %6330
  %v6332 = vrcp.pop %v6280
  %v6333 = vrcp.pop %v6283
  %v6334 = vrcp.pop %v6286
  %v6335 = vrcp.pop %v6289
  %v6336 = vrcp.pop %v6292
  %v6337 = vrcp.pop %v6295
  %v6338 = vrcp.pop %v6298
  %v6339 = vrcp.pop %v6301
  %v6340 = vrcp.pop %v6304
  %v6341 = vrcp.pop %v6307
  %v6342 = vrcp.pop %v6310
  %v6343 = vrcp.pop %v6313
  %v6344 = vrcp.pop %v6316
  %v6345 = vrcp.pop %v6319
  %v6346 = vrcp.pop %v6322
  %v6347 = vrcp.pop %v6325
  %v6348 = vrcp.pop %v6328
  %v6349 = vrcp.pop %v6331
  %v6350 = vmul.f32 %v6243, %v6332
  %v6351 = vmul.f32 %v6245, %v6333
  %v6352 = vmul.f32 %v6247, %v6334
  %v6353 = vmul.f32 %v6249, %v6335
  %v6354 = vmul.f32 %v6251, %v6336
  %v6355 = vmul.f32 %v6253, %v6337
  %v6356 = vmul.f32 %v6255, %v6338
  %v6357 = vmul.f32 %v6257, %v6339
  %v6358 = vmul.f32 %v6259, %v6340
  %v6359 = vmul.f32 %v6261, %v6341
  %v6360 = vmul.f32 %v6263, %v6342
  %v6361 = vmul.f32 %v6265, %v6343
  %v6362 = vmul.f32 %v6267, %v6344
  %v6363 = vmul.f32 %v6269, %v6345
  %v6364 = vmul.f32 %v6271, %v6346
  %v6365 = vmul.f32 %v6273, %v6347
  %v6366 = vmul.f32 %v6275, %v6348
  %v6367 = vmul.f32 %v6277, %v6349
  %v6368 = vpack.c.bf16 %v6351, %v6350
  %v6369 = vpack.c.bf16 %v6353, %v6352
  %v6370 = vpack.c.bf16 %v6355, %v6354
  %v6371 = vpack.c.bf16 %v6357, %v6356
  %v6372 = vpack.c.bf16 %v6359, %v6358
  %v6373 = vpack.c.bf16 %v6361, %v6360
  %v6374 = vpack.c.bf16 %v6363, %v6362
  %v6375 = vpack.c.bf16 %v6365, %v6364
  %v6376 = vpack.c.bf16 %v6367, %v6366
  %v6378 = vsel %vm4185, %v6368, 0
  %v6381 = vsel %vm4185, %v6369, 0
  %v6384 = vsel %vm4185, %v6370, 0
  %v6387 = vsel %vm4185, %v6371, 0
  %v6390 = vsel %vm4185, %v6372, 0
  %v6393 = vsel %vm4185, %v6373, 0
  %v6396 = vsel %vm4185, %v6374, 0
  %v6399 = vsel %vm4185, %v6375, 0
  %v6402 = vsel %vm4185, %v6376, 0
  %6404 = vmatpush.bf16.msra.mxu0 0
  %6405 = vmatpush.bf16.msra.mxu0 0
  %6406 = vmatpush.bf16.msra.mxu0 0
  %6407 = vmatpush.bf16.msra.mxu0 0
  %6408 = vmatpush.bf16.msra.mxu0 %v6060
  %6409 = vmatpush.bf16.msra.mxu0 %v6059
  %6410 = vmatpush.bf16.msra.mxu0 %v6058
  %6411 = vmatpush.bf16.msra.mxu0 %v6057
  %6412 = vmatmul.bf16.gmra.mxu0 %v6378
  %v6413 = vpop.f32.mrf.mxu0
  %v6414 = vadd.f32 0.0, %v6413
  %v6415 = vpop.f32.mrf.mxu0
  %v6416 = vadd.f32 0.0, %v6415
  %6417 = vmatmul.bf16.gmra.mxu0 %v6381
  %v6418 = vpop.f32.mrf.mxu0
  %v6419 = vadd.f32 0.0, %v6418
  %v6420 = vpop.f32.mrf.mxu0
  %v6421 = vadd.f32 0.0, %v6420
  %6422 = vmatmul.bf16.gmra.mxu0 %v6384
  %v6423 = vpop.f32.mrf.mxu0
  %v6424 = vadd.f32 0.0, %v6423
  %v6425 = vpop.f32.mrf.mxu0
  %v6426 = vadd.f32 0.0, %v6425
  %6427 = vmatmul.bf16.gmra.mxu0 %v6387
  %v6428 = vpop.f32.mrf.mxu0
  %v6429 = vadd.f32 0.0, %v6428
  %v6430 = vpop.f32.mrf.mxu0
  %v6431 = vadd.f32 0.0, %v6430
  %6432 = vmatmul.bf16.gmra.mxu0 %v6390
  %v6433 = vpop.f32.mrf.mxu0
  %v6434 = vadd.f32 0.0, %v6433
  %v6435 = vpop.f32.mrf.mxu0
  %v6436 = vadd.f32 0.0, %v6435
  %6437 = vmatmul.bf16.gmra.mxu0 %v6393
  %v6438 = vpop.f32.mrf.mxu0
  %v6439 = vadd.f32 0.0, %v6438
  %v6440 = vpop.f32.mrf.mxu0
  %v6441 = vadd.f32 0.0, %v6440
  %6442 = vmatmul.bf16.gmra.mxu0 %v6396
  %v6443 = vpop.f32.mrf.mxu0
  %v6444 = vadd.f32 0.0, %v6443
  %v6445 = vpop.f32.mrf.mxu0
  %v6446 = vadd.f32 0.0, %v6445
  %6447 = vmatmul.bf16.gmra.mxu0 %v6399
  %v6448 = vpop.f32.mrf.mxu0
  %v6449 = vadd.f32 0.0, %v6448
  %v6450 = vpop.f32.mrf.mxu0
  %v6451 = vadd.f32 0.0, %v6450
  %6452 = vmatmul.bf16.gmra.mxu0 %v6402
  %v6453 = vpop.f32.mrf.mxu0
  %v6454 = vadd.f32 0.0, %v6453
  %v6455 = vpop.f32.mrf.mxu0
  %v6456 = vadd.f32 0.0, %v6455
  %6457 = vdwg.mxu0
  %6467 = vmatpush.bf16.msra.mxu0 %v5667
  %6468 = vmatpush.bf16.msra.mxu0 %v5666
  %6469 = vmatpush.bf16.msra.mxu0 %v5665
  %6470 = vmatpush.bf16.msra.mxu0 %v5664
  %6471 = vmatpush.bf16.msra.mxu0 %v5663
  %6472 = vmatpush.bf16.msra.mxu0 %v5662
  %6473 = vmatpush.bf16.msra.mxu0 %v5661
  %6474 = vmatpush.bf16.msra.mxu0 %v5660
  %6475 = vmatmul.bf16.gmra.mxu0 %v5887
  %v6476 = vpop.f32.mrf.mxu0
  %v6477 = vadd.f32 0.0, %v6476
  %v6478 = vpop.f32.mrf.mxu0
  %v6479 = vadd.f32 0.0, %v6478
  %6480 = vmatmul.bf16.gmra.mxu0 %v5889
  %v6481 = vpop.f32.mrf.mxu0
  %v6482 = vadd.f32 0.0, %v6481
  %v6483 = vpop.f32.mrf.mxu0
  %v6484 = vadd.f32 0.0, %v6483
  %6485 = vmatmul.bf16.gmra.mxu0 %v5891
  %v6486 = vpop.f32.mrf.mxu0
  %v6487 = vadd.f32 0.0, %v6486
  %v6488 = vpop.f32.mrf.mxu0
  %v6489 = vadd.f32 0.0, %v6488
  %6490 = vmatmul.bf16.gmra.mxu0 %v5893
  %v6491 = vpop.f32.mrf.mxu0
  %v6492 = vadd.f32 0.0, %v6491
  %v6493 = vpop.f32.mrf.mxu0
  %v6494 = vadd.f32 0.0, %v6493
  %6495 = vdwg.mxu0
  %6496 = vmatpush.bf16.msra.mxu0 0
  %6497 = vmatpush.bf16.msra.mxu0 0
  %6498 = vmatpush.bf16.msra.mxu0 0
  %6499 = vmatpush.bf16.msra.mxu0 0
  %6500 = vmatpush.bf16.msra.mxu0 0
  %6501 = vmatpush.bf16.msra.mxu0 0
  %6502 = vmatpush.bf16.msra.mxu0 0
  %6503 = vmatpush.bf16.msra.mxu0 %v5668
  %6504 = vmatmul.bf16.gmra.mxu0 %v5910
  %v6505 = vpop.f32.mrf.mxu0
  %v6506 = vadd.f32 %v6477, %v6505
  %v6507 = vpop.f32.mrf.mxu0
  %v6508 = vadd.f32 %v6479, %v6507
  %6509 = vmatmul.bf16.gmra.mxu0 %v5913
  %v6510 = vpop.f32.mrf.mxu0
  %v6511 = vadd.f32 %v6482, %v6510
  %v6512 = vpop.f32.mrf.mxu0
  %v6513 = vadd.f32 %v6484, %v6512
  %6514 = vmatmul.bf16.gmra.mxu0 %v5916
  %v6515 = vpop.f32.mrf.mxu0
  %v6516 = vadd.f32 %v6487, %v6515
  %v6517 = vpop.f32.mrf.mxu0
  %v6518 = vadd.f32 %v6489, %v6517
  %6519 = vmatmul.bf16.gmra.mxu0 %v5919
  %v6520 = vpop.f32.mrf.mxu0
  %v6521 = vadd.f32 %v6492, %v6520
  %v6522 = vpop.f32.mrf.mxu0
  %v6523 = vadd.f32 %v6494, %v6522
  %6524 = vdwg.mxu0
  %v6525 = vpack.c.bf16 %v6508, %v6506
  %v6526 = vpack.c.bf16 %v6513, %v6511
  %v6527 = vpack.c.bf16 %v6518, %v6516
  %v6528 = vpack.c.bf16 %v6523, %v6521
  %v6530 = vsel %vm4185, %v6525, 0
  %v6533 = vsel %vm4185, %v6526, 0
  %v6536 = vsel %vm4185, %v6527, 0
  %v6539 = vsel %vm4185, %v6528, 0
  %6541 = vmatpush.bf16.msra.mxu0 0
  %6542 = vmatpush.bf16.msra.mxu0 0
  %6543 = vmatpush.bf16.msra.mxu0 0
  %6544 = vmatpush.bf16.msra.mxu0 0
  %6545 = vmatpush.bf16.msra.mxu0 %v6002
  %6546 = vmatpush.bf16.msra.mxu0 %v6001
  %6547 = vmatpush.bf16.msra.mxu0 %v6000
  %6548 = vmatpush.bf16.msra.mxu0 %v5999
  %6549 = vmatmul.bf16.gmra.mxu0 %v6530
  %v6550 = vpop.f32.mrf.mxu0
  %v6551 = vadd.f32 0.0, %v6550
  %v6552 = vpop.f32.mrf.mxu0
  %v6553 = vadd.f32 0.0, %v6552
  %6554 = vmatmul.bf16.gmra.mxu0 %v6533
  %v6555 = vpop.f32.mrf.mxu0
  %v6556 = vadd.f32 0.0, %v6555
  %v6557 = vpop.f32.mrf.mxu0
  %v6558 = vadd.f32 0.0, %v6557
  %6559 = vmatmul.bf16.gmra.mxu0 %v6536
  %v6560 = vpop.f32.mrf.mxu0
  %v6561 = vadd.f32 0.0, %v6560
  %v6562 = vpop.f32.mrf.mxu0
  %v6563 = vadd.f32 0.0, %v6562
  %6564 = vmatmul.bf16.gmra.mxu0 %v6539
  %v6565 = vpop.f32.mrf.mxu0
  %v6566 = vadd.f32 0.0, %v6565
  %v6567 = vpop.f32.mrf.mxu0
  %v6568 = vadd.f32 0.0, %v6567
  %6569 = vdwg.mxu0
  %v6570 = vpack.c.bf16 %v5804, %v5802
  %v6571 = vpack.c.bf16 %v5809, %v5807
  %v6572 = vpack.c.bf16 %v5814, %v5812
  %v6573 = vpack.c.bf16 %v5819, %v5817
  %v6574 = vpack.c.bf16 %v5824, %v5822
  %v6575 = vpack.c.bf16 %v5829, %v5827
  %v6576 = vpack.c.bf16 %v5834, %v5832
  %v6577 = vpack.c.bf16 %v5839, %v5837
  %v6578 = vpack.c.bf16 %v5844, %v5842
  %v6579 = vpack.c.bf16 %v6553, %v6551
  %v6580 = vpack.c.bf16 %v6558, %v6556
  %v6581 = vpack.c.bf16 %v6563, %v6561
  %v6582 = vpack.c.bf16 %v6568, %v6566
  %6587 = vrot.lane.b32.xlu0 %v6579, 64
  %v6588 = vpop.permute.xlu0 %6587
  %6589 = vrot.lane.b32.xlu0 %v6580, 64
  %v6590 = vpop.permute.xlu0 %6589
  %6591 = vrot.lane.b32.xlu0 %v6581, 64
  %v6592 = vpop.permute.xlu0 %6591
  %6593 = vrot.lane.b32.xlu0 %v6582, 64
  %v6594 = vpop.permute.xlu0 %6593
  %v6596 = vsel %vm6076, %v6570, 0
  %v6599 = vsel %vm6076, %v6571, 0
  %v6602 = vsel %vm6076, %v6572, 0
  %v6605 = vsel %vm6076, %v6573, 0
  %v6608 = vsel %vm6076, %v6574, 0
  %v6611 = vsel %vm6076, %v6575, 0
  %v6614 = vsel %vm6076, %v6576, 0
  %v6617 = vsel %vm6076, %v6577, 0
  %v6620 = vsel %vm6076, %v6578, 0
  %v6623 = vsel %vm6076, %v6588, 0
  %v6626 = vsel %vm6076, %v6590, 0
  %v6629 = vsel %vm6076, %v6592, 0
  %v6632 = vsel %vm6076, %v6594, 0
  %6634 = vmatpush.bf16.xpose.msra.mxu0 0
  %6635 = vmatpush.bf16.xpose.msra.mxu0 0
  %6636 = vmatpush.bf16.xpose.msra.mxu0 0
  %6637 = vmatpush.bf16.xpose.msra.mxu0 0
  %6638 = vmatpush.bf16.xpose.msra.mxu0 %v6632
  %6639 = vmatpush.bf16.xpose.msra.mxu0 %v6629
  %6640 = vmatpush.bf16.xpose.msra.mxu0 %v6626
  %6641 = vmatpush.bf16.xpose.msra.mxu0 %v6623
  %6642 = vmatmul.bf16.gmra.mxu0 %v6596
  %v6643 = vpop.f32.mrf.mxu0
  %v6644 = vadd.f32 %v6062, %v6643
  %v6645 = vpop.f32.mrf.mxu0
  %v6646 = vadd.f32 %v6062, %v6645
  %6647 = vmatmul.bf16.gmra.mxu0 %v6599
  %v6648 = vpop.f32.mrf.mxu0
  %v6649 = vadd.f32 %v6062, %v6648
  %v6650 = vpop.f32.mrf.mxu0
  %v6651 = vadd.f32 %v6062, %v6650
  %6652 = vmatmul.bf16.gmra.mxu0 %v6602
  %v6653 = vpop.f32.mrf.mxu0
  %v6654 = vadd.f32 %v6062, %v6653
  %v6655 = vpop.f32.mrf.mxu0
  %v6656 = vadd.f32 %v6062, %v6655
  %6657 = vmatmul.bf16.gmra.mxu0 %v6605
  %v6658 = vpop.f32.mrf.mxu0
  %v6659 = vadd.f32 %v6062, %v6658
  %v6660 = vpop.f32.mrf.mxu0
  %v6661 = vadd.f32 %v6062, %v6660
  %6662 = vmatmul.bf16.gmra.mxu0 %v6608
  %v6663 = vpop.f32.mrf.mxu0
  %v6664 = vadd.f32 %v6062, %v6663
  %v6665 = vpop.f32.mrf.mxu0
  %v6666 = vadd.f32 %v6062, %v6665
  %6667 = vmatmul.bf16.gmra.mxu0 %v6611
  %v6668 = vpop.f32.mrf.mxu0
  %v6669 = vadd.f32 %v6062, %v6668
  %v6670 = vpop.f32.mrf.mxu0
  %v6671 = vadd.f32 %v6062, %v6670
  %6672 = vmatmul.bf16.gmra.mxu0 %v6614
  %v6673 = vpop.f32.mrf.mxu0
  %v6674 = vadd.f32 %v6062, %v6673
  %v6675 = vpop.f32.mrf.mxu0
  %v6676 = vadd.f32 %v6062, %v6675
  %6677 = vmatmul.bf16.gmra.mxu0 %v6617
  %v6678 = vpop.f32.mrf.mxu0
  %v6679 = vadd.f32 %v6062, %v6678
  %v6680 = vpop.f32.mrf.mxu0
  %v6681 = vadd.f32 %v6062, %v6680
  %6682 = vmatmul.bf16.gmra.mxu0 %v6620
  %v6683 = vpop.f32.mrf.mxu0
  %v6684 = vadd.f32 %v6062, %v6683
  %v6685 = vpop.f32.mrf.mxu0
  %v6686 = vadd.f32 %v6062, %v6685
  %6687 = vdwg.mxu0
  %v6688 = vsel %vm4185, %v6644, -inf
  %6689 = vmax.xlane.f32.xlu0 %v6688
  %v6690 = vpop.xlane.xlu0 %6689
  %v6691 = vsel %vm4185, %v6646, -inf
  %6692 = vmax.xlane.f32.xlu0 %v6691
  %v6693 = vpop.xlane.xlu0 %6692
  %v6694 = vsel %vm4185, %v6649, -inf
  %6695 = vmax.xlane.f32.xlu0 %v6694
  %v6696 = vpop.xlane.xlu0 %6695
  %v6697 = vsel %vm4185, %v6651, -inf
  %6698 = vmax.xlane.f32.xlu0 %v6697
  %v6699 = vpop.xlane.xlu0 %6698
  %v6700 = vsel %vm4185, %v6654, -inf
  %6701 = vmax.xlane.f32.xlu0 %v6700
  %v6702 = vpop.xlane.xlu0 %6701
  %v6703 = vsel %vm4185, %v6656, -inf
  %6704 = vmax.xlane.f32.xlu0 %v6703
  %v6705 = vpop.xlane.xlu0 %6704
  %v6706 = vsel %vm4185, %v6659, -inf
  %6707 = vmax.xlane.f32.xlu0 %v6706
  %v6708 = vpop.xlane.xlu0 %6707
  %v6709 = vsel %vm4185, %v6661, -inf
  %6710 = vmax.xlane.f32.xlu0 %v6709
  %v6711 = vpop.xlane.xlu0 %6710
  %v6712 = vsel %vm4185, %v6664, -inf
  %6713 = vmax.xlane.f32.xlu0 %v6712
  %v6714 = vpop.xlane.xlu0 %6713
  %v6715 = vsel %vm4185, %v6666, -inf
  %6716 = vmax.xlane.f32.xlu0 %v6715
  %v6717 = vpop.xlane.xlu0 %6716
  %v6718 = vsel %vm4185, %v6669, -inf
  %6719 = vmax.xlane.f32.xlu0 %v6718
  %v6720 = vpop.xlane.xlu0 %6719
  %v6721 = vsel %vm4185, %v6671, -inf
  %6722 = vmax.xlane.f32.xlu0 %v6721
  %v6723 = vpop.xlane.xlu0 %6722
  %v6724 = vsel %vm4185, %v6674, -inf
  %6725 = vmax.xlane.f32.xlu0 %v6724
  %v6726 = vpop.xlane.xlu0 %6725
  %v6727 = vsel %vm4185, %v6676, -inf
  %6728 = vmax.xlane.f32.xlu0 %v6727
  %v6729 = vpop.xlane.xlu0 %6728
  %v6730 = vsel %vm4185, %v6679, -inf
  %6731 = vmax.xlane.f32.xlu0 %v6730
  %v6732 = vpop.xlane.xlu0 %6731
  %v6733 = vsel %vm4185, %v6681, -inf
  %6734 = vmax.xlane.f32.xlu0 %v6733
  %v6735 = vpop.xlane.xlu0 %6734
  %v6736 = vsel %vm4185, %v6684, -inf
  %6737 = vmax.xlane.f32.xlu0 %v6736
  %v6738 = vpop.xlane.xlu0 %6737
  %v6739 = vsel %vm4185, %v6686, -inf
  %6740 = vmax.xlane.f32.xlu0 %v6739
  %v6741 = vpop.xlane.xlu0 %6740
  %v6742 = vsub.f32 %v6644, %v6690
  %v6743 = vsub.f32 %v6646, %v6693
  %v6744 = vsub.f32 %v6649, %v6696
  %v6745 = vsub.f32 %v6651, %v6699
  %v6746 = vsub.f32 %v6654, %v6702
  %v6747 = vsub.f32 %v6656, %v6705
  %v6748 = vsub.f32 %v6659, %v6708
  %v6749 = vsub.f32 %v6661, %v6711
  %v6750 = vsub.f32 %v6664, %v6714
  %v6751 = vsub.f32 %v6666, %v6717
  %v6752 = vsub.f32 %v6669, %v6720
  %v6753 = vsub.f32 %v6671, %v6723
  %v6754 = vsub.f32 %v6674, %v6726
  %v6755 = vsub.f32 %v6676, %v6729
  %v6756 = vsub.f32 %v6679, %v6732
  %v6757 = vsub.f32 %v6681, %v6735
  %v6758 = vsub.f32 %v6684, %v6738
  %v6759 = vsub.f32 %v6686, %v6741
  %v6760 = vmul.f32 %v6742, 1.442695
  %v6761 = vpow.pop %v6760
  %v6762 = vmul.f32 %v6743, 1.442695
  %v6763 = vpow.pop %v6762
  %v6764 = vmul.f32 %v6744, 1.442695
  %v6765 = vpow.pop %v6764
  %v6766 = vmul.f32 %v6745, 1.442695
  %v6767 = vpow.pop %v6766
  %v6768 = vmul.f32 %v6746, 1.442695
  %v6769 = vpow.pop %v6768
  %v6770 = vmul.f32 %v6747, 1.442695
  %v6771 = vpow.pop %v6770
  %v6772 = vmul.f32 %v6748, 1.442695
  %v6773 = vpow.pop %v6772
  %v6774 = vmul.f32 %v6749, 1.442695
  %v6775 = vpow.pop %v6774
  %v6776 = vmul.f32 %v6750, 1.442695
  %v6777 = vpow.pop %v6776
  %v6778 = vmul.f32 %v6751, 1.442695
  %v6779 = vpow.pop %v6778
  %v6780 = vmul.f32 %v6752, 1.442695
  %v6781 = vpow.pop %v6780
  %v6782 = vmul.f32 %v6753, 1.442695
  %v6783 = vpow.pop %v6782
  %v6784 = vmul.f32 %v6754, 1.442695
  %v6785 = vpow.pop %v6784
  %v6786 = vmul.f32 %v6755, 1.442695
  %v6787 = vpow.pop %v6786
  %v6788 = vmul.f32 %v6756, 1.442695
  %v6789 = vpow.pop %v6788
  %v6790 = vmul.f32 %v6757, 1.442695
  %v6791 = vpow.pop %v6790
  %v6792 = vmul.f32 %v6758, 1.442695
  %v6793 = vpow.pop %v6792
  %v6794 = vmul.f32 %v6759, 1.442695
  %v6795 = vpow.pop %v6794
  %v6796 = vsel %vm4185, %v6761, 0.0
  %6797 = vadd.xlane.f32.xlu0 %v6796
  %v6798 = vpop.xlane.xlu0 %6797
  %v6799 = vsel %vm4185, %v6763, 0.0
  %6800 = vadd.xlane.f32.xlu0 %v6799
  %v6801 = vpop.xlane.xlu0 %6800
  %v6802 = vsel %vm4185, %v6765, 0.0
  %6803 = vadd.xlane.f32.xlu0 %v6802
  %v6804 = vpop.xlane.xlu0 %6803
  %v6805 = vsel %vm4185, %v6767, 0.0
  %6806 = vadd.xlane.f32.xlu0 %v6805
  %v6807 = vpop.xlane.xlu0 %6806
  %v6808 = vsel %vm4185, %v6769, 0.0
  %6809 = vadd.xlane.f32.xlu0 %v6808
  %v6810 = vpop.xlane.xlu0 %6809
  %v6811 = vsel %vm4185, %v6771, 0.0
  %6812 = vadd.xlane.f32.xlu0 %v6811
  %v6813 = vpop.xlane.xlu0 %6812
  %v6814 = vsel %vm4185, %v6773, 0.0
  %6815 = vadd.xlane.f32.xlu0 %v6814
  %v6816 = vpop.xlane.xlu0 %6815
  %v6817 = vsel %vm4185, %v6775, 0.0
  %6818 = vadd.xlane.f32.xlu0 %v6817
  %v6819 = vpop.xlane.xlu0 %6818
  %v6820 = vsel %vm4185, %v6777, 0.0
  %6821 = vadd.xlane.f32.xlu0 %v6820
  %v6822 = vpop.xlane.xlu0 %6821
  %v6823 = vsel %vm4185, %v6779, 0.0
  %6824 = vadd.xlane.f32.xlu0 %v6823
  %v6825 = vpop.xlane.xlu0 %6824
  %v6826 = vsel %vm4185, %v6781, 0.0
  %6827 = vadd.xlane.f32.xlu0 %v6826
  %v6828 = vpop.xlane.xlu0 %6827
  %v6829 = vsel %vm4185, %v6783, 0.0
  %6830 = vadd.xlane.f32.xlu0 %v6829
  %v6831 = vpop.xlane.xlu0 %6830
  %v6832 = vsel %vm4185, %v6785, 0.0
  %6833 = vadd.xlane.f32.xlu0 %v6832
  %v6834 = vpop.xlane.xlu0 %6833
  %v6835 = vsel %vm4185, %v6787, 0.0
  %6836 = vadd.xlane.f32.xlu0 %v6835
  %v6837 = vpop.xlane.xlu0 %6836
  %v6838 = vsel %vm4185, %v6789, 0.0
  %6839 = vadd.xlane.f32.xlu0 %v6838
  %v6840 = vpop.xlane.xlu0 %6839
  %v6841 = vsel %vm4185, %v6791, 0.0
  %6842 = vadd.xlane.f32.xlu0 %v6841
  %v6843 = vpop.xlane.xlu0 %6842
  %v6844 = vsel %vm4185, %v6793, 0.0
  %6845 = vadd.xlane.f32.xlu0 %v6844
  %v6846 = vpop.xlane.xlu0 %6845
  %v6847 = vsel %vm4185, %v6795, 0.0
  %6848 = vadd.xlane.f32.xlu0 %v6847
  %v6849 = vpop.xlane.xlu0 %6848
  %v6850 = vrcp.pop %v6798
  %v6851 = vrcp.pop %v6801
  %v6852 = vrcp.pop %v6804
  %v6853 = vrcp.pop %v6807
  %v6854 = vrcp.pop %v6810
  %v6855 = vrcp.pop %v6813
  %v6856 = vrcp.pop %v6816
  %v6857 = vrcp.pop %v6819
  %v6858 = vrcp.pop %v6822
  %v6859 = vrcp.pop %v6825
  %v6860 = vrcp.pop %v6828
  %v6861 = vrcp.pop %v6831
  %v6862 = vrcp.pop %v6834
  %v6863 = vrcp.pop %v6837
  %v6864 = vrcp.pop %v6840
  %v6865 = vrcp.pop %v6843
  %v6866 = vrcp.pop %v6846
  %v6867 = vrcp.pop %v6849
  %v6868 = vmul.f32 %v6761, %v6850
  %v6869 = vmul.f32 %v6763, %v6851
  %v6870 = vmul.f32 %v6765, %v6852
  %v6871 = vmul.f32 %v6767, %v6853
  %v6872 = vmul.f32 %v6769, %v6854
  %v6873 = vmul.f32 %v6771, %v6855
  %v6874 = vmul.f32 %v6773, %v6856
  %v6875 = vmul.f32 %v6775, %v6857
  %v6876 = vmul.f32 %v6777, %v6858
  %v6877 = vmul.f32 %v6779, %v6859
  %v6878 = vmul.f32 %v6781, %v6860
  %v6879 = vmul.f32 %v6783, %v6861
  %v6880 = vmul.f32 %v6785, %v6862
  %v6881 = vmul.f32 %v6787, %v6863
  %v6882 = vmul.f32 %v6789, %v6864
  %v6883 = vmul.f32 %v6791, %v6865
  %v6884 = vmul.f32 %v6793, %v6866
  %v6885 = vmul.f32 %v6795, %v6867
  %v6886 = vpack.c.bf16 %v6869, %v6868
  %v6887 = vpack.c.bf16 %v6871, %v6870
  %v6888 = vpack.c.bf16 %v6873, %v6872
  %v6889 = vpack.c.bf16 %v6875, %v6874
  %v6890 = vpack.c.bf16 %v6877, %v6876
  %v6891 = vpack.c.bf16 %v6879, %v6878
  %v6892 = vpack.c.bf16 %v6881, %v6880
  %v6893 = vpack.c.bf16 %v6883, %v6882
  %v6894 = vpack.c.bf16 %v6885, %v6884
  %v6896 = vsel %vm4185, %v6886, 0
  %v6899 = vsel %vm4185, %v6887, 0
  %v6902 = vsel %vm4185, %v6888, 0
  %v6905 = vsel %vm4185, %v6889, 0
  %v6908 = vsel %vm4185, %v6890, 0
  %v6911 = vsel %vm4185, %v6891, 0
  %v6914 = vsel %vm4185, %v6892, 0
  %v6917 = vsel %vm4185, %v6893, 0
  %v6920 = vsel %vm4185, %v6894, 0
  %6922 = vmatpush.bf16.msra.mxu0 0
  %6923 = vmatpush.bf16.msra.mxu0 0
  %6924 = vmatpush.bf16.msra.mxu0 0
  %6925 = vmatpush.bf16.msra.mxu0 0
  %6926 = vmatpush.bf16.msra.mxu0 %v6582
  %6927 = vmatpush.bf16.msra.mxu0 %v6581
  %6928 = vmatpush.bf16.msra.mxu0 %v6580
  %6929 = vmatpush.bf16.msra.mxu0 %v6579
  %6930 = vmatmul.bf16.gmra.mxu0 %v6896
  %v6931 = vpop.f32.mrf.mxu0
  %v6932 = vadd.f32 0.0, %v6931
  %v6933 = vpop.f32.mrf.mxu0
  %v6934 = vadd.f32 0.0, %v6933
  %6935 = vmatmul.bf16.gmra.mxu0 %v6899
  %v6936 = vpop.f32.mrf.mxu0
  %v6937 = vadd.f32 0.0, %v6936
  %v6938 = vpop.f32.mrf.mxu0
  %v6939 = vadd.f32 0.0, %v6938
  %6940 = vmatmul.bf16.gmra.mxu0 %v6902
  %v6941 = vpop.f32.mrf.mxu0
  %v6942 = vadd.f32 0.0, %v6941
  %v6943 = vpop.f32.mrf.mxu0
  %v6944 = vadd.f32 0.0, %v6943
  %6945 = vmatmul.bf16.gmra.mxu0 %v6905
  %v6946 = vpop.f32.mrf.mxu0
  %v6947 = vadd.f32 0.0, %v6946
  %v6948 = vpop.f32.mrf.mxu0
  %v6949 = vadd.f32 0.0, %v6948
  %6950 = vmatmul.bf16.gmra.mxu0 %v6908
  %v6951 = vpop.f32.mrf.mxu0
  %v6952 = vadd.f32 0.0, %v6951
  %v6953 = vpop.f32.mrf.mxu0
  %v6954 = vadd.f32 0.0, %v6953
  %6955 = vmatmul.bf16.gmra.mxu0 %v6911
  %v6956 = vpop.f32.mrf.mxu0
  %v6957 = vadd.f32 0.0, %v6956
  %v6958 = vpop.f32.mrf.mxu0
  %v6959 = vadd.f32 0.0, %v6958
  %6960 = vmatmul.bf16.gmra.mxu0 %v6914
  %v6961 = vpop.f32.mrf.mxu0
  %v6962 = vadd.f32 0.0, %v6961
  %v6963 = vpop.f32.mrf.mxu0
  %v6964 = vadd.f32 0.0, %v6963
  %6965 = vmatmul.bf16.gmra.mxu0 %v6917
  %v6966 = vpop.f32.mrf.mxu0
  %v6967 = vadd.f32 0.0, %v6966
  %v6968 = vpop.f32.mrf.mxu0
  %v6969 = vadd.f32 0.0, %v6968
  %6970 = vmatmul.bf16.gmra.mxu0 %v6920
  %v6971 = vpop.f32.mrf.mxu0
  %v6972 = vadd.f32 0.0, %v6971
  %v6973 = vpop.f32.mrf.mxu0
  %v6974 = vadd.f32 0.0, %v6973
  %6975 = vdwg.mxu0
  %v6976 = vadd.f32 %v5499, %v6414
  %v6977 = vadd.f32 %v5500, %v6416
  %v6978 = vadd.f32 %v5501, %v6419
  %v6979 = vadd.f32 %v5502, %v6421
  %v6980 = vadd.f32 %v5503, %v6424
  %v6981 = vadd.f32 %v5504, %v6426
  %v6982 = vadd.f32 %v5505, %v6429
  %v6983 = vadd.f32 %v5506, %v6431
  %v6984 = vadd.f32 %v5507, %v6434
  %v6985 = vadd.f32 %v5508, %v6436
  %v6986 = vadd.f32 %v5509, %v6439
  %v6987 = vadd.f32 %v5510, %v6441
  %v6988 = vadd.f32 %v5511, %v6444
  %v6989 = vadd.f32 %v5512, %v6446
  %v6990 = vadd.f32 %v5513, %v6449
  %v6991 = vadd.f32 %v5514, %v6451
  %v6992 = vadd.f32 %v5515, %v6454
  %v6993 = vadd.f32 %v5516, %v6456
  %v6994 = vadd.f32 %v5517, %v6932
  %v6995 = vadd.f32 %v5518, %v6934
  %v6996 = vadd.f32 %v5519, %v6937
  %v6997 = vadd.f32 %v5520, %v6939
  %v6998 = vadd.f32 %v5521, %v6942
  %v6999 = vadd.f32 %v5522, %v6944
  %v7000 = vadd.f32 %v5523, %v6947
  %v7001 = vadd.f32 %v5524, %v6949
  %v7002 = vadd.f32 %v5525, %v6952
  %v7003 = vadd.f32 %v5526, %v6954
  %v7004 = vadd.f32 %v5527, %v6957
  %v7005 = vadd.f32 %v5528, %v6959
  %v7006 = vadd.f32 %v5529, %v6962
  %v7007 = vadd.f32 %v5530, %v6964
  %v7008 = vadd.f32 %v5531, %v6967
  %v7009 = vadd.f32 %v5532, %v6969
  %v7010 = vadd.f32 %v5533, %v6972
  %v7011 = vadd.f32 %v5534, %v6974
  %7012 = vst.msk [vmem:[%s13] sm:$0xff] %vm4185, %v6976
  %7013 = vst.msk [vmem:[%s13 + $0x8] sm:$0xff] %vm4185, %v6977
  %7014 = vst.msk [vmem:[%s13 + $0x10] sm:$0xff] %vm4185, %v6978
  %7015 = vst.msk [vmem:[%s13 + $0x18] sm:$0xff] %vm4185, %v6979
  %7016 = vst.msk [vmem:[%s13 + $0x20] sm:$0xff] %vm4185, %v6980
  %7017 = vst.msk [vmem:[%s13 + $0x28] sm:$0xff] %vm4185, %v6981
  %7018 = vst.msk [vmem:[%s13 + $0x30] sm:$0xff] %vm4185, %v6982
  %7019 = vst.msk [vmem:[%s13 + $0x38] sm:$0xff] %vm4185, %v6983
  %7020 = vst.msk [vmem:[%s13 + $0x40] sm:$0xff] %vm4185, %v6984
  %7021 = vst.msk [vmem:[%s13 + $0x48] sm:$0xff] %vm4185, %v6985
  %7022 = vst.msk [vmem:[%s13 + $0x50] sm:$0xff] %vm4185, %v6986
  %7023 = vst.msk [vmem:[%s13 + $0x58] sm:$0xff] %vm4185, %v6987
  %7024 = vst.msk [vmem:[%s13 + $0x60] sm:$0xff] %vm4185, %v6988
  %7025 = vst.msk [vmem:[%s13 + $0x68] sm:$0xff] %vm4185, %v6989
  %7026 = vst.msk [vmem:[%s13 + $0x70] sm:$0xff] %vm4185, %v6990
  %7027 = vst.msk [vmem:[%s13 + $0x78] sm:$0xff] %vm4185, %v6991
  %7028 = vst.msk [vmem:[%s13 + $0x80] sm:$0xff] %vm4185, %v6992
  %7029 = vst.msk [vmem:[%s13 + $0x88] sm:$0xff] %vm4185, %v6993
  %s7030 = scalar_lea.vmem %s13, 144
  %7031 = vst.msk [vmem:[%s7030] sm:$0xff] %vm4185, %v6994
  %7032 = vst.msk [vmem:[%s7030 + $0x8] sm:$0xff] %vm4185, %v6995
  %7033 = vst.msk [vmem:[%s7030 + $0x10] sm:$0xff] %vm4185, %v6996
  %7034 = vst.msk [vmem:[%s7030 + $0x18] sm:$0xff] %vm4185, %v6997
  %7035 = vst.msk [vmem:[%s7030 + $0x20] sm:$0xff] %vm4185, %v6998
  %7036 = vst.msk [vmem:[%s7030 + $0x28] sm:$0xff] %vm4185, %v6999
  %7037 = vst.msk [vmem:[%s7030 + $0x30] sm:$0xff] %vm4185, %v7000
  %7038 = vst.msk [vmem:[%s7030 + $0x38] sm:$0xff] %vm4185, %v7001
  %7039 = vst.msk [vmem:[%s7030 + $0x40] sm:$0xff] %vm4185, %v7002
  %7040 = vst.msk [vmem:[%s7030 + $0x48] sm:$0xff] %vm4185, %v7003
  %7041 = vst.msk [vmem:[%s7030 + $0x50] sm:$0xff] %vm4185, %v7004
  %7042 = vst.msk [vmem:[%s7030 + $0x58] sm:$0xff] %vm4185, %v7005
  %7043 = vst.msk [vmem:[%s7030 + $0x60] sm:$0xff] %vm4185, %v7006
  %7044 = vst.msk [vmem:[%s7030 + $0x68] sm:$0xff] %vm4185, %v7007
  %7045 = vst.msk [vmem:[%s7030 + $0x70] sm:$0xff] %vm4185, %v7008
  %7046 = vst.msk [vmem:[%s7030 + $0x78] sm:$0xff] %vm4185, %v7009
  %7047 = vst.msk [vmem:[%s7030 + $0x80] sm:$0xff] %vm4185, %v7010
  %7048 = vst.msk [vmem:[%s7030 + $0x88] sm:$0xff] %vm4185, %v7011
  // Predicated region
  $region54: #{tpu_custom_call.1} parent=0 // pred_check
    _
  $region55: #{tpu_custom_call.1} parent=0 // pred_check_branch
    %7050 = sbr.rel (0) target = $region57
  $region56: #{tpu_custom_call.1} parent=0 // pred_region
    _
  $region57: #{tpu_custom_call.1} parent=0 // pred_fallthru
    _
  // Predicated region
  $region58: #{tpu_custom_call.1} parent=0 // pred_check
    _
  $region59: #{tpu_custom_call.1} parent=0 // pred_check_branch
    %7052 = sbr.rel (0) target = $region61
  $region60: #{tpu_custom_call.1} parent=0 // pred_region
    _
  $region61: #{tpu_custom_call.1} parent=0 // pred_fallthru
    _

</llo_original>
